<compile_context>
chip_gen: v6e
topology: v6e:2x2x1
jax: 0.10.0
libtpu: 0.0.40
codegen_flags: <defaults>
</compile_context>

<pallas_src>
import functools

import numpy as np
import jax
import jax.numpy as jnp
from jax.experimental import pallas as pl
from jax.experimental.pallas import tpu as pltpu

_COMPUTE_DTYPE = jnp.bfloat16   # MXU input dtype (f32 accumulation)


# ----------------------------------------------------------------------------
# 1-D bilinear (align_corners=True) interpolation helpers (trace-time, numpy)
# ----------------------------------------------------------------------------
def _interp_taps(size_in, size_out):
    """Static (lo, hi, frac) taps per output index."""
    if size_in == 1:
        return tuple((0, 0, 0.0) for _ in range(size_out))
    scale = (size_in - 1) / (size_out - 1) if size_out > 1 else 0.0
    taps = []
    for i in range(size_out):
        src = i * scale
        lo = min(int(np.floor(src)), size_in - 1)
        hi = min(lo + 1, size_in - 1)
        taps.append((lo, hi, float(src - lo)))
    return tuple(taps)


def _interp_matrix(size_in, size_out):
    """Dense (size_out, size_in) interpolation matrix."""
    A = np.zeros((size_out, size_in), dtype=np.float32)
    for i, (lo, hi, f) in enumerate(_interp_taps(size_in, size_out)):
        A[i, lo] += 1.0 - f
        A[i, hi] += f
    return A


# ----------------------------------------------------------------------------
# Fully fused Up-block kernel (one grid step == one batch element)
# ----------------------------------------------------------------------------
def _up_block_kernel(x1_ref, x2_ref, awb_ref, w1s_ref, w1u_ref, w2_ref,
                     b1_ref, b2_ref, o_ref, xp2_ref, xp1_ref, hp_ref,
                     *, H1, W1, Cin, H2, W2, Cskip, Cout, dy0, dx0, h_taps):
    Ho, Wo = 2 * H1, 2 * W1

    # ---- Stage 1: bilinear 2x upsample of x1 (align_corners=True), f32 -----
    x1v = x1_ref[0]                                           # (H1, W1, Cin)
    # W-pass: batched (over H1) matmul with the 1-D interpolation matrix.
    t = jnp.einsum('how,hwc->hoc', awb_ref[...], x1v,
                   preferred_element_type=jnp.float32)        # (H1, Wo, Cin)
    # H-pass: each output row = 2-tap weighted sum of input rows (static
    # weights -> pure VPU; row indexing is a cheap major-dim slice).
    rows = []
    for (lo, hi, frac) in h_taps:
        r = t[lo]
        if frac != 0.0:
            r = (1.0 - frac) * r + frac * t[hi]
        rows.append(r)
    up = jnp.stack(rows, axis=0)                              # (Ho, Wo, Cin)

    # ---- Stage 2: VMEM staging buffers (conv halo + F.pad + channel split) -
    xp2_ref[...] = jnp.zeros_like(xp2_ref)
    xp1_ref[...] = jnp.zeros_like(xp1_ref)
    xp2_ref[1:H2 + 1, 1:W2 + 1, :] = x2_ref[0].astype(_COMPUTE_DTYPE)
    xp1_ref[1 + dy0:1 + dy0 + Ho, 1 + dx0:1 + dx0 + Wo, :] = (
        up.astype(_COMPUTE_DTYPE))

    # ---- helper: accumulate a 3x3 conv from a halo-padded VMEM buffer ------
    # One sublane shift per kw; kh is a cheap major-dim slice of the slab.
    # TODO(synk): for larger channel counts, merge kw taps along K (K=3*C)
    # to better fill the 256-deep MXU on v6e/v7x.
    def accum_conv(xp_ref, w, acc):
        for kw in range(3):
            slab = xp_ref[:, kw:kw + W2, :]                   # (H2+2, W2, Cg)
            for kh in range(3):
                win = slab[kh:kh + H2]                        # (H2, W2, Cg)
                acc = acc + jnp.dot(win.reshape(H2 * W2, win.shape[-1]),
                                    w[kh, kw],
                                    preferred_element_type=jnp.float32)
        return acc

    w1s = w1s_ref[...].astype(_COMPUTE_DTYPE)
    w1u = w1u_ref[...].astype(_COMPUTE_DTYPE)
    w2 = w2_ref[...].astype(_COMPUTE_DTYPE)

    # ---- Stage 3: conv1 (3x3, pad=1) + bias + ReLU over the two groups -----
    acc1 = jnp.zeros((H2 * W2, Cout), jnp.float32)
    acc1 = accum_conv(xp2_ref, w1s, acc1)                     # skip channels
    acc1 = accum_conv(xp1_ref, w1u, acc1)                     # upsampled chans
    h = jnp.maximum(acc1 + b1_ref[...], 0.0)                  # (H2*W2, Cout)

    # ---- Stage 4: conv2 (3x3, pad=1) + bias + ReLU --------------------------
    hp_ref[...] = jnp.zeros_like(hp_ref)
    hp_ref[1:H2 + 1, 1:W2 + 1, :] = h.reshape(H2, W2, Cout).astype(_COMPUTE_DTYPE)
    acc2 = jnp.zeros((H2 * W2, Cout), jnp.float32)
    acc2 = accum_conv(hp_ref, w2, acc2)
    out = jnp.maximum(acc2 + b2_ref[...], 0.0)

    # TODO(synk): final store is Cout(<128)-lane masked; at these sizes (64KB
    # total) it is negligible vs. the fusion win.
    o_ref[...] = out.reshape(1, H2, W2, Cout).astype(o_ref.dtype)


# ----------------------------------------------------------------------------
# Up block forward (matches PyTorch Up.forward(x1, x2) with bilinear=True)
# ----------------------------------------------------------------------------
def up_forward(x1_nchw, x2_nchw, params):
    # TODO(synk): bilinear=False (ConvTranspose2d) constructor path is not
    # implemented; only the default bilinear=True branch.
    x1 = jnp.transpose(x1_nchw, (0, 2, 3, 1))                 # NCHW -> NHWC
    x2 = jnp.transpose(x2_nchw, (0, 2, 3, 1))
    N, H1, W1, Cin = x1.shape
    _, H2, W2, Cskip = x2.shape
    Ho, Wo = 2 * H1, 2 * W1
    dy, dx = H2 - Ho, W2 - Wo
    assert dy >= 0 and dx >= 0, "negative F.pad (crop) not supported"
    dy0, dx0 = dy // 2, dx // 2

    w1, b1 = params["w1"], params["b1"]
    w2, b2 = params["w2"], params["b2"]
    Cout = w2.shape[-1]
    assert w1.shape == (3, 3, Cskip + Cin, Cout)
    w1s = w1[:, :, :Cskip, :]          # weights for the skip-connection group
    w1u = w1[:, :, Cskip:, :]          # weights for the upsampled group

    # W-pass interpolation matrix, pre-broadcast over H1 (compile-time const).
    aw = _interp_matrix(W1, Wo)                                # (Wo, W1)
    awb = jnp.asarray(np.ascontiguousarray(
        np.broadcast_to(aw[None], (H1, Wo, W1))))
    h_taps = _interp_taps(H1, Ho)

    kernel = functools.partial(
        _up_block_kernel, H1=H1, W1=W1, Cin=Cin, H2=H2, W2=W2,
        Cskip=Cskip, Cout=Cout, dy0=dy0, dx0=dx0, h_taps=h_taps)

    flops = (2 * N * H2 * W2 * 9 * Cout * (Cskip + Cin + Cout)
             + 2 * N * (H1 * Wo * W1 + Ho * Wo) * Cin)
    bytes_accessed = 4 * (x1.size + x2.size + w1.size + w2.size
                          + b1.size + b2.size + N * H2 * W2 * Cout)

    # TODO(synk): for N == 1 on v7x (2 TensorCores) add a halo-tiled spatial
    # grid axis so both cores are fed; for large H/W the staging buffers also
    # need spatial tiling before they approach the VMEM budget.
    out_nhwc = pl.pallas_call(
        kernel,
        out_shape=jax.ShapeDtypeStruct((N, H2, W2, Cout), jnp.float32),
        grid=(N,),
        in_specs=[
            pl.BlockSpec((1, H1, W1, Cin), lambda n: (n, 0, 0, 0)),
            pl.BlockSpec((1, H2, W2, Cskip), lambda n: (n, 0, 0, 0)),
            pl.BlockSpec((H1, Wo, W1), lambda n: (0, 0, 0)),
            pl.BlockSpec((3, 3, Cskip, Cout), lambda n: (0, 0, 0, 0)),
            pl.BlockSpec((3, 3, Cin, Cout), lambda n: (0, 0, 0, 0)),
            pl.BlockSpec((3, 3, Cout, Cout), lambda n: (0, 0, 0, 0)),
            pl.BlockSpec((1, Cout), lambda n: (0, 0)),
            pl.BlockSpec((1, Cout), lambda n: (0, 0)),
        ],
        out_specs=pl.BlockSpec((1, H2, W2, Cout), lambda n: (n, 0, 0, 0)),
        scratch_shapes=[
            pltpu.VMEM((H2 + 2, W2 + 2, Cskip), _COMPUTE_DTYPE),  # x2 staged
            pltpu.VMEM((H2 + 2, W2 + 2, Cin), _COMPUTE_DTYPE),    # x1-up staged
            pltpu.VMEM((H2 + 2, W2 + 2, Cout), _COMPUTE_DTYPE),   # conv1 out
        ],
        compiler_params=pltpu.CompilerParams(
            dimension_semantics=("parallel",)),
        cost_estimate=pl.CostEstimate(flops=int(flops), transcendentals=0,
                                      bytes_accessed=int(bytes_accessed)),
    )(x1, x2, awb, w1s, w1u, w2,
      b1.reshape(1, Cout).astype(jnp.float32),
      b2.reshape(1, Cout).astype(jnp.float32))

    return jnp.transpose(out_nhwc, (0, 3, 1, 2))               # NHWC -> NCHW


# ----------------------------------------------------------------------------
# Pure-JAX f32 reference (independent implementation for validation)
# ----------------------------------------------------------------------------
def up_forward_reference(x1_nchw, x2_nchw, params):
    N, Cin, H1, W1 = x1_nchw.shape
    Ho, Wo = 2 * H1, 2 * W1
    ah = jnp.asarray(_interp_matrix(H1, Ho))
    aw = jnp.asarray(_interp_matrix(W1, Wo))
    x1 = jnp.einsum('oh,nchw->ncow', ah, x1_nchw)
    x1 = jnp.einsum('pw,ncow->ncop', aw, x1)
    dy = x2_nchw.shape[2] - x1.shape[2]
    dx = x2_nchw.shape[3] - x1.shape[3]
    x1 = jnp.pad(x1, ((0, 0), (0, 0),
                      (dy // 2, dy - dy // 2), (dx // 2, dx - dx // 2)))
    x = jnp.concatenate([x2_nchw, x1], axis=1)

    def conv(x, w_hwio, b):
        y = jax.lax.conv_general_dilated(
            x, w_hwio, window_strides=(1, 1), padding='SAME',
            dimension_numbers=('NCHW', 'HWIO', 'NCHW'))
        return jax.nn.relu(y + b.reshape(1, -1, 1, 1))

    h = conv(x, params["w1"], params["b1"])
    return conv(h, params["w2"], params["b2"])


# ----------------------------------------------------------------------------
# Deterministic parameter init (shapes match the PyTorch module, HWIO layout)
# ----------------------------------------------------------------------------
def _init_conv(key, cin, cout, k):
    kw_, kb_ = jax.random.split(key)
    fan_in = cin * k * k
    w = jax.random.normal(kw_, (k, k, cin, cout), jnp.float32) * np.sqrt(2.0 / fan_in)
    b = jax.random.normal(kb_, (cout,), jnp.float32) * 0.01
    return w, b


def init_up_params(key, in_channels, skip_channels, out_channels):
    k1, k2 = jax.random.split(key)
    w1, b1 = _init_conv(k1, in_channels + skip_channels, out_channels, 3)
    w2, b2 = _init_conv(k2, out_channels, out_channels, 3)
    return {"w1": w1, "b1": b1, "w2": w2, "b2": b2}


if __name__ == "__main__":
    key = jax.random.PRNGKey(0)
    k1, k2, kp = jax.random.split(key, 3)

    N = 2
    in_ch, skip_ch, out_ch = 64, 32, 32   # Up(in_channels=64, skip_channels=32, out_channels=32)
    H1 = W1 = 8                           # x1 spatial; skip x2 is 2x = 16x16

    x1 = jax.random.normal(k1, (N, in_ch, H1, W1), jnp.float32)
    x2 = jax.random.normal(k2, (N, skip_ch, 2 * H1, 2 * W1), jnp.float32)
    params = init_up_params(kp, in_ch, skip_ch, out_ch)

    fwd = jax.jit(up_forward)
    out = fwd(x1, x2, params)
    jax.block_until_ready(out)

    assert out.shape == (N, out_ch, 2 * H1, 2 * W1), out.shape
    assert out.dtype == jnp.float32

    # Validate against an independent f32 reference (bf16 MXU inputs -> loose tol).
    ref = up_forward_reference(x1, x2, params)
    np.testing.assert_allclose(np.asarray(out), np.asarray(ref),
                               rtol=5e-2, atol=8e-2)
    print("KERNEL_OK")
</pallas_src>

<mosaic_0001>
module attributes {stable_mosaic.version = 11 : i64} {
  func.func @_up_block_kernel(%arg0: i32, %arg1: memref<1x8x8x64xf32, #tpu.memory_space<vmem>>, %arg2: memref<1x16x16x32xf32, #tpu.memory_space<vmem>>, %arg3: memref<8x16x8xf32, #tpu.memory_space<vmem>>, %arg4: memref<3x3x32x32xf32, #tpu.memory_space<vmem>>, %arg5: memref<3x3x64x32xf32, #tpu.memory_space<vmem>>, %arg6: memref<3x3x32x32xf32, #tpu.memory_space<vmem>>, %arg7: memref<1x32xf32, #tpu.memory_space<vmem>>, %arg8: memref<1x32xf32, #tpu.memory_space<vmem>>, %arg9: memref<1x16x16x32xf32, #tpu.memory_space<vmem>>, %arg10: memref<18x18x32xbf16, #tpu.memory_space<vmem>>, %arg11: memref<18x18x64xbf16, #tpu.memory_space<vmem>>, %arg12: memref<18x18x32xbf16, #tpu.memory_space<vmem>>) attributes {dimension_semantics = [#tpu.dimension_semantics<parallel>], iteration_bounds = array<i64: 2>, scalar_prefetch = 0 : i64, scratch_operands = 3 : i64, tpu.core_type = #tpu.core_type<tc>, window_params = [{transform_indices = @transform_0, window_bounds = array<i64: 1, 8, 8, 64>}, {transform_indices = @transform_1, window_bounds = array<i64: 1, 16, 16, 32>}, {pipeline_mode = #tpu.pipeline_mode<synchronous>, transform_indices = @transform_2, window_bounds = array<i64: 8, 16, 8>}, {pipeline_mode = #tpu.pipeline_mode<synchronous>, transform_indices = @transform_3, window_bounds = array<i64: 3, 3, 32, 32>}, {pipeline_mode = #tpu.pipeline_mode<synchronous>, transform_indices = @transform_4, window_bounds = array<i64: 3, 3, 64, 32>}, {pipeline_mode = #tpu.pipeline_mode<synchronous>, transform_indices = @transform_5, window_bounds = array<i64: 3, 3, 32, 32>}, {pipeline_mode = #tpu.pipeline_mode<synchronous>, transform_indices = @transform_6, window_bounds = array<i64: 1, 32>}, {pipeline_mode = #tpu.pipeline_mode<synchronous>, transform_indices = @transform_7, window_bounds = array<i64: 1, 32>}, {transform_indices = @transform_8, window_bounds = array<i64: 1, 16, 16, 32>}]} {
    %c0 = arith.constant 0 : index
    %c0_0 = arith.constant 0 : index
    %c0_1 = arith.constant 0 : index
    %c0_2 = arith.constant 0 : index
    %0 = vector.load %arg1[%c0, %c0_0, %c0_1, %c0_2] : memref<1x8x8x64xf32, #tpu.memory_space<vmem>>, vector<1x8x8x64xf32>
    %1 = vector.shape_cast %0 : vector<1x8x8x64xf32> to vector<8x8x64xf32>
    %c0_3 = arith.constant 0 : index
    %c0_4 = arith.constant 0 : index
    %c0_5 = arith.constant 0 : index
    %2 = vector.load %arg3[%c0_3, %c0_4, %c0_5] : memref<8x16x8xf32, #tpu.memory_space<vmem>>, vector<8x16x8xf32>
    "tpu.trace_start"() <{level = 10 : i32, message = "how,hwc->hoc"}> : () -> ()
    %cst = arith.constant dense<0.000000e+00> : vector<8x16x64xf32>
    %3 = tpu.matmul %2, %1, %cst {dimension_numbers = #tpu.dot_dimension_numbers<[2], [1], [1], [2], [0, 0, 0, 1, 1, 2], [0], [0]>} : vector<8x16x8xf32>, vector<8x8x64xf32>, vector<8x16x64xf32> -> vector<8x16x64xf32>
    "tpu.trace_stop"() : () -> ()
    %4 = vector.extract_strided_slice %3 {offsets = [0, 0, 0], sizes = [1, 16, 64], strides = [1, 1, 1]} : vector<8x16x64xf32> to vector<1x16x64xf32>
    %5 = vector.shape_cast %4 : vector<1x16x64xf32> to vector<16x64xf32>
    %6 = vector.extract_strided_slice %3 {offsets = [0, 0, 0], sizes = [1, 16, 64], strides = [1, 1, 1]} : vector<8x16x64xf32> to vector<1x16x64xf32>
    %7 = vector.shape_cast %6 : vector<1x16x64xf32> to vector<16x64xf32>
    %cst_6 = arith.constant 0.533333361 : f32
    %8 = vector.broadcast %cst_6 : f32 to vector<16x64xf32>
    %9 = arith.mulf %8, %7 : vector<16x64xf32>
    %10 = vector.extract_strided_slice %3 {offsets = [1, 0, 0], sizes = [1, 16, 64], strides = [1, 1, 1]} : vector<8x16x64xf32> to vector<1x16x64xf32>
    %11 = vector.shape_cast %10 : vector<1x16x64xf32> to vector<16x64xf32>
    %cst_7 = arith.constant 0.466666669 : f32
    %12 = vector.broadcast %cst_7 : f32 to vector<16x64xf32>
    %13 = arith.mulf %12, %11 : vector<16x64xf32>
    %14 = arith.addf %9, %13 : vector<16x64xf32>
    %15 = vector.extract_strided_slice %3 {offsets = [0, 0, 0], sizes = [1, 16, 64], strides = [1, 1, 1]} : vector<8x16x64xf32> to vector<1x16x64xf32>
    %16 = vector.shape_cast %15 : vector<1x16x64xf32> to vector<16x64xf32>
    %cst_8 = arith.constant 0.0666666701 : f32
    %17 = vector.broadcast %cst_8 : f32 to vector<16x64xf32>
    %18 = arith.mulf %17, %16 : vector<16x64xf32>
    %19 = vector.extract_strided_slice %3 {offsets = [1, 0, 0], sizes = [1, 16, 64], strides = [1, 1, 1]} : vector<8x16x64xf32> to vector<1x16x64xf32>
    %20 = vector.shape_cast %19 : vector<1x16x64xf32> to vector<16x64xf32>
    %cst_9 = arith.constant 0.933333337 : f32
    %21 = vector.broadcast %cst_9 : f32 to vector<16x64xf32>
    %22 = arith.mulf %21, %20 : vector<16x64xf32>
    %23 = arith.addf %18, %22 : vector<16x64xf32>
    %24 = vector.extract_strided_slice %3 {offsets = [1, 0, 0], sizes = [1, 16, 64], strides = [1, 1, 1]} : vector<8x16x64xf32> to vector<1x16x64xf32>
    %25 = vector.shape_cast %24 : vector<1x16x64xf32> to vector<16x64xf32>
    %cst_10 = arith.constant 6.000000e-01 : f32
    %26 = vector.broadcast %cst_10 : f32 to vector<16x64xf32>
    %27 = arith.mulf %26, %25 : vector<16x64xf32>
    %28 = vector.extract_strided_slice %3 {offsets = [2, 0, 0], sizes = [1, 16, 64], strides = [1, 1, 1]} : vector<8x16x64xf32> to vector<1x16x64xf32>
    %29 = vector.shape_cast %28 : vector<1x16x64xf32> to vector<16x64xf32>
    %cst_11 = arith.constant 4.000000e-01 : f32
    %30 = vector.broadcast %cst_11 : f32 to vector<16x64xf32>
    %31 = arith.mulf %30, %29 : vector<16x64xf32>
    %32 = arith.addf %27, %31 : vector<16x64xf32>
    %33 = vector.extract_strided_slice %3 {offsets = [1, 0, 0], sizes = [1, 16, 64], strides = [1, 1, 1]} : vector<8x16x64xf32> to vector<1x16x64xf32>
    %34 = vector.shape_cast %33 : vector<1x16x64xf32> to vector<16x64xf32>
    %cst_12 = arith.constant 0.13333334 : f32
    %35 = vector.broadcast %cst_12 : f32 to vector<16x64xf32>
    %36 = arith.mulf %35, %34 : vector<16x64xf32>
    %37 = vector.extract_strided_slice %3 {offsets = [2, 0, 0], sizes = [1, 16, 64], strides = [1, 1, 1]} : vector<8x16x64xf32> to vector<1x16x64xf32>
    %38 = vector.shape_cast %37 : vector<1x16x64xf32> to vector<16x64xf32>
    %cst_13 = arith.constant 0.866666674 : f32
    %39 = vector.broadcast %cst_13 : f32 to vector<16x64xf32>
    %40 = arith.mulf %39, %38 : vector<16x64xf32>
    %41 = arith.addf %36, %40 : vector<16x64xf32>
    %42 = vector.extract_strided_slice %3 {offsets = [2, 0, 0], sizes = [1, 16, 64], strides = [1, 1, 1]} : vector<8x16x64xf32> to vector<1x16x64xf32>
    %43 = vector.shape_cast %42 : vector<1x16x64xf32> to vector<16x64xf32>
    %cst_14 = arith.constant 0.666666686 : f32
    %44 = vector.broadcast %cst_14 : f32 to vector<16x64xf32>
    %45 = arith.mulf %44, %43 : vector<16x64xf32>
    %46 = vector.extract_strided_slice %3 {offsets = [3, 0, 0], sizes = [1, 16, 64], strides = [1, 1, 1]} : vector<8x16x64xf32> to vector<1x16x64xf32>
    %47 = vector.shape_cast %46 : vector<1x16x64xf32> to vector<16x64xf32>
    %cst_15 = arith.constant 0.333333343 : f32
    %48 = vector.broadcast %cst_15 : f32 to vector<16x64xf32>
    %49 = arith.mulf %48, %47 : vector<16x64xf32>
    %50 = arith.addf %45, %49 : vector<16x64xf32>
    %51 = vector.extract_strided_slice %3 {offsets = [2, 0, 0], sizes = [1, 16, 64], strides = [1, 1, 1]} : vector<8x16x64xf32> to vector<1x16x64xf32>
    %52 = vector.shape_cast %51 : vector<1x16x64xf32> to vector<16x64xf32>
    %cst_16 = arith.constant 2.000000e-01 : f32
    %53 = vector.broadcast %cst_16 : f32 to vector<16x64xf32>
    %54 = arith.mulf %53, %52 : vector<16x64xf32>
    %55 = vector.extract_strided_slice %3 {offsets = [3, 0, 0], sizes = [1, 16, 64], strides = [1, 1, 1]} : vector<8x16x64xf32> to vector<1x16x64xf32>
    %56 = vector.shape_cast %55 : vector<1x16x64xf32> to vector<16x64xf32>
    %cst_17 = arith.constant 8.000000e-01 : f32
    %57 = vector.broadcast %cst_17 : f32 to vector<16x64xf32>
    %58 = arith.mulf %57, %56 : vector<16x64xf32>
    %59 = arith.addf %54, %58 : vector<16x64xf32>
    %60 = vector.extract_strided_slice %3 {offsets = [3, 0, 0], sizes = [1, 16, 64], strides = [1, 1, 1]} : vector<8x16x64xf32> to vector<1x16x64xf32>
    %61 = vector.shape_cast %60 : vector<1x16x64xf32> to vector<16x64xf32>
    %cst_18 = arith.constant 0.733333349 : f32
    %62 = vector.broadcast %cst_18 : f32 to vector<16x64xf32>
    %63 = arith.mulf %62, %61 : vector<16x64xf32>
    %64 = vector.extract_strided_slice %3 {offsets = [4, 0, 0], sizes = [1, 16, 64], strides = [1, 1, 1]} : vector<8x16x64xf32> to vector<1x16x64xf32>
    %65 = vector.shape_cast %64 : vector<1x16x64xf32> to vector<16x64xf32>
    %cst_19 = arith.constant 0.266666681 : f32
    %66 = vector.broadcast %cst_19 : f32 to vector<16x64xf32>
    %67 = arith.mulf %66, %65 : vector<16x64xf32>
    %68 = arith.addf %63, %67 : vector<16x64xf32>
    %69 = vector.extract_strided_slice %3 {offsets = [3, 0, 0], sizes = [1, 16, 64], strides = [1, 1, 1]} : vector<8x16x64xf32> to vector<1x16x64xf32>
    %70 = vector.shape_cast %69 : vector<1x16x64xf32> to vector<16x64xf32>
    %cst_20 = arith.constant 0.266666681 : f32
    %71 = vector.broadcast %cst_20 : f32 to vector<16x64xf32>
    %72 = arith.mulf %71, %70 : vector<16x64xf32>
    %73 = vector.extract_strided_slice %3 {offsets = [4, 0, 0], sizes = [1, 16, 64], strides = [1, 1, 1]} : vector<8x16x64xf32> to vector<1x16x64xf32>
    %74 = vector.shape_cast %73 : vector<1x16x64xf32> to vector<16x64xf32>
    %cst_21 = arith.constant 0.733333349 : f32
    %75 = vector.broadcast %cst_21 : f32 to vector<16x64xf32>
    %76 = arith.mulf %75, %74 : vector<16x64xf32>
    %77 = arith.addf %72, %76 : vector<16x64xf32>
    %78 = vector.extract_strided_slice %3 {offsets = [4, 0, 0], sizes = [1, 16, 64], strides = [1, 1, 1]} : vector<8x16x64xf32> to vector<1x16x64xf32>
    %79 = vector.shape_cast %78 : vector<1x16x64xf32> to vector<16x64xf32>
    %cst_22 = arith.constant 8.000000e-01 : f32
    %80 = vector.broadcast %cst_22 : f32 to vector<16x64xf32>
    %81 = arith.mulf %80, %79 : vector<16x64xf32>
    %82 = vector.extract_strided_slice %3 {offsets = [5, 0, 0], sizes = [1, 16, 64], strides = [1, 1, 1]} : vector<8x16x64xf32> to vector<1x16x64xf32>
    %83 = vector.shape_cast %82 : vector<1x16x64xf32> to vector<16x64xf32>
    %cst_23 = arith.constant 2.000000e-01 : f32
    %84 = vector.broadcast %cst_23 : f32 to vector<16x64xf32>
    %85 = arith.mulf %84, %83 : vector<16x64xf32>
    %86 = arith.addf %81, %85 : vector<16x64xf32>
    %87 = vector.extract_strided_slice %3 {offsets = [4, 0, 0], sizes = [1, 16, 64], strides = [1, 1, 1]} : vector<8x16x64xf32> to vector<1x16x64xf32>
    %88 = vector.shape_cast %87 : vector<1x16x64xf32> to vector<16x64xf32>
    %cst_24 = arith.constant 0.333333343 : f32
    %89 = vector.broadcast %cst_24 : f32 to vector<16x64xf32>
    %90 = arith.mulf %89, %88 : vector<16x64xf32>
    %91 = vector.extract_strided_slice %3 {offsets = [5, 0, 0], sizes = [1, 16, 64], strides = [1, 1, 1]} : vector<8x16x64xf32> to vector<1x16x64xf32>
    %92 = vector.shape_cast %91 : vector<1x16x64xf32> to vector<16x64xf32>
    %cst_25 = arith.constant 0.666666686 : f32
    %93 = vector.broadcast %cst_25 : f32 to vector<16x64xf32>
    %94 = arith.mulf %93, %92 : vector<16x64xf32>
    %95 = arith.addf %90, %94 : vector<16x64xf32>
    %96 = vector.extract_strided_slice %3 {offsets = [5, 0, 0], sizes = [1, 16, 64], strides = [1, 1, 1]} : vector<8x16x64xf32> to vector<1x16x64xf32>
    %97 = vector.shape_cast %96 : vector<1x16x64xf32> to vector<16x64xf32>
    %cst_26 = arith.constant 0.866666674 : f32
    %98 = vector.broadcast %cst_26 : f32 to vector<16x64xf32>
    %99 = arith.mulf %98, %97 : vector<16x64xf32>
    %100 = vector.extract_strided_slice %3 {offsets = [6, 0, 0], sizes = [1, 16, 64], strides = [1, 1, 1]} : vector<8x16x64xf32> to vector<1x16x64xf32>
    %101 = vector.shape_cast %100 : vector<1x16x64xf32> to vector<16x64xf32>
    %cst_27 = arith.constant 0.13333334 : f32
    %102 = vector.broadcast %cst_27 : f32 to vector<16x64xf32>
    %103 = arith.mulf %102, %101 : vector<16x64xf32>
    %104 = arith.addf %99, %103 : vector<16x64xf32>
    %105 = vector.extract_strided_slice %3 {offsets = [5, 0, 0], sizes = [1, 16, 64], strides = [1, 1, 1]} : vector<8x16x64xf32> to vector<1x16x64xf32>
    %106 = vector.shape_cast %105 : vector<1x16x64xf32> to vector<16x64xf32>
    %cst_28 = arith.constant 4.000000e-01 : f32
    %107 = vector.broadcast %cst_28 : f32 to vector<16x64xf32>
    %108 = arith.mulf %107, %106 : vector<16x64xf32>
    %109 = vector.extract_strided_slice %3 {offsets = [6, 0, 0], sizes = [1, 16, 64], strides = [1, 1, 1]} : vector<8x16x64xf32> to vector<1x16x64xf32>
    %110 = vector.shape_cast %109 : vector<1x16x64xf32> to vector<16x64xf32>
    %cst_29 = arith.constant 6.000000e-01 : f32
    %111 = vector.broadcast %cst_29 : f32 to vector<16x64xf32>
    %112 = arith.mulf %111, %110 : vector<16x64xf32>
    %113 = arith.addf %108, %112 : vector<16x64xf32>
    %114 = vector.extract_strided_slice %3 {offsets = [6, 0, 0], sizes = [1, 16, 64], strides = [1, 1, 1]} : vector<8x16x64xf32> to vector<1x16x64xf32>
    %115 = vector.shape_cast %114 : vector<1x16x64xf32> to vector<16x64xf32>
    %cst_30 = arith.constant 0.933333337 : f32
    %116 = vector.broadcast %cst_30 : f32 to vector<16x64xf32>
    %117 = arith.mulf %116, %115 : vector<16x64xf32>
    %118 = vector.extract_strided_slice %3 {offsets = [7, 0, 0], sizes = [1, 16, 64], strides = [1, 1, 1]} : vector<8x16x64xf32> to vector<1x16x64xf32>
    %119 = vector.shape_cast %118 : vector<1x16x64xf32> to vector<16x64xf32>
    %cst_31 = arith.constant 0.0666666701 : f32
    %120 = vector.broadcast %cst_31 : f32 to vector<16x64xf32>
    %121 = arith.mulf %120, %119 : vector<16x64xf32>
    %122 = arith.addf %117, %121 : vector<16x64xf32>
    %123 = vector.extract_strided_slice %3 {offsets = [6, 0, 0], sizes = [1, 16, 64], strides = [1, 1, 1]} : vector<8x16x64xf32> to vector<1x16x64xf32>
    %124 = vector.shape_cast %123 : vector<1x16x64xf32> to vector<16x64xf32>
    %cst_32 = arith.constant 0.466666669 : f32
    %125 = vector.broadcast %cst_32 : f32 to vector<16x64xf32>
    %126 = arith.mulf %125, %124 : vector<16x64xf32>
    %127 = vector.extract_strided_slice %3 {offsets = [7, 0, 0], sizes = [1, 16, 64], strides = [1, 1, 1]} : vector<8x16x64xf32> to vector<1x16x64xf32>
    %128 = vector.shape_cast %127 : vector<1x16x64xf32> to vector<16x64xf32>
    %cst_33 = arith.constant 0.533333361 : f32
    %129 = vector.broadcast %cst_33 : f32 to vector<16x64xf32>
    %130 = arith.mulf %129, %128 : vector<16x64xf32>
    %131 = arith.addf %126, %130 : vector<16x64xf32>
    %132 = vector.extract_strided_slice %3 {offsets = [7, 0, 0], sizes = [1, 16, 64], strides = [1, 1, 1]} : vector<8x16x64xf32> to vector<1x16x64xf32>
    %133 = vector.shape_cast %132 : vector<1x16x64xf32> to vector<16x64xf32>
    %134 = vector.shape_cast %5 : vector<16x64xf32> to vector<1x16x64xf32>
    %135 = vector.shape_cast %14 : vector<16x64xf32> to vector<1x16x64xf32>
    %136 = vector.shape_cast %23 : vector<16x64xf32> to vector<1x16x64xf32>
    %137 = vector.shape_cast %32 : vector<16x64xf32> to vector<1x16x64xf32>
    %138 = vector.shape_cast %41 : vector<16x64xf32> to vector<1x16x64xf32>
    %139 = vector.shape_cast %50 : vector<16x64xf32> to vector<1x16x64xf32>
    %140 = vector.shape_cast %59 : vector<16x64xf32> to vector<1x16x64xf32>
    %141 = vector.shape_cast %68 : vector<16x64xf32> to vector<1x16x64xf32>
    %142 = vector.shape_cast %77 : vector<16x64xf32> to vector<1x16x64xf32>
    %143 = vector.shape_cast %86 : vector<16x64xf32> to vector<1x16x64xf32>
    %144 = vector.shape_cast %95 : vector<16x64xf32> to vector<1x16x64xf32>
    %145 = vector.shape_cast %104 : vector<16x64xf32> to vector<1x16x64xf32>
    %146 = vector.shape_cast %113 : vector<16x64xf32> to vector<1x16x64xf32>
    %147 = vector.shape_cast %122 : vector<16x64xf32> to vector<1x16x64xf32>
    %148 = vector.shape_cast %131 : vector<16x64xf32> to vector<1x16x64xf32>
    %149 = vector.shape_cast %133 : vector<16x64xf32> to vector<1x16x64xf32>
    %150 = tpu.concatenate %134, %135, %136, %137, %138, %139, %140, %141, %142, %143, %144, %145, %146, %147, %148, %149 in 0 : vector<1x16x64xf32>, vector<1x16x64xf32>, vector<1x16x64xf32>, vector<1x16x64xf32>, vector<1x16x64xf32>, vector<1x16x64xf32>, vector<1x16x64xf32>, vector<1x16x64xf32>, vector<1x16x64xf32>, vector<1x16x64xf32>, vector<1x16x64xf32>, vector<1x16x64xf32>, vector<1x16x64xf32>, vector<1x16x64xf32>, vector<1x16x64xf32>, vector<1x16x64xf32> -> vector<16x16x64xf32>
    %cst_34 = arith.constant 0.000000e+00 : bf16
    %151 = vector.broadcast %cst_34 : bf16 to vector<18x18x32xbf16>
    %c0_35 = arith.constant 0 : index
    %c0_36 = arith.constant 0 : index
    %c0_37 = arith.constant 0 : index
    %152 = vector.load %arg10[%c0_35, %c0_36, %c0_37] : memref<18x18x32xbf16, #tpu.memory_space<vmem>>, vector<18x18x32xbf16>
    tpu.vector_store %arg10[%c0_35, %c0_36, %c0_37], %151 {strides = array<i32>} : memref<18x18x32xbf16, #tpu.memory_space<vmem>>, vector<18x18x32xbf16>,
    %cst_38 = arith.constant 0.000000e+00 : bf16
    %153 = vector.broadcast %cst_38 : bf16 to vector<18x18x64xbf16>
    %c0_39 = arith.constant 0 : index
    %c0_40 = arith.constant 0 : index
    %c0_41 = arith.constant 0 : index
    %154 = vector.load %arg11[%c0_39, %c0_40, %c0_41] : memref<18x18x64xbf16, #tpu.memory_space<vmem>>, vector<18x18x64xbf16>
    tpu.vector_store %arg11[%c0_39, %c0_40, %c0_41], %153 {strides = array<i32>} : memref<18x18x64xbf16, #tpu.memory_space<vmem>>, vector<18x18x64xbf16>,
    %c0_42 = arith.constant 0 : index
    %c0_43 = arith.constant 0 : index
    %c0_44 = arith.constant 0 : index
    %c0_45 = arith.constant 0 : index
    %155 = vector.load %arg2[%c0_42, %c0_43, %c0_44, %c0_45] : memref<1x16x16x32xf32, #tpu.memory_space<vmem>>, vector<1x16x16x32xf32>
    %156 = vector.shape_cast %155 : vector<1x16x16x32xf32> to vector<16x16x32xf32>
    %157 = arith.truncf %156 : vector<16x16x32xf32> to vector<16x16x32xbf16>
    %c1 = arith.constant 1 : index
    %c1_46 = arith.constant 1 : index
    %c0_47 = arith.constant 0 : index
    %158 = vector.load %arg10[%c1, %c1_46, %c0_47] : memref<18x18x32xbf16, #tpu.memory_space<vmem>>, vector<16x16x32xbf16>
    tpu.vector_store %arg10[%c1, %c1_46, %c0_47], %157 {strides = array<i32>} : memref<18x18x32xbf16, #tpu.memory_space<vmem>>, vector<16x16x32xbf16>,
    %159 = arith.truncf %150 : vector<16x16x64xf32> to vector<16x16x64xbf16>
    %c1_48 = arith.constant 1 : index
    %c1_49 = arith.constant 1 : index
    %c0_50 = arith.constant 0 : index
    %160 = vector.load %arg11[%c1_48, %c1_49, %c0_50] : memref<18x18x64xbf16, #tpu.memory_space<vmem>>, vector<16x16x64xbf16>
    tpu.vector_store %arg11[%c1_48, %c1_49, %c0_50], %159 {strides = array<i32>} : memref<18x18x64xbf16, #tpu.memory_space<vmem>>, vector<16x16x64xbf16>,
    %c0_51 = arith.constant 0 : index
    %c0_52 = arith.constant 0 : index
    %c0_53 = arith.constant 0 : index
    %c0_54 = arith.constant 0 : index
    %161 = vector.load %arg4[%c0_51, %c0_52, %c0_53, %c0_54] : memref<3x3x32x32xf32, #tpu.memory_space<vmem>>, vector<3x3x32x32xf32>
    %162 = arith.truncf %161 : vector<3x3x32x32xf32> to vector<3x3x32x32xbf16>
    %c0_55 = arith.constant 0 : index
    %c0_56 = arith.constant 0 : index
    %c0_57 = arith.constant 0 : index
    %c0_58 = arith.constant 0 : index
    %163 = vector.load %arg5[%c0_55, %c0_56, %c0_57, %c0_58] : memref<3x3x64x32xf32, #tpu.memory_space<vmem>>, vector<3x3x64x32xf32>
    %164 = arith.truncf %163 : vector<3x3x64x32xf32> to vector<3x3x64x32xbf16>
    %c0_59 = arith.constant 0 : index
    %c0_60 = arith.constant 0 : index
    %c0_61 = arith.constant 0 : index
    %c0_62 = arith.constant 0 : index
    %165 = vector.load %arg6[%c0_59, %c0_60, %c0_61, %c0_62] : memref<3x3x32x32xf32, #tpu.memory_space<vmem>>, vector<3x3x32x32xf32>
    %166 = arith.truncf %165 : vector<3x3x32x32xf32> to vector<3x3x32x32xbf16>
    %cst_63 = arith.constant 0.000000e+00 : f32
    %167 = vector.broadcast %cst_63 : f32 to vector<256x32xf32>
    %c0_64 = arith.constant 0 : index
    %c0_65 = arith.constant 0 : index
    %c0_66 = arith.constant 0 : index
    %168 = vector.load %arg10[%c0_64, %c0_65, %c0_66] : memref<18x18x32xbf16, #tpu.memory_space<vmem>>, vector<18x16x32xbf16>
    %169 = vector.extract_strided_slice %168 {offsets = [0, 0, 0], sizes = [16, 16, 32], strides = [1, 1, 1]} : vector<18x16x32xbf16> to vector<16x16x32xbf16>
    %170 = vector.shape_cast %169 : vector<16x16x32xbf16> to vector<256x32xbf16>
    %171 = vector.extract_strided_slice %162 {offsets = [0, 0, 0, 0], sizes = [1, 1, 32, 32], strides = [1, 1, 1, 1]} : vector<3x3x32x32xbf16> to vector<1x1x32x32xbf16>
    %172 = vector.shape_cast %171 : vector<1x1x32x32xbf16> to vector<32x32xbf16>
    %cst_67 = arith.constant dense<0.000000e+00> : vector<256x32xf32>
    %173 = tpu.matmul %170, %172, %cst_67 {dimension_numbers = #tpu.dot_dimension_numbers<[1], [0], [0], [1], [0, 0, 1, 1], [], []>} : vector<256x32xbf16>, vector<32x32xbf16>, vector<256x32xf32> -> vector<256x32xf32>
    %174 = arith.addf %167, %173 : vector<256x32xf32>
    %175 = vector.extract_strided_slice %168 {offsets = [1, 0, 0], sizes = [16, 16, 32], strides = [1, 1, 1]} : vector<18x16x32xbf16> to vector<16x16x32xbf16>
    %176 = vector.shape_cast %175 : vector<16x16x32xbf16> to vector<256x32xbf16>
    %177 = vector.extract_strided_slice %162 {offsets = [1, 0, 0, 0], sizes = [1, 1, 32, 32], strides = [1, 1, 1, 1]} : vector<3x3x32x32xbf16> to vector<1x1x32x32xbf16>
    %178 = vector.shape_cast %177 : vector<1x1x32x32xbf16> to vector<32x32xbf16>
    %cst_68 = arith.constant dense<0.000000e+00> : vector<256x32xf32>
    %179 = tpu.matmul %176, %178, %cst_68 {dimension_numbers = #tpu.dot_dimension_numbers<[1], [0], [0], [1], [0, 0, 1, 1], [], []>} : vector<256x32xbf16>, vector<32x32xbf16>, vector<256x32xf32> -> vector<256x32xf32>
    %180 = arith.addf %174, %179 : vector<256x32xf32>
    %181 = vector.extract_strided_slice %168 {offsets = [2, 0, 0], sizes = [16, 16, 32], strides = [1, 1, 1]} : vector<18x16x32xbf16> to vector<16x16x32xbf16>
    %182 = vector.shape_cast %181 : vector<16x16x32xbf16> to vector<256x32xbf16>
    %183 = vector.extract_strided_slice %162 {offsets = [2, 0, 0, 0], sizes = [1, 1, 32, 32], strides = [1, 1, 1, 1]} : vector<3x3x32x32xbf16> to vector<1x1x32x32xbf16>
    %184 = vector.shape_cast %183 : vector<1x1x32x32xbf16> to vector<32x32xbf16>
    %cst_69 = arith.constant dense<0.000000e+00> : vector<256x32xf32>
    %185 = tpu.matmul %182, %184, %cst_69 {dimension_numbers = #tpu.dot_dimension_numbers<[1], [0], [0], [1], [0, 0, 1, 1], [], []>} : vector<256x32xbf16>, vector<32x32xbf16>, vector<256x32xf32> -> vector<256x32xf32>
    %186 = arith.addf %180, %185 : vector<256x32xf32>
    %c0_70 = arith.constant 0 : index
    %c1_71 = arith.constant 1 : index
    %c0_72 = arith.constant 0 : index
    %187 = vector.load %arg10[%c0_70, %c1_71, %c0_72] : memref<18x18x32xbf16, #tpu.memory_space<vmem>>, vector<18x16x32xbf16>
    %188 = vector.extract_strided_slice %187 {offsets = [0, 0, 0], sizes = [16, 16, 32], strides = [1, 1, 1]} : vector<18x16x32xbf16> to vector<16x16x32xbf16>
    %189 = vector.shape_cast %188 : vector<16x16x32xbf16> to vector<256x32xbf16>
    %190 = vector.extract_strided_slice %162 {offsets = [0, 1, 0, 0], sizes = [1, 1, 32, 32], strides = [1, 1, 1, 1]} : vector<3x3x32x32xbf16> to vector<1x1x32x32xbf16>
    %191 = vector.shape_cast %190 : vector<1x1x32x32xbf16> to vector<32x32xbf16>
    %cst_73 = arith.constant dense<0.000000e+00> : vector<256x32xf32>
    %192 = tpu.matmul %189, %191, %cst_73 {dimension_numbers = #tpu.dot_dimension_numbers<[1], [0], [0], [1], [0, 0, 1, 1], [], []>} : vector<256x32xbf16>, vector<32x32xbf16>, vector<256x32xf32> -> vector<256x32xf32>
    %193 = arith.addf %186, %192 : vector<256x32xf32>
    %194 = vector.extract_strided_slice %187 {offsets = [1, 0, 0], sizes = [16, 16, 32], strides = [1, 1, 1]} : vector<18x16x32xbf16> to vector<16x16x32xbf16>
    %195 = vector.shape_cast %194 : vector<16x16x32xbf16> to vector<256x32xbf16>
    %196 = vector.extract_strided_slice %162 {offsets = [1, 1, 0, 0], sizes = [1, 1, 32, 32], strides = [1, 1, 1, 1]} : vector<3x3x32x32xbf16> to vector<1x1x32x32xbf16>
    %197 = vector.shape_cast %196 : vector<1x1x32x32xbf16> to vector<32x32xbf16>
    %cst_74 = arith.constant dense<0.000000e+00> : vector<256x32xf32>
    %198 = tpu.matmul %195, %197, %cst_74 {dimension_numbers = #tpu.dot_dimension_numbers<[1], [0], [0], [1], [0, 0, 1, 1], [], []>} : vector<256x32xbf16>, vector<32x32xbf16>, vector<256x32xf32> -> vector<256x32xf32>
    %199 = arith.addf %193, %198 : vector<256x32xf32>
    %200 = vector.extract_strided_slice %187 {offsets = [2, 0, 0], sizes = [16, 16, 32], strides = [1, 1, 1]} : vector<18x16x32xbf16> to vector<16x16x32xbf16>
    %201 = vector.shape_cast %200 : vector<16x16x32xbf16> to vector<256x32xbf16>
    %202 = vector.extract_strided_slice %162 {offsets = [2, 1, 0, 0], sizes = [1, 1, 32, 32], strides = [1, 1, 1, 1]} : vector<3x3x32x32xbf16> to vector<1x1x32x32xbf16>
    %203 = vector.shape_cast %202 : vector<1x1x32x32xbf16> to vector<32x32xbf16>
    %cst_75 = arith.constant dense<0.000000e+00> : vector<256x32xf32>
    %204 = tpu.matmul %201, %203, %cst_75 {dimension_numbers = #tpu.dot_dimension_numbers<[1], [0], [0], [1], [0, 0, 1, 1], [], []>} : vector<256x32xbf16>, vector<32x32xbf16>, vector<256x32xf32> -> vector<256x32xf32>
    %205 = arith.addf %199, %204 : vector<256x32xf32>
    %c0_76 = arith.constant 0 : index
    %c2 = arith.constant 2 : index
    %c0_77 = arith.constant 0 : index
    %206 = vector.load %arg10[%c0_76, %c2, %c0_77] : memref<18x18x32xbf16, #tpu.memory_space<vmem>>, vector<18x16x32xbf16>
    %207 = vector.extract_strided_slice %206 {offsets = [0, 0, 0], sizes = [16, 16, 32], strides = [1, 1, 1]} : vector<18x16x32xbf16> to vector<16x16x32xbf16>
    %208 = vector.shape_cast %207 : vector<16x16x32xbf16> to vector<256x32xbf16>
    %209 = vector.extract_strided_slice %162 {offsets = [0, 2, 0, 0], sizes = [1, 1, 32, 32], strides = [1, 1, 1, 1]} : vector<3x3x32x32xbf16> to vector<1x1x32x32xbf16>
    %210 = vector.shape_cast %209 : vector<1x1x32x32xbf16> to vector<32x32xbf16>
    %cst_78 = arith.constant dense<0.000000e+00> : vector<256x32xf32>
    %211 = tpu.matmul %208, %210, %cst_78 {dimension_numbers = #tpu.dot_dimension_numbers<[1], [0], [0], [1], [0, 0, 1, 1], [], []>} : vector<256x32xbf16>, vector<32x32xbf16>, vector<256x32xf32> -> vector<256x32xf32>
    %212 = arith.addf %205, %211 : vector<256x32xf32>
    %213 = vector.extract_strided_slice %206 {offsets = [1, 0, 0], sizes = [16, 16, 32], strides = [1, 1, 1]} : vector<18x16x32xbf16> to vector<16x16x32xbf16>
    %214 = vector.shape_cast %213 : vector<16x16x32xbf16> to vector<256x32xbf16>
    %215 = vector.extract_strided_slice %162 {offsets = [1, 2, 0, 0], sizes = [1, 1, 32, 32], strides = [1, 1, 1, 1]} : vector<3x3x32x32xbf16> to vector<1x1x32x32xbf16>
    %216 = vector.shape_cast %215 : vector<1x1x32x32xbf16> to vector<32x32xbf16>
    %cst_79 = arith.constant dense<0.000000e+00> : vector<256x32xf32>
    %217 = tpu.matmul %214, %216, %cst_79 {dimension_numbers = #tpu.dot_dimension_numbers<[1], [0], [0], [1], [0, 0, 1, 1], [], []>} : vector<256x32xbf16>, vector<32x32xbf16>, vector<256x32xf32> -> vector<256x32xf32>
    %218 = arith.addf %212, %217 : vector<256x32xf32>
    %219 = vector.extract_strided_slice %206 {offsets = [2, 0, 0], sizes = [16, 16, 32], strides = [1, 1, 1]} : vector<18x16x32xbf16> to vector<16x16x32xbf16>
    %220 = vector.shape_cast %219 : vector<16x16x32xbf16> to vector<256x32xbf16>
    %221 = vector.extract_strided_slice %162 {offsets = [2, 2, 0, 0], sizes = [1, 1, 32, 32], strides = [1, 1, 1, 1]} : vector<3x3x32x32xbf16> to vector<1x1x32x32xbf16>
    %222 = vector.shape_cast %221 : vector<1x1x32x32xbf16> to vector<32x32xbf16>
    %cst_80 = arith.constant dense<0.000000e+00> : vector<256x32xf32>
    %223 = tpu.matmul %220, %222, %cst_80 {dimension_numbers = #tpu.dot_dimension_numbers<[1], [0], [0], [1], [0, 0, 1, 1], [], []>} : vector<256x32xbf16>, vector<32x32xbf16>, vector<256x32xf32> -> vector<256x32xf32>
    %224 = arith.addf %218, %223 : vector<256x32xf32>
    %c0_81 = arith.constant 0 : index
    %c0_82 = arith.constant 0 : index
    %c0_83 = arith.constant 0 : index
    %225 = vector.load %arg11[%c0_81, %c0_82, %c0_83] : memref<18x18x64xbf16, #tpu.memory_space<vmem>>, vector<18x16x64xbf16>
    %226 = vector.extract_strided_slice %225 {offsets = [0, 0, 0], sizes = [16, 16, 64], strides = [1, 1, 1]} : vector<18x16x64xbf16> to vector<16x16x64xbf16>
    %227 = vector.shape_cast %226 : vector<16x16x64xbf16> to vector<256x64xbf16>
    %228 = vector.extract_strided_slice %164 {offsets = [0, 0, 0, 0], sizes = [1, 1, 64, 32], strides = [1, 1, 1, 1]} : vector<3x3x64x32xbf16> to vector<1x1x64x32xbf16>
    %229 = vector.shape_cast %228 : vector<1x1x64x32xbf16> to vector<64x32xbf16>
    %cst_84 = arith.constant dense<0.000000e+00> : vector<256x32xf32>
    %230 = tpu.matmul %227, %229, %cst_84 {dimension_numbers = #tpu.dot_dimension_numbers<[1], [0], [0], [1], [0, 0, 1, 1], [], []>} : vector<256x64xbf16>, vector<64x32xbf16>, vector<256x32xf32> -> vector<256x32xf32>
    %231 = arith.addf %224, %230 : vector<256x32xf32>
    %232 = vector.extract_strided_slice %225 {offsets = [1, 0, 0], sizes = [16, 16, 64], strides = [1, 1, 1]} : vector<18x16x64xbf16> to vector<16x16x64xbf16>
    %233 = vector.shape_cast %232 : vector<16x16x64xbf16> to vector<256x64xbf16>
    %234 = vector.extract_strided_slice %164 {offsets = [1, 0, 0, 0], sizes = [1, 1, 64, 32], strides = [1, 1, 1, 1]} : vector<3x3x64x32xbf16> to vector<1x1x64x32xbf16>
    %235 = vector.shape_cast %234 : vector<1x1x64x32xbf16> to vector<64x32xbf16>
    %cst_85 = arith.constant dense<0.000000e+00> : vector<256x32xf32>
    %236 = tpu.matmul %233, %235, %cst_85 {dimension_numbers = #tpu.dot_dimension_numbers<[1], [0], [0], [1], [0, 0, 1, 1], [], []>} : vector<256x64xbf16>, vector<64x32xbf16>, vector<256x32xf32> -> vector<256x32xf32>
    %237 = arith.addf %231, %236 : vector<256x32xf32>
    %238 = vector.extract_strided_slice %225 {offsets = [2, 0, 0], sizes = [16, 16, 64], strides = [1, 1, 1]} : vector<18x16x64xbf16> to vector<16x16x64xbf16>
    %239 = vector.shape_cast %238 : vector<16x16x64xbf16> to vector<256x64xbf16>
    %240 = vector.extract_strided_slice %164 {offsets = [2, 0, 0, 0], sizes = [1, 1, 64, 32], strides = [1, 1, 1, 1]} : vector<3x3x64x32xbf16> to vector<1x1x64x32xbf16>
    %241 = vector.shape_cast %240 : vector<1x1x64x32xbf16> to vector<64x32xbf16>
    %cst_86 = arith.constant dense<0.000000e+00> : vector<256x32xf32>
    %242 = tpu.matmul %239, %241, %cst_86 {dimension_numbers = #tpu.dot_dimension_numbers<[1], [0], [0], [1], [0, 0, 1, 1], [], []>} : vector<256x64xbf16>, vector<64x32xbf16>, vector<256x32xf32> -> vector<256x32xf32>
    %243 = arith.addf %237, %242 : vector<256x32xf32>
    %c0_87 = arith.constant 0 : index
    %c1_88 = arith.constant 1 : index
    %c0_89 = arith.constant 0 : index
    %244 = vector.load %arg11[%c0_87, %c1_88, %c0_89] : memref<18x18x64xbf16, #tpu.memory_space<vmem>>, vector<18x16x64xbf16>
    %245 = vector.extract_strided_slice %244 {offsets = [0, 0, 0], sizes = [16, 16, 64], strides = [1, 1, 1]} : vector<18x16x64xbf16> to vector<16x16x64xbf16>
    %246 = vector.shape_cast %245 : vector<16x16x64xbf16> to vector<256x64xbf16>
    %247 = vector.extract_strided_slice %164 {offsets = [0, 1, 0, 0], sizes = [1, 1, 64, 32], strides = [1, 1, 1, 1]} : vector<3x3x64x32xbf16> to vector<1x1x64x32xbf16>
    %248 = vector.shape_cast %247 : vector<1x1x64x32xbf16> to vector<64x32xbf16>
    %cst_90 = arith.constant dense<0.000000e+00> : vector<256x32xf32>
    %249 = tpu.matmul %246, %248, %cst_90 {dimension_numbers = #tpu.dot_dimension_numbers<[1], [0], [0], [1], [0, 0, 1, 1], [], []>} : vector<256x64xbf16>, vector<64x32xbf16>, vector<256x32xf32> -> vector<256x32xf32>
    %250 = arith.addf %243, %249 : vector<256x32xf32>
    %251 = vector.extract_strided_slice %244 {offsets = [1, 0, 0], sizes = [16, 16, 64], strides = [1, 1, 1]} : vector<18x16x64xbf16> to vector<16x16x64xbf16>
    %252 = vector.shape_cast %251 : vector<16x16x64xbf16> to vector<256x64xbf16>
    %253 = vector.extract_strided_slice %164 {offsets = [1, 1, 0, 0], sizes = [1, 1, 64, 32], strides = [1, 1, 1, 1]} : vector<3x3x64x32xbf16> to vector<1x1x64x32xbf16>
    %254 = vector.shape_cast %253 : vector<1x1x64x32xbf16> to vector<64x32xbf16>
    %cst_91 = arith.constant dense<0.000000e+00> : vector<256x32xf32>
    %255 = tpu.matmul %252, %254, %cst_91 {dimension_numbers = #tpu.dot_dimension_numbers<[1], [0], [0], [1], [0, 0, 1, 1], [], []>} : vector<256x64xbf16>, vector<64x32xbf16>, vector<256x32xf32> -> vector<256x32xf32>
    %256 = arith.addf %250, %255 : vector<256x32xf32>
    %257 = vector.extract_strided_slice %244 {offsets = [2, 0, 0], sizes = [16, 16, 64], strides = [1, 1, 1]} : vector<18x16x64xbf16> to vector<16x16x64xbf16>
    %258 = vector.shape_cast %257 : vector<16x16x64xbf16> to vector<256x64xbf16>
    %259 = vector.extract_strided_slice %164 {offsets = [2, 1, 0, 0], sizes = [1, 1, 64, 32], strides = [1, 1, 1, 1]} : vector<3x3x64x32xbf16> to vector<1x1x64x32xbf16>
    %260 = vector.shape_cast %259 : vector<1x1x64x32xbf16> to vector<64x32xbf16>
    %cst_92 = arith.constant dense<0.000000e+00> : vector<256x32xf32>
    %261 = tpu.matmul %258, %260, %cst_92 {dimension_numbers = #tpu.dot_dimension_numbers<[1], [0], [0], [1], [0, 0, 1, 1], [], []>} : vector<256x64xbf16>, vector<64x32xbf16>, vector<256x32xf32> -> vector<256x32xf32>
    %262 = arith.addf %256, %261 : vector<256x32xf32>
    %c0_93 = arith.constant 0 : index
    %c2_94 = arith.constant 2 : index
    %c0_95 = arith.constant 0 : index
    %263 = vector.load %arg11[%c0_93, %c2_94, %c0_95] : memref<18x18x64xbf16, #tpu.memory_space<vmem>>, vector<18x16x64xbf16>
    %264 = vector.extract_strided_slice %263 {offsets = [0, 0, 0], sizes = [16, 16, 64], strides = [1, 1, 1]} : vector<18x16x64xbf16> to vector<16x16x64xbf16>
    %265 = vector.shape_cast %264 : vector<16x16x64xbf16> to vector<256x64xbf16>
    %266 = vector.extract_strided_slice %164 {offsets = [0, 2, 0, 0], sizes = [1, 1, 64, 32], strides = [1, 1, 1, 1]} : vector<3x3x64x32xbf16> to vector<1x1x64x32xbf16>
    %267 = vector.shape_cast %266 : vector<1x1x64x32xbf16> to vector<64x32xbf16>
    %cst_96 = arith.constant dense<0.000000e+00> : vector<256x32xf32>
    %268 = tpu.matmul %265, %267, %cst_96 {dimension_numbers = #tpu.dot_dimension_numbers<[1], [0], [0], [1], [0, 0, 1, 1], [], []>} : vector<256x64xbf16>, vector<64x32xbf16>, vector<256x32xf32> -> vector<256x32xf32>
    %269 = arith.addf %262, %268 : vector<256x32xf32>
    %270 = vector.extract_strided_slice %263 {offsets = [1, 0, 0], sizes = [16, 16, 64], strides = [1, 1, 1]} : vector<18x16x64xbf16> to vector<16x16x64xbf16>
    %271 = vector.shape_cast %270 : vector<16x16x64xbf16> to vector<256x64xbf16>
    %272 = vector.extract_strided_slice %164 {offsets = [1, 2, 0, 0], sizes = [1, 1, 64, 32], strides = [1, 1, 1, 1]} : vector<3x3x64x32xbf16> to vector<1x1x64x32xbf16>
    %273 = vector.shape_cast %272 : vector<1x1x64x32xbf16> to vector<64x32xbf16>
    %cst_97 = arith.constant dense<0.000000e+00> : vector<256x32xf32>
    %274 = tpu.matmul %271, %273, %cst_97 {dimension_numbers = #tpu.dot_dimension_numbers<[1], [0], [0], [1], [0, 0, 1, 1], [], []>} : vector<256x64xbf16>, vector<64x32xbf16>, vector<256x32xf32> -> vector<256x32xf32>
    %275 = arith.addf %269, %274 : vector<256x32xf32>
    %276 = vector.extract_strided_slice %263 {offsets = [2, 0, 0], sizes = [16, 16, 64], strides = [1, 1, 1]} : vector<18x16x64xbf16> to vector<16x16x64xbf16>
    %277 = vector.shape_cast %276 : vector<16x16x64xbf16> to vector<256x64xbf16>
    %278 = vector.extract_strided_slice %164 {offsets = [2, 2, 0, 0], sizes = [1, 1, 64, 32], strides = [1, 1, 1, 1]} : vector<3x3x64x32xbf16> to vector<1x1x64x32xbf16>
    %279 = vector.shape_cast %278 : vector<1x1x64x32xbf16> to vector<64x32xbf16>
    %cst_98 = arith.constant dense<0.000000e+00> : vector<256x32xf32>
    %280 = tpu.matmul %277, %279, %cst_98 {dimension_numbers = #tpu.dot_dimension_numbers<[1], [0], [0], [1], [0, 0, 1, 1], [], []>} : vector<256x64xbf16>, vector<64x32xbf16>, vector<256x32xf32> -> vector<256x32xf32>
    %281 = arith.addf %275, %280 : vector<256x32xf32>
    %c0_99 = arith.constant 0 : index
    %c0_100 = arith.constant 0 : index
    %282 = vector.load %arg7[%c0_99, %c0_100] : memref<1x32xf32, #tpu.memory_space<vmem>>, vector<1x32xf32>
    %283 = vector.broadcast %282 : vector<1x32xf32> to vector<256x32xf32>
    %284 = arith.addf %281, %283 : vector<256x32xf32>
    %cst_101 = arith.constant 0.000000e+00 : f32
    %285 = vector.broadcast %cst_101 : f32 to vector<256x32xf32>
    %286 = arith.maximumf %284, %285 : vector<256x32xf32>
    %cst_102 = arith.constant 0.000000e+00 : bf16
    %287 = vector.broadcast %cst_102 : bf16 to vector<18x18x32xbf16>
    %c0_103 = arith.constant 0 : index
    %c0_104 = arith.constant 0 : index
    %c0_105 = arith.constant 0 : index
    %288 = vector.load %arg12[%c0_103, %c0_104, %c0_105] : memref<18x18x32xbf16, #tpu.memory_space<vmem>>, vector<18x18x32xbf16>
    tpu.vector_store %arg12[%c0_103, %c0_104, %c0_105], %287 {strides = array<i32>} : memref<18x18x32xbf16, #tpu.memory_space<vmem>>, vector<18x18x32xbf16>,
    %289 = vector.shape_cast %286 : vector<256x32xf32> to vector<16x16x32xf32>
    %290 = arith.truncf %289 : vector<16x16x32xf32> to vector<16x16x32xbf16>
    %c1_106 = arith.constant 1 : index
    %c1_107 = arith.constant 1 : index
    %c0_108 = arith.constant 0 : index
    %291 = vector.load %arg12[%c1_106, %c1_107, %c0_108] : memref<18x18x32xbf16, #tpu.memory_space<vmem>>, vector<16x16x32xbf16>
    tpu.vector_store %arg12[%c1_106, %c1_107, %c0_108], %290 {strides = array<i32>} : memref<18x18x32xbf16, #tpu.memory_space<vmem>>, vector<16x16x32xbf16>,
    %cst_109 = arith.constant 0.000000e+00 : f32
    %292 = vector.broadcast %cst_109 : f32 to vector<256x32xf32>
    %c0_110 = arith.constant 0 : index
    %c0_111 = arith.constant 0 : index
    %c0_112 = arith.constant 0 : index
    %293 = vector.load %arg12[%c0_110, %c0_111, %c0_112] : memref<18x18x32xbf16, #tpu.memory_space<vmem>>, vector<18x16x32xbf16>
    %294 = vector.extract_strided_slice %293 {offsets = [0, 0, 0], sizes = [16, 16, 32], strides = [1, 1, 1]} : vector<18x16x32xbf16> to vector<16x16x32xbf16>
    %295 = vector.shape_cast %294 : vector<16x16x32xbf16> to vector<256x32xbf16>
    %296 = vector.extract_strided_slice %166 {offsets = [0, 0, 0, 0], sizes = [1, 1, 32, 32], strides = [1, 1, 1, 1]} : vector<3x3x32x32xbf16> to vector<1x1x32x32xbf16>
    %297 = vector.shape_cast %296 : vector<1x1x32x32xbf16> to vector<32x32xbf16>
    %cst_113 = arith.constant dense<0.000000e+00> : vector<256x32xf32>
    %298 = tpu.matmul %295, %297, %cst_113 {dimension_numbers = #tpu.dot_dimension_numbers<[1], [0], [0], [1], [0, 0, 1, 1], [], []>} : vector<256x32xbf16>, vector<32x32xbf16>, vector<256x32xf32> -> vector<256x32xf32>
    %299 = arith.addf %292, %298 : vector<256x32xf32>
    %300 = vector.extract_strided_slice %293 {offsets = [1, 0, 0], sizes = [16, 16, 32], strides = [1, 1, 1]} : vector<18x16x32xbf16> to vector<16x16x32xbf16>
    %301 = vector.shape_cast %300 : vector<16x16x32xbf16> to vector<256x32xbf16>
    %302 = vector.extract_strided_slice %166 {offsets = [1, 0, 0, 0], sizes = [1, 1, 32, 32], strides = [1, 1, 1, 1]} : vector<3x3x32x32xbf16> to vector<1x1x32x32xbf16>
    %303 = vector.shape_cast %302 : vector<1x1x32x32xbf16> to vector<32x32xbf16>
    %cst_114 = arith.constant dense<0.000000e+00> : vector<256x32xf32>
    %304 = tpu.matmul %301, %303, %cst_114 {dimension_numbers = #tpu.dot_dimension_numbers<[1], [0], [0], [1], [0, 0, 1, 1], [], []>} : vector<256x32xbf16>, vector<32x32xbf16>, vector<256x32xf32> -> vector<256x32xf32>
    %305 = arith.addf %299, %304 : vector<256x32xf32>
    %306 = vector.extract_strided_slice %293 {offsets = [2, 0, 0], sizes = [16, 16, 32], strides = [1, 1, 1]} : vector<18x16x32xbf16> to vector<16x16x32xbf16>
    %307 = vector.shape_cast %306 : vector<16x16x32xbf16> to vector<256x32xbf16>
    %308 = vector.extract_strided_slice %166 {offsets = [2, 0, 0, 0], sizes = [1, 1, 32, 32], strides = [1, 1, 1, 1]} : vector<3x3x32x32xbf16> to vector<1x1x32x32xbf16>
    %309 = vector.shape_cast %308 : vector<1x1x32x32xbf16> to vector<32x32xbf16>
    %cst_115 = arith.constant dense<0.000000e+00> : vector<256x32xf32>
    %310 = tpu.matmul %307, %309, %cst_115 {dimension_numbers = #tpu.dot_dimension_numbers<[1], [0], [0], [1], [0, 0, 1, 1], [], []>} : vector<256x32xbf16>, vector<32x32xbf16>, vector<256x32xf32> -> vector<256x32xf32>
    %311 = arith.addf %305, %310 : vector<256x32xf32>
    %c0_116 = arith.constant 0 : index
    %c1_117 = arith.constant 1 : index
    %c0_118 = arith.constant 0 : index
    %312 = vector.load %arg12[%c0_116, %c1_117, %c0_118] : memref<18x18x32xbf16, #tpu.memory_space<vmem>>, vector<18x16x32xbf16>
    %313 = vector.extract_strided_slice %312 {offsets = [0, 0, 0], sizes = [16, 16, 32], strides = [1, 1, 1]} : vector<18x16x32xbf16> to vector<16x16x32xbf16>
    %314 = vector.shape_cast %313 : vector<16x16x32xbf16> to vector<256x32xbf16>
    %315 = vector.extract_strided_slice %166 {offsets = [0, 1, 0, 0], sizes = [1, 1, 32, 32], strides = [1, 1, 1, 1]} : vector<3x3x32x32xbf16> to vector<1x1x32x32xbf16>
    %316 = vector.shape_cast %315 : vector<1x1x32x32xbf16> to vector<32x32xbf16>
    %cst_119 = arith.constant dense<0.000000e+00> : vector<256x32xf32>
    %317 = tpu.matmul %314, %316, %cst_119 {dimension_numbers = #tpu.dot_dimension_numbers<[1], [0], [0], [1], [0, 0, 1, 1], [], []>} : vector<256x32xbf16>, vector<32x32xbf16>, vector<256x32xf32> -> vector<256x32xf32>
    %318 = arith.addf %311, %317 : vector<256x32xf32>
    %319 = vector.extract_strided_slice %312 {offsets = [1, 0, 0], sizes = [16, 16, 32], strides = [1, 1, 1]} : vector<18x16x32xbf16> to vector<16x16x32xbf16>
    %320 = vector.shape_cast %319 : vector<16x16x32xbf16> to vector<256x32xbf16>
    %321 = vector.extract_strided_slice %166 {offsets = [1, 1, 0, 0], sizes = [1, 1, 32, 32], strides = [1, 1, 1, 1]} : vector<3x3x32x32xbf16> to vector<1x1x32x32xbf16>
    %322 = vector.shape_cast %321 : vector<1x1x32x32xbf16> to vector<32x32xbf16>
    %cst_120 = arith.constant dense<0.000000e+00> : vector<256x32xf32>
    %323 = tpu.matmul %320, %322, %cst_120 {dimension_numbers = #tpu.dot_dimension_numbers<[1], [0], [0], [1], [0, 0, 1, 1], [], []>} : vector<256x32xbf16>, vector<32x32xbf16>, vector<256x32xf32> -> vector<256x32xf32>
    %324 = arith.addf %318, %323 : vector<256x32xf32>
    %325 = vector.extract_strided_slice %312 {offsets = [2, 0, 0], sizes = [16, 16, 32], strides = [1, 1, 1]} : vector<18x16x32xbf16> to vector<16x16x32xbf16>
    %326 = vector.shape_cast %325 : vector<16x16x32xbf16> to vector<256x32xbf16>
    %327 = vector.extract_strided_slice %166 {offsets = [2, 1, 0, 0], sizes = [1, 1, 32, 32], strides = [1, 1, 1, 1]} : vector<3x3x32x32xbf16> to vector<1x1x32x32xbf16>
    %328 = vector.shape_cast %327 : vector<1x1x32x32xbf16> to vector<32x32xbf16>
    %cst_121 = arith.constant dense<0.000000e+00> : vector<256x32xf32>
    %329 = tpu.matmul %326, %328, %cst_121 {dimension_numbers = #tpu.dot_dimension_numbers<[1], [0], [0], [1], [0, 0, 1, 1], [], []>} : vector<256x32xbf16>, vector<32x32xbf16>, vector<256x32xf32> -> vector<256x32xf32>
    %330 = arith.addf %324, %329 : vector<256x32xf32>
    %c0_122 = arith.constant 0 : index
    %c2_123 = arith.constant 2 : index
    %c0_124 = arith.constant 0 : index
    %331 = vector.load %arg12[%c0_122, %c2_123, %c0_124] : memref<18x18x32xbf16, #tpu.memory_space<vmem>>, vector<18x16x32xbf16>
    %332 = vector.extract_strided_slice %331 {offsets = [0, 0, 0], sizes = [16, 16, 32], strides = [1, 1, 1]} : vector<18x16x32xbf16> to vector<16x16x32xbf16>
    %333 = vector.shape_cast %332 : vector<16x16x32xbf16> to vector<256x32xbf16>
    %334 = vector.extract_strided_slice %166 {offsets = [0, 2, 0, 0], sizes = [1, 1, 32, 32], strides = [1, 1, 1, 1]} : vector<3x3x32x32xbf16> to vector<1x1x32x32xbf16>
    %335 = vector.shape_cast %334 : vector<1x1x32x32xbf16> to vector<32x32xbf16>
    %cst_125 = arith.constant dense<0.000000e+00> : vector<256x32xf32>
    %336 = tpu.matmul %333, %335, %cst_125 {dimension_numbers = #tpu.dot_dimension_numbers<[1], [0], [0], [1], [0, 0, 1, 1], [], []>} : vector<256x32xbf16>, vector<32x32xbf16>, vector<256x32xf32> -> vector<256x32xf32>
    %337 = arith.addf %330, %336 : vector<256x32xf32>
    %338 = vector.extract_strided_slice %331 {offsets = [1, 0, 0], sizes = [16, 16, 32], strides = [1, 1, 1]} : vector<18x16x32xbf16> to vector<16x16x32xbf16>
    %339 = vector.shape_cast %338 : vector<16x16x32xbf16> to vector<256x32xbf16>
    %340 = vector.extract_strided_slice %166 {offsets = [1, 2, 0, 0], sizes = [1, 1, 32, 32], strides = [1, 1, 1, 1]} : vector<3x3x32x32xbf16> to vector<1x1x32x32xbf16>
    %341 = vector.shape_cast %340 : vector<1x1x32x32xbf16> to vector<32x32xbf16>
    %cst_126 = arith.constant dense<0.000000e+00> : vector<256x32xf32>
    %342 = tpu.matmul %339, %341, %cst_126 {dimension_numbers = #tpu.dot_dimension_numbers<[1], [0], [0], [1], [0, 0, 1, 1], [], []>} : vector<256x32xbf16>, vector<32x32xbf16>, vector<256x32xf32> -> vector<256x32xf32>
    %343 = arith.addf %337, %342 : vector<256x32xf32>
    %344 = vector.extract_strided_slice %331 {offsets = [2, 0, 0], sizes = [16, 16, 32], strides = [1, 1, 1]} : vector<18x16x32xbf16> to vector<16x16x32xbf16>
    %345 = vector.shape_cast %344 : vector<16x16x32xbf16> to vector<256x32xbf16>
    %346 = vector.extract_strided_slice %166 {offsets = [2, 2, 0, 0], sizes = [1, 1, 32, 32], strides = [1, 1, 1, 1]} : vector<3x3x32x32xbf16> to vector<1x1x32x32xbf16>
    %347 = vector.shape_cast %346 : vector<1x1x32x32xbf16> to vector<32x32xbf16>
    %cst_127 = arith.constant dense<0.000000e+00> : vector<256x32xf32>
    %348 = tpu.matmul %345, %347, %cst_127 {dimension_numbers = #tpu.dot_dimension_numbers<[1], [0], [0], [1], [0, 0, 1, 1], [], []>} : vector<256x32xbf16>, vector<32x32xbf16>, vector<256x32xf32> -> vector<256x32xf32>
    %349 = arith.addf %343, %348 : vector<256x32xf32>
    %c0_128 = arith.constant 0 : index
    %c0_129 = arith.constant 0 : index
    %350 = vector.load %arg8[%c0_128, %c0_129] : memref<1x32xf32, #tpu.memory_space<vmem>>, vector<1x32xf32>
    %351 = vector.broadcast %350 : vector<1x32xf32> to vector<256x32xf32>
    %352 = arith.addf %349, %351 : vector<256x32xf32>
    %cst_130 = arith.constant 0.000000e+00 : f32
    %353 = vector.broadcast %cst_130 : f32 to vector<256x32xf32>
    %354 = arith.maximumf %352, %353 : vector<256x32xf32>
    %355 = vector.shape_cast %354 : vector<256x32xf32> to vector<1x16x16x32xf32>
    %c0_131 = arith.constant 0 : index
    %c0_132 = arith.constant 0 : index
    %c0_133 = arith.constant 0 : index
    %c0_134 = arith.constant 0 : index
    %356 = vector.load %arg9[%c0_131, %c0_132, %c0_133, %c0_134] : memref<1x16x16x32xf32, #tpu.memory_space<vmem>>, vector<1x16x16x32xf32>
    tpu.vector_store %arg9[%c0_131, %c0_132, %c0_133, %c0_134], %355 {strides = array<i32>} : memref<1x16x16x32xf32, #tpu.memory_space<vmem>>, vector<1x16x16x32xf32>,
    return
  }
  func.func @transform_0(%arg0: i32) -> (i32, i32, i32, i32) {
    %c0_i32 = arith.constant 0 : i32
    %c0_i32_0 = arith.constant 0 : i32
    %c0_i32_1 = arith.constant 0 : i32
    %c0_i32_2 = arith.constant 0 : i32
    return %arg0, %c0_i32, %c0_i32_0, %c0_i32_1 : i32, i32, i32, i32
  }
  func.func @transform_1(%arg0: i32) -> (i32, i32, i32, i32) {
    %c0_i32 = arith.constant 0 : i32
    %c0_i32_0 = arith.constant 0 : i32
    %c0_i32_1 = arith.constant 0 : i32
    %c0_i32_2 = arith.constant 0 : i32
    return %arg0, %c0_i32, %c0_i32_0, %c0_i32_1 : i32, i32, i32, i32
  }
  func.func @transform_2(%arg0: i32) -> (i32, i32, i32) {
    %c0_i32 = arith.constant 0 : i32
    %c0_i32_0 = arith.constant 0 : i32
    %c0_i32_1 = arith.constant 0 : i32
    %c0_i32_2 = arith.constant 0 : i32
    return %c0_i32, %c0_i32_0, %c0_i32_1 : i32, i32, i32
  }
  func.func @transform_3(%arg0: i32) -> (i32, i32, i32, i32) {
    %c0_i32 = arith.constant 0 : i32
    %c0_i32_0 = arith.constant 0 : i32
    %c0_i32_1 = arith.constant 0 : i32
    %c0_i32_2 = arith.constant 0 : i32
    %c0_i32_3 = arith.constant 0 : i32
    return %c0_i32, %c0_i32_0, %c0_i32_1, %c0_i32_2 : i32, i32, i32, i32
  }
  func.func @transform_4(%arg0: i32) -> (i32, i32, i32, i32) {
    %c0_i32 = arith.constant 0 : i32
    %c0_i32_0 = arith.constant 0 : i32
    %c0_i32_1 = arith.constant 0 : i32
    %c0_i32_2 = arith.constant 0 : i32
    %c0_i32_3 = arith.constant 0 : i32
    return %c0_i32, %c0_i32_0, %c0_i32_1, %c0_i32_2 : i32, i32, i32, i32
  }
  func.func @transform_5(%arg0: i32) -> (i32, i32, i32, i32) {
    %c0_i32 = arith.constant 0 : i32
    %c0_i32_0 = arith.constant 0 : i32
    %c0_i32_1 = arith.constant 0 : i32
    %c0_i32_2 = arith.constant 0 : i32
    %c0_i32_3 = arith.constant 0 : i32
    return %c0_i32, %c0_i32_0, %c0_i32_1, %c0_i32_2 : i32, i32, i32, i32
  }
  func.func @transform_6(%arg0: i32) -> (i32, i32) {
    %c0_i32 = arith.constant 0 : i32
    %c0_i32_0 = arith.constant 0 : i32
    %c0_i32_1 = arith.constant 0 : i32
    return %c0_i32, %c0_i32_0 : i32, i32
  }
  func.func @transform_7(%arg0: i32) -> (i32, i32) {
    %c0_i32 = arith.constant 0 : i32
    %c0_i32_0 = arith.constant 0 : i32
    %c0_i32_1 = arith.constant 0 : i32
    return %c0_i32, %c0_i32_0 : i32, i32
  }
  func.func @transform_8(%arg0: i32) -> (i32, i32, i32, i32) {
    %c0_i32 = arith.constant 0 : i32
    %c0_i32_0 = arith.constant 0 : i32
    %c0_i32_1 = arith.constant 0 : i32
    %c0_i32_2 = arith.constant 0 : i32
    return %arg0, %c0_i32, %c0_i32_0, %c0_i32_1 : i32, i32, i32, i32
  }
}

</mosaic_0001>

<llo_original>
// kernel: up_forward.1
$region0: #{up_forward.1}
  #allocation0 [shape = 'u32[]', space=smem, size = 0x4, offset = 0x4, fixed_abs, tag = 'smem constant byte address 0x4 - core index']
  #allocation1 [shape = 'u32[144,128]{1,0:T(1,128)}', space=vmem, size = 0x12000, scoped, tag = 'internal scratch']
  #allocation2 [shape = 'bf16[18,18,32]{2,1,0:T(8,128)(2,1)}', space=vmem, size = 0x1b000, scoped, tag = 'scratch operand']
  #allocation3 [shape = 'bf16[18,18,64]{2,1,0:T(8,128)(2,1)}', space=vmem, size = 0x1b000, scoped, tag = 'scratch operand']
  #allocation4 [shape = 'bf16[18,18,32]{2,1,0:T(8,128)(2,1)}', space=vmem, size = 0x1b000, scoped, tag = 'scratch operand']
  %s0 = inlined_call_operand.vmem [shape: f32[2,8,8,64], index: 0, kind: input, shape index: {}]
  %s1 = inlined_call_operand.vmem [shape: f32[2,16,16,32], index: 1, kind: input, shape index: {}]
  %s2 = inlined_call_operand.vmem [shape: f32[8,16,8], index: 2, kind: input, shape index: {}]
  %s3 = inlined_call_operand.vmem [shape: f32[3,3,32,32], index: 3, kind: input, shape index: {}]
  %s4 = inlined_call_operand.vmem [shape: f32[3,3,64,32], index: 4, kind: input, shape index: {}]
  %s5 = inlined_call_operand.vmem [shape: f32[3,3,32,32], index: 5, kind: input, shape index: {}]
  %s6 = inlined_call_operand.vmem [shape: f32[1,32], index: 6, kind: input, shape index: {}]
  %s7 = inlined_call_operand.vmem [shape: f32[1,32], index: 7, kind: input, shape index: {}]
  %s8 = inlined_call_operand.hbm [shape: f32[2,16,16,32], index: 8, kind: output, shape index: {}]
  %s9 = sld [smem:[#allocation0]]
  $region65: #{up_forward.1} parent=0
    _
  %s11 = ssub.s32 1, %s9
  %s12 = scalar_select 0, %s11, %s9
  $region1: #{up_forward.1} parent=0
    #allocation5 [shape = 'u8[262144]{0}', space=vmem, size = 0x40000, scoped, tag = 'output window, operand 0']
    #allocation6 [shape = 's32[2]{0}', space=sflag, size = 0x8, scoped, tag = 'scoped memory for up_forward.1']
    %13 = vsyncpa [#allocation6], 0
    %s14 = scalar_lea.sflag [#allocation6], 1
    %15 = vsyncpa %s14, 0
    loop: start=0, step=1, limit=4
    $region2: #{up_forward.1} parent=1 // loop_pre_header
      _
    $region3: #{up_forward.1} parent=1 // loop_header
      %s17 = sphi 0, %s21
      %p18 = scmp.ge.s32.totalorder %s17, 4
      %s27 = sphi 0, %s29
      %s30 = sphi 0, %s27
      %s31 = sphi 0, %s30
      %s47 = sphi 0, %s31
      %s53 = sphi 0, %s55
      %s56 = sphi 0, %s53
      %s57 = sphi 0, %s56
      %s73 = sphi 0, %s57
      %s77 = sphi 0, %s77
      %s79 = sphi 0, %s77
      %s80 = sphi 0, %s79
      %s94 = sphi 0, %s80
      %s98 = sphi 0, %s98
      %s100 = sphi 0, %s98
      %s101 = sphi 0, %s100
      %s115 = sphi 0, %s101
      %s119 = sphi 0, %s119
      %s121 = sphi 0, %s119
      %s122 = sphi 0, %s121
      %s136 = sphi 0, %s122
      %s140 = sphi 0, %s140
      %s142 = sphi 0, %s140
      %s143 = sphi 0, %s142
      %s157 = sphi 0, %s143
      %s161 = sphi 0, %s161
      %s163 = sphi 0, %s161
      %s164 = sphi 0, %s163
      %s178 = sphi 0, %s164
      %s182 = sphi 0, %s182
      %s184 = sphi 0, %s182
      %s185 = sphi 0, %s184
      %s199 = sphi 0, %s185
      %s205 = sphi 0, %s207
      %s208 = sphi 0, %s205
      %s209 = sphi 0, %s208
      %s225 = sphi 0, %s209
    $region4: #{up_forward.1} parent=1 // loop_header_branch
      %20 = sbr.rel (%p18) target = $region8
    $region5: #{up_forward.1} parent=1 // loop_body
      %s22 = ssub.s32 %s17, 1
      %s23 = ssub.s32 %s17, 2
      %s24 = sadd.s32 %s17, 1
      %s25 = ssub.s32 %s17, %s24
      %p26 = scmp.eq.s32.totalorder %s25, 0
      %s28 = sadd.s32 %s27, 1
      %s29 = scalar_select %p26, %s27, %s28
      %p32 = pneg %p26
      %p33 = scmp.eq.s32.totalorder %s17, 1
      %p34 = por %p32, %p33
      %p35 = scmp.ne.s32.totalorder %s27, %s30
      %p36 = scmp.eq.s32.totalorder %s17, 0
      %p37 = por %p35, %p36
      %p38 = scmp.ne.s32.totalorder %s27, %s30
      %p39 = scmp.eq.s32.totalorder %s22, 1
      %p40 = por %p38, %p39
      %p41 = scmp.ne.s32.totalorder %s30, %s31
      %p42 = scmp.eq.s32.totalorder %s22, 0
      %p43 = por %p41, %p42
      %p44 = scmp.ne.s32.totalorder %s30, %s31
      %p45 = scmp.eq.s32.totalorder %s23, 1
      %p46 = por %p44, %p45
      %p48 = scmp.ne.s32.totalorder %s31, %s47
      %p49 = scmp.eq.s32.totalorder %s23, 0
      %p50 = por %p48, %p49
      %s51 = ssub.s32 %s17, %s24
      %p52 = scmp.eq.s32.totalorder %s51, 0
      %s54 = sadd.s32 %s53, 1
      %s55 = scalar_select %p52, %s53, %s54
      %p58 = pneg %p52
      %p59 = scmp.eq.s32.totalorder %s17, 1
      %p60 = por %p58, %p59
      %p61 = scmp.ne.s32.totalorder %s53, %s56
      %p62 = scmp.eq.s32.totalorder %s17, 0
      %p63 = por %p61, %p62
      %p64 = scmp.ne.s32.totalorder %s53, %s56
      %p65 = scmp.eq.s32.totalorder %s22, 1
      %p66 = por %p64, %p65
      %p67 = scmp.ne.s32.totalorder %s56, %s57
      %p68 = scmp.eq.s32.totalorder %s22, 0
      %p69 = por %p67, %p68
      %p70 = scmp.ne.s32.totalorder %s56, %s57
      %p71 = scmp.eq.s32.totalorder %s23, 1
      %p72 = por %p70, %p71
      %p74 = scmp.ne.s32.totalorder %s57, %s73
      %p75 = scmp.eq.s32.totalorder %s23, 0
      %p76 = por %p74, %p75
      %s78 = sadd.s32 %s77, 1
      %p81 = scmp.eq.s32.totalorder %s17, 1
      %p82 = scmp.ne.s32.totalorder %s77, %s79
      %p83 = scmp.eq.s32.totalorder %s17, 0
      %p84 = por %p82, %p83
      %p85 = scmp.ne.s32.totalorder %s77, %s79
      %p86 = scmp.eq.s32.totalorder %s22, 1
      %p87 = por %p85, %p86
      %p88 = scmp.ne.s32.totalorder %s79, %s80
      %p89 = scmp.eq.s32.totalorder %s22, 0
      %p90 = por %p88, %p89
      %p91 = scmp.ne.s32.totalorder %s79, %s80
      %p92 = scmp.eq.s32.totalorder %s23, 1
      %p93 = por %p91, %p92
      %p95 = scmp.ne.s32.totalorder %s80, %s94
      %p96 = scmp.eq.s32.totalorder %s23, 0
      %p97 = por %p95, %p96
      %s99 = sadd.s32 %s98, 1
      %p102 = scmp.eq.s32.totalorder %s17, 1
      %p103 = scmp.ne.s32.totalorder %s98, %s100
      %p104 = scmp.eq.s32.totalorder %s17, 0
      %p105 = por %p103, %p104
      %p106 = scmp.ne.s32.totalorder %s98, %s100
      %p107 = scmp.eq.s32.totalorder %s22, 1
      %p108 = por %p106, %p107
      %p109 = scmp.ne.s32.totalorder %s100, %s101
      %p110 = scmp.eq.s32.totalorder %s22, 0
      %p111 = por %p109, %p110
      %p112 = scmp.ne.s32.totalorder %s100, %s101
      %p113 = scmp.eq.s32.totalorder %s23, 1
      %p114 = por %p112, %p113
      %p116 = scmp.ne.s32.totalorder %s101, %s115
      %p117 = scmp.eq.s32.totalorder %s23, 0
      %p118 = por %p116, %p117
      %s120 = sadd.s32 %s119, 1
      %p123 = scmp.eq.s32.totalorder %s17, 1
      %p124 = scmp.ne.s32.totalorder %s119, %s121
      %p125 = scmp.eq.s32.totalorder %s17, 0
      %p126 = por %p124, %p125
      %p127 = scmp.ne.s32.totalorder %s119, %s121
      %p128 = scmp.eq.s32.totalorder %s22, 1
      %p129 = por %p127, %p128
      %p130 = scmp.ne.s32.totalorder %s121, %s122
      %p131 = scmp.eq.s32.totalorder %s22, 0
      %p132 = por %p130, %p131
      %p133 = scmp.ne.s32.totalorder %s121, %s122
      %p134 = scmp.eq.s32.totalorder %s23, 1
      %p135 = por %p133, %p134
      %p137 = scmp.ne.s32.totalorder %s122, %s136
      %p138 = scmp.eq.s32.totalorder %s23, 0
      %p139 = por %p137, %p138
      %s141 = sadd.s32 %s140, 1
      %p144 = scmp.eq.s32.totalorder %s17, 1
      %p145 = scmp.ne.s32.totalorder %s140, %s142
      %p146 = scmp.eq.s32.totalorder %s17, 0
      %p147 = por %p145, %p146
      %p148 = scmp.ne.s32.totalorder %s140, %s142
      %p149 = scmp.eq.s32.totalorder %s22, 1
      %p150 = por %p148, %p149
      %p151 = scmp.ne.s32.totalorder %s142, %s143
      %p152 = scmp.eq.s32.totalorder %s22, 0
      %p153 = por %p151, %p152
      %p154 = scmp.ne.s32.totalorder %s142, %s143
      %p155 = scmp.eq.s32.totalorder %s23, 1
      %p156 = por %p154, %p155
      %p158 = scmp.ne.s32.totalorder %s143, %s157
      %p159 = scmp.eq.s32.totalorder %s23, 0
      %p160 = por %p158, %p159
      %s162 = sadd.s32 %s161, 1
      %p165 = scmp.eq.s32.totalorder %s17, 1
      %p166 = scmp.ne.s32.totalorder %s161, %s163
      %p167 = scmp.eq.s32.totalorder %s17, 0
      %p168 = por %p166, %p167
      %p169 = scmp.ne.s32.totalorder %s161, %s163
      %p170 = scmp.eq.s32.totalorder %s22, 1
      %p171 = por %p169, %p170
      %p172 = scmp.ne.s32.totalorder %s163, %s164
      %p173 = scmp.eq.s32.totalorder %s22, 0
      %p174 = por %p172, %p173
      %p175 = scmp.ne.s32.totalorder %s163, %s164
      %p176 = scmp.eq.s32.totalorder %s23, 1
      %p177 = por %p175, %p176
      %p179 = scmp.ne.s32.totalorder %s164, %s178
      %p180 = scmp.eq.s32.totalorder %s23, 0
      %p181 = por %p179, %p180
      %s183 = sadd.s32 %s182, 1
      %p186 = scmp.eq.s32.totalorder %s17, 1
      %p187 = scmp.ne.s32.totalorder %s182, %s184
      %p188 = scmp.eq.s32.totalorder %s17, 0
      %p189 = por %p187, %p188
      %p190 = scmp.ne.s32.totalorder %s182, %s184
      %p191 = scmp.eq.s32.totalorder %s22, 1
      %p192 = por %p190, %p191
      %p193 = scmp.ne.s32.totalorder %s184, %s185
      %p194 = scmp.eq.s32.totalorder %s22, 0
      %p195 = por %p193, %p194
      %p196 = scmp.ne.s32.totalorder %s184, %s185
      %p197 = scmp.eq.s32.totalorder %s23, 1
      %p198 = por %p196, %p197
      %p200 = scmp.ne.s32.totalorder %s185, %s199
      %p201 = scmp.eq.s32.totalorder %s23, 0
      %p202 = por %p200, %p201
      %s203 = ssub.s32 %s17, %s24
      %p204 = scmp.eq.s32.totalorder %s203, 0
      %s206 = sadd.s32 %s205, 1
      %s207 = scalar_select %p204, %s205, %s206
      %p210 = pneg %p204
      %p211 = scmp.eq.s32.totalorder %s17, 1
      %p212 = por %p210, %p211
      %p213 = scmp.ne.s32.totalorder %s205, %s208
      %p214 = scmp.eq.s32.totalorder %s17, 0
      %p215 = por %p213, %p214
      %p216 = scmp.ne.s32.totalorder %s205, %s208
      %p217 = scmp.eq.s32.totalorder %s22, 1
      %p218 = por %p216, %p217
      %p219 = scmp.ne.s32.totalorder %s208, %s209
      %p220 = scmp.eq.s32.totalorder %s22, 0
      %p221 = por %p219, %p220
      %p222 = scmp.ne.s32.totalorder %s208, %s209
      %p223 = scmp.eq.s32.totalorder %s23, 1
      %p224 = por %p222, %p223
      %p226 = scmp.ne.s32.totalorder %s209, %s225
      %p227 = scmp.eq.s32.totalorder %s23, 0
      %p228 = por %p226, %p227
      %p229 = scmp.le.s32.totalorder 1, %s17
      %p230 = scmp.lt.s32.totalorder %s17, 3
      %p231 = pnand %p229, %p230
      %p232 = pneg %p231
      // Predicated region
      $region9: #{up_forward.1} parent=5 // pred_check
        _
      $region10: #{up_forward.1} parent=5 // pred_check_branch
        %234 = sbr.rel (%p231) target = $region12
      $region11: #{up_forward.1} parent=5 // pred_region
        %s235 = ssub.s32 %s17, 1
        // Predicated region
        $region13: #{up_forward.1} parent=11 // pred_check
          %p236 = pneg %p90
        $region14: #{up_forward.1} parent=11 // pred_check_branch
          %238 = sbr.rel (%p236) target = $region16
        $region15: #{up_forward.1} parent=11 // pred_region
          _
        $region16: #{up_forward.1} parent=11 // pred_fallthru
          _
        // Predicated region
        $region17: #{up_forward.1} parent=11 // pred_check
          %p239 = pneg %p111
        $region18: #{up_forward.1} parent=11 // pred_check_branch
          %241 = sbr.rel (%p239) target = $region20
        $region19: #{up_forward.1} parent=11 // pred_region
          _
        $region20: #{up_forward.1} parent=11 // pred_fallthru
          _
        // Predicated region
        $region21: #{up_forward.1} parent=11 // pred_check
          %p242 = pneg %p132
        $region22: #{up_forward.1} parent=11 // pred_check_branch
          %244 = sbr.rel (%p242) target = $region24
        $region23: #{up_forward.1} parent=11 // pred_region
          _
        $region24: #{up_forward.1} parent=11 // pred_fallthru
          _
        // Predicated region
        $region25: #{up_forward.1} parent=11 // pred_check
          %p245 = pneg %p153
        $region26: #{up_forward.1} parent=11 // pred_check_branch
          %247 = sbr.rel (%p245) target = $region28
        $region27: #{up_forward.1} parent=11 // pred_region
          _
        $region28: #{up_forward.1} parent=11 // pred_fallthru
          _
        // Predicated region
        $region29: #{up_forward.1} parent=11 // pred_check
          %p248 = pneg %p174
        $region30: #{up_forward.1} parent=11 // pred_check_branch
          %250 = sbr.rel (%p248) target = $region32
        $region31: #{up_forward.1} parent=11 // pred_region
          _
        $region32: #{up_forward.1} parent=11 // pred_fallthru
          _
        // Predicated region
        $region33: #{up_forward.1} parent=11 // pred_check
          %p251 = pneg %p195
        $region34: #{up_forward.1} parent=11 // pred_check_branch
          %253 = sbr.rel (%p251) target = $region36
        $region35: #{up_forward.1} parent=11 // pred_region
          _
        $region36: #{up_forward.1} parent=11 // pred_fallthru
          _
      $region12: #{up_forward.1} parent=5 // pred_fallthru
        _
      %p254 = scmp.lt.s32.totalorder %s17, 2
      // Predicated region
      $region37: #{up_forward.1} parent=5 // pred_check
        %p255 = pneg %p254
      $region38: #{up_forward.1} parent=5 // pred_check_branch
        %257 = sbr.rel (%p255) target = $region40
      $region39: #{up_forward.1} parent=5 // pred_region
        // Predicated region
        $region41: #{up_forward.1} parent=39 // pred_check
          %p258 = pneg %p37
        $region42: #{up_forward.1} parent=39 // pred_check_branch
          %260 = sbr.rel (%p258) target = $region44
        $region43: #{up_forward.1} parent=39 // pred_region
          %p261 = scmp.lt.s32.totalorder %s17, 1
          %s262 = scalar_select %p261, %s17, 1
          %s263 = smul.addr %s262, 8
          %s264 = smul.addr %s263, 8
          %s265 = scalar_lea.vmem %s0, %s264
        $region44: #{up_forward.1} parent=39 // pred_fallthru
          _
        // Predicated region
        $region45: #{up_forward.1} parent=39 // pred_check
          %p266 = pneg %p63
        $region46: #{up_forward.1} parent=39 // pred_check_branch
          %268 = sbr.rel (%p266) target = $region48
        $region47: #{up_forward.1} parent=39 // pred_region
          %p269 = scmp.lt.s32.totalorder %s17, 1
          %s270 = scalar_select %p269, %s17, 1
          %s271 = smul.addr %s270, 32
          %s272 = smul.addr %s271, 8
          %s273 = scalar_lea.vmem %s1, %s272
        $region48: #{up_forward.1} parent=39 // pred_fallthru
          _
      $region40: #{up_forward.1} parent=5 // pred_fallthru
        _
      %p274 = scmp.le.s32.totalorder 1, %s17
      %p275 = scmp.lt.s32.totalorder %s17, 3
      %p276 = pnand %p274, %p275
      %p277 = pneg %p276
      // Predicated region
      $region49: #{up_forward.1} parent=5 // pred_check
        _
      $region50: #{up_forward.1} parent=5 // pred_check_branch
        %279 = sbr.rel (%p276) target = $region52
      $region51: #{up_forward.1} parent=5 // pred_region
        %s280 = ssub.s32 %s17, 1
        %p281 = scmp.lt.s32.totalorder %s22, 1
        %s282 = scalar_select %p281, %s22, 1
        %s283 = smul.addr %s282, 8
        %s284 = smul.addr %s283, 8
        %s285 = scalar_lea.vmem %s0, %s284
        %p286 = pneg %p43
        %p287 = pneg %p40
        %p288 = scmp.lt.s32.totalorder %s22, 1
        %s289 = scalar_select %p288, %s22, 1
        %s290 = smul.addr %s289, 32
        %s291 = smul.addr %s290, 8
        %s292 = scalar_lea.vmem %s1, %s291
        %p293 = pneg %p69
        %p294 = pneg %p66
        %p295 = pneg %p90
        %p296 = pneg %p87
        %p297 = pneg %p111
        %p298 = pneg %p108
        %p299 = pneg %p132
        %p300 = pneg %p129
        %p301 = pneg %p153
        %p302 = pneg %p150
        %p303 = pneg %p174
        %p304 = pneg %p171
        %p305 = pneg %p195
        %p306 = pneg %p192
        %p307 = pneg %p221
        %p308 = pneg %p218
        %s309 = sand.u32 %s208, 1
        %s310 = scalar_lea.sflag [#allocation6], %s309
        %s311 = sand.u32 %s208, 1
        %s312 = smul.addr %s311, 256
        %s313 = scalar_lea.vmem [#allocation5], %s312
        %p314 = scmp.lt.s32.totalorder %s22, 1
        %s315 = scalar_select %p314, %s22, 1
        %s316 = smul.addr %s315, 8
        %s317 = smul.addr %s316, 8
        %s318 = scalar_lea.vmem %s0, %s317
        %p319 = scmp.lt.s32.totalorder %s22, 1
        %s320 = scalar_select %p319, %s22, 1
        %s321 = smul.addr %s320, 32
        %s322 = smul.addr %s321, 8
        %s323 = scalar_lea.vmem %s1, %s322
        %v325 = vld [vmem:[%s318] sm:$0xff]
        %v326 = vld [vmem:[%s318 + $0x8] sm:$0xff]
        %v327 = vld [vmem:[%s318 + $0x10] sm:$0xff]
        %v328 = vld [vmem:[%s318 + $0x18] sm:$0xff]
        %v329 = vld [vmem:[%s318 + $0x20] sm:$0xff]
        %v330 = vld [vmem:[%s318 + $0x28] sm:$0xff]
        %v331 = vld [vmem:[%s318 + $0x30] sm:$0xff]
        %v332 = vld [vmem:[%s318 + $0x38] sm:$0xff]
        %v333 = vld [vmem:[%s2] sm:$0xff]
        %v334 = vld [vmem:[%s2 + $0x8] sm:$0xff]
        %v335 = vld [vmem:[%s2 + $0x10] sm:$0xff]
        %v336 = vld [vmem:[%s2 + $0x18] sm:$0xff]
        %v337 = vld [vmem:[%s2 + $0x20] sm:$0xff]
        %v338 = vld [vmem:[%s2 + $0x28] sm:$0xff]
        %v339 = vld [vmem:[%s2 + $0x30] sm:$0xff]
        %v340 = vld [vmem:[%s2 + $0x38] sm:$0xff]
        %v341 = vld [vmem:[%s2 + $0x40] sm:$0xff]
        %v342 = vld [vmem:[%s2 + $0x48] sm:$0xff]
        %v343 = vld [vmem:[%s2 + $0x50] sm:$0xff]
        %v344 = vld [vmem:[%s2 + $0x58] sm:$0xff]
        %v345 = vld [vmem:[%s2 + $0x60] sm:$0xff]
        %v346 = vld [vmem:[%s2 + $0x68] sm:$0xff]
        %v347 = vld [vmem:[%s2 + $0x70] sm:$0xff]
        %v348 = vld [vmem:[%s2 + $0x78] sm:$0xff]
        %vm349 = vcmask 64512
        %v351 = vsel %vm349, %v333, 0
        %v354 = vsel %vm349, %v334, 0
        %356 = vmatprep.subr.mxu0 0.0
        %357 = vmatpush1.msra.mxu0 0.0
        %358 = vmatprep.subr.mxu0 0.0
        %359 = vmatpush1.msra.mxu0 0.0
        %360 = vmatprep.subr.mxu0 0.0
        %361 = vmatpush1.msra.mxu0 0.0
        %362 = vmatprep.subr.mxu0 0.0
        %363 = vmatpush1.msra.mxu0 0.0
        %364 = vmatprep.subr.mxu0 0.0
        %365 = vmatpush1.msra.mxu0 0.0
        %366 = vmatprep.subr.mxu0 0.0
        %367 = vmatpush1.msra.mxu0 0.0
        %368 = vmatprep.subr.mxu0 0.0
        %369 = vmatpush1.msra.mxu0 0.0
        %370 = vmatprep.subr.mxu0 0.0
        %371 = vmatpush1.msra.mxu0 0.0
        %372 = vmatprep.subr.mxu0 0.0
        %373 = vmatpush1.msra.mxu0 0.0
        %374 = vmatprep.subr.mxu0 0.0
        %375 = vmatpush1.msra.mxu0 0.0
        %376 = vmatprep.subr.mxu0 0.0
        %377 = vmatpush1.msra.mxu0 0.0
        %378 = vmatprep.subr.mxu0 0.0
        %379 = vmatpush1.msra.mxu0 0.0
        %380 = vmatprep.subr.mxu0 0.0
        %381 = vmatpush1.msra.mxu0 0.0
        %382 = vmatprep.subr.mxu0 0.0
        %383 = vmatpush1.msra.mxu0 0.0
        %384 = vmatprep.subr.mxu0 0.0
        %385 = vmatpush1.msra.mxu0 0.0
        %386 = vmatprep.subr.mxu0 0.0
        %387 = vmatpush1.msra.mxu0 %v325
        %388 = vmatprep.subr.mxu0 0.0
        %389 = vmatpush2.msra.mxu0 0.0
        %390 = vmatprep.subr.mxu0 0.0
        %391 = vmatpush2.msra.mxu0 0.0
        %392 = vmatprep.subr.mxu0 0.0
        %393 = vmatpush2.msra.mxu0 0.0
        %394 = vmatprep.subr.mxu0 0.0
        %395 = vmatpush2.msra.mxu0 0.0
        %396 = vmatprep.subr.mxu0 0.0
        %397 = vmatpush2.msra.mxu0 0.0
        %398 = vmatprep.subr.mxu0 0.0
        %399 = vmatpush2.msra.mxu0 0.0
        %400 = vmatprep.subr.mxu0 0.0
        %401 = vmatpush2.msra.mxu0 0.0
        %402 = vmatprep.subr.mxu0 0.0
        %403 = vmatpush2.msra.mxu0 0.0
        %404 = vmatprep.subr.mxu0 0.0
        %405 = vmatpush2.msra.mxu0 0.0
        %406 = vmatprep.subr.mxu0 0.0
        %407 = vmatpush2.msra.mxu0 0.0
        %408 = vmatprep.subr.mxu0 0.0
        %409 = vmatpush2.msra.mxu0 0.0
        %410 = vmatprep.subr.mxu0 0.0
        %411 = vmatpush2.msra.mxu0 0.0
        %412 = vmatprep.subr.mxu0 0.0
        %413 = vmatpush2.msra.mxu0 0.0
        %414 = vmatprep.subr.mxu0 0.0
        %415 = vmatpush2.msra.mxu0 0.0
        %416 = vmatprep.subr.mxu0 0.0
        %417 = vmatpush2.msra.mxu0 0.0
        %418 = vmatprep.subr.mxu0 0.0
        %419 = vmatpush2.msra.mxu0 0.0
        %420 = vmatprep.mubr.f32.mxu0 0.0
        %421 = vmatmul.mubr.f32.gmra.mxu0 %v351
        %v422 = vpop.f32.mrf.mxu0
        %v423 = vadd.f32 0.0, %v422
        %v424 = vpop.f32.mrf.mxu0
        %425 = vmatprep.mubr.f32.mxu0 0.0
        %426 = vmatmul.mubr.f32.gmra.mxu0 %v354
        %v427 = vpop.f32.mrf.mxu0
        %v428 = vadd.f32 0.0, %v427
        %v429 = vpop.f32.mrf.mxu0
        %430 = vdwg.mxu0
        %v432 = vsel %vm349, %v335, 0
        %v435 = vsel %vm349, %v336, 0
        %437 = vmatprep.subr.mxu0 0.0
        %438 = vmatpush1.msra.mxu0 0.0
        %439 = vmatprep.subr.mxu0 0.0
        %440 = vmatpush1.msra.mxu0 0.0
        %441 = vmatprep.subr.mxu0 0.0
        %442 = vmatpush1.msra.mxu0 0.0
        %443 = vmatprep.subr.mxu0 0.0
        %444 = vmatpush1.msra.mxu0 0.0
        %445 = vmatprep.subr.mxu0 0.0
        %446 = vmatpush1.msra.mxu0 0.0
        %447 = vmatprep.subr.mxu0 0.0
        %448 = vmatpush1.msra.mxu0 0.0
        %449 = vmatprep.subr.mxu0 0.0
        %450 = vmatpush1.msra.mxu0 0.0
        %451 = vmatprep.subr.mxu0 0.0
        %452 = vmatpush1.msra.mxu0 0.0
        %453 = vmatprep.subr.mxu0 0.0
        %454 = vmatpush1.msra.mxu0 0.0
        %455 = vmatprep.subr.mxu0 0.0
        %456 = vmatpush1.msra.mxu0 0.0
        %457 = vmatprep.subr.mxu0 0.0
        %458 = vmatpush1.msra.mxu0 0.0
        %459 = vmatprep.subr.mxu0 0.0
        %460 = vmatpush1.msra.mxu0 0.0
        %461 = vmatprep.subr.mxu0 0.0
        %462 = vmatpush1.msra.mxu0 0.0
        %463 = vmatprep.subr.mxu0 0.0
        %464 = vmatpush1.msra.mxu0 0.0
        %465 = vmatprep.subr.mxu0 0.0
        %466 = vmatpush1.msra.mxu0 0.0
        %467 = vmatprep.subr.mxu0 0.0
        %468 = vmatpush1.msra.mxu0 %v326
        %469 = vmatprep.subr.mxu0 0.0
        %470 = vmatpush2.msra.mxu0 0.0
        %471 = vmatprep.subr.mxu0 0.0
        %472 = vmatpush2.msra.mxu0 0.0
        %473 = vmatprep.subr.mxu0 0.0
        %474 = vmatpush2.msra.mxu0 0.0
        %475 = vmatprep.subr.mxu0 0.0
        %476 = vmatpush2.msra.mxu0 0.0
        %477 = vmatprep.subr.mxu0 0.0
        %478 = vmatpush2.msra.mxu0 0.0
        %479 = vmatprep.subr.mxu0 0.0
        %480 = vmatpush2.msra.mxu0 0.0
        %481 = vmatprep.subr.mxu0 0.0
        %482 = vmatpush2.msra.mxu0 0.0
        %483 = vmatprep.subr.mxu0 0.0
        %484 = vmatpush2.msra.mxu0 0.0
        %485 = vmatprep.subr.mxu0 0.0
        %486 = vmatpush2.msra.mxu0 0.0
        %487 = vmatprep.subr.mxu0 0.0
        %488 = vmatpush2.msra.mxu0 0.0
        %489 = vmatprep.subr.mxu0 0.0
        %490 = vmatpush2.msra.mxu0 0.0
        %491 = vmatprep.subr.mxu0 0.0
        %492 = vmatpush2.msra.mxu0 0.0
        %493 = vmatprep.subr.mxu0 0.0
        %494 = vmatpush2.msra.mxu0 0.0
        %495 = vmatprep.subr.mxu0 0.0
        %496 = vmatpush2.msra.mxu0 0.0
        %497 = vmatprep.subr.mxu0 0.0
        %498 = vmatpush2.msra.mxu0 0.0
        %499 = vmatprep.subr.mxu0 0.0
        %500 = vmatpush2.msra.mxu0 0.0
        %501 = vmatprep.mubr.f32.mxu0 0.0
        %502 = vmatmul.mubr.f32.gmra.mxu0 %v432
        %v503 = vpop.f32.mrf.mxu0
        %v504 = vadd.f32 0.0, %v503
        %v505 = vpop.f32.mrf.mxu0
        %506 = vmatprep.mubr.f32.mxu0 0.0
        %507 = vmatmul.mubr.f32.gmra.mxu0 %v435
        %v508 = vpop.f32.mrf.mxu0
        %v509 = vadd.f32 0.0, %v508
        %v510 = vpop.f32.mrf.mxu0
        %511 = vdwg.mxu0
        %v513 = vsel %vm349, %v337, 0
        %v516 = vsel %vm349, %v338, 0
        %518 = vmatprep.subr.mxu0 0.0
        %519 = vmatpush1.msra.mxu0 0.0
        %520 = vmatprep.subr.mxu0 0.0
        %521 = vmatpush1.msra.mxu0 0.0
        %522 = vmatprep.subr.mxu0 0.0
        %523 = vmatpush1.msra.mxu0 0.0
        %524 = vmatprep.subr.mxu0 0.0
        %525 = vmatpush1.msra.mxu0 0.0
        %526 = vmatprep.subr.mxu0 0.0
        %527 = vmatpush1.msra.mxu0 0.0
        %528 = vmatprep.subr.mxu0 0.0
        %529 = vmatpush1.msra.mxu0 0.0
        %530 = vmatprep.subr.mxu0 0.0
        %531 = vmatpush1.msra.mxu0 0.0
        %532 = vmatprep.subr.mxu0 0.0
        %533 = vmatpush1.msra.mxu0 0.0
        %534 = vmatprep.subr.mxu0 0.0
        %535 = vmatpush1.msra.mxu0 0.0
        %536 = vmatprep.subr.mxu0 0.0
        %537 = vmatpush1.msra.mxu0 0.0
        %538 = vmatprep.subr.mxu0 0.0
        %539 = vmatpush1.msra.mxu0 0.0
        %540 = vmatprep.subr.mxu0 0.0
        %541 = vmatpush1.msra.mxu0 0.0
        %542 = vmatprep.subr.mxu0 0.0
        %543 = vmatpush1.msra.mxu0 0.0
        %544 = vmatprep.subr.mxu0 0.0
        %545 = vmatpush1.msra.mxu0 0.0
        %546 = vmatprep.subr.mxu0 0.0
        %547 = vmatpush1.msra.mxu0 0.0
        %548 = vmatprep.subr.mxu0 0.0
        %549 = vmatpush1.msra.mxu0 %v327
        %550 = vmatprep.subr.mxu0 0.0
        %551 = vmatpush2.msra.mxu0 0.0
        %552 = vmatprep.subr.mxu0 0.0
        %553 = vmatpush2.msra.mxu0 0.0
        %554 = vmatprep.subr.mxu0 0.0
        %555 = vmatpush2.msra.mxu0 0.0
        %556 = vmatprep.subr.mxu0 0.0
        %557 = vmatpush2.msra.mxu0 0.0
        %558 = vmatprep.subr.mxu0 0.0
        %559 = vmatpush2.msra.mxu0 0.0
        %560 = vmatprep.subr.mxu0 0.0
        %561 = vmatpush2.msra.mxu0 0.0
        %562 = vmatprep.subr.mxu0 0.0
        %563 = vmatpush2.msra.mxu0 0.0
        %564 = vmatprep.subr.mxu0 0.0
        %565 = vmatpush2.msra.mxu0 0.0
        %566 = vmatprep.subr.mxu0 0.0
        %567 = vmatpush2.msra.mxu0 0.0
        %568 = vmatprep.subr.mxu0 0.0
        %569 = vmatpush2.msra.mxu0 0.0
        %570 = vmatprep.subr.mxu0 0.0
        %571 = vmatpush2.msra.mxu0 0.0
        %572 = vmatprep.subr.mxu0 0.0
        %573 = vmatpush2.msra.mxu0 0.0
        %574 = vmatprep.subr.mxu0 0.0
        %575 = vmatpush2.msra.mxu0 0.0
        %576 = vmatprep.subr.mxu0 0.0
        %577 = vmatpush2.msra.mxu0 0.0
        %578 = vmatprep.subr.mxu0 0.0
        %579 = vmatpush2.msra.mxu0 0.0
        %580 = vmatprep.subr.mxu0 0.0
        %581 = vmatpush2.msra.mxu0 0.0
        %582 = vmatprep.mubr.f32.mxu0 0.0
        %583 = vmatmul.mubr.f32.gmra.mxu0 %v513
        %v584 = vpop.f32.mrf.mxu0
        %v585 = vadd.f32 0.0, %v584
        %v586 = vpop.f32.mrf.mxu0
        %587 = vmatprep.mubr.f32.mxu0 0.0
        %588 = vmatmul.mubr.f32.gmra.mxu0 %v516
        %v589 = vpop.f32.mrf.mxu0
        %v590 = vadd.f32 0.0, %v589
        %v591 = vpop.f32.mrf.mxu0
        %592 = vdwg.mxu0
        %v594 = vsel %vm349, %v339, 0
        %v597 = vsel %vm349, %v340, 0
        %599 = vmatprep.subr.mxu0 0.0
        %600 = vmatpush1.msra.mxu0 0.0
        %601 = vmatprep.subr.mxu0 0.0
        %602 = vmatpush1.msra.mxu0 0.0
        %603 = vmatprep.subr.mxu0 0.0
        %604 = vmatpush1.msra.mxu0 0.0
        %605 = vmatprep.subr.mxu0 0.0
        %606 = vmatpush1.msra.mxu0 0.0
        %607 = vmatprep.subr.mxu0 0.0
        %608 = vmatpush1.msra.mxu0 0.0
        %609 = vmatprep.subr.mxu0 0.0
        %610 = vmatpush1.msra.mxu0 0.0
        %611 = vmatprep.subr.mxu0 0.0
        %612 = vmatpush1.msra.mxu0 0.0
        %613 = vmatprep.subr.mxu0 0.0
        %614 = vmatpush1.msra.mxu0 0.0
        %615 = vmatprep.subr.mxu0 0.0
        %616 = vmatpush1.msra.mxu0 0.0
        %617 = vmatprep.subr.mxu0 0.0
        %618 = vmatpush1.msra.mxu0 0.0
        %619 = vmatprep.subr.mxu0 0.0
        %620 = vmatpush1.msra.mxu0 0.0
        %621 = vmatprep.subr.mxu0 0.0
        %622 = vmatpush1.msra.mxu0 0.0
        %623 = vmatprep.subr.mxu0 0.0
        %624 = vmatpush1.msra.mxu0 0.0
        %625 = vmatprep.subr.mxu0 0.0
        %626 = vmatpush1.msra.mxu0 0.0
        %627 = vmatprep.subr.mxu0 0.0
        %628 = vmatpush1.msra.mxu0 0.0
        %629 = vmatprep.subr.mxu0 0.0
        %630 = vmatpush1.msra.mxu0 %v328
        %631 = vmatprep.subr.mxu0 0.0
        %632 = vmatpush2.msra.mxu0 0.0
        %633 = vmatprep.subr.mxu0 0.0
        %634 = vmatpush2.msra.mxu0 0.0
        %635 = vmatprep.subr.mxu0 0.0
        %636 = vmatpush2.msra.mxu0 0.0
        %637 = vmatprep.subr.mxu0 0.0
        %638 = vmatpush2.msra.mxu0 0.0
        %639 = vmatprep.subr.mxu0 0.0
        %640 = vmatpush2.msra.mxu0 0.0
        %641 = vmatprep.subr.mxu0 0.0
        %642 = vmatpush2.msra.mxu0 0.0
        %643 = vmatprep.subr.mxu0 0.0
        %644 = vmatpush2.msra.mxu0 0.0
        %645 = vmatprep.subr.mxu0 0.0
        %646 = vmatpush2.msra.mxu0 0.0
        %647 = vmatprep.subr.mxu0 0.0
        %648 = vmatpush2.msra.mxu0 0.0
        %649 = vmatprep.subr.mxu0 0.0
        %650 = vmatpush2.msra.mxu0 0.0
        %651 = vmatprep.subr.mxu0 0.0
        %652 = vmatpush2.msra.mxu0 0.0
        %653 = vmatprep.subr.mxu0 0.0
        %654 = vmatpush2.msra.mxu0 0.0
        %655 = vmatprep.subr.mxu0 0.0
        %656 = vmatpush2.msra.mxu0 0.0
        %657 = vmatprep.subr.mxu0 0.0
        %658 = vmatpush2.msra.mxu0 0.0
        %659 = vmatprep.subr.mxu0 0.0
        %660 = vmatpush2.msra.mxu0 0.0
        %661 = vmatprep.subr.mxu0 0.0
        %662 = vmatpush2.msra.mxu0 0.0
        %663 = vmatprep.mubr.f32.mxu0 0.0
        %664 = vmatmul.mubr.f32.gmra.mxu0 %v594
        %v665 = vpop.f32.mrf.mxu0
        %v666 = vadd.f32 0.0, %v665
        %v667 = vpop.f32.mrf.mxu0
        %668 = vmatprep.mubr.f32.mxu0 0.0
        %669 = vmatmul.mubr.f32.gmra.mxu0 %v597
        %v670 = vpop.f32.mrf.mxu0
        %v671 = vadd.f32 0.0, %v670
        %v672 = vpop.f32.mrf.mxu0
        %673 = vdwg.mxu0
        %v675 = vsel %vm349, %v341, 0
        %v678 = vsel %vm349, %v342, 0
        %680 = vmatprep.subr.mxu0 0.0
        %681 = vmatpush1.msra.mxu0 0.0
        %682 = vmatprep.subr.mxu0 0.0
        %683 = vmatpush1.msra.mxu0 0.0
        %684 = vmatprep.subr.mxu0 0.0
        %685 = vmatpush1.msra.mxu0 0.0
        %686 = vmatprep.subr.mxu0 0.0
        %687 = vmatpush1.msra.mxu0 0.0
        %688 = vmatprep.subr.mxu0 0.0
        %689 = vmatpush1.msra.mxu0 0.0
        %690 = vmatprep.subr.mxu0 0.0
        %691 = vmatpush1.msra.mxu0 0.0
        %692 = vmatprep.subr.mxu0 0.0
        %693 = vmatpush1.msra.mxu0 0.0
        %694 = vmatprep.subr.mxu0 0.0
        %695 = vmatpush1.msra.mxu0 0.0
        %696 = vmatprep.subr.mxu0 0.0
        %697 = vmatpush1.msra.mxu0 0.0
        %698 = vmatprep.subr.mxu0 0.0
        %699 = vmatpush1.msra.mxu0 0.0
        %700 = vmatprep.subr.mxu0 0.0
        %701 = vmatpush1.msra.mxu0 0.0
        %702 = vmatprep.subr.mxu0 0.0
        %703 = vmatpush1.msra.mxu0 0.0
        %704 = vmatprep.subr.mxu0 0.0
        %705 = vmatpush1.msra.mxu0 0.0
        %706 = vmatprep.subr.mxu0 0.0
        %707 = vmatpush1.msra.mxu0 0.0
        %708 = vmatprep.subr.mxu0 0.0
        %709 = vmatpush1.msra.mxu0 0.0
        %710 = vmatprep.subr.mxu0 0.0
        %711 = vmatpush1.msra.mxu0 %v329
        %712 = vmatprep.subr.mxu0 0.0
        %713 = vmatpush2.msra.mxu0 0.0
        %714 = vmatprep.subr.mxu0 0.0
        %715 = vmatpush2.msra.mxu0 0.0
        %716 = vmatprep.subr.mxu0 0.0
        %717 = vmatpush2.msra.mxu0 0.0
        %718 = vmatprep.subr.mxu0 0.0
        %719 = vmatpush2.msra.mxu0 0.0
        %720 = vmatprep.subr.mxu0 0.0
        %721 = vmatpush2.msra.mxu0 0.0
        %722 = vmatprep.subr.mxu0 0.0
        %723 = vmatpush2.msra.mxu0 0.0
        %724 = vmatprep.subr.mxu0 0.0
        %725 = vmatpush2.msra.mxu0 0.0
        %726 = vmatprep.subr.mxu0 0.0
        %727 = vmatpush2.msra.mxu0 0.0
        %728 = vmatprep.subr.mxu0 0.0
        %729 = vmatpush2.msra.mxu0 0.0
        %730 = vmatprep.subr.mxu0 0.0
        %731 = vmatpush2.msra.mxu0 0.0
        %732 = vmatprep.subr.mxu0 0.0
        %733 = vmatpush2.msra.mxu0 0.0
        %734 = vmatprep.subr.mxu0 0.0
        %735 = vmatpush2.msra.mxu0 0.0
        %736 = vmatprep.subr.mxu0 0.0
        %737 = vmatpush2.msra.mxu0 0.0
        %738 = vmatprep.subr.mxu0 0.0
        %739 = vmatpush2.msra.mxu0 0.0
        %740 = vmatprep.subr.mxu0 0.0
        %741 = vmatpush2.msra.mxu0 0.0
        %742 = vmatprep.subr.mxu0 0.0
        %743 = vmatpush2.msra.mxu0 0.0
        %744 = vmatprep.mubr.f32.mxu0 0.0
        %745 = vmatmul.mubr.f32.gmra.mxu0 %v675
        %v746 = vpop.f32.mrf.mxu0
        %v747 = vadd.f32 0.0, %v746
        %v748 = vpop.f32.mrf.mxu0
        %749 = vmatprep.mubr.f32.mxu0 0.0
        %750 = vmatmul.mubr.f32.gmra.mxu0 %v678
        %v751 = vpop.f32.mrf.mxu0
        %v752 = vadd.f32 0.0, %v751
        %v753 = vpop.f32.mrf.mxu0
        %754 = vdwg.mxu0
        %v756 = vsel %vm349, %v343, 0
        %v759 = vsel %vm349, %v344, 0
        %761 = vmatprep.subr.mxu0 0.0
        %762 = vmatpush1.msra.mxu0 0.0
        %763 = vmatprep.subr.mxu0 0.0
        %764 = vmatpush1.msra.mxu0 0.0
        %765 = vmatprep.subr.mxu0 0.0
        %766 = vmatpush1.msra.mxu0 0.0
        %767 = vmatprep.subr.mxu0 0.0
        %768 = vmatpush1.msra.mxu0 0.0
        %769 = vmatprep.subr.mxu0 0.0
        %770 = vmatpush1.msra.mxu0 0.0
        %771 = vmatprep.subr.mxu0 0.0
        %772 = vmatpush1.msra.mxu0 0.0
        %773 = vmatprep.subr.mxu0 0.0
        %774 = vmatpush1.msra.mxu0 0.0
        %775 = vmatprep.subr.mxu0 0.0
        %776 = vmatpush1.msra.mxu0 0.0
        %777 = vmatprep.subr.mxu0 0.0
        %778 = vmatpush1.msra.mxu0 0.0
        %779 = vmatprep.subr.mxu0 0.0
        %780 = vmatpush1.msra.mxu0 0.0
        %781 = vmatprep.subr.mxu0 0.0
        %782 = vmatpush1.msra.mxu0 0.0
        %783 = vmatprep.subr.mxu0 0.0
        %784 = vmatpush1.msra.mxu0 0.0
        %785 = vmatprep.subr.mxu0 0.0
        %786 = vmatpush1.msra.mxu0 0.0
        %787 = vmatprep.subr.mxu0 0.0
        %788 = vmatpush1.msra.mxu0 0.0
        %789 = vmatprep.subr.mxu0 0.0
        %790 = vmatpush1.msra.mxu0 0.0
        %791 = vmatprep.subr.mxu0 0.0
        %792 = vmatpush1.msra.mxu0 %v330
        %793 = vmatprep.subr.mxu0 0.0
        %794 = vmatpush2.msra.mxu0 0.0
        %795 = vmatprep.subr.mxu0 0.0
        %796 = vmatpush2.msra.mxu0 0.0
        %797 = vmatprep.subr.mxu0 0.0
        %798 = vmatpush2.msra.mxu0 0.0
        %799 = vmatprep.subr.mxu0 0.0
        %800 = vmatpush2.msra.mxu0 0.0
        %801 = vmatprep.subr.mxu0 0.0
        %802 = vmatpush2.msra.mxu0 0.0
        %803 = vmatprep.subr.mxu0 0.0
        %804 = vmatpush2.msra.mxu0 0.0
        %805 = vmatprep.subr.mxu0 0.0
        %806 = vmatpush2.msra.mxu0 0.0
        %807 = vmatprep.subr.mxu0 0.0
        %808 = vmatpush2.msra.mxu0 0.0
        %809 = vmatprep.subr.mxu0 0.0
        %810 = vmatpush2.msra.mxu0 0.0
        %811 = vmatprep.subr.mxu0 0.0
        %812 = vmatpush2.msra.mxu0 0.0
        %813 = vmatprep.subr.mxu0 0.0
        %814 = vmatpush2.msra.mxu0 0.0
        %815 = vmatprep.subr.mxu0 0.0
        %816 = vmatpush2.msra.mxu0 0.0
        %817 = vmatprep.subr.mxu0 0.0
        %818 = vmatpush2.msra.mxu0 0.0
        %819 = vmatprep.subr.mxu0 0.0
        %820 = vmatpush2.msra.mxu0 0.0
        %821 = vmatprep.subr.mxu0 0.0
        %822 = vmatpush2.msra.mxu0 0.0
        %823 = vmatprep.subr.mxu0 0.0
        %824 = vmatpush2.msra.mxu0 0.0
        %825 = vmatprep.mubr.f32.mxu0 0.0
        %826 = vmatmul.mubr.f32.gmra.mxu0 %v756
        %v827 = vpop.f32.mrf.mxu0
        %v828 = vadd.f32 0.0, %v827
        %v829 = vpop.f32.mrf.mxu0
        %830 = vmatprep.mubr.f32.mxu0 0.0
        %831 = vmatmul.mubr.f32.gmra.mxu0 %v759
        %v832 = vpop.f32.mrf.mxu0
        %v833 = vadd.f32 0.0, %v832
        %v834 = vpop.f32.mrf.mxu0
        %835 = vdwg.mxu0
        %v837 = vsel %vm349, %v345, 0
        %v840 = vsel %vm349, %v346, 0
        %842 = vmatprep.subr.mxu0 0.0
        %843 = vmatpush1.msra.mxu0 0.0
        %844 = vmatprep.subr.mxu0 0.0
        %845 = vmatpush1.msra.mxu0 0.0
        %846 = vmatprep.subr.mxu0 0.0
        %847 = vmatpush1.msra.mxu0 0.0
        %848 = vmatprep.subr.mxu0 0.0
        %849 = vmatpush1.msra.mxu0 0.0
        %850 = vmatprep.subr.mxu0 0.0
        %851 = vmatpush1.msra.mxu0 0.0
        %852 = vmatprep.subr.mxu0 0.0
        %853 = vmatpush1.msra.mxu0 0.0
        %854 = vmatprep.subr.mxu0 0.0
        %855 = vmatpush1.msra.mxu0 0.0
        %856 = vmatprep.subr.mxu0 0.0
        %857 = vmatpush1.msra.mxu0 0.0
        %858 = vmatprep.subr.mxu0 0.0
        %859 = vmatpush1.msra.mxu0 0.0
        %860 = vmatprep.subr.mxu0 0.0
        %861 = vmatpush1.msra.mxu0 0.0
        %862 = vmatprep.subr.mxu0 0.0
        %863 = vmatpush1.msra.mxu0 0.0
        %864 = vmatprep.subr.mxu0 0.0
        %865 = vmatpush1.msra.mxu0 0.0
        %866 = vmatprep.subr.mxu0 0.0
        %867 = vmatpush1.msra.mxu0 0.0
        %868 = vmatprep.subr.mxu0 0.0
        %869 = vmatpush1.msra.mxu0 0.0
        %870 = vmatprep.subr.mxu0 0.0
        %871 = vmatpush1.msra.mxu0 0.0
        %872 = vmatprep.subr.mxu0 0.0
        %873 = vmatpush1.msra.mxu0 %v331
        %874 = vmatprep.subr.mxu0 0.0
        %875 = vmatpush2.msra.mxu0 0.0
        %876 = vmatprep.subr.mxu0 0.0
        %877 = vmatpush2.msra.mxu0 0.0
        %878 = vmatprep.subr.mxu0 0.0
        %879 = vmatpush2.msra.mxu0 0.0
        %880 = vmatprep.subr.mxu0 0.0
        %881 = vmatpush2.msra.mxu0 0.0
        %882 = vmatprep.subr.mxu0 0.0
        %883 = vmatpush2.msra.mxu0 0.0
        %884 = vmatprep.subr.mxu0 0.0
        %885 = vmatpush2.msra.mxu0 0.0
        %886 = vmatprep.subr.mxu0 0.0
        %887 = vmatpush2.msra.mxu0 0.0
        %888 = vmatprep.subr.mxu0 0.0
        %889 = vmatpush2.msra.mxu0 0.0
        %890 = vmatprep.subr.mxu0 0.0
        %891 = vmatpush2.msra.mxu0 0.0
        %892 = vmatprep.subr.mxu0 0.0
        %893 = vmatpush2.msra.mxu0 0.0
        %894 = vmatprep.subr.mxu0 0.0
        %895 = vmatpush2.msra.mxu0 0.0
        %896 = vmatprep.subr.mxu0 0.0
        %897 = vmatpush2.msra.mxu0 0.0
        %898 = vmatprep.subr.mxu0 0.0
        %899 = vmatpush2.msra.mxu0 0.0
        %900 = vmatprep.subr.mxu0 0.0
        %901 = vmatpush2.msra.mxu0 0.0
        %902 = vmatprep.subr.mxu0 0.0
        %903 = vmatpush2.msra.mxu0 0.0
        %904 = vmatprep.subr.mxu0 0.0
        %905 = vmatpush2.msra.mxu0 0.0
        %906 = vmatprep.mubr.f32.mxu0 0.0
        %907 = vmatmul.mubr.f32.gmra.mxu0 %v837
        %v908 = vpop.f32.mrf.mxu0
        %v909 = vadd.f32 0.0, %v908
        %v910 = vpop.f32.mrf.mxu0
        %911 = vmatprep.mubr.f32.mxu0 0.0
        %912 = vmatmul.mubr.f32.gmra.mxu0 %v840
        %v913 = vpop.f32.mrf.mxu0
        %v914 = vadd.f32 0.0, %v913
        %v915 = vpop.f32.mrf.mxu0
        %916 = vdwg.mxu0
        %v918 = vsel %vm349, %v347, 0
        %v921 = vsel %vm349, %v348, 0
        %923 = vmatprep.subr.mxu0 0.0
        %924 = vmatpush1.msra.mxu0 0.0
        %925 = vmatprep.subr.mxu0 0.0
        %926 = vmatpush1.msra.mxu0 0.0
        %927 = vmatprep.subr.mxu0 0.0
        %928 = vmatpush1.msra.mxu0 0.0
        %929 = vmatprep.subr.mxu0 0.0
        %930 = vmatpush1.msra.mxu0 0.0
        %931 = vmatprep.subr.mxu0 0.0
        %932 = vmatpush1.msra.mxu0 0.0
        %933 = vmatprep.subr.mxu0 0.0
        %934 = vmatpush1.msra.mxu0 0.0
        %935 = vmatprep.subr.mxu0 0.0
        %936 = vmatpush1.msra.mxu0 0.0
        %937 = vmatprep.subr.mxu0 0.0
        %938 = vmatpush1.msra.mxu0 0.0
        %939 = vmatprep.subr.mxu0 0.0
        %940 = vmatpush1.msra.mxu0 0.0
        %941 = vmatprep.subr.mxu0 0.0
        %942 = vmatpush1.msra.mxu0 0.0
        %943 = vmatprep.subr.mxu0 0.0
        %944 = vmatpush1.msra.mxu0 0.0
        %945 = vmatprep.subr.mxu0 0.0
        %946 = vmatpush1.msra.mxu0 0.0
        %947 = vmatprep.subr.mxu0 0.0
        %948 = vmatpush1.msra.mxu0 0.0
        %949 = vmatprep.subr.mxu0 0.0
        %950 = vmatpush1.msra.mxu0 0.0
        %951 = vmatprep.subr.mxu0 0.0
        %952 = vmatpush1.msra.mxu0 0.0
        %953 = vmatprep.subr.mxu0 0.0
        %954 = vmatpush1.msra.mxu0 %v332
        %955 = vmatprep.subr.mxu0 0.0
        %956 = vmatpush2.msra.mxu0 0.0
        %957 = vmatprep.subr.mxu0 0.0
        %958 = vmatpush2.msra.mxu0 0.0
        %959 = vmatprep.subr.mxu0 0.0
        %960 = vmatpush2.msra.mxu0 0.0
        %961 = vmatprep.subr.mxu0 0.0
        %962 = vmatpush2.msra.mxu0 0.0
        %963 = vmatprep.subr.mxu0 0.0
        %964 = vmatpush2.msra.mxu0 0.0
        %965 = vmatprep.subr.mxu0 0.0
        %966 = vmatpush2.msra.mxu0 0.0
        %967 = vmatprep.subr.mxu0 0.0
        %968 = vmatpush2.msra.mxu0 0.0
        %969 = vmatprep.subr.mxu0 0.0
        %970 = vmatpush2.msra.mxu0 0.0
        %971 = vmatprep.subr.mxu0 0.0
        %972 = vmatpush2.msra.mxu0 0.0
        %973 = vmatprep.subr.mxu0 0.0
        %974 = vmatpush2.msra.mxu0 0.0
        %975 = vmatprep.subr.mxu0 0.0
        %976 = vmatpush2.msra.mxu0 0.0
        %977 = vmatprep.subr.mxu0 0.0
        %978 = vmatpush2.msra.mxu0 0.0
        %979 = vmatprep.subr.mxu0 0.0
        %980 = vmatpush2.msra.mxu0 0.0
        %981 = vmatprep.subr.mxu0 0.0
        %982 = vmatpush2.msra.mxu0 0.0
        %983 = vmatprep.subr.mxu0 0.0
        %984 = vmatpush2.msra.mxu0 0.0
        %985 = vmatprep.subr.mxu0 0.0
        %986 = vmatpush2.msra.mxu0 0.0
        %987 = vmatprep.mubr.f32.mxu0 0.0
        %988 = vmatmul.mubr.f32.gmra.mxu0 %v918
        %v989 = vpop.f32.mrf.mxu0
        %v990 = vadd.f32 0.0, %v989
        %v991 = vpop.f32.mrf.mxu0
        %992 = vmatprep.mubr.f32.mxu0 0.0
        %993 = vmatmul.mubr.f32.gmra.mxu0 %v921
        %v994 = vpop.f32.mrf.mxu0
        %v995 = vadd.f32 0.0, %v994
        %v996 = vpop.f32.mrf.mxu0
        %997 = vdwg.mxu0
        %v998 = vmul.f32 %v423, 0.53333336
        %v999 = vmul.f32 %v428, 0.53333336
        %v1000 = vmul.f32 %v504, 0.46666667
        %v1001 = vmul.f32 %v509, 0.46666667
        %v1002 = vadd.f32 %v998, %v1000
        %v1003 = vadd.f32 %v999, %v1001
        %v1004 = vmul.f32 %v423, 0.06666667
        %v1005 = vmul.f32 %v428, 0.06666667
        %v1006 = vmul.f32 %v504, 0.93333334
        %v1007 = vmul.f32 %v509, 0.93333334
        %v1008 = vadd.f32 %v1004, %v1006
        %v1009 = vadd.f32 %v1005, %v1007
        %v1010 = vmul.f32 %v504, 0.6
        %v1011 = vmul.f32 %v509, 0.6
        %v1012 = vmul.f32 %v585, 0.4
        %v1013 = vmul.f32 %v590, 0.4
        %v1014 = vadd.f32 %v1010, %v1012
        %v1015 = vadd.f32 %v1011, %v1013
        %v1016 = vmul.f32 %v504, 0.13333334
        %v1017 = vmul.f32 %v509, 0.13333334
        %v1018 = vmul.f32 %v585, 0.8666667
        %v1019 = vmul.f32 %v590, 0.8666667
        %v1020 = vadd.f32 %v1016, %v1018
        %v1021 = vadd.f32 %v1017, %v1019
        %v1022 = vmul.f32 %v585, 0.6666667
        %v1023 = vmul.f32 %v590, 0.6666667
        %v1024 = vmul.f32 %v666, 0.33333334
        %v1025 = vmul.f32 %v671, 0.33333334
        %v1026 = vadd.f32 %v1022, %v1024
        %v1027 = vadd.f32 %v1023, %v1025
        %v1028 = vmul.f32 %v585, 0.2
        %v1029 = vmul.f32 %v590, 0.2
        %v1030 = vmul.f32 %v666, 0.8
        %v1031 = vmul.f32 %v671, 0.8
        %v1032 = vadd.f32 %v1028, %v1030
        %v1033 = vadd.f32 %v1029, %v1031
        %v1034 = vmul.f32 %v666, 0.73333335
        %v1035 = vmul.f32 %v671, 0.73333335
        %v1036 = vmul.f32 %v747, 0.26666668
        %v1037 = vmul.f32 %v752, 0.26666668
        %v1038 = vadd.f32 %v1034, %v1036
        %v1039 = vadd.f32 %v1035, %v1037
        %v1040 = vmul.f32 %v666, 0.26666668
        %v1041 = vmul.f32 %v671, 0.26666668
        %v1042 = vmul.f32 %v747, 0.73333335
        %v1043 = vmul.f32 %v752, 0.73333335
        %v1044 = vadd.f32 %v1040, %v1042
        %v1045 = vadd.f32 %v1041, %v1043
        %v1046 = vmul.f32 %v747, 0.8
        %v1047 = vmul.f32 %v752, 0.8
        %v1048 = vmul.f32 %v828, 0.2
        %v1049 = vmul.f32 %v833, 0.2
        %v1050 = vadd.f32 %v1046, %v1048
        %v1051 = vadd.f32 %v1047, %v1049
        %v1052 = vmul.f32 %v747, 0.33333334
        %v1053 = vmul.f32 %v752, 0.33333334
        %v1054 = vmul.f32 %v828, 0.6666667
        %v1055 = vmul.f32 %v833, 0.6666667
        %v1056 = vadd.f32 %v1052, %v1054
        %v1057 = vadd.f32 %v1053, %v1055
        %v1058 = vmul.f32 %v828, 0.8666667
        %v1059 = vmul.f32 %v833, 0.8666667
        %v1060 = vmul.f32 %v909, 0.13333334
        %v1061 = vmul.f32 %v914, 0.13333334
        %v1062 = vadd.f32 %v1058, %v1060
        %v1063 = vadd.f32 %v1059, %v1061
        %v1064 = vmul.f32 %v828, 0.4
        %v1065 = vmul.f32 %v833, 0.4
        %v1066 = vmul.f32 %v909, 0.6
        %v1067 = vmul.f32 %v914, 0.6
        %v1068 = vadd.f32 %v1064, %v1066
        %v1069 = vadd.f32 %v1065, %v1067
        %v1070 = vmul.f32 %v909, 0.93333334
        %v1071 = vmul.f32 %v914, 0.93333334
        %v1072 = vmul.f32 %v990, 0.06666667
        %v1073 = vmul.f32 %v995, 0.06666667
        %v1074 = vadd.f32 %v1070, %v1072
        %v1075 = vadd.f32 %v1071, %v1073
        %v1076 = vmul.f32 %v909, 0.46666667
        %v1077 = vmul.f32 %v914, 0.46666667
        %v1078 = vmul.f32 %v990, 0.53333336
        %v1079 = vmul.f32 %v995, 0.53333336
        %v1080 = vadd.f32 %v1076, %v1078
        %v1081 = vadd.f32 %v1077, %v1079
        %vm1082 = vcmask 257024
        %1083 = vst.msk [vmem:[#allocation2] sm:$0xf] %vm1082, 0
        %1084 = vst.msk [vmem:[#allocation2 + $0x4] sm:$0xf] %vm1082, 0
        %vm1085 = vcmask 253952
        %1086 = vst.msk [vmem:[#allocation2 + $0x8] sm:$0x1] %vm1085, 0
        %1087 = vst.msk [vmem:[#allocation2 + $0xc] sm:$0xf] %vm1082, 0
        %1088 = vst.msk [vmem:[#allocation2 + $0x10] sm:$0xf] %vm1082, 0
        %1089 = vst.msk [vmem:[#allocation2 + $0x14] sm:$0x1] %vm1085, 0
        %1090 = vst.msk [vmem:[#allocation2 + $0x18] sm:$0xf] %vm1082, 0
        %1091 = vst.msk [vmem:[#allocation2 + $0x1c] sm:$0xf] %vm1082, 0
        %1092 = vst.msk [vmem:[#allocation2 + $0x20] sm:$0x1] %vm1085, 0
        %1093 = vst.msk [vmem:[#allocation2 + $0x24] sm:$0xf] %vm1082, 0
        %1094 = vst.msk [vmem:[#allocation2 + $0x28] sm:$0xf] %vm1082, 0
        %1095 = vst.msk [vmem:[#allocation2 + $0x2c] sm:$0x1] %vm1085, 0
        %1096 = vst.msk [vmem:[#allocation2 + $0x30] sm:$0xf] %vm1082, 0
        %1097 = vst.msk [vmem:[#allocation2 + $0x34] sm:$0xf] %vm1082, 0
        %1098 = vst.msk [vmem:[#allocation2 + $0x38] sm:$0x1] %vm1085, 0
        %1099 = vst.msk [vmem:[#allocation2 + $0x3c] sm:$0xf] %vm1082, 0
        %1100 = vst.msk [vmem:[#allocation2 + $0x40] sm:$0xf] %vm1082, 0
        %1101 = vst.msk [vmem:[#allocation2 + $0x44] sm:$0x1] %vm1085, 0
        %1102 = vst.msk [vmem:[#allocation2 + $0x48] sm:$0xf] %vm1082, 0
        %1103 = vst.msk [vmem:[#allocation2 + $0x4c] sm:$0xf] %vm1082, 0
        %1104 = vst.msk [vmem:[#allocation2 + $0x50] sm:$0x1] %vm1085, 0
        %1105 = vst.msk [vmem:[#allocation2 + $0x54] sm:$0xf] %vm1082, 0
        %1106 = vst.msk [vmem:[#allocation2 + $0x58] sm:$0xf] %vm1082, 0
        %1107 = vst.msk [vmem:[#allocation2 + $0x5c] sm:$0x1] %vm1085, 0
        %1108 = vst.msk [vmem:[#allocation2 + $0x60] sm:$0xf] %vm1082, 0
        %1109 = vst.msk [vmem:[#allocation2 + $0x64] sm:$0xf] %vm1082, 0
        %1110 = vst.msk [vmem:[#allocation2 + $0x68] sm:$0x1] %vm1085, 0
        %1111 = vst.msk [vmem:[#allocation2 + $0x6c] sm:$0xf] %vm1082, 0
        %1112 = vst.msk [vmem:[#allocation2 + $0x70] sm:$0xf] %vm1082, 0
        %1113 = vst.msk [vmem:[#allocation2 + $0x74] sm:$0x1] %vm1085, 0
        %1114 = vst.msk [vmem:[#allocation2 + $0x78] sm:$0xf] %vm1082, 0
        %1115 = vst.msk [vmem:[#allocation2 + $0x7c] sm:$0xf] %vm1082, 0
        %1116 = vst.msk [vmem:[#allocation2 + $0x80] sm:$0x1] %vm1085, 0
        %1117 = vst.msk [vmem:[#allocation2 + $0x84] sm:$0xf] %vm1082, 0
        %1118 = vst.msk [vmem:[#allocation2 + $0x88] sm:$0xf] %vm1082, 0
        %1119 = vst.msk [vmem:[#allocation2 + $0x8c] sm:$0x1] %vm1085, 0
        %1120 = vst.msk [vmem:[#allocation2 + $0x90] sm:$0xf] %vm1082, 0
        %1121 = vst.msk [vmem:[#allocation2 + $0x94] sm:$0xf] %vm1082, 0
        %1122 = vst.msk [vmem:[#allocation2 + $0x98] sm:$0x1] %vm1085, 0
        %1123 = vst.msk [vmem:[#allocation2 + $0x9c] sm:$0xf] %vm1082, 0
        %1124 = vst.msk [vmem:[#allocation2 + $0xa0] sm:$0xf] %vm1082, 0
        %1125 = vst.msk [vmem:[#allocation2 + $0xa4] sm:$0x1] %vm1085, 0
        %1126 = vst.msk [vmem:[#allocation2 + $0xa8] sm:$0xf] %vm1082, 0
        %1127 = vst.msk [vmem:[#allocation2 + $0xac] sm:$0xf] %vm1082, 0
        %1128 = vst.msk [vmem:[#allocation2 + $0xb0] sm:$0x1] %vm1085, 0
        %1129 = vst.msk [vmem:[#allocation2 + $0xb4] sm:$0xf] %vm1082, 0
        %1130 = vst.msk [vmem:[#allocation2 + $0xb8] sm:$0xf] %vm1082, 0
        %1131 = vst.msk [vmem:[#allocation2 + $0xbc] sm:$0x1] %vm1085, 0
        %1132 = vst.msk [vmem:[#allocation2 + $0xc0] sm:$0xf] %vm1082, 0
        %1133 = vst.msk [vmem:[#allocation2 + $0xc4] sm:$0xf] %vm1082, 0
        %1134 = vst.msk [vmem:[#allocation2 + $0xc8] sm:$0x1] %vm1085, 0
        %1135 = vst.msk [vmem:[#allocation2 + $0xcc] sm:$0xf] %vm1082, 0
        %1136 = vst.msk [vmem:[#allocation2 + $0xd0] sm:$0xf] %vm1082, 0
        %1137 = vst.msk [vmem:[#allocation2 + $0xd4] sm:$0x1] %vm1085, 0
        %vm1138 = vcmask 519168
        %1139 = vst.msk [vmem:[#allocation3] sm:$0xf] %vm1138, 0
        %1140 = vst.msk [vmem:[#allocation3 + $0x4] sm:$0xf] %vm1138, 0
        %vm1141 = vcmask 516096
        %1142 = vst.msk [vmem:[#allocation3 + $0x8] sm:$0x1] %vm1141, 0
        %1143 = vst.msk [vmem:[#allocation3 + $0xc] sm:$0xf] %vm1138, 0
        %1144 = vst.msk [vmem:[#allocation3 + $0x10] sm:$0xf] %vm1138, 0
        %1145 = vst.msk [vmem:[#allocation3 + $0x14] sm:$0x1] %vm1141, 0
        %1146 = vst.msk [vmem:[#allocation3 + $0x18] sm:$0xf] %vm1138, 0
        %1147 = vst.msk [vmem:[#allocation3 + $0x1c] sm:$0xf] %vm1138, 0
        %1148 = vst.msk [vmem:[#allocation3 + $0x20] sm:$0x1] %vm1141, 0
        %1149 = vst.msk [vmem:[#allocation3 + $0x24] sm:$0xf] %vm1138, 0
        %1150 = vst.msk [vmem:[#allocation3 + $0x28] sm:$0xf] %vm1138, 0
        %1151 = vst.msk [vmem:[#allocation3 + $0x2c] sm:$0x1] %vm1141, 0
        %1152 = vst.msk [vmem:[#allocation3 + $0x30] sm:$0xf] %vm1138, 0
        %1153 = vst.msk [vmem:[#allocation3 + $0x34] sm:$0xf] %vm1138, 0
        %1154 = vst.msk [vmem:[#allocation3 + $0x38] sm:$0x1] %vm1141, 0
        %1155 = vst.msk [vmem:[#allocation3 + $0x3c] sm:$0xf] %vm1138, 0
        %1156 = vst.msk [vmem:[#allocation3 + $0x40] sm:$0xf] %vm1138, 0
        %1157 = vst.msk [vmem:[#allocation3 + $0x44] sm:$0x1] %vm1141, 0
        %1158 = vst.msk [vmem:[#allocation3 + $0x48] sm:$0xf] %vm1138, 0
        %1159 = vst.msk [vmem:[#allocation3 + $0x4c] sm:$0xf] %vm1138, 0
        %1160 = vst.msk [vmem:[#allocation3 + $0x50] sm:$0x1] %vm1141, 0
        %1161 = vst.msk [vmem:[#allocation3 + $0x54] sm:$0xf] %vm1138, 0
        %1162 = vst.msk [vmem:[#allocation3 + $0x58] sm:$0xf] %vm1138, 0
        %1163 = vst.msk [vmem:[#allocation3 + $0x5c] sm:$0x1] %vm1141, 0
        %1164 = vst.msk [vmem:[#allocation3 + $0x60] sm:$0xf] %vm1138, 0
        %1165 = vst.msk [vmem:[#allocation3 + $0x64] sm:$0xf] %vm1138, 0
        %1166 = vst.msk [vmem:[#allocation3 + $0x68] sm:$0x1] %vm1141, 0
        %1167 = vst.msk [vmem:[#allocation3 + $0x6c] sm:$0xf] %vm1138, 0
        %1168 = vst.msk [vmem:[#allocation3 + $0x70] sm:$0xf] %vm1138, 0
        %1169 = vst.msk [vmem:[#allocation3 + $0x74] sm:$0x1] %vm1141, 0
        %1170 = vst.msk [vmem:[#allocation3 + $0x78] sm:$0xf] %vm1138, 0
        %1171 = vst.msk [vmem:[#allocation3 + $0x7c] sm:$0xf] %vm1138, 0
        %1172 = vst.msk [vmem:[#allocation3 + $0x80] sm:$0x1] %vm1141, 0
        %1173 = vst.msk [vmem:[#allocation3 + $0x84] sm:$0xf] %vm1138, 0
        %1174 = vst.msk [vmem:[#allocation3 + $0x88] sm:$0xf] %vm1138, 0
        %1175 = vst.msk [vmem:[#allocation3 + $0x8c] sm:$0x1] %vm1141, 0
        %1176 = vst.msk [vmem:[#allocation3 + $0x90] sm:$0xf] %vm1138, 0
        %1177 = vst.msk [vmem:[#allocation3 + $0x94] sm:$0xf] %vm1138, 0
        %1178 = vst.msk [vmem:[#allocation3 + $0x98] sm:$0x1] %vm1141, 0
        %1179 = vst.msk [vmem:[#allocation3 + $0x9c] sm:$0xf] %vm1138, 0
        %1180 = vst.msk [vmem:[#allocation3 + $0xa0] sm:$0xf] %vm1138, 0
        %1181 = vst.msk [vmem:[#allocation3 + $0xa4] sm:$0x1] %vm1141, 0
        %1182 = vst.msk [vmem:[#allocation3 + $0xa8] sm:$0xf] %vm1138, 0
        %1183 = vst.msk [vmem:[#allocation3 + $0xac] sm:$0xf] %vm1138, 0
        %1184 = vst.msk [vmem:[#allocation3 + $0xb0] sm:$0x1] %vm1141, 0
        %1185 = vst.msk [vmem:[#allocation3 + $0xb4] sm:$0xf] %vm1138, 0
        %1186 = vst.msk [vmem:[#allocation3 + $0xb8] sm:$0xf] %vm1138, 0
        %1187 = vst.msk [vmem:[#allocation3 + $0xbc] sm:$0x1] %vm1141, 0
        %1188 = vst.msk [vmem:[#allocation3 + $0xc0] sm:$0xf] %vm1138, 0
        %1189 = vst.msk [vmem:[#allocation3 + $0xc4] sm:$0xf] %vm1138, 0
        %1190 = vst.msk [vmem:[#allocation3 + $0xc8] sm:$0x1] %vm1141, 0
        %1191 = vst.msk [vmem:[#allocation3 + $0xcc] sm:$0xf] %vm1138, 0
        %1192 = vst.msk [vmem:[#allocation3 + $0xd0] sm:$0xf] %vm1138, 0
        %1193 = vst.msk [vmem:[#allocation3 + $0xd4] sm:$0x1] %vm1141, 0
        %v1194 = vld [vmem:[%s323] sm:$0xff]
        %v1195 = vld [vmem:[%s323 + $0x8] sm:$0xff]
        %v1196 = vld [vmem:[%s323 + $0x10] sm:$0xff]
        %v1197 = vld [vmem:[%s323 + $0x18] sm:$0xff]
        %v1198 = vld [vmem:[%s323 + $0x20] sm:$0xff]
        %v1199 = vld [vmem:[%s323 + $0x28] sm:$0xff]
        %v1200 = vld [vmem:[%s323 + $0x30] sm:$0xff]
        %v1201 = vld [vmem:[%s323 + $0x38] sm:$0xff]
        %v1202 = vld [vmem:[%s323 + $0x40] sm:$0xff]
        %v1203 = vld [vmem:[%s323 + $0x48] sm:$0xff]
        %v1204 = vld [vmem:[%s323 + $0x50] sm:$0xff]
        %v1205 = vld [vmem:[%s323 + $0x58] sm:$0xff]
        %v1206 = vld [vmem:[%s323 + $0x60] sm:$0xff]
        %v1207 = vld [vmem:[%s323 + $0x68] sm:$0xff]
        %v1208 = vld [vmem:[%s323 + $0x70] sm:$0xff]
        %v1209 = vld [vmem:[%s323 + $0x78] sm:$0xff]
        %v1210 = vld [vmem:[%s323 + $0x80] sm:$0xff]
        %v1211 = vld [vmem:[%s323 + $0x88] sm:$0xff]
        %v1212 = vld [vmem:[%s323 + $0x90] sm:$0xff]
        %v1213 = vld [vmem:[%s323 + $0x98] sm:$0xff]
        %v1214 = vld [vmem:[%s323 + $0xa0] sm:$0xff]
        %v1215 = vld [vmem:[%s323 + $0xa8] sm:$0xff]
        %v1216 = vld [vmem:[%s323 + $0xb0] sm:$0xff]
        %v1217 = vld [vmem:[%s323 + $0xb8] sm:$0xff]
        %v1218 = vld [vmem:[%s323 + $0xc0] sm:$0xff]
        %v1219 = vld [vmem:[%s323 + $0xc8] sm:$0xff]
        %v1220 = vld [vmem:[%s323 + $0xd0] sm:$0xff]
        %v1221 = vld [vmem:[%s323 + $0xd8] sm:$0xff]
        %v1222 = vld [vmem:[%s323 + $0xe0] sm:$0xff]
        %v1223 = vld [vmem:[%s323 + $0xe8] sm:$0xff]
        %v1224 = vld [vmem:[%s323 + $0xf0] sm:$0xff]
        %v1225 = vld [vmem:[%s323 + $0xf8] sm:$0xff]
        %v1226 = vpack.c.bf16 %v1195, %v1194
        %v1227 = vpack.c.bf16 %v1197, %v1196
        %v1228 = vpack.c.bf16 %v1199, %v1198
        %v1229 = vpack.c.bf16 %v1201, %v1200
        %v1230 = vpack.c.bf16 %v1203, %v1202
        %v1231 = vpack.c.bf16 %v1205, %v1204
        %v1232 = vpack.c.bf16 %v1207, %v1206
        %v1233 = vpack.c.bf16 %v1209, %v1208
        %v1234 = vpack.c.bf16 %v1211, %v1210
        %v1235 = vpack.c.bf16 %v1213, %v1212
        %v1236 = vpack.c.bf16 %v1215, %v1214
        %v1237 = vpack.c.bf16 %v1217, %v1216
        %v1238 = vpack.c.bf16 %v1219, %v1218
        %v1239 = vpack.c.bf16 %v1221, %v1220
        %v1240 = vpack.c.bf16 %v1223, %v1222
        %v1241 = vpack.c.bf16 %v1225, %v1224
        %v1258 = vunpack.c.l.b16 %v1226
        %v1259 = vunpack.c.h.b16 %v1226
        %v1260 = vunpack.c.l.b16 %v1227
        %v1261 = vunpack.c.h.b16 %v1227
        %v1262 = vunpack.c.l.b16 %v1228
        %v1263 = vunpack.c.h.b16 %v1228
        %v1264 = vunpack.c.l.b16 %v1229
        %v1265 = vunpack.c.h.b16 %v1229
        %v1266 = vunpack.c.l.b16 %v1230
        %v1267 = vunpack.c.h.b16 %v1230
        %v1268 = vunpack.c.l.b16 %v1231
        %v1269 = vunpack.c.h.b16 %v1231
        %v1270 = vunpack.c.l.b16 %v1232
        %v1271 = vunpack.c.h.b16 %v1232
        %v1272 = vunpack.c.l.b16 %v1233
        %v1273 = vunpack.c.h.b16 %v1233
        %v1274 = vunpack.c.l.b16 %v1234
        %v1275 = vunpack.c.h.b16 %v1234
        %v1276 = vunpack.c.l.b16 %v1235
        %v1277 = vunpack.c.h.b16 %v1235
        %v1278 = vunpack.c.l.b16 %v1236
        %v1279 = vunpack.c.h.b16 %v1236
        %v1280 = vunpack.c.l.b16 %v1237
        %v1281 = vunpack.c.h.b16 %v1237
        %v1282 = vunpack.c.l.b16 %v1238
        %v1283 = vunpack.c.h.b16 %v1238
        %v1284 = vunpack.c.l.b16 %v1239
        %v1285 = vunpack.c.h.b16 %v1239
        %v1286 = vunpack.c.l.b16 %v1240
        %v1287 = vunpack.c.h.b16 %v1240
        %v1288 = vunpack.c.l.b16 %v1241
        %v1289 = vunpack.c.h.b16 %v1241
        %v1290 = vpack.c.b16 %v1258, %v1258
        %v1291 = vpack.c.b16 %v1259, %v1259
        %v1292 = vpack.c.b16 %v1260, %v1260
        %v1293 = vpack.c.b16 %v1261, %v1261
        %v1294 = vpack.c.b16 %v1262, %v1262
        %v1295 = vpack.c.b16 %v1263, %v1263
        %v1296 = vpack.c.b16 %v1264, %v1264
        %v1297 = vpack.c.b16 %v1265, %v1265
        %v1298 = vpack.c.b16 %v1266, %v1266
        %v1299 = vpack.c.b16 %v1267, %v1267
        %v1300 = vpack.c.b16 %v1268, %v1268
        %v1301 = vpack.c.b16 %v1269, %v1269
        %v1302 = vpack.c.b16 %v1270, %v1270
        %v1303 = vpack.c.b16 %v1271, %v1271
        %v1304 = vpack.c.b16 %v1272, %v1272
        %v1305 = vpack.c.b16 %v1273, %v1273
        %v1306 = vpack.c.b16 %v1274, %v1274
        %v1307 = vpack.c.b16 %v1275, %v1275
        %v1308 = vpack.c.b16 %v1276, %v1276
        %v1309 = vpack.c.b16 %v1277, %v1277
        %v1310 = vpack.c.b16 %v1278, %v1278
        %v1311 = vpack.c.b16 %v1279, %v1279
        %v1312 = vpack.c.b16 %v1280, %v1280
        %v1313 = vpack.c.b16 %v1281, %v1281
        %v1314 = vpack.c.b16 %v1282, %v1282
        %v1315 = vpack.c.b16 %v1283, %v1283
        %v1316 = vpack.c.b16 %v1284, %v1284
        %v1317 = vpack.c.b16 %v1285, %v1285
        %v1318 = vpack.c.b16 %v1286, %v1286
        %v1319 = vpack.c.b16 %v1287, %v1287
        %v1320 = vpack.c.b16 %v1288, %v1288
        %v1321 = vpack.c.b16 %v1289, %v1289
        %vm1322 = vsmask.f32 256
        %vm1323 = vsmask.f32 4368
        %vm1324 = vmor %vm1322, %vm1323
        %v1326 = vshrl.u32 %v1290, 16
        %v1328 = vrot.slane %v1326, 7
        %v1329 = vshll.u32 %v1290, 16
        %v1331 = vor.u32 %v1328, %v1329
        %v1332 = vrot.slane %v1328, 4
        %v1334 = vshrl.u32 %v1291, 16
        %v1336 = vrot.slane %v1334, 7
        %v1337 = vshll.u32 %v1291, 16
        %v1339 = vor.u32 %v1336, %v1337
        %v1340 = vsel %vm1324, %v1332, %v1339
        %v1341 = vrot.slane %v1336, 4
        %v1343 = vshrl.u32 %v1292, 16
        %v1345 = vrot.slane %v1343, 7
        %v1346 = vshll.u32 %v1292, 16
        %v1348 = vor.u32 %v1345, %v1346
        %v1349 = vrot.slane %v1345, 4
        %v1351 = vshrl.u32 %v1293, 16
        %v1353 = vrot.slane %v1351, 7
        %v1354 = vshll.u32 %v1293, 16
        %v1356 = vor.u32 %v1353, %v1354
        %v1357 = vsel %vm1324, %v1349, %v1356
        %v1358 = vrot.slane %v1353, 4
        %v1360 = vshrl.u32 %v1294, 16
        %v1362 = vrot.slane %v1360, 7
        %v1363 = vshll.u32 %v1294, 16
        %v1365 = vor.u32 %v1362, %v1363
        %v1366 = vrot.slane %v1362, 4
        %v1368 = vshrl.u32 %v1295, 16
        %v1370 = vrot.slane %v1368, 7
        %v1371 = vshll.u32 %v1295, 16
        %v1373 = vor.u32 %v1370, %v1371
        %v1374 = vsel %vm1324, %v1366, %v1373
        %v1375 = vrot.slane %v1370, 4
        %v1377 = vshrl.u32 %v1296, 16
        %v1379 = vrot.slane %v1377, 7
        %v1380 = vshll.u32 %v1296, 16
        %v1382 = vor.u32 %v1379, %v1380
        %v1383 = vrot.slane %v1379, 4
        %v1385 = vshrl.u32 %v1297, 16
        %v1387 = vrot.slane %v1385, 7
        %v1388 = vshll.u32 %v1297, 16
        %v1390 = vor.u32 %v1387, %v1388
        %v1391 = vsel %vm1324, %v1383, %v1390
        %v1392 = vrot.slane %v1387, 4
        %v1394 = vshrl.u32 %v1298, 16
        %v1396 = vrot.slane %v1394, 7
        %v1397 = vshll.u32 %v1298, 16
        %v1399 = vor.u32 %v1396, %v1397
        %v1400 = vrot.slane %v1396, 4
        %v1402 = vshrl.u32 %v1299, 16
        %v1404 = vrot.slane %v1402, 7
        %v1405 = vshll.u32 %v1299, 16
        %v1407 = vor.u32 %v1404, %v1405
        %v1408 = vsel %vm1324, %v1400, %v1407
        %v1409 = vrot.slane %v1404, 4
        %v1411 = vshrl.u32 %v1300, 16
        %v1413 = vrot.slane %v1411, 7
        %v1414 = vshll.u32 %v1300, 16
        %v1416 = vor.u32 %v1413, %v1414
        %v1417 = vrot.slane %v1413, 4
        %v1419 = vshrl.u32 %v1301, 16
        %v1421 = vrot.slane %v1419, 7
        %v1422 = vshll.u32 %v1301, 16
        %v1424 = vor.u32 %v1421, %v1422
        %v1425 = vsel %vm1324, %v1417, %v1424
        %v1426 = vrot.slane %v1421, 4
        %v1428 = vshrl.u32 %v1302, 16
        %v1430 = vrot.slane %v1428, 7
        %v1431 = vshll.u32 %v1302, 16
        %v1433 = vor.u32 %v1430, %v1431
        %v1434 = vrot.slane %v1430, 4
        %v1436 = vshrl.u32 %v1303, 16
        %v1438 = vrot.slane %v1436, 7
        %v1439 = vshll.u32 %v1303, 16
        %v1441 = vor.u32 %v1438, %v1439
        %v1442 = vsel %vm1324, %v1434, %v1441
        %v1443 = vrot.slane %v1438, 4
        %v1445 = vshrl.u32 %v1304, 16
        %v1447 = vrot.slane %v1445, 7
        %v1448 = vshll.u32 %v1304, 16
        %v1450 = vor.u32 %v1447, %v1448
        %v1451 = vrot.slane %v1447, 4
        %v1453 = vshrl.u32 %v1305, 16
        %v1455 = vrot.slane %v1453, 7
        %v1456 = vshll.u32 %v1305, 16
        %v1458 = vor.u32 %v1455, %v1456
        %v1459 = vsel %vm1324, %v1451, %v1458
        %v1460 = vrot.slane %v1455, 4
        %v1462 = vshrl.u32 %v1306, 16
        %v1464 = vrot.slane %v1462, 7
        %v1465 = vshll.u32 %v1306, 16
        %v1467 = vor.u32 %v1464, %v1465
        %v1468 = vrot.slane %v1464, 4
        %v1470 = vshrl.u32 %v1307, 16
        %v1472 = vrot.slane %v1470, 7
        %v1473 = vshll.u32 %v1307, 16
        %v1475 = vor.u32 %v1472, %v1473
        %v1476 = vsel %vm1324, %v1468, %v1475
        %v1477 = vrot.slane %v1472, 4
        %v1479 = vshrl.u32 %v1308, 16
        %v1481 = vrot.slane %v1479, 7
        %v1482 = vshll.u32 %v1308, 16
        %v1484 = vor.u32 %v1481, %v1482
        %v1485 = vrot.slane %v1481, 4
        %v1487 = vshrl.u32 %v1309, 16
        %v1489 = vrot.slane %v1487, 7
        %v1490 = vshll.u32 %v1309, 16
        %v1492 = vor.u32 %v1489, %v1490
        %v1493 = vsel %vm1324, %v1485, %v1492
        %v1494 = vrot.slane %v1489, 4
        %v1496 = vshrl.u32 %v1310, 16
        %v1498 = vrot.slane %v1496, 7
        %v1499 = vshll.u32 %v1310, 16
        %v1501 = vor.u32 %v1498, %v1499
        %v1502 = vrot.slane %v1498, 4
        %v1504 = vshrl.u32 %v1311, 16
        %v1506 = vrot.slane %v1504, 7
        %v1507 = vshll.u32 %v1311, 16
        %v1509 = vor.u32 %v1506, %v1507
        %v1510 = vsel %vm1324, %v1502, %v1509
        %v1511 = vrot.slane %v1506, 4
        %v1513 = vshrl.u32 %v1312, 16
        %v1515 = vrot.slane %v1513, 7
        %v1516 = vshll.u32 %v1312, 16
        %v1518 = vor.u32 %v1515, %v1516
        %v1519 = vrot.slane %v1515, 4
        %v1521 = vshrl.u32 %v1313, 16
        %v1523 = vrot.slane %v1521, 7
        %v1524 = vshll.u32 %v1313, 16
        %v1526 = vor.u32 %v1523, %v1524
        %v1527 = vsel %vm1324, %v1519, %v1526
        %v1528 = vrot.slane %v1523, 4
        %v1530 = vshrl.u32 %v1314, 16
        %v1532 = vrot.slane %v1530, 7
        %v1533 = vshll.u32 %v1314, 16
        %v1535 = vor.u32 %v1532, %v1533
        %v1536 = vrot.slane %v1532, 4
        %v1538 = vshrl.u32 %v1315, 16
        %v1540 = vrot.slane %v1538, 7
        %v1541 = vshll.u32 %v1315, 16
        %v1543 = vor.u32 %v1540, %v1541
        %v1544 = vsel %vm1324, %v1536, %v1543
        %v1545 = vrot.slane %v1540, 4
        %v1547 = vshrl.u32 %v1316, 16
        %v1549 = vrot.slane %v1547, 7
        %v1550 = vshll.u32 %v1316, 16
        %v1552 = vor.u32 %v1549, %v1550
        %v1553 = vrot.slane %v1549, 4
        %v1555 = vshrl.u32 %v1317, 16
        %v1557 = vrot.slane %v1555, 7
        %v1558 = vshll.u32 %v1317, 16
        %v1560 = vor.u32 %v1557, %v1558
        %v1561 = vsel %vm1324, %v1553, %v1560
        %v1562 = vrot.slane %v1557, 4
        %v1564 = vshrl.u32 %v1318, 16
        %v1566 = vrot.slane %v1564, 7
        %v1567 = vshll.u32 %v1318, 16
        %v1569 = vor.u32 %v1566, %v1567
        %v1570 = vrot.slane %v1566, 4
        %v1572 = vshrl.u32 %v1319, 16
        %v1574 = vrot.slane %v1572, 7
        %v1575 = vshll.u32 %v1319, 16
        %v1577 = vor.u32 %v1574, %v1575
        %v1578 = vsel %vm1324, %v1570, %v1577
        %v1579 = vrot.slane %v1574, 4
        %v1581 = vshrl.u32 %v1320, 16
        %v1583 = vrot.slane %v1581, 7
        %v1584 = vshll.u32 %v1320, 16
        %v1586 = vor.u32 %v1583, %v1584
        %v1587 = vrot.slane %v1583, 4
        %v1589 = vshrl.u32 %v1321, 16
        %v1591 = vrot.slane %v1589, 7
        %v1592 = vshll.u32 %v1321, 16
        %v1594 = vor.u32 %v1591, %v1592
        %v1595 = vsel %vm1324, %v1587, %v1594
        %v1596 = vrot.slane %v1591, 4
        %s1645 = scalar_lea.vmem [#allocation2], 12
        %vm1646 = vcmask 257024
        %vm1647 = vsmask.f32 7938
        %vm1648 = vmand %vm1646, %vm1647
        %v1649 = vld [vmem:[%s1645] sm:$0xf]
        %v1650 = vsel %vm1648, %v1331, %v1649
        %1651 = vst [vmem:[%s1645] sm:$0xf] %v1650
        %1652 = vst.msk [vmem:[%s1645 + $0x4] sm:$0xf] %vm1082, %v1340
        %vm1653 = vcmask 253952
        %vm1654 = vmand %vm1653, %vm1322
        %v1655 = vld [vmem:[%s1645 + $0x8] sm:$0x1]
        %v1656 = vsel %vm1654, %v1341, %v1655
        %1657 = vst [vmem:[%s1645 + $0x8] sm:$0x1] %v1656
        %v1658 = vld [vmem:[%s1645 + $0xc] sm:$0xf]
        %v1659 = vsel %vm1648, %v1348, %v1658
        %1660 = vst [vmem:[%s1645 + $0xc] sm:$0xf] %v1659
        %1661 = vst.msk [vmem:[%s1645 + $0x10] sm:$0xf] %vm1082, %v1357
        %v1662 = vld [vmem:[%s1645 + $0x14] sm:$0x1]
        %v1663 = vsel %vm1654, %v1358, %v1662
        %1664 = vst [vmem:[%s1645 + $0x14] sm:$0x1] %v1663
        %v1665 = vld [vmem:[%s1645 + $0x18] sm:$0xf]
        %v1666 = vsel %vm1648, %v1365, %v1665
        %1667 = vst [vmem:[%s1645 + $0x18] sm:$0xf] %v1666
        %1668 = vst.msk [vmem:[%s1645 + $0x1c] sm:$0xf] %vm1082, %v1374
        %v1669 = vld [vmem:[%s1645 + $0x20] sm:$0x1]
        %v1670 = vsel %vm1654, %v1375, %v1669
        %1671 = vst [vmem:[%s1645 + $0x20] sm:$0x1] %v1670
        %v1672 = vld [vmem:[%s1645 + $0x24] sm:$0xf]
        %v1673 = vsel %vm1648, %v1382, %v1672
        %1674 = vst [vmem:[%s1645 + $0x24] sm:$0xf] %v1673
        %1675 = vst.msk [vmem:[%s1645 + $0x28] sm:$0xf] %vm1082, %v1391
        %v1676 = vld [vmem:[%s1645 + $0x2c] sm:$0x1]
        %v1677 = vsel %vm1654, %v1392, %v1676
        %1678 = vst [vmem:[%s1645 + $0x2c] sm:$0x1] %v1677
        %v1679 = vld [vmem:[%s1645 + $0x30] sm:$0xf]
        %v1680 = vsel %vm1648, %v1399, %v1679
        %1681 = vst [vmem:[%s1645 + $0x30] sm:$0xf] %v1680
        %1682 = vst.msk [vmem:[%s1645 + $0x34] sm:$0xf] %vm1082, %v1408
        %v1683 = vld [vmem:[%s1645 + $0x38] sm:$0x1]
        %v1684 = vsel %vm1654, %v1409, %v1683
        %1685 = vst [vmem:[%s1645 + $0x38] sm:$0x1] %v1684
        %v1686 = vld [vmem:[%s1645 + $0x3c] sm:$0xf]
        %v1687 = vsel %vm1648, %v1416, %v1686
        %1688 = vst [vmem:[%s1645 + $0x3c] sm:$0xf] %v1687
        %1689 = vst.msk [vmem:[%s1645 + $0x40] sm:$0xf] %vm1082, %v1425
        %v1690 = vld [vmem:[%s1645 + $0x44] sm:$0x1]
        %v1691 = vsel %vm1654, %v1426, %v1690
        %1692 = vst [vmem:[%s1645 + $0x44] sm:$0x1] %v1691
        %v1693 = vld [vmem:[%s1645 + $0x48] sm:$0xf]
        %v1694 = vsel %vm1648, %v1433, %v1693
        %1695 = vst [vmem:[%s1645 + $0x48] sm:$0xf] %v1694
        %1696 = vst.msk [vmem:[%s1645 + $0x4c] sm:$0xf] %vm1082, %v1442
        %v1697 = vld [vmem:[%s1645 + $0x50] sm:$0x1]
        %v1698 = vsel %vm1654, %v1443, %v1697
        %1699 = vst [vmem:[%s1645 + $0x50] sm:$0x1] %v1698
        %v1700 = vld [vmem:[%s1645 + $0x54] sm:$0xf]
        %v1701 = vsel %vm1648, %v1450, %v1700
        %1702 = vst [vmem:[%s1645 + $0x54] sm:$0xf] %v1701
        %1703 = vst.msk [vmem:[%s1645 + $0x58] sm:$0xf] %vm1082, %v1459
        %v1704 = vld [vmem:[%s1645 + $0x5c] sm:$0x1]
        %v1705 = vsel %vm1654, %v1460, %v1704
        %1706 = vst [vmem:[%s1645 + $0x5c] sm:$0x1] %v1705
        %v1707 = vld [vmem:[%s1645 + $0x60] sm:$0xf]
        %v1708 = vsel %vm1648, %v1467, %v1707
        %1709 = vst [vmem:[%s1645 + $0x60] sm:$0xf] %v1708
        %1710 = vst.msk [vmem:[%s1645 + $0x64] sm:$0xf] %vm1082, %v1476
        %v1711 = vld [vmem:[%s1645 + $0x68] sm:$0x1]
        %v1712 = vsel %vm1654, %v1477, %v1711
        %1713 = vst [vmem:[%s1645 + $0x68] sm:$0x1] %v1712
        %v1714 = vld [vmem:[%s1645 + $0x6c] sm:$0xf]
        %v1715 = vsel %vm1648, %v1484, %v1714
        %1716 = vst [vmem:[%s1645 + $0x6c] sm:$0xf] %v1715
        %1717 = vst.msk [vmem:[%s1645 + $0x70] sm:$0xf] %vm1082, %v1493
        %v1718 = vld [vmem:[%s1645 + $0x74] sm:$0x1]
        %v1719 = vsel %vm1654, %v1494, %v1718
        %1720 = vst [vmem:[%s1645 + $0x74] sm:$0x1] %v1719
        %v1721 = vld [vmem:[%s1645 + $0x78] sm:$0xf]
        %v1722 = vsel %vm1648, %v1501, %v1721
        %1723 = vst [vmem:[%s1645 + $0x78] sm:$0xf] %v1722
        %1724 = vst.msk [vmem:[%s1645 + $0x7c] sm:$0xf] %vm1082, %v1510
        %v1725 = vld [vmem:[%s1645 + $0x80] sm:$0x1]
        %v1726 = vsel %vm1654, %v1511, %v1725
        %1727 = vst [vmem:[%s1645 + $0x80] sm:$0x1] %v1726
        %v1728 = vld [vmem:[%s1645 + $0x84] sm:$0xf]
        %v1729 = vsel %vm1648, %v1518, %v1728
        %1730 = vst [vmem:[%s1645 + $0x84] sm:$0xf] %v1729
        %1731 = vst.msk [vmem:[%s1645 + $0x88] sm:$0xf] %vm1082, %v1527
        %v1732 = vld [vmem:[%s1645 + $0x8c] sm:$0x1]
        %v1733 = vsel %vm1654, %v1528, %v1732
        %1734 = vst [vmem:[%s1645 + $0x8c] sm:$0x1] %v1733
        %v1735 = vld [vmem:[%s1645 + $0x90] sm:$0xf]
        %v1736 = vsel %vm1648, %v1535, %v1735
        %1737 = vst [vmem:[%s1645 + $0x90] sm:$0xf] %v1736
        %1738 = vst.msk [vmem:[%s1645 + $0x94] sm:$0xf] %vm1082, %v1544
        %v1739 = vld [vmem:[%s1645 + $0x98] sm:$0x1]
        %v1740 = vsel %vm1654, %v1545, %v1739
        %1741 = vst [vmem:[%s1645 + $0x98] sm:$0x1] %v1740
        %v1742 = vld [vmem:[%s1645 + $0x9c] sm:$0xf]
        %v1743 = vsel %vm1648, %v1552, %v1742
        %1744 = vst [vmem:[%s1645 + $0x9c] sm:$0xf] %v1743
        %1745 = vst.msk [vmem:[%s1645 + $0xa0] sm:$0xf] %vm1082, %v1561
        %v1746 = vld [vmem:[%s1645 + $0xa4] sm:$0x1]
        %v1747 = vsel %vm1654, %v1562, %v1746
        %1748 = vst [vmem:[%s1645 + $0xa4] sm:$0x1] %v1747
        %v1749 = vld [vmem:[%s1645 + $0xa8] sm:$0xf]
        %v1750 = vsel %vm1648, %v1569, %v1749
        %1751 = vst [vmem:[%s1645 + $0xa8] sm:$0xf] %v1750
        %1752 = vst.msk [vmem:[%s1645 + $0xac] sm:$0xf] %vm1082, %v1578
        %v1753 = vld [vmem:[%s1645 + $0xb0] sm:$0x1]
        %v1754 = vsel %vm1654, %v1579, %v1753
        %1755 = vst [vmem:[%s1645 + $0xb0] sm:$0x1] %v1754
        %v1756 = vld [vmem:[%s1645 + $0xb4] sm:$0xf]
        %v1757 = vsel %vm1648, %v1586, %v1756
        %1758 = vst [vmem:[%s1645 + $0xb4] sm:$0xf] %v1757
        %1759 = vst.msk [vmem:[%s1645 + $0xb8] sm:$0xf] %vm1082, %v1595
        %v1760 = vld [vmem:[%s1645 + $0xbc] sm:$0x1]
        %v1761 = vsel %vm1654, %v1596, %v1760
        %1762 = vst [vmem:[%s1645 + $0xbc] sm:$0x1] %v1761
        %v1763 = vpack.c.bf16 %v428, %v423
        %v1764 = vpack.c.bf16 %v1003, %v1002
        %v1765 = vpack.c.bf16 %v1009, %v1008
        %v1766 = vpack.c.bf16 %v1015, %v1014
        %v1767 = vpack.c.bf16 %v1021, %v1020
        %v1768 = vpack.c.bf16 %v1027, %v1026
        %v1769 = vpack.c.bf16 %v1033, %v1032
        %v1770 = vpack.c.bf16 %v1039, %v1038
        %v1771 = vpack.c.bf16 %v1045, %v1044
        %v1772 = vpack.c.bf16 %v1051, %v1050
        %v1773 = vpack.c.bf16 %v1057, %v1056
        %v1774 = vpack.c.bf16 %v1063, %v1062
        %v1775 = vpack.c.bf16 %v1069, %v1068
        %v1776 = vpack.c.bf16 %v1075, %v1074
        %v1777 = vpack.c.bf16 %v1081, %v1080
        %v1778 = vpack.c.bf16 %v995, %v990
        %v1795 = vunpack.c.l.b16 %v1763
        %v1796 = vunpack.c.h.b16 %v1763
        %v1797 = vunpack.c.l.b16 %v1764
        %v1798 = vunpack.c.h.b16 %v1764
        %v1799 = vunpack.c.l.b16 %v1765
        %v1800 = vunpack.c.h.b16 %v1765
        %v1801 = vunpack.c.l.b16 %v1766
        %v1802 = vunpack.c.h.b16 %v1766
        %v1803 = vunpack.c.l.b16 %v1767
        %v1804 = vunpack.c.h.b16 %v1767
        %v1805 = vunpack.c.l.b16 %v1768
        %v1806 = vunpack.c.h.b16 %v1768
        %v1807 = vunpack.c.l.b16 %v1769
        %v1808 = vunpack.c.h.b16 %v1769
        %v1809 = vunpack.c.l.b16 %v1770
        %v1810 = vunpack.c.h.b16 %v1770
        %v1811 = vunpack.c.l.b16 %v1771
        %v1812 = vunpack.c.h.b16 %v1771
        %v1813 = vunpack.c.l.b16 %v1772
        %v1814 = vunpack.c.h.b16 %v1772
        %v1815 = vunpack.c.l.b16 %v1773
        %v1816 = vunpack.c.h.b16 %v1773
        %v1817 = vunpack.c.l.b16 %v1774
        %v1818 = vunpack.c.h.b16 %v1774
        %v1819 = vunpack.c.l.b16 %v1775
        %v1820 = vunpack.c.h.b16 %v1775
        %v1821 = vunpack.c.l.b16 %v1776
        %v1822 = vunpack.c.h.b16 %v1776
        %v1823 = vunpack.c.l.b16 %v1777
        %v1824 = vunpack.c.h.b16 %v1777
        %v1825 = vunpack.c.l.b16 %v1778
        %v1826 = vunpack.c.h.b16 %v1778
        %v1827 = vpack.c.b16 %v1795, %v1795
        %v1828 = vpack.c.b16 %v1796, %v1796
        %v1829 = vpack.c.b16 %v1797, %v1797
        %v1830 = vpack.c.b16 %v1798, %v1798
        %v1831 = vpack.c.b16 %v1799, %v1799
        %v1832 = vpack.c.b16 %v1800, %v1800
        %v1833 = vpack.c.b16 %v1801, %v1801
        %v1834 = vpack.c.b16 %v1802, %v1802
        %v1835 = vpack.c.b16 %v1803, %v1803
        %v1836 = vpack.c.b16 %v1804, %v1804
        %v1837 = vpack.c.b16 %v1805, %v1805
        %v1838 = vpack.c.b16 %v1806, %v1806
        %v1839 = vpack.c.b16 %v1807, %v1807
        %v1840 = vpack.c.b16 %v1808, %v1808
        %v1841 = vpack.c.b16 %v1809, %v1809
        %v1842 = vpack.c.b16 %v1810, %v1810
        %v1843 = vpack.c.b16 %v1811, %v1811
        %v1844 = vpack.c.b16 %v1812, %v1812
        %v1845 = vpack.c.b16 %v1813, %v1813
        %v1846 = vpack.c.b16 %v1814, %v1814
        %v1847 = vpack.c.b16 %v1815, %v1815
        %v1848 = vpack.c.b16 %v1816, %v1816
        %v1849 = vpack.c.b16 %v1817, %v1817
        %v1850 = vpack.c.b16 %v1818, %v1818
        %v1851 = vpack.c.b16 %v1819, %v1819
        %v1852 = vpack.c.b16 %v1820, %v1820
        %v1853 = vpack.c.b16 %v1821, %v1821
        %v1854 = vpack.c.b16 %v1822, %v1822
        %v1855 = vpack.c.b16 %v1823, %v1823
        %v1856 = vpack.c.b16 %v1824, %v1824
        %v1857 = vpack.c.b16 %v1825, %v1825
        %v1858 = vpack.c.b16 %v1826, %v1826
        %v1860 = vshrl.u32 %v1827, 16
        %v1862 = vrot.slane %v1860, 7
        %v1863 = vshll.u32 %v1827, 16
        %v1865 = vor.u32 %v1862, %v1863
        %v1866 = vrot.slane %v1862, 4
        %v1868 = vshrl.u32 %v1828, 16
        %v1870 = vrot.slane %v1868, 7
        %v1871 = vshll.u32 %v1828, 16
        %v1873 = vor.u32 %v1870, %v1871
        %v1874 = vsel %vm1324, %v1866, %v1873
        %v1875 = vrot.slane %v1870, 4
        %v1877 = vshrl.u32 %v1829, 16
        %v1879 = vrot.slane %v1877, 7
        %v1880 = vshll.u32 %v1829, 16
        %v1882 = vor.u32 %v1879, %v1880
        %v1883 = vrot.slane %v1879, 4
        %v1885 = vshrl.u32 %v1830, 16
        %v1887 = vrot.slane %v1885, 7
        %v1888 = vshll.u32 %v1830, 16
        %v1890 = vor.u32 %v1887, %v1888
        %v1891 = vsel %vm1324, %v1883, %v1890
        %v1892 = vrot.slane %v1887, 4
        %v1894 = vshrl.u32 %v1831, 16
        %v1896 = vrot.slane %v1894, 7
        %v1897 = vshll.u32 %v1831, 16
        %v1899 = vor.u32 %v1896, %v1897
        %v1900 = vrot.slane %v1896, 4
        %v1902 = vshrl.u32 %v1832, 16
        %v1904 = vrot.slane %v1902, 7
        %v1905 = vshll.u32 %v1832, 16
        %v1907 = vor.u32 %v1904, %v1905
        %v1908 = vsel %vm1324, %v1900, %v1907
        %v1909 = vrot.slane %v1904, 4
        %v1911 = vshrl.u32 %v1833, 16
        %v1913 = vrot.slane %v1911, 7
        %v1914 = vshll.u32 %v1833, 16
        %v1916 = vor.u32 %v1913, %v1914
        %v1917 = vrot.slane %v1913, 4
        %v1919 = vshrl.u32 %v1834, 16
        %v1921 = vrot.slane %v1919, 7
        %v1922 = vshll.u32 %v1834, 16
        %v1924 = vor.u32 %v1921, %v1922
        %v1925 = vsel %vm1324, %v1917, %v1924
        %v1926 = vrot.slane %v1921, 4
        %v1928 = vshrl.u32 %v1835, 16
        %v1930 = vrot.slane %v1928, 7
        %v1931 = vshll.u32 %v1835, 16
        %v1933 = vor.u32 %v1930, %v1931
        %v1934 = vrot.slane %v1930, 4
        %v1936 = vshrl.u32 %v1836, 16
        %v1938 = vrot.slane %v1936, 7
        %v1939 = vshll.u32 %v1836, 16
        %v1941 = vor.u32 %v1938, %v1939
        %v1942 = vsel %vm1324, %v1934, %v1941
        %v1943 = vrot.slane %v1938, 4
        %v1945 = vshrl.u32 %v1837, 16
        %v1947 = vrot.slane %v1945, 7
        %v1948 = vshll.u32 %v1837, 16
        %v1950 = vor.u32 %v1947, %v1948
        %v1951 = vrot.slane %v1947, 4
        %v1953 = vshrl.u32 %v1838, 16
        %v1955 = vrot.slane %v1953, 7
        %v1956 = vshll.u32 %v1838, 16
        %v1958 = vor.u32 %v1955, %v1956
        %v1959 = vsel %vm1324, %v1951, %v1958
        %v1960 = vrot.slane %v1955, 4
        %v1962 = vshrl.u32 %v1839, 16
        %v1964 = vrot.slane %v1962, 7
        %v1965 = vshll.u32 %v1839, 16
        %v1967 = vor.u32 %v1964, %v1965
        %v1968 = vrot.slane %v1964, 4
        %v1970 = vshrl.u32 %v1840, 16
        %v1972 = vrot.slane %v1970, 7
        %v1973 = vshll.u32 %v1840, 16
        %v1975 = vor.u32 %v1972, %v1973
        %v1976 = vsel %vm1324, %v1968, %v1975
        %v1977 = vrot.slane %v1972, 4
        %v1979 = vshrl.u32 %v1841, 16
        %v1981 = vrot.slane %v1979, 7
        %v1982 = vshll.u32 %v1841, 16
        %v1984 = vor.u32 %v1981, %v1982
        %v1985 = vrot.slane %v1981, 4
        %v1987 = vshrl.u32 %v1842, 16
        %v1989 = vrot.slane %v1987, 7
        %v1990 = vshll.u32 %v1842, 16
        %v1992 = vor.u32 %v1989, %v1990
        %v1993 = vsel %vm1324, %v1985, %v1992
        %v1994 = vrot.slane %v1989, 4
        %v1996 = vshrl.u32 %v1843, 16
        %v1998 = vrot.slane %v1996, 7
        %v1999 = vshll.u32 %v1843, 16
        %v2001 = vor.u32 %v1998, %v1999
        %v2002 = vrot.slane %v1998, 4
        %v2004 = vshrl.u32 %v1844, 16
        %v2006 = vrot.slane %v2004, 7
        %v2007 = vshll.u32 %v1844, 16
        %v2009 = vor.u32 %v2006, %v2007
        %v2010 = vsel %vm1324, %v2002, %v2009
        %v2011 = vrot.slane %v2006, 4
        %v2013 = vshrl.u32 %v1845, 16
        %v2015 = vrot.slane %v2013, 7
        %v2016 = vshll.u32 %v1845, 16
        %v2018 = vor.u32 %v2015, %v2016
        %v2019 = vrot.slane %v2015, 4
        %v2021 = vshrl.u32 %v1846, 16
        %v2023 = vrot.slane %v2021, 7
        %v2024 = vshll.u32 %v1846, 16
        %v2026 = vor.u32 %v2023, %v2024
        %v2027 = vsel %vm1324, %v2019, %v2026
        %v2028 = vrot.slane %v2023, 4
        %v2030 = vshrl.u32 %v1847, 16
        %v2032 = vrot.slane %v2030, 7
        %v2033 = vshll.u32 %v1847, 16
        %v2035 = vor.u32 %v2032, %v2033
        %v2036 = vrot.slane %v2032, 4
        %v2038 = vshrl.u32 %v1848, 16
        %v2040 = vrot.slane %v2038, 7
        %v2041 = vshll.u32 %v1848, 16
        %v2043 = vor.u32 %v2040, %v2041
        %v2044 = vsel %vm1324, %v2036, %v2043
        %v2045 = vrot.slane %v2040, 4
        %v2047 = vshrl.u32 %v1849, 16
        %v2049 = vrot.slane %v2047, 7
        %v2050 = vshll.u32 %v1849, 16
        %v2052 = vor.u32 %v2049, %v2050
        %v2053 = vrot.slane %v2049, 4
        %v2055 = vshrl.u32 %v1850, 16
        %v2057 = vrot.slane %v2055, 7
        %v2058 = vshll.u32 %v1850, 16
        %v2060 = vor.u32 %v2057, %v2058
        %v2061 = vsel %vm1324, %v2053, %v2060
        %v2062 = vrot.slane %v2057, 4
        %v2064 = vshrl.u32 %v1851, 16
        %v2066 = vrot.slane %v2064, 7
        %v2067 = vshll.u32 %v1851, 16
        %v2069 = vor.u32 %v2066, %v2067
        %v2070 = vrot.slane %v2066, 4
        %v2072 = vshrl.u32 %v1852, 16
        %v2074 = vrot.slane %v2072, 7
        %v2075 = vshll.u32 %v1852, 16
        %v2077 = vor.u32 %v2074, %v2075
        %v2078 = vsel %vm1324, %v2070, %v2077
        %v2079 = vrot.slane %v2074, 4
        %v2081 = vshrl.u32 %v1853, 16
        %v2083 = vrot.slane %v2081, 7
        %v2084 = vshll.u32 %v1853, 16
        %v2086 = vor.u32 %v2083, %v2084
        %v2087 = vrot.slane %v2083, 4
        %v2089 = vshrl.u32 %v1854, 16
        %v2091 = vrot.slane %v2089, 7
        %v2092 = vshll.u32 %v1854, 16
        %v2094 = vor.u32 %v2091, %v2092
        %v2095 = vsel %vm1324, %v2087, %v2094
        %v2096 = vrot.slane %v2091, 4
        %v2098 = vshrl.u32 %v1855, 16
        %v2100 = vrot.slane %v2098, 7
        %v2101 = vshll.u32 %v1855, 16
        %v2103 = vor.u32 %v2100, %v2101
        %v2104 = vrot.slane %v2100, 4
        %v2106 = vshrl.u32 %v1856, 16
        %v2108 = vrot.slane %v2106, 7
        %v2109 = vshll.u32 %v1856, 16
        %v2111 = vor.u32 %v2108, %v2109
        %v2112 = vsel %vm1324, %v2104, %v2111
        %v2113 = vrot.slane %v2108, 4
        %v2115 = vshrl.u32 %v1857, 16
        %v2117 = vrot.slane %v2115, 7
        %v2118 = vshll.u32 %v1857, 16
        %v2120 = vor.u32 %v2117, %v2118
        %v2121 = vrot.slane %v2117, 4
        %v2123 = vshrl.u32 %v1858, 16
        %v2125 = vrot.slane %v2123, 7
        %v2126 = vshll.u32 %v1858, 16
        %v2128 = vor.u32 %v2125, %v2126
        %v2129 = vsel %vm1324, %v2121, %v2128
        %v2130 = vrot.slane %v2125, 4
        %s2179 = scalar_lea.vmem [#allocation3], 12
        %vm2180 = vcmask 519168
        %vm2181 = vmand %vm2180, %vm1647
        %v2182 = vld [vmem:[%s2179] sm:$0xf]
        %v2183 = vsel %vm2181, %v1865, %v2182
        %2184 = vst [vmem:[%s2179] sm:$0xf] %v2183
        %2185 = vst.msk [vmem:[%s2179 + $0x4] sm:$0xf] %vm1138, %v1874
        %vm2186 = vcmask 516096
        %vm2187 = vmand %vm2186, %vm1322
        %v2188 = vld [vmem:[%s2179 + $0x8] sm:$0x1]
        %v2189 = vsel %vm2187, %v1875, %v2188
        %2190 = vst [vmem:[%s2179 + $0x8] sm:$0x1] %v2189
        %v2191 = vld [vmem:[%s2179 + $0xc] sm:$0xf]
        %v2192 = vsel %vm2181, %v1882, %v2191
        %2193 = vst [vmem:[%s2179 + $0xc] sm:$0xf] %v2192
        %2194 = vst.msk [vmem:[%s2179 + $0x10] sm:$0xf] %vm1138, %v1891
        %v2195 = vld [vmem:[%s2179 + $0x14] sm:$0x1]
        %v2196 = vsel %vm2187, %v1892, %v2195
        %2197 = vst [vmem:[%s2179 + $0x14] sm:$0x1] %v2196
        %v2198 = vld [vmem:[%s2179 + $0x18] sm:$0xf]
        %v2199 = vsel %vm2181, %v1899, %v2198
        %2200 = vst [vmem:[%s2179 + $0x18] sm:$0xf] %v2199
        %2201 = vst.msk [vmem:[%s2179 + $0x1c] sm:$0xf] %vm1138, %v1908
        %v2202 = vld [vmem:[%s2179 + $0x20] sm:$0x1]
        %v2203 = vsel %vm2187, %v1909, %v2202
        %2204 = vst [vmem:[%s2179 + $0x20] sm:$0x1] %v2203
        %v2205 = vld [vmem:[%s2179 + $0x24] sm:$0xf]
        %v2206 = vsel %vm2181, %v1916, %v2205
        %2207 = vst [vmem:[%s2179 + $0x24] sm:$0xf] %v2206
        %2208 = vst.msk [vmem:[%s2179 + $0x28] sm:$0xf] %vm1138, %v1925
        %v2209 = vld [vmem:[%s2179 + $0x2c] sm:$0x1]
        %v2210 = vsel %vm2187, %v1926, %v2209
        %2211 = vst [vmem:[%s2179 + $0x2c] sm:$0x1] %v2210
        %v2212 = vld [vmem:[%s2179 + $0x30] sm:$0xf]
        %v2213 = vsel %vm2181, %v1933, %v2212
        %2214 = vst [vmem:[%s2179 + $0x30] sm:$0xf] %v2213
        %2215 = vst.msk [vmem:[%s2179 + $0x34] sm:$0xf] %vm1138, %v1942
        %v2216 = vld [vmem:[%s2179 + $0x38] sm:$0x1]
        %v2217 = vsel %vm2187, %v1943, %v2216
        %2218 = vst [vmem:[%s2179 + $0x38] sm:$0x1] %v2217
        %v2219 = vld [vmem:[%s2179 + $0x3c] sm:$0xf]
        %v2220 = vsel %vm2181, %v1950, %v2219
        %2221 = vst [vmem:[%s2179 + $0x3c] sm:$0xf] %v2220
        %2222 = vst.msk [vmem:[%s2179 + $0x40] sm:$0xf] %vm1138, %v1959
        %v2223 = vld [vmem:[%s2179 + $0x44] sm:$0x1]
        %v2224 = vsel %vm2187, %v1960, %v2223
        %2225 = vst [vmem:[%s2179 + $0x44] sm:$0x1] %v2224
        %v2226 = vld [vmem:[%s2179 + $0x48] sm:$0xf]
        %v2227 = vsel %vm2181, %v1967, %v2226
        %2228 = vst [vmem:[%s2179 + $0x48] sm:$0xf] %v2227
        %2229 = vst.msk [vmem:[%s2179 + $0x4c] sm:$0xf] %vm1138, %v1976
        %v2230 = vld [vmem:[%s2179 + $0x50] sm:$0x1]
        %v2231 = vsel %vm2187, %v1977, %v2230
        %2232 = vst [vmem:[%s2179 + $0x50] sm:$0x1] %v2231
        %v2233 = vld [vmem:[%s2179 + $0x54] sm:$0xf]
        %v2234 = vsel %vm2181, %v1984, %v2233
        %2235 = vst [vmem:[%s2179 + $0x54] sm:$0xf] %v2234
        %2236 = vst.msk [vmem:[%s2179 + $0x58] sm:$0xf] %vm1138, %v1993
        %v2237 = vld [vmem:[%s2179 + $0x5c] sm:$0x1]
        %v2238 = vsel %vm2187, %v1994, %v2237
        %2239 = vst [vmem:[%s2179 + $0x5c] sm:$0x1] %v2238
        %v2240 = vld [vmem:[%s2179 + $0x60] sm:$0xf]
        %v2241 = vsel %vm2181, %v2001, %v2240
        %2242 = vst [vmem:[%s2179 + $0x60] sm:$0xf] %v2241
        %2243 = vst.msk [vmem:[%s2179 + $0x64] sm:$0xf] %vm1138, %v2010
        %v2244 = vld [vmem:[%s2179 + $0x68] sm:$0x1]
        %v2245 = vsel %vm2187, %v2011, %v2244
        %2246 = vst [vmem:[%s2179 + $0x68] sm:$0x1] %v2245
        %v2247 = vld [vmem:[%s2179 + $0x6c] sm:$0xf]
        %v2248 = vsel %vm2181, %v2018, %v2247
        %2249 = vst [vmem:[%s2179 + $0x6c] sm:$0xf] %v2248
        %2250 = vst.msk [vmem:[%s2179 + $0x70] sm:$0xf] %vm1138, %v2027
        %v2251 = vld [vmem:[%s2179 + $0x74] sm:$0x1]
        %v2252 = vsel %vm2187, %v2028, %v2251
        %2253 = vst [vmem:[%s2179 + $0x74] sm:$0x1] %v2252
        %v2254 = vld [vmem:[%s2179 + $0x78] sm:$0xf]
        %v2255 = vsel %vm2181, %v2035, %v2254
        %2256 = vst [vmem:[%s2179 + $0x78] sm:$0xf] %v2255
        %2257 = vst.msk [vmem:[%s2179 + $0x7c] sm:$0xf] %vm1138, %v2044
        %v2258 = vld [vmem:[%s2179 + $0x80] sm:$0x1]
        %v2259 = vsel %vm2187, %v2045, %v2258
        %2260 = vst [vmem:[%s2179 + $0x80] sm:$0x1] %v2259
        %v2261 = vld [vmem:[%s2179 + $0x84] sm:$0xf]
        %v2262 = vsel %vm2181, %v2052, %v2261
        %2263 = vst [vmem:[%s2179 + $0x84] sm:$0xf] %v2262
        %2264 = vst.msk [vmem:[%s2179 + $0x88] sm:$0xf] %vm1138, %v2061
        %v2265 = vld [vmem:[%s2179 + $0x8c] sm:$0x1]
        %v2266 = vsel %vm2187, %v2062, %v2265
        %2267 = vst [vmem:[%s2179 + $0x8c] sm:$0x1] %v2266
        %v2268 = vld [vmem:[%s2179 + $0x90] sm:$0xf]
        %v2269 = vsel %vm2181, %v2069, %v2268
        %2270 = vst [vmem:[%s2179 + $0x90] sm:$0xf] %v2269
        %2271 = vst.msk [vmem:[%s2179 + $0x94] sm:$0xf] %vm1138, %v2078
        %v2272 = vld [vmem:[%s2179 + $0x98] sm:$0x1]
        %v2273 = vsel %vm2187, %v2079, %v2272
        %2274 = vst [vmem:[%s2179 + $0x98] sm:$0x1] %v2273
        %v2275 = vld [vmem:[%s2179 + $0x9c] sm:$0xf]
        %v2276 = vsel %vm2181, %v2086, %v2275
        %2277 = vst [vmem:[%s2179 + $0x9c] sm:$0xf] %v2276
        %2278 = vst.msk [vmem:[%s2179 + $0xa0] sm:$0xf] %vm1138, %v2095
        %v2279 = vld [vmem:[%s2179 + $0xa4] sm:$0x1]
        %v2280 = vsel %vm2187, %v2096, %v2279
        %2281 = vst [vmem:[%s2179 + $0xa4] sm:$0x1] %v2280
        %v2282 = vld [vmem:[%s2179 + $0xa8] sm:$0xf]
        %v2283 = vsel %vm2181, %v2103, %v2282
        %2284 = vst [vmem:[%s2179 + $0xa8] sm:$0xf] %v2283
        %2285 = vst.msk [vmem:[%s2179 + $0xac] sm:$0xf] %vm1138, %v2112
        %v2286 = vld [vmem:[%s2179 + $0xb0] sm:$0x1]
        %v2287 = vsel %vm2187, %v2113, %v2286
        %2288 = vst [vmem:[%s2179 + $0xb0] sm:$0x1] %v2287
        %v2289 = vld [vmem:[%s2179 + $0xb4] sm:$0xf]
        %v2290 = vsel %vm2181, %v2120, %v2289
        %2291 = vst [vmem:[%s2179 + $0xb4] sm:$0xf] %v2290
        %2292 = vst.msk [vmem:[%s2179 + $0xb8] sm:$0xf] %vm1138, %v2129
        %v2293 = vld [vmem:[%s2179 + $0xbc] sm:$0x1]
        %v2294 = vsel %vm2187, %v2130, %v2293
        %2295 = vst [vmem:[%s2179 + $0xbc] sm:$0x1] %v2294
        %v2296 = vld [vmem:[%s3] sm:$0xff]
        %v2297 = vld [vmem:[%s3 + $0x8] sm:$0xff]
        %v2298 = vld [vmem:[%s3 + $0x10] sm:$0xff]
        %v2299 = vld [vmem:[%s3 + $0x18] sm:$0xff]
        %v2300 = vld [vmem:[%s3 + $0x20] sm:$0xff]
        %v2301 = vld [vmem:[%s3 + $0x28] sm:$0xff]
        %v2302 = vld [vmem:[%s3 + $0x30] sm:$0xff]
        %v2303 = vld [vmem:[%s3 + $0x38] sm:$0xff]
        %v2304 = vld [vmem:[%s3 + $0x40] sm:$0xff]
        %v2305 = vld [vmem:[%s3 + $0x48] sm:$0xff]
        %v2306 = vld [vmem:[%s3 + $0x50] sm:$0xff]
        %v2307 = vld [vmem:[%s3 + $0x58] sm:$0xff]
        %v2308 = vld [vmem:[%s3 + $0x60] sm:$0xff]
        %v2309 = vld [vmem:[%s3 + $0x68] sm:$0xff]
        %v2310 = vld [vmem:[%s3 + $0x70] sm:$0xff]
        %v2311 = vld [vmem:[%s3 + $0x78] sm:$0xff]
        %v2312 = vld [vmem:[%s3 + $0x80] sm:$0xff]
        %v2313 = vld [vmem:[%s3 + $0x88] sm:$0xff]
        %v2314 = vld [vmem:[%s3 + $0x90] sm:$0xff]
        %v2315 = vld [vmem:[%s3 + $0x98] sm:$0xff]
        %v2316 = vld [vmem:[%s3 + $0xa0] sm:$0xff]
        %v2317 = vld [vmem:[%s3 + $0xa8] sm:$0xff]
        %v2318 = vld [vmem:[%s3 + $0xb0] sm:$0xff]
        %v2319 = vld [vmem:[%s3 + $0xb8] sm:$0xff]
        %v2320 = vld [vmem:[%s3 + $0xc0] sm:$0xff]
        %v2321 = vld [vmem:[%s3 + $0xc8] sm:$0xff]
        %v2322 = vld [vmem:[%s3 + $0xd0] sm:$0xff]
        %v2323 = vld [vmem:[%s3 + $0xd8] sm:$0xff]
        %v2324 = vld [vmem:[%s3 + $0xe0] sm:$0xff]
        %v2325 = vld [vmem:[%s3 + $0xe8] sm:$0xff]
        %v2326 = vld [vmem:[%s3 + $0xf0] sm:$0xff]
        %v2327 = vld [vmem:[%s3 + $0xf8] sm:$0xff]
        %v2328 = vld [vmem:[%s3 + $0x100] sm:$0xff]
        %v2329 = vld [vmem:[%s3 + $0x108] sm:$0xff]
        %v2330 = vld [vmem:[%s3 + $0x110] sm:$0xff]
        %v2331 = vld [vmem:[%s3 + $0x118] sm:$0xff]
        %v2332 = vpack.c.bf16 %v2297, %v2296
        %v2333 = vpack.c.bf16 %v2299, %v2298
        %v2334 = vpack.c.bf16 %v2301, %v2300
        %v2335 = vpack.c.bf16 %v2303, %v2302
        %v2336 = vpack.c.bf16 %v2305, %v2304
        %v2337 = vpack.c.bf16 %v2307, %v2306
        %v2338 = vpack.c.bf16 %v2309, %v2308
        %v2339 = vpack.c.bf16 %v2311, %v2310
        %v2340 = vpack.c.bf16 %v2313, %v2312
        %v2341 = vpack.c.bf16 %v2315, %v2314
        %v2342 = vpack.c.bf16 %v2317, %v2316
        %v2343 = vpack.c.bf16 %v2319, %v2318
        %v2344 = vpack.c.bf16 %v2321, %v2320
        %v2345 = vpack.c.bf16 %v2323, %v2322
        %v2346 = vpack.c.bf16 %v2325, %v2324
        %v2347 = vpack.c.bf16 %v2327, %v2326
        %v2348 = vpack.c.bf16 %v2329, %v2328
        %v2349 = vpack.c.bf16 %v2331, %v2330
        %v2350 = vld [vmem:[%s4] sm:$0xff]
        %v2351 = vld [vmem:[%s4 + $0x8] sm:$0xff]
        %v2352 = vld [vmem:[%s4 + $0x10] sm:$0xff]
        %v2353 = vld [vmem:[%s4 + $0x18] sm:$0xff]
        %v2354 = vld [vmem:[%s4 + $0x20] sm:$0xff]
        %v2355 = vld [vmem:[%s4 + $0x28] sm:$0xff]
        %v2356 = vld [vmem:[%s4 + $0x30] sm:$0xff]
        %v2357 = vld [vmem:[%s4 + $0x38] sm:$0xff]
        %v2358 = vld [vmem:[%s4 + $0x40] sm:$0xff]
        %v2359 = vld [vmem:[%s4 + $0x48] sm:$0xff]
        %v2360 = vld [vmem:[%s4 + $0x50] sm:$0xff]
        %v2361 = vld [vmem:[%s4 + $0x58] sm:$0xff]
        %v2362 = vld [vmem:[%s4 + $0x60] sm:$0xff]
        %v2363 = vld [vmem:[%s4 + $0x68] sm:$0xff]
        %v2364 = vld [vmem:[%s4 + $0x70] sm:$0xff]
        %v2365 = vld [vmem:[%s4 + $0x78] sm:$0xff]
        %v2366 = vld [vmem:[%s4 + $0x80] sm:$0xff]
        %v2367 = vld [vmem:[%s4 + $0x88] sm:$0xff]
        %v2368 = vld [vmem:[%s4 + $0x90] sm:$0xff]
        %v2369 = vld [vmem:[%s4 + $0x98] sm:$0xff]
        %v2370 = vld [vmem:[%s4 + $0xa0] sm:$0xff]
        %v2371 = vld [vmem:[%s4 + $0xa8] sm:$0xff]
        %v2372 = vld [vmem:[%s4 + $0xb0] sm:$0xff]
        %v2373 = vld [vmem:[%s4 + $0xb8] sm:$0xff]
        %v2374 = vld [vmem:[%s4 + $0xc0] sm:$0xff]
        %v2375 = vld [vmem:[%s4 + $0xc8] sm:$0xff]
        %v2376 = vld [vmem:[%s4 + $0xd0] sm:$0xff]
        %v2377 = vld [vmem:[%s4 + $0xd8] sm:$0xff]
        %v2378 = vld [vmem:[%s4 + $0xe0] sm:$0xff]
        %v2379 = vld [vmem:[%s4 + $0xe8] sm:$0xff]
        %v2380 = vld [vmem:[%s4 + $0xf0] sm:$0xff]
        %v2381 = vld [vmem:[%s4 + $0xf8] sm:$0xff]
        %v2382 = vld [vmem:[%s4 + $0x100] sm:$0xff]
        %v2383 = vld [vmem:[%s4 + $0x108] sm:$0xff]
        %v2384 = vld [vmem:[%s4 + $0x110] sm:$0xff]
        %v2385 = vld [vmem:[%s4 + $0x118] sm:$0xff]
        %v2386 = vld [vmem:[%s4 + $0x120] sm:$0xff]
        %v2387 = vld [vmem:[%s4 + $0x128] sm:$0xff]
        %v2388 = vld [vmem:[%s4 + $0x130] sm:$0xff]
        %v2389 = vld [vmem:[%s4 + $0x138] sm:$0xff]
        %v2390 = vld [vmem:[%s4 + $0x140] sm:$0xff]
        %v2391 = vld [vmem:[%s4 + $0x148] sm:$0xff]
        %v2392 = vld [vmem:[%s4 + $0x150] sm:$0xff]
        %v2393 = vld [vmem:[%s4 + $0x158] sm:$0xff]
        %v2394 = vld [vmem:[%s4 + $0x160] sm:$0xff]
        %v2395 = vld [vmem:[%s4 + $0x168] sm:$0xff]
        %v2396 = vld [vmem:[%s4 + $0x170] sm:$0xff]
        %v2397 = vld [vmem:[%s4 + $0x178] sm:$0xff]
        %v2398 = vld [vmem:[%s4 + $0x180] sm:$0xff]
        %v2399 = vld [vmem:[%s4 + $0x188] sm:$0xff]
        %v2400 = vld [vmem:[%s4 + $0x190] sm:$0xff]
        %v2401 = vld [vmem:[%s4 + $0x198] sm:$0xff]
        %v2402 = vld [vmem:[%s4 + $0x1a0] sm:$0xff]
        %v2403 = vld [vmem:[%s4 + $0x1a8] sm:$0xff]
        %v2404 = vld [vmem:[%s4 + $0x1b0] sm:$0xff]
        %v2405 = vld [vmem:[%s4 + $0x1b8] sm:$0xff]
        %v2406 = vld [vmem:[%s4 + $0x1c0] sm:$0xff]
        %v2407 = vld [vmem:[%s4 + $0x1c8] sm:$0xff]
        %v2408 = vld [vmem:[%s4 + $0x1d0] sm:$0xff]
        %v2409 = vld [vmem:[%s4 + $0x1d8] sm:$0xff]
        %v2410 = vld [vmem:[%s4 + $0x1e0] sm:$0xff]
        %v2411 = vld [vmem:[%s4 + $0x1e8] sm:$0xff]
        %v2412 = vld [vmem:[%s4 + $0x1f0] sm:$0xff]
        %v2413 = vld [vmem:[%s4 + $0x1f8] sm:$0xff]
        %v2414 = vld [vmem:[%s4 + $0x200] sm:$0xff]
        %v2415 = vld [vmem:[%s4 + $0x208] sm:$0xff]
        %v2416 = vld [vmem:[%s4 + $0x210] sm:$0xff]
        %v2417 = vld [vmem:[%s4 + $0x218] sm:$0xff]
        %v2418 = vld [vmem:[%s4 + $0x220] sm:$0xff]
        %v2419 = vld [vmem:[%s4 + $0x228] sm:$0xff]
        %v2420 = vld [vmem:[%s4 + $0x230] sm:$0xff]
        %v2421 = vld [vmem:[%s4 + $0x238] sm:$0xff]
        %v2422 = vpack.c.bf16 %v2351, %v2350
        %v2423 = vpack.c.bf16 %v2353, %v2352
        %v2424 = vpack.c.bf16 %v2355, %v2354
        %v2425 = vpack.c.bf16 %v2357, %v2356
        %v2426 = vpack.c.bf16 %v2359, %v2358
        %v2427 = vpack.c.bf16 %v2361, %v2360
        %v2428 = vpack.c.bf16 %v2363, %v2362
        %v2429 = vpack.c.bf16 %v2365, %v2364
        %v2430 = vpack.c.bf16 %v2367, %v2366
        %v2431 = vpack.c.bf16 %v2369, %v2368
        %v2432 = vpack.c.bf16 %v2371, %v2370
        %v2433 = vpack.c.bf16 %v2373, %v2372
        %v2434 = vpack.c.bf16 %v2375, %v2374
        %v2435 = vpack.c.bf16 %v2377, %v2376
        %v2436 = vpack.c.bf16 %v2379, %v2378
        %v2437 = vpack.c.bf16 %v2381, %v2380
        %v2438 = vpack.c.bf16 %v2383, %v2382
        %v2439 = vpack.c.bf16 %v2385, %v2384
        %v2440 = vpack.c.bf16 %v2387, %v2386
        %v2441 = vpack.c.bf16 %v2389, %v2388
        %v2442 = vpack.c.bf16 %v2391, %v2390
        %v2443 = vpack.c.bf16 %v2393, %v2392
        %v2444 = vpack.c.bf16 %v2395, %v2394
        %v2445 = vpack.c.bf16 %v2397, %v2396
        %v2446 = vpack.c.bf16 %v2399, %v2398
        %v2447 = vpack.c.bf16 %v2401, %v2400
        %v2448 = vpack.c.bf16 %v2403, %v2402
        %v2449 = vpack.c.bf16 %v2405, %v2404
        %v2450 = vpack.c.bf16 %v2407, %v2406
        %v2451 = vpack.c.bf16 %v2409, %v2408
        %v2452 = vpack.c.bf16 %v2411, %v2410
        %v2453 = vpack.c.bf16 %v2413, %v2412
        %v2454 = vpack.c.bf16 %v2415, %v2414
        %v2455 = vpack.c.bf16 %v2417, %v2416
        %v2456 = vpack.c.bf16 %v2419, %v2418
        %v2457 = vpack.c.bf16 %v2421, %v2420
        %v2458 = vld [vmem:[%s5] sm:$0xff]
        %v2459 = vld [vmem:[%s5 + $0x8] sm:$0xff]
        %v2460 = vld [vmem:[%s5 + $0x10] sm:$0xff]
        %v2461 = vld [vmem:[%s5 + $0x18] sm:$0xff]
        %v2462 = vld [vmem:[%s5 + $0x20] sm:$0xff]
        %v2463 = vld [vmem:[%s5 + $0x28] sm:$0xff]
        %v2464 = vld [vmem:[%s5 + $0x30] sm:$0xff]
        %v2465 = vld [vmem:[%s5 + $0x38] sm:$0xff]
        %v2466 = vld [vmem:[%s5 + $0x40] sm:$0xff]
        %v2467 = vld [vmem:[%s5 + $0x48] sm:$0xff]
        %v2468 = vld [vmem:[%s5 + $0x50] sm:$0xff]
        %v2469 = vld [vmem:[%s5 + $0x58] sm:$0xff]
        %v2470 = vld [vmem:[%s5 + $0x60] sm:$0xff]
        %v2471 = vld [vmem:[%s5 + $0x68] sm:$0xff]
        %v2472 = vld [vmem:[%s5 + $0x70] sm:$0xff]
        %v2473 = vld [vmem:[%s5 + $0x78] sm:$0xff]
        %v2474 = vld [vmem:[%s5 + $0x80] sm:$0xff]
        %v2475 = vld [vmem:[%s5 + $0x88] sm:$0xff]
        %v2476 = vld [vmem:[%s5 + $0x90] sm:$0xff]
        %v2477 = vld [vmem:[%s5 + $0x98] sm:$0xff]
        %v2478 = vld [vmem:[%s5 + $0xa0] sm:$0xff]
        %v2479 = vld [vmem:[%s5 + $0xa8] sm:$0xff]
        %v2480 = vld [vmem:[%s5 + $0xb0] sm:$0xff]
        %v2481 = vld [vmem:[%s5 + $0xb8] sm:$0xff]
        %v2482 = vld [vmem:[%s5 + $0xc0] sm:$0xff]
        %v2483 = vld [vmem:[%s5 + $0xc8] sm:$0xff]
        %v2484 = vld [vmem:[%s5 + $0xd0] sm:$0xff]
        %v2485 = vld [vmem:[%s5 + $0xd8] sm:$0xff]
        %v2486 = vld [vmem:[%s5 + $0xe0] sm:$0xff]
        %v2487 = vld [vmem:[%s5 + $0xe8] sm:$0xff]
        %v2488 = vld [vmem:[%s5 + $0xf0] sm:$0xff]
        %v2489 = vld [vmem:[%s5 + $0xf8] sm:$0xff]
        %v2490 = vld [vmem:[%s5 + $0x100] sm:$0xff]
        %v2491 = vld [vmem:[%s5 + $0x108] sm:$0xff]
        %v2492 = vld [vmem:[%s5 + $0x110] sm:$0xff]
        %v2493 = vld [vmem:[%s5 + $0x118] sm:$0xff]
        %v2494 = vpack.c.bf16 %v2459, %v2458
        %v2495 = vpack.c.bf16 %v2461, %v2460
        %v2496 = vpack.c.bf16 %v2463, %v2462
        %v2497 = vpack.c.bf16 %v2465, %v2464
        %v2498 = vpack.c.bf16 %v2467, %v2466
        %v2499 = vpack.c.bf16 %v2469, %v2468
        %v2500 = vpack.c.bf16 %v2471, %v2470
        %v2501 = vpack.c.bf16 %v2473, %v2472
        %v2502 = vpack.c.bf16 %v2475, %v2474
        %v2503 = vpack.c.bf16 %v2477, %v2476
        %v2504 = vpack.c.bf16 %v2479, %v2478
        %v2505 = vpack.c.bf16 %v2481, %v2480
        %v2506 = vpack.c.bf16 %v2483, %v2482
        %v2507 = vpack.c.bf16 %v2485, %v2484
        %v2508 = vpack.c.bf16 %v2487, %v2486
        %v2509 = vpack.c.bf16 %v2489, %v2488
        %v2510 = vpack.c.bf16 %v2491, %v2490
        %v2511 = vpack.c.bf16 %v2493, %v2492
        %v2512 = vld [vmem:[#allocation2] sm:$0xf]
        %v2513 = vld [vmem:[#allocation2 + $0x4] sm:$0xf]
        %v2514 = vld [vmem:[#allocation2 + $0xc] sm:$0xf]
        %v2515 = vld [vmem:[#allocation2 + $0x10] sm:$0xf]
        %v2516 = vld [vmem:[#allocation2 + $0x18] sm:$0xf]
        %v2517 = vld [vmem:[#allocation2 + $0x1c] sm:$0xf]
        %v2518 = vld [vmem:[#allocation2 + $0x24] sm:$0xf]
        %v2519 = vld [vmem:[#allocation2 + $0x28] sm:$0xf]
        %v2520 = vld [vmem:[#allocation2 + $0x30] sm:$0xf]
        %v2521 = vld [vmem:[#allocation2 + $0x34] sm:$0xf]
        %v2522 = vld [vmem:[#allocation2 + $0x3c] sm:$0xf]
        %v2523 = vld [vmem:[#allocation2 + $0x40] sm:$0xf]
        %v2524 = vld [vmem:[#allocation2 + $0x48] sm:$0xf]
        %v2525 = vld [vmem:[#allocation2 + $0x4c] sm:$0xf]
        %v2526 = vld [vmem:[#allocation2 + $0x54] sm:$0xf]
        %v2527 = vld [vmem:[#allocation2 + $0x58] sm:$0xf]
        %v2528 = vld [vmem:[#allocation2 + $0x60] sm:$0xf]
        %v2529 = vld [vmem:[#allocation2 + $0x64] sm:$0xf]
        %v2530 = vld [vmem:[#allocation2 + $0x6c] sm:$0xf]
        %v2531 = vld [vmem:[#allocation2 + $0x70] sm:$0xf]
        %v2532 = vld [vmem:[#allocation2 + $0x78] sm:$0xf]
        %v2533 = vld [vmem:[#allocation2 + $0x7c] sm:$0xf]
        %v2534 = vld [vmem:[#allocation2 + $0x84] sm:$0xf]
        %v2535 = vld [vmem:[#allocation2 + $0x88] sm:$0xf]
        %v2536 = vld [vmem:[#allocation2 + $0x90] sm:$0xf]
        %v2537 = vld [vmem:[#allocation2 + $0x94] sm:$0xf]
        %v2538 = vld [vmem:[#allocation2 + $0x9c] sm:$0xf]
        %v2539 = vld [vmem:[#allocation2 + $0xa0] sm:$0xf]
        %v2540 = vld [vmem:[#allocation2 + $0xa8] sm:$0xf]
        %v2541 = vld [vmem:[#allocation2 + $0xac] sm:$0xf]
        %v2542 = vld [vmem:[#allocation2 + $0xb4] sm:$0xf]
        %v2543 = vld [vmem:[#allocation2 + $0xb8] sm:$0xf]
        %v2544 = vld [vmem:[#allocation2 + $0xc0] sm:$0xf]
        %v2545 = vld [vmem:[#allocation2 + $0xc4] sm:$0xf]
        %v2546 = vld [vmem:[#allocation2 + $0xcc] sm:$0xf]
        %v2547 = vld [vmem:[#allocation2 + $0xd0] sm:$0xf]
        %v2580 = vunpack.c.l.b16 %v2514
        %v2581 = vunpack.c.l.b16 %v2515
        %v2582 = vunpack.c.l.b16 %v2516
        %v2583 = vunpack.c.l.b16 %v2517
        %v2584 = vunpack.c.l.b16 %v2518
        %v2585 = vunpack.c.l.b16 %v2519
        %v2586 = vunpack.c.l.b16 %v2520
        %v2587 = vunpack.c.l.b16 %v2521
        %v2588 = vunpack.c.l.b16 %v2522
        %v2589 = vunpack.c.l.b16 %v2523
        %v2590 = vunpack.c.l.b16 %v2524
        %v2591 = vunpack.c.l.b16 %v2525
        %v2592 = vunpack.c.l.b16 %v2526
        %v2593 = vunpack.c.l.b16 %v2527
        %v2594 = vunpack.c.l.b16 %v2528
        %v2595 = vunpack.c.l.b16 %v2529
        %v2596 = vunpack.c.l.b16 %v2530
        %v2597 = vunpack.c.l.b16 %v2531
        %v2598 = vunpack.c.l.b16 %v2532
        %v2599 = vunpack.c.l.b16 %v2533
        %v2600 = vunpack.c.l.b16 %v2534
        %v2601 = vunpack.c.l.b16 %v2535
        %v2602 = vunpack.c.l.b16 %v2536
        %v2603 = vunpack.c.l.b16 %v2537
        %v2604 = vunpack.c.l.b16 %v2538
        %v2605 = vunpack.c.l.b16 %v2539
        %v2606 = vunpack.c.l.b16 %v2540
        %v2607 = vunpack.c.l.b16 %v2541
        %v2608 = vunpack.c.l.b16 %v2542
        %v2609 = vunpack.c.l.b16 %v2543
        %v2610 = vunpack.c.l.b16 %v2544
        %v2611 = vunpack.c.l.b16 %v2545
        %v2612 = vpack.c.b16 %v2581, %v2580
        %v2613 = vpack.c.b16 %v2583, %v2582
        %v2614 = vpack.c.b16 %v2585, %v2584
        %v2615 = vpack.c.b16 %v2587, %v2586
        %v2616 = vpack.c.b16 %v2589, %v2588
        %v2617 = vpack.c.b16 %v2591, %v2590
        %v2618 = vpack.c.b16 %v2593, %v2592
        %v2619 = vpack.c.b16 %v2595, %v2594
        %v2620 = vpack.c.b16 %v2597, %v2596
        %v2621 = vpack.c.b16 %v2599, %v2598
        %v2622 = vpack.c.b16 %v2601, %v2600
        %v2623 = vpack.c.b16 %v2603, %v2602
        %v2624 = vpack.c.b16 %v2605, %v2604
        %v2625 = vpack.c.b16 %v2607, %v2606
        %v2626 = vpack.c.b16 %v2609, %v2608
        %v2627 = vpack.c.b16 %v2611, %v2610
        %vm2628 = vcmask 261120
        %v2630 = vsel %vm2628, %v2612, 0
        %v2633 = vsel %vm2628, %v2613, 0
        %v2636 = vsel %vm2628, %v2614, 0
        %v2639 = vsel %vm2628, %v2615, 0
        %v2642 = vsel %vm2628, %v2616, 0
        %v2645 = vsel %vm2628, %v2617, 0
        %v2648 = vsel %vm2628, %v2618, 0
        %v2651 = vsel %vm2628, %v2619, 0
        %v2654 = vsel %vm2628, %v2620, 0
        %v2657 = vsel %vm2628, %v2621, 0
        %v2660 = vsel %vm2628, %v2622, 0
        %v2663 = vsel %vm2628, %v2623, 0
        %v2666 = vsel %vm2628, %v2624, 0
        %v2669 = vsel %vm2628, %v2625, 0
        %v2672 = vsel %vm2628, %v2626, 0
        %v2675 = vsel %vm2628, %v2627, 0
        %2677 = vmatprep.subr.bf16.mxu0 0
        %2678 = vmatpush1.bf16.msra.mxu0 0
        %2679 = vmatprep.subr.bf16.mxu0 0
        %2680 = vmatpush1.bf16.msra.mxu0 0
        %2681 = vmatprep.subr.bf16.mxu0 0
        %2682 = vmatpush1.bf16.msra.mxu0 0
        %2683 = vmatprep.subr.bf16.mxu0 0
        %2684 = vmatpush1.bf16.msra.mxu0 0
        %2685 = vmatprep.subr.bf16.mxu0 0
        %2686 = vmatpush1.bf16.msra.mxu0 0
        %2687 = vmatprep.subr.bf16.mxu0 0
        %2688 = vmatpush1.bf16.msra.mxu0 0
        %2689 = vmatprep.subr.bf16.mxu0 0
        %2690 = vmatpush1.bf16.msra.mxu0 %v2339
        %2691 = vmatprep.subr.bf16.mxu0 0
        %2692 = vmatpush1.bf16.msra.mxu0 %v2338
        %2693 = vmatprep.subr.bf16.mxu0 0
        %2694 = vmatpush2.bf16.msra.mxu0 0
        %2695 = vmatprep.subr.bf16.mxu0 0
        %2696 = vmatpush2.bf16.msra.mxu0 0
        %2697 = vmatprep.subr.bf16.mxu0 0
        %2698 = vmatpush2.bf16.msra.mxu0 0
        %2699 = vmatprep.subr.bf16.mxu0 0
        %2700 = vmatpush2.bf16.msra.mxu0 0
        %2701 = vmatprep.subr.bf16.mxu0 0
        %2702 = vmatpush2.bf16.msra.mxu0 0
        %2703 = vmatprep.subr.bf16.mxu0 0
        %2704 = vmatpush2.bf16.msra.mxu0 0
        %2705 = vmatprep.subr.bf16.mxu0 0
        %2706 = vmatpush2.bf16.msra.mxu0 0
        %2707 = vmatprep.subr.bf16.mxu0 0
        %2708 = vmatpush2.bf16.msra.mxu0 0
        %2709 = vmatprep.mubr.bf16.mxu0 0
        %2710 = vmatmul.mubr.bf16.gmra.mxu0 %v2630
        %v2711 = vpop.f32.mrf.mxu0
        %v2712 = vadd.f32 0.0, %v2711
        %v2713 = vpop.f32.mrf.mxu0
        %v2714 = vpop.f32.mrf.mxu0
        %v2715 = vadd.f32 0.0, %v2714
        %v2716 = vpop.f32.mrf.mxu0
        %2717 = vmatprep.mubr.bf16.mxu0 0
        %2718 = vmatmul.mubr.bf16.gmra.mxu0 %v2633
        %v2719 = vpop.f32.mrf.mxu0
        %v2720 = vadd.f32 0.0, %v2719
        %v2721 = vpop.f32.mrf.mxu0
        %v2722 = vpop.f32.mrf.mxu0
        %v2723 = vadd.f32 0.0, %v2722
        %v2724 = vpop.f32.mrf.mxu0
        %2725 = vmatprep.mubr.bf16.mxu0 0
        %2726 = vmatmul.mubr.bf16.gmra.mxu0 %v2636
        %v2727 = vpop.f32.mrf.mxu0
        %v2728 = vadd.f32 0.0, %v2727
        %v2729 = vpop.f32.mrf.mxu0
        %v2730 = vpop.f32.mrf.mxu0
        %v2731 = vadd.f32 0.0, %v2730
        %v2732 = vpop.f32.mrf.mxu0
        %2733 = vmatprep.mubr.bf16.mxu0 0
        %2734 = vmatmul.mubr.bf16.gmra.mxu0 %v2639
        %v2735 = vpop.f32.mrf.mxu0
        %v2736 = vadd.f32 0.0, %v2735
        %v2737 = vpop.f32.mrf.mxu0
        %v2738 = vpop.f32.mrf.mxu0
        %v2739 = vadd.f32 0.0, %v2738
        %v2740 = vpop.f32.mrf.mxu0
        %2741 = vmatprep.mubr.bf16.mxu0 0
        %2742 = vmatmul.mubr.bf16.gmra.mxu0 %v2642
        %v2743 = vpop.f32.mrf.mxu0
        %v2744 = vadd.f32 0.0, %v2743
        %v2745 = vpop.f32.mrf.mxu0
        %v2746 = vpop.f32.mrf.mxu0
        %v2747 = vadd.f32 0.0, %v2746
        %v2748 = vpop.f32.mrf.mxu0
        %2749 = vmatprep.mubr.bf16.mxu0 0
        %2750 = vmatmul.mubr.bf16.gmra.mxu0 %v2645
        %v2751 = vpop.f32.mrf.mxu0
        %v2752 = vadd.f32 0.0, %v2751
        %v2753 = vpop.f32.mrf.mxu0
        %v2754 = vpop.f32.mrf.mxu0
        %v2755 = vadd.f32 0.0, %v2754
        %v2756 = vpop.f32.mrf.mxu0
        %2757 = vmatprep.mubr.bf16.mxu0 0
        %2758 = vmatmul.mubr.bf16.gmra.mxu0 %v2648
        %v2759 = vpop.f32.mrf.mxu0
        %v2760 = vadd.f32 0.0, %v2759
        %v2761 = vpop.f32.mrf.mxu0
        %v2762 = vpop.f32.mrf.mxu0
        %v2763 = vadd.f32 0.0, %v2762
        %v2764 = vpop.f32.mrf.mxu0
        %2765 = vmatprep.mubr.bf16.mxu0 0
        %2766 = vmatmul.mubr.bf16.gmra.mxu0 %v2651
        %v2767 = vpop.f32.mrf.mxu0
        %v2768 = vadd.f32 0.0, %v2767
        %v2769 = vpop.f32.mrf.mxu0
        %v2770 = vpop.f32.mrf.mxu0
        %v2771 = vadd.f32 0.0, %v2770
        %v2772 = vpop.f32.mrf.mxu0
        %2773 = vmatprep.mubr.bf16.mxu0 0
        %2774 = vmatmul.mubr.bf16.gmra.mxu0 %v2654
        %v2775 = vpop.f32.mrf.mxu0
        %v2776 = vadd.f32 0.0, %v2775
        %v2777 = vpop.f32.mrf.mxu0
        %v2778 = vpop.f32.mrf.mxu0
        %v2779 = vadd.f32 0.0, %v2778
        %v2780 = vpop.f32.mrf.mxu0
        %2781 = vmatprep.mubr.bf16.mxu0 0
        %2782 = vmatmul.mubr.bf16.gmra.mxu0 %v2657
        %v2783 = vpop.f32.mrf.mxu0
        %v2784 = vadd.f32 0.0, %v2783
        %v2785 = vpop.f32.mrf.mxu0
        %v2786 = vpop.f32.mrf.mxu0
        %v2787 = vadd.f32 0.0, %v2786
        %v2788 = vpop.f32.mrf.mxu0
        %2789 = vmatprep.mubr.bf16.mxu0 0
        %2790 = vmatmul.mubr.bf16.gmra.mxu0 %v2660
        %v2791 = vpop.f32.mrf.mxu0
        %v2792 = vadd.f32 0.0, %v2791
        %v2793 = vpop.f32.mrf.mxu0
        %v2794 = vpop.f32.mrf.mxu0
        %v2795 = vadd.f32 0.0, %v2794
        %v2796 = vpop.f32.mrf.mxu0
        %2797 = vmatprep.mubr.bf16.mxu0 0
        %2798 = vmatmul.mubr.bf16.gmra.mxu0 %v2663
        %v2799 = vpop.f32.mrf.mxu0
        %v2800 = vadd.f32 0.0, %v2799
        %v2801 = vpop.f32.mrf.mxu0
        %v2802 = vpop.f32.mrf.mxu0
        %v2803 = vadd.f32 0.0, %v2802
        %v2804 = vpop.f32.mrf.mxu0
        %2805 = vmatprep.mubr.bf16.mxu0 0
        %2806 = vmatmul.mubr.bf16.gmra.mxu0 %v2666
        %v2807 = vpop.f32.mrf.mxu0
        %v2808 = vadd.f32 0.0, %v2807
        %v2809 = vpop.f32.mrf.mxu0
        %v2810 = vpop.f32.mrf.mxu0
        %v2811 = vadd.f32 0.0, %v2810
        %v2812 = vpop.f32.mrf.mxu0
        %2813 = vmatprep.mubr.bf16.mxu0 0
        %2814 = vmatmul.mubr.bf16.gmra.mxu0 %v2669
        %v2815 = vpop.f32.mrf.mxu0
        %v2816 = vadd.f32 0.0, %v2815
        %v2817 = vpop.f32.mrf.mxu0
        %v2818 = vpop.f32.mrf.mxu0
        %v2819 = vadd.f32 0.0, %v2818
        %v2820 = vpop.f32.mrf.mxu0
        %2821 = vmatprep.mubr.bf16.mxu0 0
        %2822 = vmatmul.mubr.bf16.gmra.mxu0 %v2672
        %v2823 = vpop.f32.mrf.mxu0
        %v2824 = vadd.f32 0.0, %v2823
        %v2825 = vpop.f32.mrf.mxu0
        %v2826 = vpop.f32.mrf.mxu0
        %v2827 = vadd.f32 0.0, %v2826
        %v2828 = vpop.f32.mrf.mxu0
        %2829 = vmatprep.mubr.bf16.mxu0 0
        %2830 = vmatmul.mubr.bf16.gmra.mxu0 %v2675
        %v2831 = vpop.f32.mrf.mxu0
        %v2832 = vadd.f32 0.0, %v2831
        %v2833 = vpop.f32.mrf.mxu0
        %v2834 = vpop.f32.mrf.mxu0
        %v2835 = vadd.f32 0.0, %v2834
        %v2836 = vpop.f32.mrf.mxu0
        %2837 = vdwg.mxu0
        %v2840 = vunpack.c.l.b16 %v2512
        %v2841 = vunpack.c.l.b16 %v2513
        %v2842 = vpack.c.b16 %v2841, %v2840
        %v2844 = vsel %vm2628, %v2842, 0
        %2846 = vmatprep.subr.bf16.mxu0 0
        %2847 = vmatpush1.bf16.msra.mxu0 0
        %2848 = vmatprep.subr.bf16.mxu0 0
        %2849 = vmatpush1.bf16.msra.mxu0 0
        %2850 = vmatprep.subr.bf16.mxu0 0
        %2851 = vmatpush1.bf16.msra.mxu0 0
        %2852 = vmatprep.subr.bf16.mxu0 0
        %2853 = vmatpush1.bf16.msra.mxu0 0
        %2854 = vmatprep.subr.bf16.mxu0 0
        %2855 = vmatpush1.bf16.msra.mxu0 0
        %2856 = vmatprep.subr.bf16.mxu0 0
        %2857 = vmatpush1.bf16.msra.mxu0 0
        %2858 = vmatprep.subr.bf16.mxu0 0
        %2859 = vmatpush1.bf16.msra.mxu0 %v2333
        %2860 = vmatprep.subr.bf16.mxu0 0
        %2861 = vmatpush1.bf16.msra.mxu0 %v2332
        %2862 = vmatprep.subr.bf16.mxu0 0
        %2863 = vmatpush2.bf16.msra.mxu0 0
        %2864 = vmatprep.subr.bf16.mxu0 0
        %2865 = vmatpush2.bf16.msra.mxu0 0
        %2866 = vmatprep.subr.bf16.mxu0 0
        %2867 = vmatpush2.bf16.msra.mxu0 0
        %2868 = vmatprep.subr.bf16.mxu0 0
        %2869 = vmatpush2.bf16.msra.mxu0 0
        %2870 = vmatprep.subr.bf16.mxu0 0
        %2871 = vmatpush2.bf16.msra.mxu0 0
        %2872 = vmatprep.subr.bf16.mxu0 0
        %2873 = vmatpush2.bf16.msra.mxu0 0
        %2874 = vmatprep.subr.bf16.mxu0 0
        %2875 = vmatpush2.bf16.msra.mxu0 0
        %2876 = vmatprep.subr.bf16.mxu0 0
        %2877 = vmatpush2.bf16.msra.mxu0 0
        %2878 = vmatprep.mubr.bf16.mxu0 0
        %2879 = vmatmul.mubr.bf16.gmra.mxu0 %v2844
        %v2880 = vpop.f32.mrf.mxu0
        %v2881 = vadd.f32 %v2712, %v2880
        %v2882 = vpop.f32.mrf.mxu0
        %v2883 = vpop.f32.mrf.mxu0
        %v2884 = vadd.f32 %v2715, %v2883
        %v2885 = vpop.f32.mrf.mxu0
        %2886 = vmatprep.mubr.bf16.mxu0 0
        %2887 = vmatmul.mubr.bf16.gmra.mxu0 %v2630
        %v2888 = vpop.f32.mrf.mxu0
        %v2889 = vadd.f32 %v2720, %v2888
        %v2890 = vpop.f32.mrf.mxu0
        %v2891 = vpop.f32.mrf.mxu0
        %v2892 = vadd.f32 %v2723, %v2891
        %v2893 = vpop.f32.mrf.mxu0
        %2894 = vmatprep.mubr.bf16.mxu0 0
        %2895 = vmatmul.mubr.bf16.gmra.mxu0 %v2633
        %v2896 = vpop.f32.mrf.mxu0
        %v2897 = vadd.f32 %v2728, %v2896
        %v2898 = vpop.f32.mrf.mxu0
        %v2899 = vpop.f32.mrf.mxu0
        %v2900 = vadd.f32 %v2731, %v2899
        %v2901 = vpop.f32.mrf.mxu0
        %2902 = vmatprep.mubr.bf16.mxu0 0
        %2903 = vmatmul.mubr.bf16.gmra.mxu0 %v2636
        %v2904 = vpop.f32.mrf.mxu0
        %v2905 = vadd.f32 %v2736, %v2904
        %v2906 = vpop.f32.mrf.mxu0
        %v2907 = vpop.f32.mrf.mxu0
        %v2908 = vadd.f32 %v2739, %v2907
        %v2909 = vpop.f32.mrf.mxu0
        %2910 = vmatprep.mubr.bf16.mxu0 0
        %2911 = vmatmul.mubr.bf16.gmra.mxu0 %v2639
        %v2912 = vpop.f32.mrf.mxu0
        %v2913 = vadd.f32 %v2744, %v2912
        %v2914 = vpop.f32.mrf.mxu0
        %v2915 = vpop.f32.mrf.mxu0
        %v2916 = vadd.f32 %v2747, %v2915
        %v2917 = vpop.f32.mrf.mxu0
        %2918 = vmatprep.mubr.bf16.mxu0 0
        %2919 = vmatmul.mubr.bf16.gmra.mxu0 %v2642
        %v2920 = vpop.f32.mrf.mxu0
        %v2921 = vadd.f32 %v2752, %v2920
        %v2922 = vpop.f32.mrf.mxu0
        %v2923 = vpop.f32.mrf.mxu0
        %v2924 = vadd.f32 %v2755, %v2923
        %v2925 = vpop.f32.mrf.mxu0
        %2926 = vmatprep.mubr.bf16.mxu0 0
        %2927 = vmatmul.mubr.bf16.gmra.mxu0 %v2645
        %v2928 = vpop.f32.mrf.mxu0
        %v2929 = vadd.f32 %v2760, %v2928
        %v2930 = vpop.f32.mrf.mxu0
        %v2931 = vpop.f32.mrf.mxu0
        %v2932 = vadd.f32 %v2763, %v2931
        %v2933 = vpop.f32.mrf.mxu0
        %2934 = vmatprep.mubr.bf16.mxu0 0
        %2935 = vmatmul.mubr.bf16.gmra.mxu0 %v2648
        %v2936 = vpop.f32.mrf.mxu0
        %v2937 = vadd.f32 %v2768, %v2936
        %v2938 = vpop.f32.mrf.mxu0
        %v2939 = vpop.f32.mrf.mxu0
        %v2940 = vadd.f32 %v2771, %v2939
        %v2941 = vpop.f32.mrf.mxu0
        %2942 = vmatprep.mubr.bf16.mxu0 0
        %2943 = vmatmul.mubr.bf16.gmra.mxu0 %v2651
        %v2944 = vpop.f32.mrf.mxu0
        %v2945 = vadd.f32 %v2776, %v2944
        %v2946 = vpop.f32.mrf.mxu0
        %v2947 = vpop.f32.mrf.mxu0
        %v2948 = vadd.f32 %v2779, %v2947
        %v2949 = vpop.f32.mrf.mxu0
        %2950 = vmatprep.mubr.bf16.mxu0 0
        %2951 = vmatmul.mubr.bf16.gmra.mxu0 %v2654
        %v2952 = vpop.f32.mrf.mxu0
        %v2953 = vadd.f32 %v2784, %v2952
        %v2954 = vpop.f32.mrf.mxu0
        %v2955 = vpop.f32.mrf.mxu0
        %v2956 = vadd.f32 %v2787, %v2955
        %v2957 = vpop.f32.mrf.mxu0
        %2958 = vmatprep.mubr.bf16.mxu0 0
        %2959 = vmatmul.mubr.bf16.gmra.mxu0 %v2657
        %v2960 = vpop.f32.mrf.mxu0
        %v2961 = vadd.f32 %v2792, %v2960
        %v2962 = vpop.f32.mrf.mxu0
        %v2963 = vpop.f32.mrf.mxu0
        %v2964 = vadd.f32 %v2795, %v2963
        %v2965 = vpop.f32.mrf.mxu0
        %2966 = vmatprep.mubr.bf16.mxu0 0
        %2967 = vmatmul.mubr.bf16.gmra.mxu0 %v2660
        %v2968 = vpop.f32.mrf.mxu0
        %v2969 = vadd.f32 %v2800, %v2968
        %v2970 = vpop.f32.mrf.mxu0
        %v2971 = vpop.f32.mrf.mxu0
        %v2972 = vadd.f32 %v2803, %v2971
        %v2973 = vpop.f32.mrf.mxu0
        %2974 = vmatprep.mubr.bf16.mxu0 0
        %2975 = vmatmul.mubr.bf16.gmra.mxu0 %v2663
        %v2976 = vpop.f32.mrf.mxu0
        %v2977 = vadd.f32 %v2808, %v2976
        %v2978 = vpop.f32.mrf.mxu0
        %v2979 = vpop.f32.mrf.mxu0
        %v2980 = vadd.f32 %v2811, %v2979
        %v2981 = vpop.f32.mrf.mxu0
        %2982 = vmatprep.mubr.bf16.mxu0 0
        %2983 = vmatmul.mubr.bf16.gmra.mxu0 %v2666
        %v2984 = vpop.f32.mrf.mxu0
        %v2985 = vadd.f32 %v2816, %v2984
        %v2986 = vpop.f32.mrf.mxu0
        %v2987 = vpop.f32.mrf.mxu0
        %v2988 = vadd.f32 %v2819, %v2987
        %v2989 = vpop.f32.mrf.mxu0
        %2990 = vmatprep.mubr.bf16.mxu0 0
        %2991 = vmatmul.mubr.bf16.gmra.mxu0 %v2669
        %v2992 = vpop.f32.mrf.mxu0
        %v2993 = vadd.f32 %v2824, %v2992
        %v2994 = vpop.f32.mrf.mxu0
        %v2995 = vpop.f32.mrf.mxu0
        %v2996 = vadd.f32 %v2827, %v2995
        %v2997 = vpop.f32.mrf.mxu0
        %2998 = vmatprep.mubr.bf16.mxu0 0
        %2999 = vmatmul.mubr.bf16.gmra.mxu0 %v2672
        %v3000 = vpop.f32.mrf.mxu0
        %v3001 = vadd.f32 %v2832, %v3000
        %v3002 = vpop.f32.mrf.mxu0
        %v3003 = vpop.f32.mrf.mxu0
        %v3004 = vadd.f32 %v2835, %v3003
        %v3005 = vpop.f32.mrf.mxu0
        %3006 = vdwg.mxu0
        %v3009 = vunpack.c.l.b16 %v2546
        %v3010 = vunpack.c.l.b16 %v2547
        %v3011 = vpack.c.b16 %v3010, %v3009
        %v3013 = vsel %vm2628, %v3011, 0
        %3015 = vmatprep.subr.bf16.mxu0 0
        %3016 = vmatpush1.bf16.msra.mxu0 0
        %3017 = vmatprep.subr.bf16.mxu0 0
        %3018 = vmatpush1.bf16.msra.mxu0 0
        %3019 = vmatprep.subr.bf16.mxu0 0
        %3020 = vmatpush1.bf16.msra.mxu0 0
        %3021 = vmatprep.subr.bf16.mxu0 0
        %3022 = vmatpush1.bf16.msra.mxu0 0
        %3023 = vmatprep.subr.bf16.mxu0 0
        %3024 = vmatpush1.bf16.msra.mxu0 0
        %3025 = vmatprep.subr.bf16.mxu0 0
        %3026 = vmatpush1.bf16.msra.mxu0 0
        %3027 = vmatprep.subr.bf16.mxu0 0
        %3028 = vmatpush1.bf16.msra.mxu0 %v2345
        %3029 = vmatprep.subr.bf16.mxu0 0
        %3030 = vmatpush1.bf16.msra.mxu0 %v2344
        %3031 = vmatprep.subr.bf16.mxu0 0
        %3032 = vmatpush2.bf16.msra.mxu0 0
        %3033 = vmatprep.subr.bf16.mxu0 0
        %3034 = vmatpush2.bf16.msra.mxu0 0
        %3035 = vmatprep.subr.bf16.mxu0 0
        %3036 = vmatpush2.bf16.msra.mxu0 0
        %3037 = vmatprep.subr.bf16.mxu0 0
        %3038 = vmatpush2.bf16.msra.mxu0 0
        %3039 = vmatprep.subr.bf16.mxu0 0
        %3040 = vmatpush2.bf16.msra.mxu0 0
        %3041 = vmatprep.subr.bf16.mxu0 0
        %3042 = vmatpush2.bf16.msra.mxu0 0
        %3043 = vmatprep.subr.bf16.mxu0 0
        %3044 = vmatpush2.bf16.msra.mxu0 0
        %3045 = vmatprep.subr.bf16.mxu0 0
        %3046 = vmatpush2.bf16.msra.mxu0 0
        %3047 = vmatprep.mubr.bf16.mxu0 0
        %3048 = vmatmul.mubr.bf16.gmra.mxu0 %v2633
        %v3049 = vpop.f32.mrf.mxu0
        %v3050 = vadd.f32 0.0, %v3049
        %v3051 = vpop.f32.mrf.mxu0
        %v3052 = vpop.f32.mrf.mxu0
        %v3053 = vadd.f32 0.0, %v3052
        %v3054 = vpop.f32.mrf.mxu0
        %3055 = vmatprep.mubr.bf16.mxu0 0
        %3056 = vmatmul.mubr.bf16.gmra.mxu0 %v2636
        %v3057 = vpop.f32.mrf.mxu0
        %v3058 = vadd.f32 0.0, %v3057
        %v3059 = vpop.f32.mrf.mxu0
        %v3060 = vpop.f32.mrf.mxu0
        %v3061 = vadd.f32 0.0, %v3060
        %v3062 = vpop.f32.mrf.mxu0
        %3063 = vmatprep.mubr.bf16.mxu0 0
        %3064 = vmatmul.mubr.bf16.gmra.mxu0 %v2639
        %v3065 = vpop.f32.mrf.mxu0
        %v3066 = vadd.f32 0.0, %v3065
        %v3067 = vpop.f32.mrf.mxu0
        %v3068 = vpop.f32.mrf.mxu0
        %v3069 = vadd.f32 0.0, %v3068
        %v3070 = vpop.f32.mrf.mxu0
        %3071 = vmatprep.mubr.bf16.mxu0 0
        %3072 = vmatmul.mubr.bf16.gmra.mxu0 %v2642
        %v3073 = vpop.f32.mrf.mxu0
        %v3074 = vadd.f32 0.0, %v3073
        %v3075 = vpop.f32.mrf.mxu0
        %v3076 = vpop.f32.mrf.mxu0
        %v3077 = vadd.f32 0.0, %v3076
        %v3078 = vpop.f32.mrf.mxu0
        %3079 = vmatprep.mubr.bf16.mxu0 0
        %3080 = vmatmul.mubr.bf16.gmra.mxu0 %v2645
        %v3081 = vpop.f32.mrf.mxu0
        %v3082 = vadd.f32 0.0, %v3081
        %v3083 = vpop.f32.mrf.mxu0
        %v3084 = vpop.f32.mrf.mxu0
        %v3085 = vadd.f32 0.0, %v3084
        %v3086 = vpop.f32.mrf.mxu0
        %3087 = vmatprep.mubr.bf16.mxu0 0
        %3088 = vmatmul.mubr.bf16.gmra.mxu0 %v2648
        %v3089 = vpop.f32.mrf.mxu0
        %v3090 = vadd.f32 0.0, %v3089
        %v3091 = vpop.f32.mrf.mxu0
        %v3092 = vpop.f32.mrf.mxu0
        %v3093 = vadd.f32 0.0, %v3092
        %v3094 = vpop.f32.mrf.mxu0
        %3095 = vmatprep.mubr.bf16.mxu0 0
        %3096 = vmatmul.mubr.bf16.gmra.mxu0 %v2651
        %v3097 = vpop.f32.mrf.mxu0
        %v3098 = vadd.f32 0.0, %v3097
        %v3099 = vpop.f32.mrf.mxu0
        %v3100 = vpop.f32.mrf.mxu0
        %v3101 = vadd.f32 0.0, %v3100
        %v3102 = vpop.f32.mrf.mxu0
        %3103 = vmatprep.mubr.bf16.mxu0 0
        %3104 = vmatmul.mubr.bf16.gmra.mxu0 %v2654
        %v3105 = vpop.f32.mrf.mxu0
        %v3106 = vadd.f32 0.0, %v3105
        %v3107 = vpop.f32.mrf.mxu0
        %v3108 = vpop.f32.mrf.mxu0
        %v3109 = vadd.f32 0.0, %v3108
        %v3110 = vpop.f32.mrf.mxu0
        %3111 = vmatprep.mubr.bf16.mxu0 0
        %3112 = vmatmul.mubr.bf16.gmra.mxu0 %v2657
        %v3113 = vpop.f32.mrf.mxu0
        %v3114 = vadd.f32 0.0, %v3113
        %v3115 = vpop.f32.mrf.mxu0
        %v3116 = vpop.f32.mrf.mxu0
        %v3117 = vadd.f32 0.0, %v3116
        %v3118 = vpop.f32.mrf.mxu0
        %3119 = vmatprep.mubr.bf16.mxu0 0
        %3120 = vmatmul.mubr.bf16.gmra.mxu0 %v2660
        %v3121 = vpop.f32.mrf.mxu0
        %v3122 = vadd.f32 0.0, %v3121
        %v3123 = vpop.f32.mrf.mxu0
        %v3124 = vpop.f32.mrf.mxu0
        %v3125 = vadd.f32 0.0, %v3124
        %v3126 = vpop.f32.mrf.mxu0
        %3127 = vmatprep.mubr.bf16.mxu0 0
        %3128 = vmatmul.mubr.bf16.gmra.mxu0 %v2663
        %v3129 = vpop.f32.mrf.mxu0
        %v3130 = vadd.f32 0.0, %v3129
        %v3131 = vpop.f32.mrf.mxu0
        %v3132 = vpop.f32.mrf.mxu0
        %v3133 = vadd.f32 0.0, %v3132
        %v3134 = vpop.f32.mrf.mxu0
        %3135 = vmatprep.mubr.bf16.mxu0 0
        %3136 = vmatmul.mubr.bf16.gmra.mxu0 %v2666
        %v3137 = vpop.f32.mrf.mxu0
        %v3138 = vadd.f32 0.0, %v3137
        %v3139 = vpop.f32.mrf.mxu0
        %v3140 = vpop.f32.mrf.mxu0
        %v3141 = vadd.f32 0.0, %v3140
        %v3142 = vpop.f32.mrf.mxu0
        %3143 = vmatprep.mubr.bf16.mxu0 0
        %3144 = vmatmul.mubr.bf16.gmra.mxu0 %v2669
        %v3145 = vpop.f32.mrf.mxu0
        %v3146 = vadd.f32 0.0, %v3145
        %v3147 = vpop.f32.mrf.mxu0
        %v3148 = vpop.f32.mrf.mxu0
        %v3149 = vadd.f32 0.0, %v3148
        %v3150 = vpop.f32.mrf.mxu0
        %3151 = vmatprep.mubr.bf16.mxu0 0
        %3152 = vmatmul.mubr.bf16.gmra.mxu0 %v2672
        %v3153 = vpop.f32.mrf.mxu0
        %v3154 = vadd.f32 0.0, %v3153
        %v3155 = vpop.f32.mrf.mxu0
        %v3156 = vpop.f32.mrf.mxu0
        %v3157 = vadd.f32 0.0, %v3156
        %v3158 = vpop.f32.mrf.mxu0
        %3159 = vmatprep.mubr.bf16.mxu0 0
        %3160 = vmatmul.mubr.bf16.gmra.mxu0 %v2675
        %v3161 = vpop.f32.mrf.mxu0
        %v3162 = vadd.f32 0.0, %v3161
        %v3163 = vpop.f32.mrf.mxu0
        %v3164 = vpop.f32.mrf.mxu0
        %v3165 = vadd.f32 0.0, %v3164
        %v3166 = vpop.f32.mrf.mxu0
        %3167 = vmatprep.mubr.bf16.mxu0 0
        %3168 = vmatmul.mubr.bf16.gmra.mxu0 %v3013
        %v3169 = vpop.f32.mrf.mxu0
        %v3170 = vadd.f32 0.0, %v3169
        %v3171 = vpop.f32.mrf.mxu0
        %v3172 = vpop.f32.mrf.mxu0
        %v3173 = vadd.f32 0.0, %v3172
        %v3174 = vpop.f32.mrf.mxu0
        %3175 = vdwg.mxu0
        %v3176 = vadd.f32 %v2881, %v3050
        %v3177 = vadd.f32 %v2884, %v3053
        %v3178 = vadd.f32 %v2889, %v3058
        %v3179 = vadd.f32 %v2892, %v3061
        %v3180 = vadd.f32 %v2897, %v3066
        %v3181 = vadd.f32 %v2900, %v3069
        %v3182 = vadd.f32 %v2905, %v3074
        %v3183 = vadd.f32 %v2908, %v3077
        %v3184 = vadd.f32 %v2913, %v3082
        %v3185 = vadd.f32 %v2916, %v3085
        %v3186 = vadd.f32 %v2921, %v3090
        %v3187 = vadd.f32 %v2924, %v3093
        %v3188 = vadd.f32 %v2929, %v3098
        %v3189 = vadd.f32 %v2932, %v3101
        %v3190 = vadd.f32 %v2937, %v3106
        %v3191 = vadd.f32 %v2940, %v3109
        %v3192 = vadd.f32 %v2945, %v3114
        %v3193 = vadd.f32 %v2948, %v3117
        %v3194 = vadd.f32 %v2953, %v3122
        %v3195 = vadd.f32 %v2956, %v3125
        %v3196 = vadd.f32 %v2961, %v3130
        %v3197 = vadd.f32 %v2964, %v3133
        %v3198 = vadd.f32 %v2969, %v3138
        %v3199 = vadd.f32 %v2972, %v3141
        %v3200 = vadd.f32 %v2977, %v3146
        %v3201 = vadd.f32 %v2980, %v3149
        %v3202 = vadd.f32 %v2985, %v3154
        %v3203 = vadd.f32 %v2988, %v3157
        %v3204 = vadd.f32 %v2993, %v3162
        %v3205 = vadd.f32 %v2996, %v3165
        %v3206 = vadd.f32 %v3001, %v3170
        %v3207 = vadd.f32 %v3004, %v3173
        %v3208 = vld [vmem:[#allocation2] sm:$0xf]
        %v3209 = vld [vmem:[#allocation2 + $0x4] sm:$0xf]
        %v3210 = vld [vmem:[#allocation2 + $0x8] sm:$0x1]
        %v3211 = vld [vmem:[#allocation2 + $0xc] sm:$0xf]
        %v3212 = vld [vmem:[#allocation2 + $0x10] sm:$0xf]
        %v3213 = vld [vmem:[#allocation2 + $0x14] sm:$0x1]
        %v3214 = vld [vmem:[#allocation2 + $0x18] sm:$0xf]
        %v3215 = vld [vmem:[#allocation2 + $0x1c] sm:$0xf]
        %v3216 = vld [vmem:[#allocation2 + $0x20] sm:$0x1]
        %v3217 = vld [vmem:[#allocation2 + $0x24] sm:$0xf]
        %v3218 = vld [vmem:[#allocation2 + $0x28] sm:$0xf]
        %v3219 = vld [vmem:[#allocation2 + $0x2c] sm:$0x1]
        %v3220 = vld [vmem:[#allocation2 + $0x30] sm:$0xf]
        %v3221 = vld [vmem:[#allocation2 + $0x34] sm:$0xf]
        %v3222 = vld [vmem:[#allocation2 + $0x38] sm:$0x1]
        %v3223 = vld [vmem:[#allocation2 + $0x3c] sm:$0xf]
        %v3224 = vld [vmem:[#allocation2 + $0x40] sm:$0xf]
        %v3225 = vld [vmem:[#allocation2 + $0x44] sm:$0x1]
        %v3226 = vld [vmem:[#allocation2 + $0x48] sm:$0xf]
        %v3227 = vld [vmem:[#allocation2 + $0x4c] sm:$0xf]
        %v3228 = vld [vmem:[#allocation2 + $0x50] sm:$0x1]
        %v3229 = vld [vmem:[#allocation2 + $0x54] sm:$0xf]
        %v3230 = vld [vmem:[#allocation2 + $0x58] sm:$0xf]
        %v3231 = vld [vmem:[#allocation2 + $0x5c] sm:$0x1]
        %v3232 = vld [vmem:[#allocation2 + $0x60] sm:$0xf]
        %v3233 = vld [vmem:[#allocation2 + $0x64] sm:$0xf]
        %v3234 = vld [vmem:[#allocation2 + $0x68] sm:$0x1]
        %v3235 = vld [vmem:[#allocation2 + $0x6c] sm:$0xf]
        %v3236 = vld [vmem:[#allocation2 + $0x70] sm:$0xf]
        %v3237 = vld [vmem:[#allocation2 + $0x74] sm:$0x1]
        %v3238 = vld [vmem:[#allocation2 + $0x78] sm:$0xf]
        %v3239 = vld [vmem:[#allocation2 + $0x7c] sm:$0xf]
        %v3240 = vld [vmem:[#allocation2 + $0x80] sm:$0x1]
        %v3241 = vld [vmem:[#allocation2 + $0x84] sm:$0xf]
        %v3242 = vld [vmem:[#allocation2 + $0x88] sm:$0xf]
        %v3243 = vld [vmem:[#allocation2 + $0x8c] sm:$0x1]
        %v3244 = vld [vmem:[#allocation2 + $0x90] sm:$0xf]
        %v3245 = vld [vmem:[#allocation2 + $0x94] sm:$0xf]
        %v3246 = vld [vmem:[#allocation2 + $0x98] sm:$0x1]
        %v3247 = vld [vmem:[#allocation2 + $0x9c] sm:$0xf]
        %v3248 = vld [vmem:[#allocation2 + $0xa0] sm:$0xf]
        %v3249 = vld [vmem:[#allocation2 + $0xa4] sm:$0x1]
        %v3250 = vld [vmem:[#allocation2 + $0xa8] sm:$0xf]
        %v3251 = vld [vmem:[#allocation2 + $0xac] sm:$0xf]
        %v3252 = vld [vmem:[#allocation2 + $0xb0] sm:$0x1]
        %v3253 = vld [vmem:[#allocation2 + $0xb4] sm:$0xf]
        %v3254 = vld [vmem:[#allocation2 + $0xb8] sm:$0xf]
        %v3255 = vld [vmem:[#allocation2 + $0xbc] sm:$0x1]
        %v3256 = vld [vmem:[#allocation2 + $0xc0] sm:$0xf]
        %v3257 = vld [vmem:[#allocation2 + $0xc4] sm:$0xf]
        %v3258 = vld [vmem:[#allocation2 + $0xc8] sm:$0x1]
        %v3259 = vld [vmem:[#allocation2 + $0xcc] sm:$0xf]
        %v3260 = vld [vmem:[#allocation2 + $0xd0] sm:$0xf]
        %v3261 = vld [vmem:[#allocation2 + $0xd4] sm:$0x1]
        %vm3262 = vsmask.f32 3328
        %vm3263 = vsmask.f32 7440
        %vm3264 = vmor %vm3262, %vm3263
        %v3266 = vshrl.u32 %v3208, 16
        %v3268 = vrot.slane %v3266, 4
        %v3269 = vshll.u32 %v3208, 16
        %v3271 = vrot.slane %v3269, 5
        %v3272 = vor.u32 %v3268, %v3271
        %v3273 = vrot.slane %v3272, 4
        %v3275 = vshll.u32 %v3209, 16
        %v3277 = vrot.slane %v3275, 5
        %v3278 = vsel %vm3264, %v3273, %v3277
        %v3279 = vshrl.u32 %v3209, 16
        %v3281 = vrot.slane %v3279, 4
        %v3282 = vor.u32 %v3281, %v3277
        %v3283 = vrot.slane %v3282, 4
        %v3285 = vshll.u32 %v3210, 16
        %v3287 = vrot.slane %v3285, 5
        %v3288 = vsel %vm3264, %v3283, %v3287
        %v3290 = vshrl.u32 %v3211, 16
        %v3292 = vrot.slane %v3290, 4
        %v3293 = vshll.u32 %v3211, 16
        %v3295 = vrot.slane %v3293, 5
        %v3296 = vor.u32 %v3292, %v3295
        %v3297 = vrot.slane %v3296, 4
        %v3299 = vshll.u32 %v3212, 16
        %v3301 = vrot.slane %v3299, 5
        %v3302 = vsel %vm3264, %v3297, %v3301
        %v3303 = vshrl.u32 %v3212, 16
        %v3305 = vrot.slane %v3303, 4
        %v3306 = vor.u32 %v3305, %v3301
        %v3307 = vrot.slane %v3306, 4
        %v3309 = vshll.u32 %v3213, 16
        %v3311 = vrot.slane %v3309, 5
        %v3312 = vsel %vm3264, %v3307, %v3311
        %v3314 = vshrl.u32 %v3214, 16
        %v3316 = vrot.slane %v3314, 4
        %v3317 = vshll.u32 %v3214, 16
        %v3319 = vrot.slane %v3317, 5
        %v3320 = vor.u32 %v3316, %v3319
        %v3321 = vrot.slane %v3320, 4
        %v3323 = vshll.u32 %v3215, 16
        %v3325 = vrot.slane %v3323, 5
        %v3326 = vsel %vm3264, %v3321, %v3325
        %v3327 = vshrl.u32 %v3215, 16
        %v3329 = vrot.slane %v3327, 4
        %v3330 = vor.u32 %v3329, %v3325
        %v3331 = vrot.slane %v3330, 4
        %v3333 = vshll.u32 %v3216, 16
        %v3335 = vrot.slane %v3333, 5
        %v3336 = vsel %vm3264, %v3331, %v3335
        %v3338 = vshrl.u32 %v3217, 16
        %v3340 = vrot.slane %v3338, 4
        %v3341 = vshll.u32 %v3217, 16
        %v3343 = vrot.slane %v3341, 5
        %v3344 = vor.u32 %v3340, %v3343
        %v3345 = vrot.slane %v3344, 4
        %v3347 = vshll.u32 %v3218, 16
        %v3349 = vrot.slane %v3347, 5
        %v3350 = vsel %vm3264, %v3345, %v3349
        %v3351 = vshrl.u32 %v3218, 16
        %v3353 = vrot.slane %v3351, 4
        %v3354 = vor.u32 %v3353, %v3349
        %v3355 = vrot.slane %v3354, 4
        %v3357 = vshll.u32 %v3219, 16
        %v3359 = vrot.slane %v3357, 5
        %v3360 = vsel %vm3264, %v3355, %v3359
        %v3362 = vshrl.u32 %v3220, 16
        %v3364 = vrot.slane %v3362, 4
        %v3365 = vshll.u32 %v3220, 16
        %v3367 = vrot.slane %v3365, 5
        %v3368 = vor.u32 %v3364, %v3367
        %v3369 = vrot.slane %v3368, 4
        %v3371 = vshll.u32 %v3221, 16
        %v3373 = vrot.slane %v3371, 5
        %v3374 = vsel %vm3264, %v3369, %v3373
        %v3375 = vshrl.u32 %v3221, 16
        %v3377 = vrot.slane %v3375, 4
        %v3378 = vor.u32 %v3377, %v3373
        %v3379 = vrot.slane %v3378, 4
        %v3381 = vshll.u32 %v3222, 16
        %v3383 = vrot.slane %v3381, 5
        %v3384 = vsel %vm3264, %v3379, %v3383
        %v3386 = vshrl.u32 %v3223, 16
        %v3388 = vrot.slane %v3386, 4
        %v3389 = vshll.u32 %v3223, 16
        %v3391 = vrot.slane %v3389, 5
        %v3392 = vor.u32 %v3388, %v3391
        %v3393 = vrot.slane %v3392, 4
        %v3395 = vshll.u32 %v3224, 16
        %v3397 = vrot.slane %v3395, 5
        %v3398 = vsel %vm3264, %v3393, %v3397
        %v3399 = vshrl.u32 %v3224, 16
        %v3401 = vrot.slane %v3399, 4
        %v3402 = vor.u32 %v3401, %v3397
        %v3403 = vrot.slane %v3402, 4
        %v3405 = vshll.u32 %v3225, 16
        %v3407 = vrot.slane %v3405, 5
        %v3408 = vsel %vm3264, %v3403, %v3407
        %v3410 = vshrl.u32 %v3226, 16
        %v3412 = vrot.slane %v3410, 4
        %v3413 = vshll.u32 %v3226, 16
        %v3415 = vrot.slane %v3413, 5
        %v3416 = vor.u32 %v3412, %v3415
        %v3417 = vrot.slane %v3416, 4
        %v3419 = vshll.u32 %v3227, 16
        %v3421 = vrot.slane %v3419, 5
        %v3422 = vsel %vm3264, %v3417, %v3421
        %v3423 = vshrl.u32 %v3227, 16
        %v3425 = vrot.slane %v3423, 4
        %v3426 = vor.u32 %v3425, %v3421
        %v3427 = vrot.slane %v3426, 4
        %v3429 = vshll.u32 %v3228, 16
        %v3431 = vrot.slane %v3429, 5
        %v3432 = vsel %vm3264, %v3427, %v3431
        %v3434 = vshrl.u32 %v3229, 16
        %v3436 = vrot.slane %v3434, 4
        %v3437 = vshll.u32 %v3229, 16
        %v3439 = vrot.slane %v3437, 5
        %v3440 = vor.u32 %v3436, %v3439
        %v3441 = vrot.slane %v3440, 4
        %v3443 = vshll.u32 %v3230, 16
        %v3445 = vrot.slane %v3443, 5
        %v3446 = vsel %vm3264, %v3441, %v3445
        %v3447 = vshrl.u32 %v3230, 16
        %v3449 = vrot.slane %v3447, 4
        %v3450 = vor.u32 %v3449, %v3445
        %v3451 = vrot.slane %v3450, 4
        %v3453 = vshll.u32 %v3231, 16
        %v3455 = vrot.slane %v3453, 5
        %v3456 = vsel %vm3264, %v3451, %v3455
        %v3458 = vshrl.u32 %v3232, 16
        %v3460 = vrot.slane %v3458, 4
        %v3461 = vshll.u32 %v3232, 16
        %v3463 = vrot.slane %v3461, 5
        %v3464 = vor.u32 %v3460, %v3463
        %v3465 = vrot.slane %v3464, 4
        %v3467 = vshll.u32 %v3233, 16
        %v3469 = vrot.slane %v3467, 5
        %v3470 = vsel %vm3264, %v3465, %v3469
        %v3471 = vshrl.u32 %v3233, 16
        %v3473 = vrot.slane %v3471, 4
        %v3474 = vor.u32 %v3473, %v3469
        %v3475 = vrot.slane %v3474, 4
        %v3477 = vshll.u32 %v3234, 16
        %v3479 = vrot.slane %v3477, 5
        %v3480 = vsel %vm3264, %v3475, %v3479
        %v3482 = vshrl.u32 %v3235, 16
        %v3484 = vrot.slane %v3482, 4
        %v3485 = vshll.u32 %v3235, 16
        %v3487 = vrot.slane %v3485, 5
        %v3488 = vor.u32 %v3484, %v3487
        %v3489 = vrot.slane %v3488, 4
        %v3491 = vshll.u32 %v3236, 16
        %v3493 = vrot.slane %v3491, 5
        %v3494 = vsel %vm3264, %v3489, %v3493
        %v3495 = vshrl.u32 %v3236, 16
        %v3497 = vrot.slane %v3495, 4
        %v3498 = vor.u32 %v3497, %v3493
        %v3499 = vrot.slane %v3498, 4
        %v3501 = vshll.u32 %v3237, 16
        %v3503 = vrot.slane %v3501, 5
        %v3504 = vsel %vm3264, %v3499, %v3503
        %v3506 = vshrl.u32 %v3238, 16
        %v3508 = vrot.slane %v3506, 4
        %v3509 = vshll.u32 %v3238, 16
        %v3511 = vrot.slane %v3509, 5
        %v3512 = vor.u32 %v3508, %v3511
        %v3513 = vrot.slane %v3512, 4
        %v3515 = vshll.u32 %v3239, 16
        %v3517 = vrot.slane %v3515, 5
        %v3518 = vsel %vm3264, %v3513, %v3517
        %v3519 = vshrl.u32 %v3239, 16
        %v3521 = vrot.slane %v3519, 4
        %v3522 = vor.u32 %v3521, %v3517
        %v3523 = vrot.slane %v3522, 4
        %v3525 = vshll.u32 %v3240, 16
        %v3527 = vrot.slane %v3525, 5
        %v3528 = vsel %vm3264, %v3523, %v3527
        %v3530 = vshrl.u32 %v3241, 16
        %v3532 = vrot.slane %v3530, 4
        %v3533 = vshll.u32 %v3241, 16
        %v3535 = vrot.slane %v3533, 5
        %v3536 = vor.u32 %v3532, %v3535
        %v3537 = vrot.slane %v3536, 4
        %v3539 = vshll.u32 %v3242, 16
        %v3541 = vrot.slane %v3539, 5
        %v3542 = vsel %vm3264, %v3537, %v3541
        %v3543 = vshrl.u32 %v3242, 16
        %v3545 = vrot.slane %v3543, 4
        %v3546 = vor.u32 %v3545, %v3541
        %v3547 = vrot.slane %v3546, 4
        %v3549 = vshll.u32 %v3243, 16
        %v3551 = vrot.slane %v3549, 5
        %v3552 = vsel %vm3264, %v3547, %v3551
        %v3554 = vshrl.u32 %v3244, 16
        %v3556 = vrot.slane %v3554, 4
        %v3557 = vshll.u32 %v3244, 16
        %v3559 = vrot.slane %v3557, 5
        %v3560 = vor.u32 %v3556, %v3559
        %v3561 = vrot.slane %v3560, 4
        %v3563 = vshll.u32 %v3245, 16
        %v3565 = vrot.slane %v3563, 5
        %v3566 = vsel %vm3264, %v3561, %v3565
        %v3567 = vshrl.u32 %v3245, 16
        %v3569 = vrot.slane %v3567, 4
        %v3570 = vor.u32 %v3569, %v3565
        %v3571 = vrot.slane %v3570, 4
        %v3573 = vshll.u32 %v3246, 16
        %v3575 = vrot.slane %v3573, 5
        %v3576 = vsel %vm3264, %v3571, %v3575
        %v3578 = vshrl.u32 %v3247, 16
        %v3580 = vrot.slane %v3578, 4
        %v3581 = vshll.u32 %v3247, 16
        %v3583 = vrot.slane %v3581, 5
        %v3584 = vor.u32 %v3580, %v3583
        %v3585 = vrot.slane %v3584, 4
        %v3587 = vshll.u32 %v3248, 16
        %v3589 = vrot.slane %v3587, 5
        %v3590 = vsel %vm3264, %v3585, %v3589
        %v3591 = vshrl.u32 %v3248, 16
        %v3593 = vrot.slane %v3591, 4
        %v3594 = vor.u32 %v3593, %v3589
        %v3595 = vrot.slane %v3594, 4
        %v3597 = vshll.u32 %v3249, 16
        %v3599 = vrot.slane %v3597, 5
        %v3600 = vsel %vm3264, %v3595, %v3599
        %v3602 = vshrl.u32 %v3250, 16
        %v3604 = vrot.slane %v3602, 4
        %v3605 = vshll.u32 %v3250, 16
        %v3607 = vrot.slane %v3605, 5
        %v3608 = vor.u32 %v3604, %v3607
        %v3609 = vrot.slane %v3608, 4
        %v3611 = vshll.u32 %v3251, 16
        %v3613 = vrot.slane %v3611, 5
        %v3614 = vsel %vm3264, %v3609, %v3613
        %v3615 = vshrl.u32 %v3251, 16
        %v3617 = vrot.slane %v3615, 4
        %v3618 = vor.u32 %v3617, %v3613
        %v3619 = vrot.slane %v3618, 4
        %v3621 = vshll.u32 %v3252, 16
        %v3623 = vrot.slane %v3621, 5
        %v3624 = vsel %vm3264, %v3619, %v3623
        %v3626 = vshrl.u32 %v3253, 16
        %v3628 = vrot.slane %v3626, 4
        %v3629 = vshll.u32 %v3253, 16
        %v3631 = vrot.slane %v3629, 5
        %v3632 = vor.u32 %v3628, %v3631
        %v3633 = vrot.slane %v3632, 4
        %v3635 = vshll.u32 %v3254, 16
        %v3637 = vrot.slane %v3635, 5
        %v3638 = vsel %vm3264, %v3633, %v3637
        %v3639 = vshrl.u32 %v3254, 16
        %v3641 = vrot.slane %v3639, 4
        %v3642 = vor.u32 %v3641, %v3637
        %v3643 = vrot.slane %v3642, 4
        %v3645 = vshll.u32 %v3255, 16
        %v3647 = vrot.slane %v3645, 5
        %v3648 = vsel %vm3264, %v3643, %v3647
        %v3649 = vunpack.c.l.b16 %v3278
        %v3650 = vunpack.c.l.b16 %v3288
        %v3651 = vunpack.c.l.b16 %v3302
        %v3652 = vunpack.c.l.b16 %v3312
        %v3653 = vunpack.c.l.b16 %v3326
        %v3654 = vunpack.c.l.b16 %v3336
        %v3655 = vunpack.c.l.b16 %v3350
        %v3656 = vunpack.c.l.b16 %v3360
        %v3657 = vunpack.c.l.b16 %v3374
        %v3658 = vunpack.c.l.b16 %v3384
        %v3659 = vunpack.c.l.b16 %v3398
        %v3660 = vunpack.c.l.b16 %v3408
        %v3661 = vunpack.c.l.b16 %v3422
        %v3662 = vunpack.c.l.b16 %v3432
        %v3663 = vunpack.c.l.b16 %v3446
        %v3664 = vunpack.c.l.b16 %v3456
        %v3665 = vunpack.c.l.b16 %v3470
        %v3666 = vunpack.c.l.b16 %v3480
        %v3667 = vunpack.c.l.b16 %v3494
        %v3668 = vunpack.c.l.b16 %v3504
        %v3669 = vunpack.c.l.b16 %v3518
        %v3670 = vunpack.c.l.b16 %v3528
        %v3671 = vunpack.c.l.b16 %v3542
        %v3672 = vunpack.c.l.b16 %v3552
        %v3673 = vunpack.c.l.b16 %v3566
        %v3674 = vunpack.c.l.b16 %v3576
        %v3675 = vunpack.c.l.b16 %v3590
        %v3676 = vunpack.c.l.b16 %v3600
        %v3677 = vunpack.c.l.b16 %v3614
        %v3678 = vunpack.c.l.b16 %v3624
        %v3679 = vunpack.c.l.b16 %v3638
        %v3680 = vunpack.c.l.b16 %v3648
        %v3681 = vpack.c.b16 %v3650, %v3649
        %v3682 = vpack.c.b16 %v3652, %v3651
        %v3683 = vpack.c.b16 %v3654, %v3653
        %v3684 = vpack.c.b16 %v3656, %v3655
        %v3685 = vpack.c.b16 %v3658, %v3657
        %v3686 = vpack.c.b16 %v3660, %v3659
        %v3687 = vpack.c.b16 %v3662, %v3661
        %v3688 = vpack.c.b16 %v3664, %v3663
        %v3689 = vpack.c.b16 %v3666, %v3665
        %v3690 = vpack.c.b16 %v3668, %v3667
        %v3691 = vpack.c.b16 %v3670, %v3669
        %v3692 = vpack.c.b16 %v3672, %v3671
        %v3693 = vpack.c.b16 %v3674, %v3673
        %v3694 = vpack.c.b16 %v3676, %v3675
        %v3695 = vpack.c.b16 %v3678, %v3677
        %v3696 = vpack.c.b16 %v3680, %v3679
        %v3698 = vsel %vm2628, %v3681, 0
        %v3701 = vsel %vm2628, %v3682, 0
        %v3704 = vsel %vm2628, %v3683, 0
        %v3707 = vsel %vm2628, %v3684, 0
        %v3710 = vsel %vm2628, %v3685, 0
        %v3713 = vsel %vm2628, %v3686, 0
        %v3716 = vsel %vm2628, %v3687, 0
        %v3719 = vsel %vm2628, %v3688, 0
        %v3722 = vsel %vm2628, %v3689, 0
        %v3725 = vsel %vm2628, %v3690, 0
        %v3728 = vsel %vm2628, %v3691, 0
        %v3731 = vsel %vm2628, %v3692, 0
        %v3734 = vsel %vm2628, %v3693, 0
        %v3737 = vsel %vm2628, %v3694, 0
        %v3740 = vsel %vm2628, %v3695, 0
        %v3743 = vsel %vm2628, %v3696, 0
        %3745 = vmatprep.subr.bf16.mxu0 0
        %3746 = vmatpush1.bf16.msra.mxu0 0
        %3747 = vmatprep.subr.bf16.mxu0 0
        %3748 = vmatpush1.bf16.msra.mxu0 0
        %3749 = vmatprep.subr.bf16.mxu0 0
        %3750 = vmatpush1.bf16.msra.mxu0 0
        %3751 = vmatprep.subr.bf16.mxu0 0
        %3752 = vmatpush1.bf16.msra.mxu0 0
        %3753 = vmatprep.subr.bf16.mxu0 0
        %3754 = vmatpush1.bf16.msra.mxu0 0
        %3755 = vmatprep.subr.bf16.mxu0 0
        %3756 = vmatpush1.bf16.msra.mxu0 0
        %3757 = vmatprep.subr.bf16.mxu0 0
        %3758 = vmatpush1.bf16.msra.mxu0 %v2335
        %3759 = vmatprep.subr.bf16.mxu0 0
        %3760 = vmatpush1.bf16.msra.mxu0 %v2334
        %3761 = vmatprep.subr.bf16.mxu0 0
        %3762 = vmatpush2.bf16.msra.mxu0 0
        %3763 = vmatprep.subr.bf16.mxu0 0
        %3764 = vmatpush2.bf16.msra.mxu0 0
        %3765 = vmatprep.subr.bf16.mxu0 0
        %3766 = vmatpush2.bf16.msra.mxu0 0
        %3767 = vmatprep.subr.bf16.mxu0 0
        %3768 = vmatpush2.bf16.msra.mxu0 0
        %3769 = vmatprep.subr.bf16.mxu0 0
        %3770 = vmatpush2.bf16.msra.mxu0 0
        %3771 = vmatprep.subr.bf16.mxu0 0
        %3772 = vmatpush2.bf16.msra.mxu0 0
        %3773 = vmatprep.subr.bf16.mxu0 0
        %3774 = vmatpush2.bf16.msra.mxu0 0
        %3775 = vmatprep.subr.bf16.mxu0 0
        %3776 = vmatpush2.bf16.msra.mxu0 0
        %3777 = vmatprep.mubr.bf16.mxu0 0
        %3778 = vmatmul.mubr.bf16.gmra.mxu0 %v3698
        %v3779 = vpop.f32.mrf.mxu0
        %v3780 = vadd.f32 0.0, %v3779
        %v3781 = vpop.f32.mrf.mxu0
        %v3782 = vpop.f32.mrf.mxu0
        %v3783 = vadd.f32 0.0, %v3782
        %v3784 = vpop.f32.mrf.mxu0
        %3785 = vmatprep.mubr.bf16.mxu0 0
        %3786 = vmatmul.mubr.bf16.gmra.mxu0 %v3701
        %v3787 = vpop.f32.mrf.mxu0
        %v3788 = vadd.f32 0.0, %v3787
        %v3789 = vpop.f32.mrf.mxu0
        %v3790 = vpop.f32.mrf.mxu0
        %v3791 = vadd.f32 0.0, %v3790
        %v3792 = vpop.f32.mrf.mxu0
        %3793 = vmatprep.mubr.bf16.mxu0 0
        %3794 = vmatmul.mubr.bf16.gmra.mxu0 %v3704
        %v3795 = vpop.f32.mrf.mxu0
        %v3796 = vadd.f32 0.0, %v3795
        %v3797 = vpop.f32.mrf.mxu0
        %v3798 = vpop.f32.mrf.mxu0
        %v3799 = vadd.f32 0.0, %v3798
        %v3800 = vpop.f32.mrf.mxu0
        %3801 = vmatprep.mubr.bf16.mxu0 0
        %3802 = vmatmul.mubr.bf16.gmra.mxu0 %v3707
        %v3803 = vpop.f32.mrf.mxu0
        %v3804 = vadd.f32 0.0, %v3803
        %v3805 = vpop.f32.mrf.mxu0
        %v3806 = vpop.f32.mrf.mxu0
        %v3807 = vadd.f32 0.0, %v3806
        %v3808 = vpop.f32.mrf.mxu0
        %3809 = vmatprep.mubr.bf16.mxu0 0
        %3810 = vmatmul.mubr.bf16.gmra.mxu0 %v3710
        %v3811 = vpop.f32.mrf.mxu0
        %v3812 = vadd.f32 0.0, %v3811
        %v3813 = vpop.f32.mrf.mxu0
        %v3814 = vpop.f32.mrf.mxu0
        %v3815 = vadd.f32 0.0, %v3814
        %v3816 = vpop.f32.mrf.mxu0
        %3817 = vmatprep.mubr.bf16.mxu0 0
        %3818 = vmatmul.mubr.bf16.gmra.mxu0 %v3713
        %v3819 = vpop.f32.mrf.mxu0
        %v3820 = vadd.f32 0.0, %v3819
        %v3821 = vpop.f32.mrf.mxu0
        %v3822 = vpop.f32.mrf.mxu0
        %v3823 = vadd.f32 0.0, %v3822
        %v3824 = vpop.f32.mrf.mxu0
        %3825 = vmatprep.mubr.bf16.mxu0 0
        %3826 = vmatmul.mubr.bf16.gmra.mxu0 %v3716
        %v3827 = vpop.f32.mrf.mxu0
        %v3828 = vadd.f32 0.0, %v3827
        %v3829 = vpop.f32.mrf.mxu0
        %v3830 = vpop.f32.mrf.mxu0
        %v3831 = vadd.f32 0.0, %v3830
        %v3832 = vpop.f32.mrf.mxu0
        %3833 = vmatprep.mubr.bf16.mxu0 0
        %3834 = vmatmul.mubr.bf16.gmra.mxu0 %v3719
        %v3835 = vpop.f32.mrf.mxu0
        %v3836 = vadd.f32 0.0, %v3835
        %v3837 = vpop.f32.mrf.mxu0
        %v3838 = vpop.f32.mrf.mxu0
        %v3839 = vadd.f32 0.0, %v3838
        %v3840 = vpop.f32.mrf.mxu0
        %3841 = vmatprep.mubr.bf16.mxu0 0
        %3842 = vmatmul.mubr.bf16.gmra.mxu0 %v3722
        %v3843 = vpop.f32.mrf.mxu0
        %v3844 = vadd.f32 0.0, %v3843
        %v3845 = vpop.f32.mrf.mxu0
        %v3846 = vpop.f32.mrf.mxu0
        %v3847 = vadd.f32 0.0, %v3846
        %v3848 = vpop.f32.mrf.mxu0
        %3849 = vmatprep.mubr.bf16.mxu0 0
        %3850 = vmatmul.mubr.bf16.gmra.mxu0 %v3725
        %v3851 = vpop.f32.mrf.mxu0
        %v3852 = vadd.f32 0.0, %v3851
        %v3853 = vpop.f32.mrf.mxu0
        %v3854 = vpop.f32.mrf.mxu0
        %v3855 = vadd.f32 0.0, %v3854
        %v3856 = vpop.f32.mrf.mxu0
        %3857 = vmatprep.mubr.bf16.mxu0 0
        %3858 = vmatmul.mubr.bf16.gmra.mxu0 %v3728
        %v3859 = vpop.f32.mrf.mxu0
        %v3860 = vadd.f32 0.0, %v3859
        %v3861 = vpop.f32.mrf.mxu0
        %v3862 = vpop.f32.mrf.mxu0
        %v3863 = vadd.f32 0.0, %v3862
        %v3864 = vpop.f32.mrf.mxu0
        %3865 = vmatprep.mubr.bf16.mxu0 0
        %3866 = vmatmul.mubr.bf16.gmra.mxu0 %v3731
        %v3867 = vpop.f32.mrf.mxu0
        %v3868 = vadd.f32 0.0, %v3867
        %v3869 = vpop.f32.mrf.mxu0
        %v3870 = vpop.f32.mrf.mxu0
        %v3871 = vadd.f32 0.0, %v3870
        %v3872 = vpop.f32.mrf.mxu0
        %3873 = vmatprep.mubr.bf16.mxu0 0
        %3874 = vmatmul.mubr.bf16.gmra.mxu0 %v3734
        %v3875 = vpop.f32.mrf.mxu0
        %v3876 = vadd.f32 0.0, %v3875
        %v3877 = vpop.f32.mrf.mxu0
        %v3878 = vpop.f32.mrf.mxu0
        %v3879 = vadd.f32 0.0, %v3878
        %v3880 = vpop.f32.mrf.mxu0
        %3881 = vmatprep.mubr.bf16.mxu0 0
        %3882 = vmatmul.mubr.bf16.gmra.mxu0 %v3737
        %v3883 = vpop.f32.mrf.mxu0
        %v3884 = vadd.f32 0.0, %v3883
        %v3885 = vpop.f32.mrf.mxu0
        %v3886 = vpop.f32.mrf.mxu0
        %v3887 = vadd.f32 0.0, %v3886
        %v3888 = vpop.f32.mrf.mxu0
        %3889 = vmatprep.mubr.bf16.mxu0 0
        %3890 = vmatmul.mubr.bf16.gmra.mxu0 %v3740
        %v3891 = vpop.f32.mrf.mxu0
        %v3892 = vadd.f32 0.0, %v3891
        %v3893 = vpop.f32.mrf.mxu0
        %v3894 = vpop.f32.mrf.mxu0
        %v3895 = vadd.f32 0.0, %v3894
        %v3896 = vpop.f32.mrf.mxu0
        %3897 = vmatprep.mubr.bf16.mxu0 0
        %3898 = vmatmul.mubr.bf16.gmra.mxu0 %v3743
        %v3899 = vpop.f32.mrf.mxu0
        %v3900 = vadd.f32 0.0, %v3899
        %v3901 = vpop.f32.mrf.mxu0
        %v3902 = vpop.f32.mrf.mxu0
        %v3903 = vadd.f32 0.0, %v3902
        %v3904 = vpop.f32.mrf.mxu0
        %3905 = vdwg.mxu0
        %v3906 = vadd.f32 %v3176, %v3780
        %v3907 = vadd.f32 %v3177, %v3783
        %v3908 = vadd.f32 %v3178, %v3788
        %v3909 = vadd.f32 %v3179, %v3791
        %v3910 = vadd.f32 %v3180, %v3796
        %v3911 = vadd.f32 %v3181, %v3799
        %v3912 = vadd.f32 %v3182, %v3804
        %v3913 = vadd.f32 %v3183, %v3807
        %v3914 = vadd.f32 %v3184, %v3812
        %v3915 = vadd.f32 %v3185, %v3815
        %v3916 = vadd.f32 %v3186, %v3820
        %v3917 = vadd.f32 %v3187, %v3823
        %v3918 = vadd.f32 %v3188, %v3828
        %v3919 = vadd.f32 %v3189, %v3831
        %v3920 = vadd.f32 %v3190, %v3836
        %v3921 = vadd.f32 %v3191, %v3839
        %v3922 = vadd.f32 %v3192, %v3844
        %v3923 = vadd.f32 %v3193, %v3847
        %v3924 = vadd.f32 %v3194, %v3852
        %v3925 = vadd.f32 %v3195, %v3855
        %v3926 = vadd.f32 %v3196, %v3860
        %v3927 = vadd.f32 %v3197, %v3863
        %v3928 = vadd.f32 %v3198, %v3868
        %v3929 = vadd.f32 %v3199, %v3871
        %v3930 = vadd.f32 %v3200, %v3876
        %v3931 = vadd.f32 %v3201, %v3879
        %v3932 = vadd.f32 %v3202, %v3884
        %v3933 = vadd.f32 %v3203, %v3887
        %v3934 = vadd.f32 %v3204, %v3892
        %v3935 = vadd.f32 %v3205, %v3895
        %v3936 = vadd.f32 %v3206, %v3900
        %v3937 = vadd.f32 %v3207, %v3903
        %v3939 = vshrl.u32 %v3256, 16
        %v3941 = vrot.slane %v3939, 4
        %v3942 = vshll.u32 %v3256, 16
        %v3944 = vrot.slane %v3942, 5
        %v3945 = vor.u32 %v3941, %v3944
        %v3946 = vrot.slane %v3945, 4
        %v3948 = vshll.u32 %v3257, 16
        %v3950 = vrot.slane %v3948, 5
        %v3951 = vsel %vm3264, %v3946, %v3950
        %v3952 = vshrl.u32 %v3257, 16
        %v3954 = vrot.slane %v3952, 4
        %v3955 = vor.u32 %v3954, %v3950
        %v3956 = vrot.slane %v3955, 4
        %v3958 = vshll.u32 %v3258, 16
        %v3960 = vrot.slane %v3958, 5
        %v3961 = vsel %vm3264, %v3956, %v3960
        %v3962 = vunpack.c.l.b16 %v3951
        %v3963 = vunpack.c.l.b16 %v3961
        %v3964 = vpack.c.b16 %v3963, %v3962
        %v3966 = vsel %vm2628, %v3964, 0
        %3968 = vmatprep.subr.bf16.mxu0 0
        %3969 = vmatpush1.bf16.msra.mxu0 0
        %3970 = vmatprep.subr.bf16.mxu0 0
        %3971 = vmatpush1.bf16.msra.mxu0 0
        %3972 = vmatprep.subr.bf16.mxu0 0
        %3973 = vmatpush1.bf16.msra.mxu0 0
        %3974 = vmatprep.subr.bf16.mxu0 0
        %3975 = vmatpush1.bf16.msra.mxu0 0
        %3976 = vmatprep.subr.bf16.mxu0 0
        %3977 = vmatpush1.bf16.msra.mxu0 0
        %3978 = vmatprep.subr.bf16.mxu0 0
        %3979 = vmatpush1.bf16.msra.mxu0 0
        %3980 = vmatprep.subr.bf16.mxu0 0
        %3981 = vmatpush1.bf16.msra.mxu0 %v2341
        %3982 = vmatprep.subr.bf16.mxu0 0
        %3983 = vmatpush1.bf16.msra.mxu0 %v2340
        %3984 = vmatprep.subr.bf16.mxu0 0
        %3985 = vmatpush2.bf16.msra.mxu0 0
        %3986 = vmatprep.subr.bf16.mxu0 0
        %3987 = vmatpush2.bf16.msra.mxu0 0
        %3988 = vmatprep.subr.bf16.mxu0 0
        %3989 = vmatpush2.bf16.msra.mxu0 0
        %3990 = vmatprep.subr.bf16.mxu0 0
        %3991 = vmatpush2.bf16.msra.mxu0 0
        %3992 = vmatprep.subr.bf16.mxu0 0
        %3993 = vmatpush2.bf16.msra.mxu0 0
        %3994 = vmatprep.subr.bf16.mxu0 0
        %3995 = vmatpush2.bf16.msra.mxu0 0
        %3996 = vmatprep.subr.bf16.mxu0 0
        %3997 = vmatpush2.bf16.msra.mxu0 0
        %3998 = vmatprep.subr.bf16.mxu0 0
        %3999 = vmatpush2.bf16.msra.mxu0 0
        %4000 = vmatprep.mubr.bf16.mxu0 0
        %4001 = vmatmul.mubr.bf16.gmra.mxu0 %v3701
        %v4002 = vpop.f32.mrf.mxu0
        %v4003 = vadd.f32 0.0, %v4002
        %v4004 = vpop.f32.mrf.mxu0
        %v4005 = vpop.f32.mrf.mxu0
        %v4006 = vadd.f32 0.0, %v4005
        %v4007 = vpop.f32.mrf.mxu0
        %4008 = vmatprep.mubr.bf16.mxu0 0
        %4009 = vmatmul.mubr.bf16.gmra.mxu0 %v3704
        %v4010 = vpop.f32.mrf.mxu0
        %v4011 = vadd.f32 0.0, %v4010
        %v4012 = vpop.f32.mrf.mxu0
        %v4013 = vpop.f32.mrf.mxu0
        %v4014 = vadd.f32 0.0, %v4013
        %v4015 = vpop.f32.mrf.mxu0
        %4016 = vmatprep.mubr.bf16.mxu0 0
        %4017 = vmatmul.mubr.bf16.gmra.mxu0 %v3707
        %v4018 = vpop.f32.mrf.mxu0
        %v4019 = vadd.f32 0.0, %v4018
        %v4020 = vpop.f32.mrf.mxu0
        %v4021 = vpop.f32.mrf.mxu0
        %v4022 = vadd.f32 0.0, %v4021
        %v4023 = vpop.f32.mrf.mxu0
        %4024 = vmatprep.mubr.bf16.mxu0 0
        %4025 = vmatmul.mubr.bf16.gmra.mxu0 %v3710
        %v4026 = vpop.f32.mrf.mxu0
        %v4027 = vadd.f32 0.0, %v4026
        %v4028 = vpop.f32.mrf.mxu0
        %v4029 = vpop.f32.mrf.mxu0
        %v4030 = vadd.f32 0.0, %v4029
        %v4031 = vpop.f32.mrf.mxu0
        %4032 = vmatprep.mubr.bf16.mxu0 0
        %4033 = vmatmul.mubr.bf16.gmra.mxu0 %v3713
        %v4034 = vpop.f32.mrf.mxu0
        %v4035 = vadd.f32 0.0, %v4034
        %v4036 = vpop.f32.mrf.mxu0
        %v4037 = vpop.f32.mrf.mxu0
        %v4038 = vadd.f32 0.0, %v4037
        %v4039 = vpop.f32.mrf.mxu0
        %4040 = vmatprep.mubr.bf16.mxu0 0
        %4041 = vmatmul.mubr.bf16.gmra.mxu0 %v3716
        %v4042 = vpop.f32.mrf.mxu0
        %v4043 = vadd.f32 0.0, %v4042
        %v4044 = vpop.f32.mrf.mxu0
        %v4045 = vpop.f32.mrf.mxu0
        %v4046 = vadd.f32 0.0, %v4045
        %v4047 = vpop.f32.mrf.mxu0
        %4048 = vmatprep.mubr.bf16.mxu0 0
        %4049 = vmatmul.mubr.bf16.gmra.mxu0 %v3719
        %v4050 = vpop.f32.mrf.mxu0
        %v4051 = vadd.f32 0.0, %v4050
        %v4052 = vpop.f32.mrf.mxu0
        %v4053 = vpop.f32.mrf.mxu0
        %v4054 = vadd.f32 0.0, %v4053
        %v4055 = vpop.f32.mrf.mxu0
        %4056 = vmatprep.mubr.bf16.mxu0 0
        %4057 = vmatmul.mubr.bf16.gmra.mxu0 %v3722
        %v4058 = vpop.f32.mrf.mxu0
        %v4059 = vadd.f32 0.0, %v4058
        %v4060 = vpop.f32.mrf.mxu0
        %v4061 = vpop.f32.mrf.mxu0
        %v4062 = vadd.f32 0.0, %v4061
        %v4063 = vpop.f32.mrf.mxu0
        %4064 = vmatprep.mubr.bf16.mxu0 0
        %4065 = vmatmul.mubr.bf16.gmra.mxu0 %v3725
        %v4066 = vpop.f32.mrf.mxu0
        %v4067 = vadd.f32 0.0, %v4066
        %v4068 = vpop.f32.mrf.mxu0
        %v4069 = vpop.f32.mrf.mxu0
        %v4070 = vadd.f32 0.0, %v4069
        %v4071 = vpop.f32.mrf.mxu0
        %4072 = vmatprep.mubr.bf16.mxu0 0
        %4073 = vmatmul.mubr.bf16.gmra.mxu0 %v3728
        %v4074 = vpop.f32.mrf.mxu0
        %v4075 = vadd.f32 0.0, %v4074
        %v4076 = vpop.f32.mrf.mxu0
        %v4077 = vpop.f32.mrf.mxu0
        %v4078 = vadd.f32 0.0, %v4077
        %v4079 = vpop.f32.mrf.mxu0
        %4080 = vmatprep.mubr.bf16.mxu0 0
        %4081 = vmatmul.mubr.bf16.gmra.mxu0 %v3731
        %v4082 = vpop.f32.mrf.mxu0
        %v4083 = vadd.f32 0.0, %v4082
        %v4084 = vpop.f32.mrf.mxu0
        %v4085 = vpop.f32.mrf.mxu0
        %v4086 = vadd.f32 0.0, %v4085
        %v4087 = vpop.f32.mrf.mxu0
        %4088 = vmatprep.mubr.bf16.mxu0 0
        %4089 = vmatmul.mubr.bf16.gmra.mxu0 %v3734
        %v4090 = vpop.f32.mrf.mxu0
        %v4091 = vadd.f32 0.0, %v4090
        %v4092 = vpop.f32.mrf.mxu0
        %v4093 = vpop.f32.mrf.mxu0
        %v4094 = vadd.f32 0.0, %v4093
        %v4095 = vpop.f32.mrf.mxu0
        %4096 = vmatprep.mubr.bf16.mxu0 0
        %4097 = vmatmul.mubr.bf16.gmra.mxu0 %v3737
        %v4098 = vpop.f32.mrf.mxu0
        %v4099 = vadd.f32 0.0, %v4098
        %v4100 = vpop.f32.mrf.mxu0
        %v4101 = vpop.f32.mrf.mxu0
        %v4102 = vadd.f32 0.0, %v4101
        %v4103 = vpop.f32.mrf.mxu0
        %4104 = vmatprep.mubr.bf16.mxu0 0
        %4105 = vmatmul.mubr.bf16.gmra.mxu0 %v3740
        %v4106 = vpop.f32.mrf.mxu0
        %v4107 = vadd.f32 0.0, %v4106
        %v4108 = vpop.f32.mrf.mxu0
        %v4109 = vpop.f32.mrf.mxu0
        %v4110 = vadd.f32 0.0, %v4109
        %v4111 = vpop.f32.mrf.mxu0
        %4112 = vmatprep.mubr.bf16.mxu0 0
        %4113 = vmatmul.mubr.bf16.gmra.mxu0 %v3743
        %v4114 = vpop.f32.mrf.mxu0
        %v4115 = vadd.f32 0.0, %v4114
        %v4116 = vpop.f32.mrf.mxu0
        %v4117 = vpop.f32.mrf.mxu0
        %v4118 = vadd.f32 0.0, %v4117
        %v4119 = vpop.f32.mrf.mxu0
        %4120 = vmatprep.mubr.bf16.mxu0 0
        %4121 = vmatmul.mubr.bf16.gmra.mxu0 %v3966
        %v4122 = vpop.f32.mrf.mxu0
        %v4123 = vadd.f32 0.0, %v4122
        %v4124 = vpop.f32.mrf.mxu0
        %v4125 = vpop.f32.mrf.mxu0
        %v4126 = vadd.f32 0.0, %v4125
        %v4127 = vpop.f32.mrf.mxu0
        %4128 = vdwg.mxu0
        %v4129 = vadd.f32 %v3906, %v4003
        %v4130 = vadd.f32 %v3907, %v4006
        %v4131 = vadd.f32 %v3908, %v4011
        %v4132 = vadd.f32 %v3909, %v4014
        %v4133 = vadd.f32 %v3910, %v4019
        %v4134 = vadd.f32 %v3911, %v4022
        %v4135 = vadd.f32 %v3912, %v4027
        %v4136 = vadd.f32 %v3913, %v4030
        %v4137 = vadd.f32 %v3914, %v4035
        %v4138 = vadd.f32 %v3915, %v4038
        %v4139 = vadd.f32 %v3916, %v4043
        %v4140 = vadd.f32 %v3917, %v4046
        %v4141 = vadd.f32 %v3918, %v4051
        %v4142 = vadd.f32 %v3919, %v4054
        %v4143 = vadd.f32 %v3920, %v4059
        %v4144 = vadd.f32 %v3921, %v4062
        %v4145 = vadd.f32 %v3922, %v4067
        %v4146 = vadd.f32 %v3923, %v4070
        %v4147 = vadd.f32 %v3924, %v4075
        %v4148 = vadd.f32 %v3925, %v4078
        %v4149 = vadd.f32 %v3926, %v4083
        %v4150 = vadd.f32 %v3927, %v4086
        %v4151 = vadd.f32 %v3928, %v4091
        %v4152 = vadd.f32 %v3929, %v4094
        %v4153 = vadd.f32 %v3930, %v4099
        %v4154 = vadd.f32 %v3931, %v4102
        %v4155 = vadd.f32 %v3932, %v4107
        %v4156 = vadd.f32 %v3933, %v4110
        %v4157 = vadd.f32 %v3934, %v4115
        %v4158 = vadd.f32 %v3935, %v4118
        %v4159 = vadd.f32 %v3936, %v4123
        %v4160 = vadd.f32 %v3937, %v4126
        %v4162 = vshrl.u32 %v3259, 16
        %v4164 = vrot.slane %v4162, 4
        %v4165 = vshll.u32 %v3259, 16
        %v4167 = vrot.slane %v4165, 5
        %v4168 = vor.u32 %v4164, %v4167
        %v4169 = vrot.slane %v4168, 4
        %v4171 = vshll.u32 %v3260, 16
        %v4173 = vrot.slane %v4171, 5
        %v4174 = vsel %vm3264, %v4169, %v4173
        %v4175 = vshrl.u32 %v3260, 16
        %v4177 = vrot.slane %v4175, 4
        %v4178 = vor.u32 %v4177, %v4173
        %v4179 = vrot.slane %v4178, 4
        %v4181 = vshll.u32 %v3261, 16
        %v4183 = vrot.slane %v4181, 5
        %v4184 = vsel %vm3264, %v4179, %v4183
        %v4185 = vunpack.c.l.b16 %v4174
        %v4186 = vunpack.c.l.b16 %v4184
        %v4187 = vpack.c.b16 %v4186, %v4185
        %v4189 = vsel %vm2628, %v4187, 0
        %4191 = vmatprep.subr.bf16.mxu0 0
        %4192 = vmatpush1.bf16.msra.mxu0 0
        %4193 = vmatprep.subr.bf16.mxu0 0
        %4194 = vmatpush1.bf16.msra.mxu0 0
        %4195 = vmatprep.subr.bf16.mxu0 0
        %4196 = vmatpush1.bf16.msra.mxu0 0
        %4197 = vmatprep.subr.bf16.mxu0 0
        %4198 = vmatpush1.bf16.msra.mxu0 0
        %4199 = vmatprep.subr.bf16.mxu0 0
        %4200 = vmatpush1.bf16.msra.mxu0 0
        %4201 = vmatprep.subr.bf16.mxu0 0
        %4202 = vmatpush1.bf16.msra.mxu0 0
        %4203 = vmatprep.subr.bf16.mxu0 0
        %4204 = vmatpush1.bf16.msra.mxu0 %v2347
        %4205 = vmatprep.subr.bf16.mxu0 0
        %4206 = vmatpush1.bf16.msra.mxu0 %v2346
        %4207 = vmatprep.subr.bf16.mxu0 0
        %4208 = vmatpush2.bf16.msra.mxu0 0
        %4209 = vmatprep.subr.bf16.mxu0 0
        %4210 = vmatpush2.bf16.msra.mxu0 0
        %4211 = vmatprep.subr.bf16.mxu0 0
        %4212 = vmatpush2.bf16.msra.mxu0 0
        %4213 = vmatprep.subr.bf16.mxu0 0
        %4214 = vmatpush2.bf16.msra.mxu0 0
        %4215 = vmatprep.subr.bf16.mxu0 0
        %4216 = vmatpush2.bf16.msra.mxu0 0
        %4217 = vmatprep.subr.bf16.mxu0 0
        %4218 = vmatpush2.bf16.msra.mxu0 0
        %4219 = vmatprep.subr.bf16.mxu0 0
        %4220 = vmatpush2.bf16.msra.mxu0 0
        %4221 = vmatprep.subr.bf16.mxu0 0
        %4222 = vmatpush2.bf16.msra.mxu0 0
        %4223 = vmatprep.mubr.bf16.mxu0 0
        %4224 = vmatmul.mubr.bf16.gmra.mxu0 %v3704
        %v4225 = vpop.f32.mrf.mxu0
        %v4226 = vadd.f32 0.0, %v4225
        %v4227 = vpop.f32.mrf.mxu0
        %v4228 = vpop.f32.mrf.mxu0
        %v4229 = vadd.f32 0.0, %v4228
        %v4230 = vpop.f32.mrf.mxu0
        %4231 = vmatprep.mubr.bf16.mxu0 0
        %4232 = vmatmul.mubr.bf16.gmra.mxu0 %v3707
        %v4233 = vpop.f32.mrf.mxu0
        %v4234 = vadd.f32 0.0, %v4233
        %v4235 = vpop.f32.mrf.mxu0
        %v4236 = vpop.f32.mrf.mxu0
        %v4237 = vadd.f32 0.0, %v4236
        %v4238 = vpop.f32.mrf.mxu0
        %4239 = vmatprep.mubr.bf16.mxu0 0
        %4240 = vmatmul.mubr.bf16.gmra.mxu0 %v3710
        %v4241 = vpop.f32.mrf.mxu0
        %v4242 = vadd.f32 0.0, %v4241
        %v4243 = vpop.f32.mrf.mxu0
        %v4244 = vpop.f32.mrf.mxu0
        %v4245 = vadd.f32 0.0, %v4244
        %v4246 = vpop.f32.mrf.mxu0
        %4247 = vmatprep.mubr.bf16.mxu0 0
        %4248 = vmatmul.mubr.bf16.gmra.mxu0 %v3713
        %v4249 = vpop.f32.mrf.mxu0
        %v4250 = vadd.f32 0.0, %v4249
        %v4251 = vpop.f32.mrf.mxu0
        %v4252 = vpop.f32.mrf.mxu0
        %v4253 = vadd.f32 0.0, %v4252
        %v4254 = vpop.f32.mrf.mxu0
        %4255 = vmatprep.mubr.bf16.mxu0 0
        %4256 = vmatmul.mubr.bf16.gmra.mxu0 %v3716
        %v4257 = vpop.f32.mrf.mxu0
        %v4258 = vadd.f32 0.0, %v4257
        %v4259 = vpop.f32.mrf.mxu0
        %v4260 = vpop.f32.mrf.mxu0
        %v4261 = vadd.f32 0.0, %v4260
        %v4262 = vpop.f32.mrf.mxu0
        %4263 = vmatprep.mubr.bf16.mxu0 0
        %4264 = vmatmul.mubr.bf16.gmra.mxu0 %v3719
        %v4265 = vpop.f32.mrf.mxu0
        %v4266 = vadd.f32 0.0, %v4265
        %v4267 = vpop.f32.mrf.mxu0
        %v4268 = vpop.f32.mrf.mxu0
        %v4269 = vadd.f32 0.0, %v4268
        %v4270 = vpop.f32.mrf.mxu0
        %4271 = vmatprep.mubr.bf16.mxu0 0
        %4272 = vmatmul.mubr.bf16.gmra.mxu0 %v3722
        %v4273 = vpop.f32.mrf.mxu0
        %v4274 = vadd.f32 0.0, %v4273
        %v4275 = vpop.f32.mrf.mxu0
        %v4276 = vpop.f32.mrf.mxu0
        %v4277 = vadd.f32 0.0, %v4276
        %v4278 = vpop.f32.mrf.mxu0
        %4279 = vmatprep.mubr.bf16.mxu0 0
        %4280 = vmatmul.mubr.bf16.gmra.mxu0 %v3725
        %v4281 = vpop.f32.mrf.mxu0
        %v4282 = vadd.f32 0.0, %v4281
        %v4283 = vpop.f32.mrf.mxu0
        %v4284 = vpop.f32.mrf.mxu0
        %v4285 = vadd.f32 0.0, %v4284
        %v4286 = vpop.f32.mrf.mxu0
        %4287 = vmatprep.mubr.bf16.mxu0 0
        %4288 = vmatmul.mubr.bf16.gmra.mxu0 %v3728
        %v4289 = vpop.f32.mrf.mxu0
        %v4290 = vadd.f32 0.0, %v4289
        %v4291 = vpop.f32.mrf.mxu0
        %v4292 = vpop.f32.mrf.mxu0
        %v4293 = vadd.f32 0.0, %v4292
        %v4294 = vpop.f32.mrf.mxu0
        %4295 = vmatprep.mubr.bf16.mxu0 0
        %4296 = vmatmul.mubr.bf16.gmra.mxu0 %v3731
        %v4297 = vpop.f32.mrf.mxu0
        %v4298 = vadd.f32 0.0, %v4297
        %v4299 = vpop.f32.mrf.mxu0
        %v4300 = vpop.f32.mrf.mxu0
        %v4301 = vadd.f32 0.0, %v4300
        %v4302 = vpop.f32.mrf.mxu0
        %4303 = vmatprep.mubr.bf16.mxu0 0
        %4304 = vmatmul.mubr.bf16.gmra.mxu0 %v3734
        %v4305 = vpop.f32.mrf.mxu0
        %v4306 = vadd.f32 0.0, %v4305
        %v4307 = vpop.f32.mrf.mxu0
        %v4308 = vpop.f32.mrf.mxu0
        %v4309 = vadd.f32 0.0, %v4308
        %v4310 = vpop.f32.mrf.mxu0
        %4311 = vmatprep.mubr.bf16.mxu0 0
        %4312 = vmatmul.mubr.bf16.gmra.mxu0 %v3737
        %v4313 = vpop.f32.mrf.mxu0
        %v4314 = vadd.f32 0.0, %v4313
        %v4315 = vpop.f32.mrf.mxu0
        %v4316 = vpop.f32.mrf.mxu0
        %v4317 = vadd.f32 0.0, %v4316
        %v4318 = vpop.f32.mrf.mxu0
        %4319 = vmatprep.mubr.bf16.mxu0 0
        %4320 = vmatmul.mubr.bf16.gmra.mxu0 %v3740
        %v4321 = vpop.f32.mrf.mxu0
        %v4322 = vadd.f32 0.0, %v4321
        %v4323 = vpop.f32.mrf.mxu0
        %v4324 = vpop.f32.mrf.mxu0
        %v4325 = vadd.f32 0.0, %v4324
        %v4326 = vpop.f32.mrf.mxu0
        %4327 = vmatprep.mubr.bf16.mxu0 0
        %4328 = vmatmul.mubr.bf16.gmra.mxu0 %v3743
        %v4329 = vpop.f32.mrf.mxu0
        %v4330 = vadd.f32 0.0, %v4329
        %v4331 = vpop.f32.mrf.mxu0
        %v4332 = vpop.f32.mrf.mxu0
        %v4333 = vadd.f32 0.0, %v4332
        %v4334 = vpop.f32.mrf.mxu0
        %4335 = vmatprep.mubr.bf16.mxu0 0
        %4336 = vmatmul.mubr.bf16.gmra.mxu0 %v3966
        %v4337 = vpop.f32.mrf.mxu0
        %v4338 = vadd.f32 0.0, %v4337
        %v4339 = vpop.f32.mrf.mxu0
        %v4340 = vpop.f32.mrf.mxu0
        %v4341 = vadd.f32 0.0, %v4340
        %v4342 = vpop.f32.mrf.mxu0
        %4343 = vmatprep.mubr.bf16.mxu0 0
        %4344 = vmatmul.mubr.bf16.gmra.mxu0 %v4189
        %v4345 = vpop.f32.mrf.mxu0
        %v4346 = vadd.f32 0.0, %v4345
        %v4347 = vpop.f32.mrf.mxu0
        %v4348 = vpop.f32.mrf.mxu0
        %v4349 = vadd.f32 0.0, %v4348
        %v4350 = vpop.f32.mrf.mxu0
        %4351 = vdwg.mxu0
        %v4352 = vadd.f32 %v4129, %v4226
        %v4353 = vadd.f32 %v4130, %v4229
        %v4354 = vadd.f32 %v4131, %v4234
        %v4355 = vadd.f32 %v4132, %v4237
        %v4356 = vadd.f32 %v4133, %v4242
        %v4357 = vadd.f32 %v4134, %v4245
        %v4358 = vadd.f32 %v4135, %v4250
        %v4359 = vadd.f32 %v4136, %v4253
        %v4360 = vadd.f32 %v4137, %v4258
        %v4361 = vadd.f32 %v4138, %v4261
        %v4362 = vadd.f32 %v4139, %v4266
        %v4363 = vadd.f32 %v4140, %v4269
        %v4364 = vadd.f32 %v4141, %v4274
        %v4365 = vadd.f32 %v4142, %v4277
        %v4366 = vadd.f32 %v4143, %v4282
        %v4367 = vadd.f32 %v4144, %v4285
        %v4368 = vadd.f32 %v4145, %v4290
        %v4369 = vadd.f32 %v4146, %v4293
        %v4370 = vadd.f32 %v4147, %v4298
        %v4371 = vadd.f32 %v4148, %v4301
        %v4372 = vadd.f32 %v4149, %v4306
        %v4373 = vadd.f32 %v4150, %v4309
        %v4374 = vadd.f32 %v4151, %v4314
        %v4375 = vadd.f32 %v4152, %v4317
        %v4376 = vadd.f32 %v4153, %v4322
        %v4377 = vadd.f32 %v4154, %v4325
        %v4378 = vadd.f32 %v4155, %v4330
        %v4379 = vadd.f32 %v4156, %v4333
        %v4380 = vadd.f32 %v4157, %v4338
        %v4381 = vadd.f32 %v4158, %v4341
        %v4382 = vadd.f32 %v4159, %v4346
        %v4383 = vadd.f32 %v4160, %v4349
        %v4384 = vld [vmem:[#allocation2] sm:$0xe]
        %v4385 = vld [vmem:[#allocation2 + $0xc] sm:$0xe]
        %v4386 = vld [vmem:[#allocation2 + $0x18] sm:$0xe]
        %v4387 = vld [vmem:[#allocation2 + $0x24] sm:$0xe]
        %v4388 = vld [vmem:[#allocation2 + $0x30] sm:$0xe]
        %v4389 = vld [vmem:[#allocation2 + $0x3c] sm:$0xe]
        %v4390 = vld [vmem:[#allocation2 + $0x48] sm:$0xe]
        %v4391 = vld [vmem:[#allocation2 + $0x54] sm:$0xe]
        %v4392 = vld [vmem:[#allocation2 + $0x60] sm:$0xe]
        %v4393 = vld [vmem:[#allocation2 + $0x6c] sm:$0xe]
        %v4394 = vld [vmem:[#allocation2 + $0x78] sm:$0xe]
        %v4395 = vld [vmem:[#allocation2 + $0x84] sm:$0xe]
        %v4396 = vld [vmem:[#allocation2 + $0x90] sm:$0xe]
        %v4397 = vld [vmem:[#allocation2 + $0x9c] sm:$0xe]
        %v4398 = vld [vmem:[#allocation2 + $0xa8] sm:$0xe]
        %v4399 = vld [vmem:[#allocation2 + $0xb4] sm:$0xe]
        %v4400 = vld [vmem:[#allocation2 + $0xc0] sm:$0xe]
        %v4401 = vld [vmem:[#allocation2 + $0xcc] sm:$0xe]
        %vm4450 = vcmask 1042432
        %vm4451 = vcmask 1046532
        %vm4452 = vmor %vm4450, %vm4451
        %v4453 = vrot.slane %v4384, 5
        %v4454 = vrot.slane %v4453, 4
        %v4455 = vrot.slane %v3209, 5
        %v4456 = vsel %vm4452, %v4454, %v4455
        %v4457 = vrot.slane %v4455, 4
        %v4458 = vrot.slane %v3210, 5
        %v4459 = vsel %vm4452, %v4457, %v4458
        %v4460 = vrot.slane %v4385, 5
        %v4461 = vrot.slane %v4460, 4
        %v4462 = vrot.slane %v3212, 5
        %v4463 = vsel %vm4452, %v4461, %v4462
        %v4464 = vrot.slane %v4462, 4
        %v4465 = vrot.slane %v3213, 5
        %v4466 = vsel %vm4452, %v4464, %v4465
        %v4467 = vrot.slane %v4386, 5
        %v4468 = vrot.slane %v4467, 4
        %v4469 = vrot.slane %v3215, 5
        %v4470 = vsel %vm4452, %v4468, %v4469
        %v4471 = vrot.slane %v4469, 4
        %v4472 = vrot.slane %v3216, 5
        %v4473 = vsel %vm4452, %v4471, %v4472
        %v4474 = vrot.slane %v4387, 5
        %v4475 = vrot.slane %v4474, 4
        %v4476 = vrot.slane %v3218, 5
        %v4477 = vsel %vm4452, %v4475, %v4476
        %v4478 = vrot.slane %v4476, 4
        %v4479 = vrot.slane %v3219, 5
        %v4480 = vsel %vm4452, %v4478, %v4479
        %v4481 = vrot.slane %v4388, 5
        %v4482 = vrot.slane %v4481, 4
        %v4483 = vrot.slane %v3221, 5
        %v4484 = vsel %vm4452, %v4482, %v4483
        %v4485 = vrot.slane %v4483, 4
        %v4486 = vrot.slane %v3222, 5
        %v4487 = vsel %vm4452, %v4485, %v4486
        %v4488 = vrot.slane %v4389, 5
        %v4489 = vrot.slane %v4488, 4
        %v4490 = vrot.slane %v3224, 5
        %v4491 = vsel %vm4452, %v4489, %v4490
        %v4492 = vrot.slane %v4490, 4
        %v4493 = vrot.slane %v3225, 5
        %v4494 = vsel %vm4452, %v4492, %v4493
        %v4495 = vrot.slane %v4390, 5
        %v4496 = vrot.slane %v4495, 4
        %v4497 = vrot.slane %v3227, 5
        %v4498 = vsel %vm4452, %v4496, %v4497
        %v4499 = vrot.slane %v4497, 4
        %v4500 = vrot.slane %v3228, 5
        %v4501 = vsel %vm4452, %v4499, %v4500
        %v4502 = vrot.slane %v4391, 5
        %v4503 = vrot.slane %v4502, 4
        %v4504 = vrot.slane %v3230, 5
        %v4505 = vsel %vm4452, %v4503, %v4504
        %v4506 = vrot.slane %v4504, 4
        %v4507 = vrot.slane %v3231, 5
        %v4508 = vsel %vm4452, %v4506, %v4507
        %v4509 = vrot.slane %v4392, 5
        %v4510 = vrot.slane %v4509, 4
        %v4511 = vrot.slane %v3233, 5
        %v4512 = vsel %vm4452, %v4510, %v4511
        %v4513 = vrot.slane %v4511, 4
        %v4514 = vrot.slane %v3234, 5
        %v4515 = vsel %vm4452, %v4513, %v4514
        %v4516 = vrot.slane %v4393, 5
        %v4517 = vrot.slane %v4516, 4
        %v4518 = vrot.slane %v3236, 5
        %v4519 = vsel %vm4452, %v4517, %v4518
        %v4520 = vrot.slane %v4518, 4
        %v4521 = vrot.slane %v3237, 5
        %v4522 = vsel %vm4452, %v4520, %v4521
        %v4523 = vrot.slane %v4394, 5
        %v4524 = vrot.slane %v4523, 4
        %v4525 = vrot.slane %v3239, 5
        %v4526 = vsel %vm4452, %v4524, %v4525
        %v4527 = vrot.slane %v4525, 4
        %v4528 = vrot.slane %v3240, 5
        %v4529 = vsel %vm4452, %v4527, %v4528
        %v4530 = vrot.slane %v4395, 5
        %v4531 = vrot.slane %v4530, 4
        %v4532 = vrot.slane %v3242, 5
        %v4533 = vsel %vm4452, %v4531, %v4532
        %v4534 = vrot.slane %v4532, 4
        %v4535 = vrot.slane %v3243, 5
        %v4536 = vsel %vm4452, %v4534, %v4535
        %v4537 = vrot.slane %v4396, 5
        %v4538 = vrot.slane %v4537, 4
        %v4539 = vrot.slane %v3245, 5
        %v4540 = vsel %vm4452, %v4538, %v4539
        %v4541 = vrot.slane %v4539, 4
        %v4542 = vrot.slane %v3246, 5
        %v4543 = vsel %vm4452, %v4541, %v4542
        %v4544 = vrot.slane %v4397, 5
        %v4545 = vrot.slane %v4544, 4
        %v4546 = vrot.slane %v3248, 5
        %v4547 = vsel %vm4452, %v4545, %v4546
        %v4548 = vrot.slane %v4546, 4
        %v4549 = vrot.slane %v3249, 5
        %v4550 = vsel %vm4452, %v4548, %v4549
        %v4551 = vrot.slane %v4398, 5
        %v4552 = vrot.slane %v4551, 4
        %v4553 = vrot.slane %v3251, 5
        %v4554 = vsel %vm4452, %v4552, %v4553
        %v4555 = vrot.slane %v4553, 4
        %v4556 = vrot.slane %v3252, 5
        %v4557 = vsel %vm4452, %v4555, %v4556
        %v4558 = vrot.slane %v4399, 5
        %v4559 = vrot.slane %v4558, 4
        %v4560 = vrot.slane %v3254, 5
        %v4561 = vsel %vm4452, %v4559, %v4560
        %v4562 = vrot.slane %v4560, 4
        %v4563 = vrot.slane %v3255, 5
        %v4564 = vsel %vm4452, %v4562, %v4563
        %v4565 = vunpack.c.l.b16 %v4456
        %v4566 = vunpack.c.l.b16 %v4459
        %v4567 = vunpack.c.l.b16 %v4463
        %v4568 = vunpack.c.l.b16 %v4466
        %v4569 = vunpack.c.l.b16 %v4470
        %v4570 = vunpack.c.l.b16 %v4473
        %v4571 = vunpack.c.l.b16 %v4477
        %v4572 = vunpack.c.l.b16 %v4480
        %v4573 = vunpack.c.l.b16 %v4484
        %v4574 = vunpack.c.l.b16 %v4487
        %v4575 = vunpack.c.l.b16 %v4491
        %v4576 = vunpack.c.l.b16 %v4494
        %v4577 = vunpack.c.l.b16 %v4498
        %v4578 = vunpack.c.l.b16 %v4501
        %v4579 = vunpack.c.l.b16 %v4505
        %v4580 = vunpack.c.l.b16 %v4508
        %v4581 = vunpack.c.l.b16 %v4512
        %v4582 = vunpack.c.l.b16 %v4515
        %v4583 = vunpack.c.l.b16 %v4519
        %v4584 = vunpack.c.l.b16 %v4522
        %v4585 = vunpack.c.l.b16 %v4526
        %v4586 = vunpack.c.l.b16 %v4529
        %v4587 = vunpack.c.l.b16 %v4533
        %v4588 = vunpack.c.l.b16 %v4536
        %v4589 = vunpack.c.l.b16 %v4540
        %v4590 = vunpack.c.l.b16 %v4543
        %v4591 = vunpack.c.l.b16 %v4547
        %v4592 = vunpack.c.l.b16 %v4550
        %v4593 = vunpack.c.l.b16 %v4554
        %v4594 = vunpack.c.l.b16 %v4557
        %v4595 = vunpack.c.l.b16 %v4561
        %v4596 = vunpack.c.l.b16 %v4564
        %v4597 = vpack.c.b16 %v4566, %v4565
        %v4598 = vpack.c.b16 %v4568, %v4567
        %v4599 = vpack.c.b16 %v4570, %v4569
        %v4600 = vpack.c.b16 %v4572, %v4571
        %v4601 = vpack.c.b16 %v4574, %v4573
        %v4602 = vpack.c.b16 %v4576, %v4575
        %v4603 = vpack.c.b16 %v4578, %v4577
        %v4604 = vpack.c.b16 %v4580, %v4579
        %v4605 = vpack.c.b16 %v4582, %v4581
        %v4606 = vpack.c.b16 %v4584, %v4583
        %v4607 = vpack.c.b16 %v4586, %v4585
        %v4608 = vpack.c.b16 %v4588, %v4587
        %v4609 = vpack.c.b16 %v4590, %v4589
        %v4610 = vpack.c.b16 %v4592, %v4591
        %v4611 = vpack.c.b16 %v4594, %v4593
        %v4612 = vpack.c.b16 %v4596, %v4595
        %v4614 = vsel %vm2628, %v4597, 0
        %v4617 = vsel %vm2628, %v4598, 0
        %v4620 = vsel %vm2628, %v4599, 0
        %v4623 = vsel %vm2628, %v4600, 0
        %v4626 = vsel %vm2628, %v4601, 0
        %v4629 = vsel %vm2628, %v4602, 0
        %v4632 = vsel %vm2628, %v4603, 0
        %v4635 = vsel %vm2628, %v4604, 0
        %v4638 = vsel %vm2628, %v4605, 0
        %v4641 = vsel %vm2628, %v4606, 0
        %v4644 = vsel %vm2628, %v4607, 0
        %v4647 = vsel %vm2628, %v4608, 0
        %v4650 = vsel %vm2628, %v4609, 0
        %v4653 = vsel %vm2628, %v4610, 0
        %v4656 = vsel %vm2628, %v4611, 0
        %v4659 = vsel %vm2628, %v4612, 0
        %4661 = vmatprep.subr.bf16.mxu0 0
        %4662 = vmatpush1.bf16.msra.mxu0 0
        %4663 = vmatprep.subr.bf16.mxu0 0
        %4664 = vmatpush1.bf16.msra.mxu0 0
        %4665 = vmatprep.subr.bf16.mxu0 0
        %4666 = vmatpush1.bf16.msra.mxu0 0
        %4667 = vmatprep.subr.bf16.mxu0 0
        %4668 = vmatpush1.bf16.msra.mxu0 0
        %4669 = vmatprep.subr.bf16.mxu0 0
        %4670 = vmatpush1.bf16.msra.mxu0 0
        %4671 = vmatprep.subr.bf16.mxu0 0
        %4672 = vmatpush1.bf16.msra.mxu0 0
        %4673 = vmatprep.subr.bf16.mxu0 0
        %4674 = vmatpush1.bf16.msra.mxu0 %v2337
        %4675 = vmatprep.subr.bf16.mxu0 0
        %4676 = vmatpush1.bf16.msra.mxu0 %v2336
        %4677 = vmatprep.subr.bf16.mxu0 0
        %4678 = vmatpush2.bf16.msra.mxu0 0
        %4679 = vmatprep.subr.bf16.mxu0 0
        %4680 = vmatpush2.bf16.msra.mxu0 0
        %4681 = vmatprep.subr.bf16.mxu0 0
        %4682 = vmatpush2.bf16.msra.mxu0 0
        %4683 = vmatprep.subr.bf16.mxu0 0
        %4684 = vmatpush2.bf16.msra.mxu0 0
        %4685 = vmatprep.subr.bf16.mxu0 0
        %4686 = vmatpush2.bf16.msra.mxu0 0
        %4687 = vmatprep.subr.bf16.mxu0 0
        %4688 = vmatpush2.bf16.msra.mxu0 0
        %4689 = vmatprep.subr.bf16.mxu0 0
        %4690 = vmatpush2.bf16.msra.mxu0 0
        %4691 = vmatprep.subr.bf16.mxu0 0
        %4692 = vmatpush2.bf16.msra.mxu0 0
        %4693 = vmatprep.mubr.bf16.mxu0 0
        %4694 = vmatmul.mubr.bf16.gmra.mxu0 %v4614
        %v4695 = vpop.f32.mrf.mxu0
        %v4696 = vadd.f32 0.0, %v4695
        %v4697 = vpop.f32.mrf.mxu0
        %v4698 = vpop.f32.mrf.mxu0
        %v4699 = vadd.f32 0.0, %v4698
        %v4700 = vpop.f32.mrf.mxu0
        %4701 = vmatprep.mubr.bf16.mxu0 0
        %4702 = vmatmul.mubr.bf16.gmra.mxu0 %v4617
        %v4703 = vpop.f32.mrf.mxu0
        %v4704 = vadd.f32 0.0, %v4703
        %v4705 = vpop.f32.mrf.mxu0
        %v4706 = vpop.f32.mrf.mxu0
        %v4707 = vadd.f32 0.0, %v4706
        %v4708 = vpop.f32.mrf.mxu0
        %4709 = vmatprep.mubr.bf16.mxu0 0
        %4710 = vmatmul.mubr.bf16.gmra.mxu0 %v4620
        %v4711 = vpop.f32.mrf.mxu0
        %v4712 = vadd.f32 0.0, %v4711
        %v4713 = vpop.f32.mrf.mxu0
        %v4714 = vpop.f32.mrf.mxu0
        %v4715 = vadd.f32 0.0, %v4714
        %v4716 = vpop.f32.mrf.mxu0
        %4717 = vmatprep.mubr.bf16.mxu0 0
        %4718 = vmatmul.mubr.bf16.gmra.mxu0 %v4623
        %v4719 = vpop.f32.mrf.mxu0
        %v4720 = vadd.f32 0.0, %v4719
        %v4721 = vpop.f32.mrf.mxu0
        %v4722 = vpop.f32.mrf.mxu0
        %v4723 = vadd.f32 0.0, %v4722
        %v4724 = vpop.f32.mrf.mxu0
        %4725 = vmatprep.mubr.bf16.mxu0 0
        %4726 = vmatmul.mubr.bf16.gmra.mxu0 %v4626
        %v4727 = vpop.f32.mrf.mxu0
        %v4728 = vadd.f32 0.0, %v4727
        %v4729 = vpop.f32.mrf.mxu0
        %v4730 = vpop.f32.mrf.mxu0
        %v4731 = vadd.f32 0.0, %v4730
        %v4732 = vpop.f32.mrf.mxu0
        %4733 = vmatprep.mubr.bf16.mxu0 0
        %4734 = vmatmul.mubr.bf16.gmra.mxu0 %v4629
        %v4735 = vpop.f32.mrf.mxu0
        %v4736 = vadd.f32 0.0, %v4735
        %v4737 = vpop.f32.mrf.mxu0
        %v4738 = vpop.f32.mrf.mxu0
        %v4739 = vadd.f32 0.0, %v4738
        %v4740 = vpop.f32.mrf.mxu0
        %4741 = vmatprep.mubr.bf16.mxu0 0
        %4742 = vmatmul.mubr.bf16.gmra.mxu0 %v4632
        %v4743 = vpop.f32.mrf.mxu0
        %v4744 = vadd.f32 0.0, %v4743
        %v4745 = vpop.f32.mrf.mxu0
        %v4746 = vpop.f32.mrf.mxu0
        %v4747 = vadd.f32 0.0, %v4746
        %v4748 = vpop.f32.mrf.mxu0
        %4749 = vmatprep.mubr.bf16.mxu0 0
        %4750 = vmatmul.mubr.bf16.gmra.mxu0 %v4635
        %v4751 = vpop.f32.mrf.mxu0
        %v4752 = vadd.f32 0.0, %v4751
        %v4753 = vpop.f32.mrf.mxu0
        %v4754 = vpop.f32.mrf.mxu0
        %v4755 = vadd.f32 0.0, %v4754
        %v4756 = vpop.f32.mrf.mxu0
        %4757 = vmatprep.mubr.bf16.mxu0 0
        %4758 = vmatmul.mubr.bf16.gmra.mxu0 %v4638
        %v4759 = vpop.f32.mrf.mxu0
        %v4760 = vadd.f32 0.0, %v4759
        %v4761 = vpop.f32.mrf.mxu0
        %v4762 = vpop.f32.mrf.mxu0
        %v4763 = vadd.f32 0.0, %v4762
        %v4764 = vpop.f32.mrf.mxu0
        %4765 = vmatprep.mubr.bf16.mxu0 0
        %4766 = vmatmul.mubr.bf16.gmra.mxu0 %v4641
        %v4767 = vpop.f32.mrf.mxu0
        %v4768 = vadd.f32 0.0, %v4767
        %v4769 = vpop.f32.mrf.mxu0
        %v4770 = vpop.f32.mrf.mxu0
        %v4771 = vadd.f32 0.0, %v4770
        %v4772 = vpop.f32.mrf.mxu0
        %4773 = vmatprep.mubr.bf16.mxu0 0
        %4774 = vmatmul.mubr.bf16.gmra.mxu0 %v4644
        %v4775 = vpop.f32.mrf.mxu0
        %v4776 = vadd.f32 0.0, %v4775
        %v4777 = vpop.f32.mrf.mxu0
        %v4778 = vpop.f32.mrf.mxu0
        %v4779 = vadd.f32 0.0, %v4778
        %v4780 = vpop.f32.mrf.mxu0
        %4781 = vmatprep.mubr.bf16.mxu0 0
        %4782 = vmatmul.mubr.bf16.gmra.mxu0 %v4647
        %v4783 = vpop.f32.mrf.mxu0
        %v4784 = vadd.f32 0.0, %v4783
        %v4785 = vpop.f32.mrf.mxu0
        %v4786 = vpop.f32.mrf.mxu0
        %v4787 = vadd.f32 0.0, %v4786
        %v4788 = vpop.f32.mrf.mxu0
        %4789 = vmatprep.mubr.bf16.mxu0 0
        %4790 = vmatmul.mubr.bf16.gmra.mxu0 %v4650
        %v4791 = vpop.f32.mrf.mxu0
        %v4792 = vadd.f32 0.0, %v4791
        %v4793 = vpop.f32.mrf.mxu0
        %v4794 = vpop.f32.mrf.mxu0
        %v4795 = vadd.f32 0.0, %v4794
        %v4796 = vpop.f32.mrf.mxu0
        %4797 = vmatprep.mubr.bf16.mxu0 0
        %4798 = vmatmul.mubr.bf16.gmra.mxu0 %v4653
        %v4799 = vpop.f32.mrf.mxu0
        %v4800 = vadd.f32 0.0, %v4799
        %v4801 = vpop.f32.mrf.mxu0
        %v4802 = vpop.f32.mrf.mxu0
        %v4803 = vadd.f32 0.0, %v4802
        %v4804 = vpop.f32.mrf.mxu0
        %4805 = vmatprep.mubr.bf16.mxu0 0
        %4806 = vmatmul.mubr.bf16.gmra.mxu0 %v4656
        %v4807 = vpop.f32.mrf.mxu0
        %v4808 = vadd.f32 0.0, %v4807
        %v4809 = vpop.f32.mrf.mxu0
        %v4810 = vpop.f32.mrf.mxu0
        %v4811 = vadd.f32 0.0, %v4810
        %v4812 = vpop.f32.mrf.mxu0
        %4813 = vmatprep.mubr.bf16.mxu0 0
        %4814 = vmatmul.mubr.bf16.gmra.mxu0 %v4659
        %v4815 = vpop.f32.mrf.mxu0
        %v4816 = vadd.f32 0.0, %v4815
        %v4817 = vpop.f32.mrf.mxu0
        %v4818 = vpop.f32.mrf.mxu0
        %v4819 = vadd.f32 0.0, %v4818
        %v4820 = vpop.f32.mrf.mxu0
        %4821 = vdwg.mxu0
        %v4822 = vadd.f32 %v4352, %v4696
        %v4823 = vadd.f32 %v4353, %v4699
        %v4824 = vadd.f32 %v4354, %v4704
        %v4825 = vadd.f32 %v4355, %v4707
        %v4826 = vadd.f32 %v4356, %v4712
        %v4827 = vadd.f32 %v4357, %v4715
        %v4828 = vadd.f32 %v4358, %v4720
        %v4829 = vadd.f32 %v4359, %v4723
        %v4830 = vadd.f32 %v4360, %v4728
        %v4831 = vadd.f32 %v4361, %v4731
        %v4832 = vadd.f32 %v4362, %v4736
        %v4833 = vadd.f32 %v4363, %v4739
        %v4834 = vadd.f32 %v4364, %v4744
        %v4835 = vadd.f32 %v4365, %v4747
        %v4836 = vadd.f32 %v4366, %v4752
        %v4837 = vadd.f32 %v4367, %v4755
        %v4838 = vadd.f32 %v4368, %v4760
        %v4839 = vadd.f32 %v4369, %v4763
        %v4840 = vadd.f32 %v4370, %v4768
        %v4841 = vadd.f32 %v4371, %v4771
        %v4842 = vadd.f32 %v4372, %v4776
        %v4843 = vadd.f32 %v4373, %v4779
        %v4844 = vadd.f32 %v4374, %v4784
        %v4845 = vadd.f32 %v4375, %v4787
        %v4846 = vadd.f32 %v4376, %v4792
        %v4847 = vadd.f32 %v4377, %v4795
        %v4848 = vadd.f32 %v4378, %v4800
        %v4849 = vadd.f32 %v4379, %v4803
        %v4850 = vadd.f32 %v4380, %v4808
        %v4851 = vadd.f32 %v4381, %v4811
        %v4852 = vadd.f32 %v4382, %v4816
        %v4853 = vadd.f32 %v4383, %v4819
        %v4857 = vrot.slane %v4400, 5
        %v4858 = vrot.slane %v4857, 4
        %v4859 = vrot.slane %v3257, 5
        %v4860 = vsel %vm4452, %v4858, %v4859
        %v4861 = vrot.slane %v4859, 4
        %v4862 = vrot.slane %v3258, 5
        %v4863 = vsel %vm4452, %v4861, %v4862
        %v4864 = vunpack.c.l.b16 %v4860
        %v4865 = vunpack.c.l.b16 %v4863
        %v4866 = vpack.c.b16 %v4865, %v4864
        %v4868 = vsel %vm2628, %v4866, 0
        %4870 = vmatprep.subr.bf16.mxu0 0
        %4871 = vmatpush1.bf16.msra.mxu0 0
        %4872 = vmatprep.subr.bf16.mxu0 0
        %4873 = vmatpush1.bf16.msra.mxu0 0
        %4874 = vmatprep.subr.bf16.mxu0 0
        %4875 = vmatpush1.bf16.msra.mxu0 0
        %4876 = vmatprep.subr.bf16.mxu0 0
        %4877 = vmatpush1.bf16.msra.mxu0 0
        %4878 = vmatprep.subr.bf16.mxu0 0
        %4879 = vmatpush1.bf16.msra.mxu0 0
        %4880 = vmatprep.subr.bf16.mxu0 0
        %4881 = vmatpush1.bf16.msra.mxu0 0
        %4882 = vmatprep.subr.bf16.mxu0 0
        %4883 = vmatpush1.bf16.msra.mxu0 %v2343
        %4884 = vmatprep.subr.bf16.mxu0 0
        %4885 = vmatpush1.bf16.msra.mxu0 %v2342
        %4886 = vmatprep.subr.bf16.mxu0 0
        %4887 = vmatpush2.bf16.msra.mxu0 0
        %4888 = vmatprep.subr.bf16.mxu0 0
        %4889 = vmatpush2.bf16.msra.mxu0 0
        %4890 = vmatprep.subr.bf16.mxu0 0
        %4891 = vmatpush2.bf16.msra.mxu0 0
        %4892 = vmatprep.subr.bf16.mxu0 0
        %4893 = vmatpush2.bf16.msra.mxu0 0
        %4894 = vmatprep.subr.bf16.mxu0 0
        %4895 = vmatpush2.bf16.msra.mxu0 0
        %4896 = vmatprep.subr.bf16.mxu0 0
        %4897 = vmatpush2.bf16.msra.mxu0 0
        %4898 = vmatprep.subr.bf16.mxu0 0
        %4899 = vmatpush2.bf16.msra.mxu0 0
        %4900 = vmatprep.subr.bf16.mxu0 0
        %4901 = vmatpush2.bf16.msra.mxu0 0
        %4902 = vmatprep.mubr.bf16.mxu0 0
        %4903 = vmatmul.mubr.bf16.gmra.mxu0 %v4617
        %v4904 = vpop.f32.mrf.mxu0
        %v4905 = vadd.f32 0.0, %v4904
        %v4906 = vpop.f32.mrf.mxu0
        %v4907 = vpop.f32.mrf.mxu0
        %v4908 = vadd.f32 0.0, %v4907
        %v4909 = vpop.f32.mrf.mxu0
        %4910 = vmatprep.mubr.bf16.mxu0 0
        %4911 = vmatmul.mubr.bf16.gmra.mxu0 %v4620
        %v4912 = vpop.f32.mrf.mxu0
        %v4913 = vadd.f32 0.0, %v4912
        %v4914 = vpop.f32.mrf.mxu0
        %v4915 = vpop.f32.mrf.mxu0
        %v4916 = vadd.f32 0.0, %v4915
        %v4917 = vpop.f32.mrf.mxu0
        %4918 = vmatprep.mubr.bf16.mxu0 0
        %4919 = vmatmul.mubr.bf16.gmra.mxu0 %v4623
        %v4920 = vpop.f32.mrf.mxu0
        %v4921 = vadd.f32 0.0, %v4920
        %v4922 = vpop.f32.mrf.mxu0
        %v4923 = vpop.f32.mrf.mxu0
        %v4924 = vadd.f32 0.0, %v4923
        %v4925 = vpop.f32.mrf.mxu0
        %4926 = vmatprep.mubr.bf16.mxu0 0
        %4927 = vmatmul.mubr.bf16.gmra.mxu0 %v4626
        %v4928 = vpop.f32.mrf.mxu0
        %v4929 = vadd.f32 0.0, %v4928
        %v4930 = vpop.f32.mrf.mxu0
        %v4931 = vpop.f32.mrf.mxu0
        %v4932 = vadd.f32 0.0, %v4931
        %v4933 = vpop.f32.mrf.mxu0
        %4934 = vmatprep.mubr.bf16.mxu0 0
        %4935 = vmatmul.mubr.bf16.gmra.mxu0 %v4629
        %v4936 = vpop.f32.mrf.mxu0
        %v4937 = vadd.f32 0.0, %v4936
        %v4938 = vpop.f32.mrf.mxu0
        %v4939 = vpop.f32.mrf.mxu0
        %v4940 = vadd.f32 0.0, %v4939
        %v4941 = vpop.f32.mrf.mxu0
        %4942 = vmatprep.mubr.bf16.mxu0 0
        %4943 = vmatmul.mubr.bf16.gmra.mxu0 %v4632
        %v4944 = vpop.f32.mrf.mxu0
        %v4945 = vadd.f32 0.0, %v4944
        %v4946 = vpop.f32.mrf.mxu0
        %v4947 = vpop.f32.mrf.mxu0
        %v4948 = vadd.f32 0.0, %v4947
        %v4949 = vpop.f32.mrf.mxu0
        %4950 = vmatprep.mubr.bf16.mxu0 0
        %4951 = vmatmul.mubr.bf16.gmra.mxu0 %v4635
        %v4952 = vpop.f32.mrf.mxu0
        %v4953 = vadd.f32 0.0, %v4952
        %v4954 = vpop.f32.mrf.mxu0
        %v4955 = vpop.f32.mrf.mxu0
        %v4956 = vadd.f32 0.0, %v4955
        %v4957 = vpop.f32.mrf.mxu0
        %4958 = vmatprep.mubr.bf16.mxu0 0
        %4959 = vmatmul.mubr.bf16.gmra.mxu0 %v4638
        %v4960 = vpop.f32.mrf.mxu0
        %v4961 = vadd.f32 0.0, %v4960
        %v4962 = vpop.f32.mrf.mxu0
        %v4963 = vpop.f32.mrf.mxu0
        %v4964 = vadd.f32 0.0, %v4963
        %v4965 = vpop.f32.mrf.mxu0
        %4966 = vmatprep.mubr.bf16.mxu0 0
        %4967 = vmatmul.mubr.bf16.gmra.mxu0 %v4641
        %v4968 = vpop.f32.mrf.mxu0
        %v4969 = vadd.f32 0.0, %v4968
        %v4970 = vpop.f32.mrf.mxu0
        %v4971 = vpop.f32.mrf.mxu0
        %v4972 = vadd.f32 0.0, %v4971
        %v4973 = vpop.f32.mrf.mxu0
        %4974 = vmatprep.mubr.bf16.mxu0 0
        %4975 = vmatmul.mubr.bf16.gmra.mxu0 %v4644
        %v4976 = vpop.f32.mrf.mxu0
        %v4977 = vadd.f32 0.0, %v4976
        %v4978 = vpop.f32.mrf.mxu0
        %v4979 = vpop.f32.mrf.mxu0
        %v4980 = vadd.f32 0.0, %v4979
        %v4981 = vpop.f32.mrf.mxu0
        %4982 = vmatprep.mubr.bf16.mxu0 0
        %4983 = vmatmul.mubr.bf16.gmra.mxu0 %v4647
        %v4984 = vpop.f32.mrf.mxu0
        %v4985 = vadd.f32 0.0, %v4984
        %v4986 = vpop.f32.mrf.mxu0
        %v4987 = vpop.f32.mrf.mxu0
        %v4988 = vadd.f32 0.0, %v4987
        %v4989 = vpop.f32.mrf.mxu0
        %4990 = vmatprep.mubr.bf16.mxu0 0
        %4991 = vmatmul.mubr.bf16.gmra.mxu0 %v4650
        %v4992 = vpop.f32.mrf.mxu0
        %v4993 = vadd.f32 0.0, %v4992
        %v4994 = vpop.f32.mrf.mxu0
        %v4995 = vpop.f32.mrf.mxu0
        %v4996 = vadd.f32 0.0, %v4995
        %v4997 = vpop.f32.mrf.mxu0
        %4998 = vmatprep.mubr.bf16.mxu0 0
        %4999 = vmatmul.mubr.bf16.gmra.mxu0 %v4653
        %v5000 = vpop.f32.mrf.mxu0
        %v5001 = vadd.f32 0.0, %v5000
        %v5002 = vpop.f32.mrf.mxu0
        %v5003 = vpop.f32.mrf.mxu0
        %v5004 = vadd.f32 0.0, %v5003
        %v5005 = vpop.f32.mrf.mxu0
        %5006 = vmatprep.mubr.bf16.mxu0 0
        %5007 = vmatmul.mubr.bf16.gmra.mxu0 %v4656
        %v5008 = vpop.f32.mrf.mxu0
        %v5009 = vadd.f32 0.0, %v5008
        %v5010 = vpop.f32.mrf.mxu0
        %v5011 = vpop.f32.mrf.mxu0
        %v5012 = vadd.f32 0.0, %v5011
        %v5013 = vpop.f32.mrf.mxu0
        %5014 = vmatprep.mubr.bf16.mxu0 0
        %5015 = vmatmul.mubr.bf16.gmra.mxu0 %v4659
        %v5016 = vpop.f32.mrf.mxu0
        %v5017 = vadd.f32 0.0, %v5016
        %v5018 = vpop.f32.mrf.mxu0
        %v5019 = vpop.f32.mrf.mxu0
        %v5020 = vadd.f32 0.0, %v5019
        %v5021 = vpop.f32.mrf.mxu0
        %5022 = vmatprep.mubr.bf16.mxu0 0
        %5023 = vmatmul.mubr.bf16.gmra.mxu0 %v4868
        %v5024 = vpop.f32.mrf.mxu0
        %v5025 = vadd.f32 0.0, %v5024
        %v5026 = vpop.f32.mrf.mxu0
        %v5027 = vpop.f32.mrf.mxu0
        %v5028 = vadd.f32 0.0, %v5027
        %v5029 = vpop.f32.mrf.mxu0
        %5030 = vdwg.mxu0
        %v5031 = vadd.f32 %v4822, %v4905
        %v5032 = vadd.f32 %v4823, %v4908
        %v5033 = vadd.f32 %v4824, %v4913
        %v5034 = vadd.f32 %v4825, %v4916
        %v5035 = vadd.f32 %v4826, %v4921
        %v5036 = vadd.f32 %v4827, %v4924
        %v5037 = vadd.f32 %v4828, %v4929
        %v5038 = vadd.f32 %v4829, %v4932
        %v5039 = vadd.f32 %v4830, %v4937
        %v5040 = vadd.f32 %v4831, %v4940
        %v5041 = vadd.f32 %v4832, %v4945
        %v5042 = vadd.f32 %v4833, %v4948
        %v5043 = vadd.f32 %v4834, %v4953
        %v5044 = vadd.f32 %v4835, %v4956
        %v5045 = vadd.f32 %v4836, %v4961
        %v5046 = vadd.f32 %v4837, %v4964
        %v5047 = vadd.f32 %v4838, %v4969
        %v5048 = vadd.f32 %v4839, %v4972
        %v5049 = vadd.f32 %v4840, %v4977
        %v5050 = vadd.f32 %v4841, %v4980
        %v5051 = vadd.f32 %v4842, %v4985
        %v5052 = vadd.f32 %v4843, %v4988
        %v5053 = vadd.f32 %v4844, %v4993
        %v5054 = vadd.f32 %v4845, %v4996
        %v5055 = vadd.f32 %v4846, %v5001
        %v5056 = vadd.f32 %v4847, %v5004
        %v5057 = vadd.f32 %v4848, %v5009
        %v5058 = vadd.f32 %v4849, %v5012
        %v5059 = vadd.f32 %v4850, %v5017
        %v5060 = vadd.f32 %v4851, %v5020
        %v5061 = vadd.f32 %v4852, %v5025
        %v5062 = vadd.f32 %v4853, %v5028
        %v5066 = vrot.slane %v4401, 5
        %v5067 = vrot.slane %v5066, 4
        %v5068 = vrot.slane %v3260, 5
        %v5069 = vsel %vm4452, %v5067, %v5068
        %v5070 = vrot.slane %v5068, 4
        %v5071 = vrot.slane %v3261, 5
        %v5072 = vsel %vm4452, %v5070, %v5071
        %v5073 = vunpack.c.l.b16 %v5069
        %v5074 = vunpack.c.l.b16 %v5072
        %v5075 = vpack.c.b16 %v5074, %v5073
        %v5077 = vsel %vm2628, %v5075, 0
        %5079 = vmatprep.subr.bf16.mxu0 0
        %5080 = vmatpush1.bf16.msra.mxu0 0
        %5081 = vmatprep.subr.bf16.mxu0 0
        %5082 = vmatpush1.bf16.msra.mxu0 0
        %5083 = vmatprep.subr.bf16.mxu0 0
        %5084 = vmatpush1.bf16.msra.mxu0 0
        %5085 = vmatprep.subr.bf16.mxu0 0
        %5086 = vmatpush1.bf16.msra.mxu0 0
        %5087 = vmatprep.subr.bf16.mxu0 0
        %5088 = vmatpush1.bf16.msra.mxu0 0
        %5089 = vmatprep.subr.bf16.mxu0 0
        %5090 = vmatpush1.bf16.msra.mxu0 0
        %5091 = vmatprep.subr.bf16.mxu0 0
        %5092 = vmatpush1.bf16.msra.mxu0 %v2349
        %5093 = vmatprep.subr.bf16.mxu0 0
        %5094 = vmatpush1.bf16.msra.mxu0 %v2348
        %5095 = vmatprep.subr.bf16.mxu0 0
        %5096 = vmatpush2.bf16.msra.mxu0 0
        %5097 = vmatprep.subr.bf16.mxu0 0
        %5098 = vmatpush2.bf16.msra.mxu0 0
        %5099 = vmatprep.subr.bf16.mxu0 0
        %5100 = vmatpush2.bf16.msra.mxu0 0
        %5101 = vmatprep.subr.bf16.mxu0 0
        %5102 = vmatpush2.bf16.msra.mxu0 0
        %5103 = vmatprep.subr.bf16.mxu0 0
        %5104 = vmatpush2.bf16.msra.mxu0 0
        %5105 = vmatprep.subr.bf16.mxu0 0
        %5106 = vmatpush2.bf16.msra.mxu0 0
        %5107 = vmatprep.subr.bf16.mxu0 0
        %5108 = vmatpush2.bf16.msra.mxu0 0
        %5109 = vmatprep.subr.bf16.mxu0 0
        %5110 = vmatpush2.bf16.msra.mxu0 0
        %5111 = vmatprep.mubr.bf16.mxu0 0
        %5112 = vmatmul.mubr.bf16.gmra.mxu0 %v4620
        %v5113 = vpop.f32.mrf.mxu0
        %v5114 = vadd.f32 0.0, %v5113
        %v5115 = vpop.f32.mrf.mxu0
        %v5116 = vpop.f32.mrf.mxu0
        %v5117 = vadd.f32 0.0, %v5116
        %v5118 = vpop.f32.mrf.mxu0
        %5119 = vmatprep.mubr.bf16.mxu0 0
        %5120 = vmatmul.mubr.bf16.gmra.mxu0 %v4623
        %v5121 = vpop.f32.mrf.mxu0
        %v5122 = vadd.f32 0.0, %v5121
        %v5123 = vpop.f32.mrf.mxu0
        %v5124 = vpop.f32.mrf.mxu0
        %v5125 = vadd.f32 0.0, %v5124
        %v5126 = vpop.f32.mrf.mxu0
        %5127 = vmatprep.mubr.bf16.mxu0 0
        %5128 = vmatmul.mubr.bf16.gmra.mxu0 %v4626
        %v5129 = vpop.f32.mrf.mxu0
        %v5130 = vadd.f32 0.0, %v5129
        %v5131 = vpop.f32.mrf.mxu0
        %v5132 = vpop.f32.mrf.mxu0
        %v5133 = vadd.f32 0.0, %v5132
        %v5134 = vpop.f32.mrf.mxu0
        %5135 = vmatprep.mubr.bf16.mxu0 0
        %5136 = vmatmul.mubr.bf16.gmra.mxu0 %v4629
        %v5137 = vpop.f32.mrf.mxu0
        %v5138 = vadd.f32 0.0, %v5137
        %v5139 = vpop.f32.mrf.mxu0
        %v5140 = vpop.f32.mrf.mxu0
        %v5141 = vadd.f32 0.0, %v5140
        %v5142 = vpop.f32.mrf.mxu0
        %5143 = vmatprep.mubr.bf16.mxu0 0
        %5144 = vmatmul.mubr.bf16.gmra.mxu0 %v4632
        %v5145 = vpop.f32.mrf.mxu0
        %v5146 = vadd.f32 0.0, %v5145
        %v5147 = vpop.f32.mrf.mxu0
        %v5148 = vpop.f32.mrf.mxu0
        %v5149 = vadd.f32 0.0, %v5148
        %v5150 = vpop.f32.mrf.mxu0
        %5151 = vmatprep.mubr.bf16.mxu0 0
        %5152 = vmatmul.mubr.bf16.gmra.mxu0 %v4635
        %v5153 = vpop.f32.mrf.mxu0
        %v5154 = vadd.f32 0.0, %v5153
        %v5155 = vpop.f32.mrf.mxu0
        %v5156 = vpop.f32.mrf.mxu0
        %v5157 = vadd.f32 0.0, %v5156
        %v5158 = vpop.f32.mrf.mxu0
        %5159 = vmatprep.mubr.bf16.mxu0 0
        %5160 = vmatmul.mubr.bf16.gmra.mxu0 %v4638
        %v5161 = vpop.f32.mrf.mxu0
        %v5162 = vadd.f32 0.0, %v5161
        %v5163 = vpop.f32.mrf.mxu0
        %v5164 = vpop.f32.mrf.mxu0
        %v5165 = vadd.f32 0.0, %v5164
        %v5166 = vpop.f32.mrf.mxu0
        %5167 = vmatprep.mubr.bf16.mxu0 0
        %5168 = vmatmul.mubr.bf16.gmra.mxu0 %v4641
        %v5169 = vpop.f32.mrf.mxu0
        %v5170 = vadd.f32 0.0, %v5169
        %v5171 = vpop.f32.mrf.mxu0
        %v5172 = vpop.f32.mrf.mxu0
        %v5173 = vadd.f32 0.0, %v5172
        %v5174 = vpop.f32.mrf.mxu0
        %5175 = vmatprep.mubr.bf16.mxu0 0
        %5176 = vmatmul.mubr.bf16.gmra.mxu0 %v4644
        %v5177 = vpop.f32.mrf.mxu0
        %v5178 = vadd.f32 0.0, %v5177
        %v5179 = vpop.f32.mrf.mxu0
        %v5180 = vpop.f32.mrf.mxu0
        %v5181 = vadd.f32 0.0, %v5180
        %v5182 = vpop.f32.mrf.mxu0
        %5183 = vmatprep.mubr.bf16.mxu0 0
        %5184 = vmatmul.mubr.bf16.gmra.mxu0 %v4647
        %v5185 = vpop.f32.mrf.mxu0
        %v5186 = vadd.f32 0.0, %v5185
        %v5187 = vpop.f32.mrf.mxu0
        %v5188 = vpop.f32.mrf.mxu0
        %v5189 = vadd.f32 0.0, %v5188
        %v5190 = vpop.f32.mrf.mxu0
        %5191 = vmatprep.mubr.bf16.mxu0 0
        %5192 = vmatmul.mubr.bf16.gmra.mxu0 %v4650
        %v5193 = vpop.f32.mrf.mxu0
        %v5194 = vadd.f32 0.0, %v5193
        %v5195 = vpop.f32.mrf.mxu0
        %v5196 = vpop.f32.mrf.mxu0
        %v5197 = vadd.f32 0.0, %v5196
        %v5198 = vpop.f32.mrf.mxu0
        %5199 = vmatprep.mubr.bf16.mxu0 0
        %5200 = vmatmul.mubr.bf16.gmra.mxu0 %v4653
        %v5201 = vpop.f32.mrf.mxu0
        %v5202 = vadd.f32 0.0, %v5201
        %v5203 = vpop.f32.mrf.mxu0
        %v5204 = vpop.f32.mrf.mxu0
        %v5205 = vadd.f32 0.0, %v5204
        %v5206 = vpop.f32.mrf.mxu0
        %5207 = vmatprep.mubr.bf16.mxu0 0
        %5208 = vmatmul.mubr.bf16.gmra.mxu0 %v4656
        %v5209 = vpop.f32.mrf.mxu0
        %v5210 = vadd.f32 0.0, %v5209
        %v5211 = vpop.f32.mrf.mxu0
        %v5212 = vpop.f32.mrf.mxu0
        %v5213 = vadd.f32 0.0, %v5212
        %v5214 = vpop.f32.mrf.mxu0
        %5215 = vmatprep.mubr.bf16.mxu0 0
        %5216 = vmatmul.mubr.bf16.gmra.mxu0 %v4659
        %v5217 = vpop.f32.mrf.mxu0
        %v5218 = vadd.f32 0.0, %v5217
        %v5219 = vpop.f32.mrf.mxu0
        %v5220 = vpop.f32.mrf.mxu0
        %v5221 = vadd.f32 0.0, %v5220
        %v5222 = vpop.f32.mrf.mxu0
        %5223 = vmatprep.mubr.bf16.mxu0 0
        %5224 = vmatmul.mubr.bf16.gmra.mxu0 %v4868
        %v5225 = vpop.f32.mrf.mxu0
        %v5226 = vadd.f32 0.0, %v5225
        %v5227 = vpop.f32.mrf.mxu0
        %v5228 = vpop.f32.mrf.mxu0
        %v5229 = vadd.f32 0.0, %v5228
        %v5230 = vpop.f32.mrf.mxu0
        %5231 = vmatprep.mubr.bf16.mxu0 0
        %5232 = vmatmul.mubr.bf16.gmra.mxu0 %v5077
        %v5233 = vpop.f32.mrf.mxu0
        %v5234 = vadd.f32 0.0, %v5233
        %v5235 = vpop.f32.mrf.mxu0
        %v5236 = vpop.f32.mrf.mxu0
        %v5237 = vadd.f32 0.0, %v5236
        %v5238 = vpop.f32.mrf.mxu0
        %5239 = vdwg.mxu0
        %v5240 = vadd.f32 %v5031, %v5114
        %v5241 = vadd.f32 %v5032, %v5117
        %v5242 = vadd.f32 %v5033, %v5122
        %v5243 = vadd.f32 %v5034, %v5125
        %v5244 = vadd.f32 %v5035, %v5130
        %v5245 = vadd.f32 %v5036, %v5133
        %v5246 = vadd.f32 %v5037, %v5138
        %v5247 = vadd.f32 %v5038, %v5141
        %v5248 = vadd.f32 %v5039, %v5146
        %v5249 = vadd.f32 %v5040, %v5149
        %v5250 = vadd.f32 %v5041, %v5154
        %v5251 = vadd.f32 %v5042, %v5157
        %v5252 = vadd.f32 %v5043, %v5162
        %v5253 = vadd.f32 %v5044, %v5165
        %v5254 = vadd.f32 %v5045, %v5170
        %v5255 = vadd.f32 %v5046, %v5173
        %v5256 = vadd.f32 %v5047, %v5178
        %v5257 = vadd.f32 %v5048, %v5181
        %v5258 = vadd.f32 %v5049, %v5186
        %v5259 = vadd.f32 %v5050, %v5189
        %v5260 = vadd.f32 %v5051, %v5194
        %v5261 = vadd.f32 %v5052, %v5197
        %v5262 = vadd.f32 %v5053, %v5202
        %v5263 = vadd.f32 %v5054, %v5205
        %v5264 = vadd.f32 %v5055, %v5210
        %v5265 = vadd.f32 %v5056, %v5213
        %v5266 = vadd.f32 %v5057, %v5218
        %v5267 = vadd.f32 %v5058, %v5221
        %v5268 = vadd.f32 %v5059, %v5226
        %v5269 = vadd.f32 %v5060, %v5229
        %v5270 = vadd.f32 %v5061, %v5234
        %v5271 = vadd.f32 %v5062, %v5237
        %v5272 = vld [vmem:[#allocation3] sm:$0xf]
        %v5273 = vld [vmem:[#allocation3 + $0x4] sm:$0xf]
        %v5274 = vld [vmem:[#allocation3 + $0xc] sm:$0xf]
        %v5275 = vld [vmem:[#allocation3 + $0x10] sm:$0xf]
        %v5276 = vld [vmem:[#allocation3 + $0x18] sm:$0xf]
        %v5277 = vld [vmem:[#allocation3 + $0x1c] sm:$0xf]
        %v5278 = vld [vmem:[#allocation3 + $0x24] sm:$0xf]
        %v5279 = vld [vmem:[#allocation3 + $0x28] sm:$0xf]
        %v5280 = vld [vmem:[#allocation3 + $0x30] sm:$0xf]
        %v5281 = vld [vmem:[#allocation3 + $0x34] sm:$0xf]
        %v5282 = vld [vmem:[#allocation3 + $0x3c] sm:$0xf]
        %v5283 = vld [vmem:[#allocation3 + $0x40] sm:$0xf]
        %v5284 = vld [vmem:[#allocation3 + $0x48] sm:$0xf]
        %v5285 = vld [vmem:[#allocation3 + $0x4c] sm:$0xf]
        %v5286 = vld [vmem:[#allocation3 + $0x54] sm:$0xf]
        %v5287 = vld [vmem:[#allocation3 + $0x58] sm:$0xf]
        %v5288 = vld [vmem:[#allocation3 + $0x60] sm:$0xf]
        %v5289 = vld [vmem:[#allocation3 + $0x64] sm:$0xf]
        %v5290 = vld [vmem:[#allocation3 + $0x6c] sm:$0xf]
        %v5291 = vld [vmem:[#allocation3 + $0x70] sm:$0xf]
        %v5292 = vld [vmem:[#allocation3 + $0x78] sm:$0xf]
        %v5293 = vld [vmem:[#allocation3 + $0x7c] sm:$0xf]
        %v5294 = vld [vmem:[#allocation3 + $0x84] sm:$0xf]
        %v5295 = vld [vmem:[#allocation3 + $0x88] sm:$0xf]
        %v5296 = vld [vmem:[#allocation3 + $0x90] sm:$0xf]
        %v5297 = vld [vmem:[#allocation3 + $0x94] sm:$0xf]
        %v5298 = vld [vmem:[#allocation3 + $0x9c] sm:$0xf]
        %v5299 = vld [vmem:[#allocation3 + $0xa0] sm:$0xf]
        %v5300 = vld [vmem:[#allocation3 + $0xa8] sm:$0xf]
        %v5301 = vld [vmem:[#allocation3 + $0xac] sm:$0xf]
        %v5302 = vld [vmem:[#allocation3 + $0xb4] sm:$0xf]
        %v5303 = vld [vmem:[#allocation3 + $0xb8] sm:$0xf]
        %v5304 = vld [vmem:[#allocation3 + $0xc0] sm:$0xf]
        %v5305 = vld [vmem:[#allocation3 + $0xc4] sm:$0xf]
        %v5306 = vld [vmem:[#allocation3 + $0xcc] sm:$0xf]
        %v5307 = vld [vmem:[#allocation3 + $0xd0] sm:$0xf]
        %v5340 = vunpack.c.l.b16 %v5272
        %v5341 = vunpack.c.l.b16 %v5273
        %v5342 = vunpack.c.l.b16 %v5274
        %v5343 = vunpack.c.l.b16 %v5275
        %v5344 = vunpack.c.l.b16 %v5276
        %v5345 = vunpack.c.l.b16 %v5277
        %v5346 = vunpack.c.l.b16 %v5278
        %v5347 = vunpack.c.l.b16 %v5279
        %v5348 = vunpack.c.l.b16 %v5280
        %v5349 = vunpack.c.l.b16 %v5281
        %v5350 = vunpack.c.l.b16 %v5282
        %v5351 = vunpack.c.l.b16 %v5283
        %v5352 = vunpack.c.l.b16 %v5284
        %v5353 = vunpack.c.l.b16 %v5285
        %v5354 = vunpack.c.l.b16 %v5286
        %v5355 = vunpack.c.l.b16 %v5287
        %v5356 = vunpack.c.l.b16 %v5288
        %v5357 = vunpack.c.l.b16 %v5289
        %v5358 = vunpack.c.l.b16 %v5290
        %v5359 = vunpack.c.l.b16 %v5291
        %v5360 = vunpack.c.l.b16 %v5292
        %v5361 = vunpack.c.l.b16 %v5293
        %v5362 = vunpack.c.l.b16 %v5294
        %v5363 = vunpack.c.l.b16 %v5295
        %v5364 = vunpack.c.l.b16 %v5296
        %v5365 = vunpack.c.l.b16 %v5297
        %v5366 = vunpack.c.l.b16 %v5298
        %v5367 = vunpack.c.l.b16 %v5299
        %v5368 = vunpack.c.l.b16 %v5300
        %v5369 = vunpack.c.l.b16 %v5301
        %v5370 = vunpack.c.l.b16 %v5302
        %v5371 = vunpack.c.l.b16 %v5303
        %v5372 = vpack.c.b16 %v5341, %v5340
        %v5373 = vpack.c.b16 %v5343, %v5342
        %v5374 = vpack.c.b16 %v5345, %v5344
        %v5375 = vpack.c.b16 %v5347, %v5346
        %v5376 = vpack.c.b16 %v5349, %v5348
        %v5377 = vpack.c.b16 %v5351, %v5350
        %v5378 = vpack.c.b16 %v5353, %v5352
        %v5379 = vpack.c.b16 %v5355, %v5354
        %v5380 = vpack.c.b16 %v5357, %v5356
        %v5381 = vpack.c.b16 %v5359, %v5358
        %v5382 = vpack.c.b16 %v5361, %v5360
        %v5383 = vpack.c.b16 %v5363, %v5362
        %v5384 = vpack.c.b16 %v5365, %v5364
        %v5385 = vpack.c.b16 %v5367, %v5366
        %v5386 = vpack.c.b16 %v5369, %v5368
        %v5387 = vpack.c.b16 %v5371, %v5370
        %vm5388 = vcmask 523264
        %v5390 = vsel %vm5388, %v5372, 0
        %v5393 = vsel %vm5388, %v5373, 0
        %v5396 = vsel %vm5388, %v5374, 0
        %v5399 = vsel %vm5388, %v5375, 0
        %v5402 = vsel %vm5388, %v5376, 0
        %v5405 = vsel %vm5388, %v5377, 0
        %v5408 = vsel %vm5388, %v5378, 0
        %v5411 = vsel %vm5388, %v5379, 0
        %v5414 = vsel %vm5388, %v5380, 0
        %v5417 = vsel %vm5388, %v5381, 0
        %v5420 = vsel %vm5388, %v5382, 0
        %v5423 = vsel %vm5388, %v5383, 0
        %v5426 = vsel %vm5388, %v5384, 0
        %v5429 = vsel %vm5388, %v5385, 0
        %v5432 = vsel %vm5388, %v5386, 0
        %v5435 = vsel %vm5388, %v5387, 0
        %5437 = vmatprep.subr.bf16.mxu0 0
        %5438 = vmatpush1.bf16.msra.mxu0 0
        %5439 = vmatprep.subr.bf16.mxu0 0
        %5440 = vmatpush1.bf16.msra.mxu0 0
        %5441 = vmatprep.subr.bf16.mxu0 0
        %5442 = vmatpush1.bf16.msra.mxu0 0
        %5443 = vmatprep.subr.bf16.mxu0 0
        %5444 = vmatpush1.bf16.msra.mxu0 0
        %5445 = vmatprep.subr.bf16.mxu0 0
        %5446 = vmatpush1.bf16.msra.mxu0 %v2425
        %5447 = vmatprep.subr.bf16.mxu0 0
        %5448 = vmatpush1.bf16.msra.mxu0 %v2424
        %5449 = vmatprep.subr.bf16.mxu0 0
        %5450 = vmatpush1.bf16.msra.mxu0 %v2423
        %5451 = vmatprep.subr.bf16.mxu0 0
        %5452 = vmatpush1.bf16.msra.mxu0 %v2422
        %5453 = vmatprep.subr.bf16.mxu0 0
        %5454 = vmatpush2.bf16.msra.mxu0 0
        %5455 = vmatprep.subr.bf16.mxu0 0
        %5456 = vmatpush2.bf16.msra.mxu0 0
        %5457 = vmatprep.subr.bf16.mxu0 0
        %5458 = vmatpush2.bf16.msra.mxu0 0
        %5459 = vmatprep.subr.bf16.mxu0 0
        %5460 = vmatpush2.bf16.msra.mxu0 0
        %5461 = vmatprep.subr.bf16.mxu0 0
        %5462 = vmatpush2.bf16.msra.mxu0 0
        %5463 = vmatprep.subr.bf16.mxu0 0
        %5464 = vmatpush2.bf16.msra.mxu0 0
        %5465 = vmatprep.subr.bf16.mxu0 0
        %5466 = vmatpush2.bf16.msra.mxu0 0
        %5467 = vmatprep.subr.bf16.mxu0 0
        %5468 = vmatpush2.bf16.msra.mxu0 0
        %5469 = vmatprep.mubr.bf16.mxu0 0
        %5470 = vmatmul.mubr.bf16.gmra.mxu0 %v5390
        %v5471 = vpop.f32.mrf.mxu0
        %v5472 = vadd.f32 0.0, %v5471
        %v5473 = vpop.f32.mrf.mxu0
        %v5474 = vpop.f32.mrf.mxu0
        %v5475 = vadd.f32 0.0, %v5474
        %v5476 = vpop.f32.mrf.mxu0
        %5477 = vmatprep.mubr.bf16.mxu0 0
        %5478 = vmatmul.mubr.bf16.gmra.mxu0 %v5393
        %v5479 = vpop.f32.mrf.mxu0
        %v5480 = vadd.f32 0.0, %v5479
        %v5481 = vpop.f32.mrf.mxu0
        %v5482 = vpop.f32.mrf.mxu0
        %v5483 = vadd.f32 0.0, %v5482
        %v5484 = vpop.f32.mrf.mxu0
        %5485 = vmatprep.mubr.bf16.mxu0 0
        %5486 = vmatmul.mubr.bf16.gmra.mxu0 %v5396
        %v5487 = vpop.f32.mrf.mxu0
        %v5488 = vadd.f32 0.0, %v5487
        %v5489 = vpop.f32.mrf.mxu0
        %v5490 = vpop.f32.mrf.mxu0
        %v5491 = vadd.f32 0.0, %v5490
        %v5492 = vpop.f32.mrf.mxu0
        %5493 = vmatprep.mubr.bf16.mxu0 0
        %5494 = vmatmul.mubr.bf16.gmra.mxu0 %v5399
        %v5495 = vpop.f32.mrf.mxu0
        %v5496 = vadd.f32 0.0, %v5495
        %v5497 = vpop.f32.mrf.mxu0
        %v5498 = vpop.f32.mrf.mxu0
        %v5499 = vadd.f32 0.0, %v5498
        %v5500 = vpop.f32.mrf.mxu0
        %5501 = vmatprep.mubr.bf16.mxu0 0
        %5502 = vmatmul.mubr.bf16.gmra.mxu0 %v5402
        %v5503 = vpop.f32.mrf.mxu0
        %v5504 = vadd.f32 0.0, %v5503
        %v5505 = vpop.f32.mrf.mxu0
        %v5506 = vpop.f32.mrf.mxu0
        %v5507 = vadd.f32 0.0, %v5506
        %v5508 = vpop.f32.mrf.mxu0
        %5509 = vmatprep.mubr.bf16.mxu0 0
        %5510 = vmatmul.mubr.bf16.gmra.mxu0 %v5405
        %v5511 = vpop.f32.mrf.mxu0
        %v5512 = vadd.f32 0.0, %v5511
        %v5513 = vpop.f32.mrf.mxu0
        %v5514 = vpop.f32.mrf.mxu0
        %v5515 = vadd.f32 0.0, %v5514
        %v5516 = vpop.f32.mrf.mxu0
        %5517 = vmatprep.mubr.bf16.mxu0 0
        %5518 = vmatmul.mubr.bf16.gmra.mxu0 %v5408
        %v5519 = vpop.f32.mrf.mxu0
        %v5520 = vadd.f32 0.0, %v5519
        %v5521 = vpop.f32.mrf.mxu0
        %v5522 = vpop.f32.mrf.mxu0
        %v5523 = vadd.f32 0.0, %v5522
        %v5524 = vpop.f32.mrf.mxu0
        %5525 = vmatprep.mubr.bf16.mxu0 0
        %5526 = vmatmul.mubr.bf16.gmra.mxu0 %v5411
        %v5527 = vpop.f32.mrf.mxu0
        %v5528 = vadd.f32 0.0, %v5527
        %v5529 = vpop.f32.mrf.mxu0
        %v5530 = vpop.f32.mrf.mxu0
        %v5531 = vadd.f32 0.0, %v5530
        %v5532 = vpop.f32.mrf.mxu0
        %5533 = vmatprep.mubr.bf16.mxu0 0
        %5534 = vmatmul.mubr.bf16.gmra.mxu0 %v5414
        %v5535 = vpop.f32.mrf.mxu0
        %v5536 = vadd.f32 0.0, %v5535
        %v5537 = vpop.f32.mrf.mxu0
        %v5538 = vpop.f32.mrf.mxu0
        %v5539 = vadd.f32 0.0, %v5538
        %v5540 = vpop.f32.mrf.mxu0
        %5541 = vmatprep.mubr.bf16.mxu0 0
        %5542 = vmatmul.mubr.bf16.gmra.mxu0 %v5417
        %v5543 = vpop.f32.mrf.mxu0
        %v5544 = vadd.f32 0.0, %v5543
        %v5545 = vpop.f32.mrf.mxu0
        %v5546 = vpop.f32.mrf.mxu0
        %v5547 = vadd.f32 0.0, %v5546
        %v5548 = vpop.f32.mrf.mxu0
        %5549 = vmatprep.mubr.bf16.mxu0 0
        %5550 = vmatmul.mubr.bf16.gmra.mxu0 %v5420
        %v5551 = vpop.f32.mrf.mxu0
        %v5552 = vadd.f32 0.0, %v5551
        %v5553 = vpop.f32.mrf.mxu0
        %v5554 = vpop.f32.mrf.mxu0
        %v5555 = vadd.f32 0.0, %v5554
        %v5556 = vpop.f32.mrf.mxu0
        %5557 = vmatprep.mubr.bf16.mxu0 0
        %5558 = vmatmul.mubr.bf16.gmra.mxu0 %v5423
        %v5559 = vpop.f32.mrf.mxu0
        %v5560 = vadd.f32 0.0, %v5559
        %v5561 = vpop.f32.mrf.mxu0
        %v5562 = vpop.f32.mrf.mxu0
        %v5563 = vadd.f32 0.0, %v5562
        %v5564 = vpop.f32.mrf.mxu0
        %5565 = vmatprep.mubr.bf16.mxu0 0
        %5566 = vmatmul.mubr.bf16.gmra.mxu0 %v5426
        %v5567 = vpop.f32.mrf.mxu0
        %v5568 = vadd.f32 0.0, %v5567
        %v5569 = vpop.f32.mrf.mxu0
        %v5570 = vpop.f32.mrf.mxu0
        %v5571 = vadd.f32 0.0, %v5570
        %v5572 = vpop.f32.mrf.mxu0
        %5573 = vmatprep.mubr.bf16.mxu0 0
        %5574 = vmatmul.mubr.bf16.gmra.mxu0 %v5429
        %v5575 = vpop.f32.mrf.mxu0
        %v5576 = vadd.f32 0.0, %v5575
        %v5577 = vpop.f32.mrf.mxu0
        %v5578 = vpop.f32.mrf.mxu0
        %v5579 = vadd.f32 0.0, %v5578
        %v5580 = vpop.f32.mrf.mxu0
        %5581 = vmatprep.mubr.bf16.mxu0 0
        %5582 = vmatmul.mubr.bf16.gmra.mxu0 %v5432
        %v5583 = vpop.f32.mrf.mxu0
        %v5584 = vadd.f32 0.0, %v5583
        %v5585 = vpop.f32.mrf.mxu0
        %v5586 = vpop.f32.mrf.mxu0
        %v5587 = vadd.f32 0.0, %v5586
        %v5588 = vpop.f32.mrf.mxu0
        %5589 = vmatprep.mubr.bf16.mxu0 0
        %5590 = vmatmul.mubr.bf16.gmra.mxu0 %v5435
        %v5591 = vpop.f32.mrf.mxu0
        %v5592 = vadd.f32 0.0, %v5591
        %v5593 = vpop.f32.mrf.mxu0
        %v5594 = vpop.f32.mrf.mxu0
        %v5595 = vadd.f32 0.0, %v5594
        %v5596 = vpop.f32.mrf.mxu0
        %5597 = vdwg.mxu0
        %v5598 = vadd.f32 %v5240, %v5472
        %v5599 = vadd.f32 %v5241, %v5475
        %v5600 = vadd.f32 %v5242, %v5480
        %v5601 = vadd.f32 %v5243, %v5483
        %v5602 = vadd.f32 %v5244, %v5488
        %v5603 = vadd.f32 %v5245, %v5491
        %v5604 = vadd.f32 %v5246, %v5496
        %v5605 = vadd.f32 %v5247, %v5499
        %v5606 = vadd.f32 %v5248, %v5504
        %v5607 = vadd.f32 %v5249, %v5507
        %v5608 = vadd.f32 %v5250, %v5512
        %v5609 = vadd.f32 %v5251, %v5515
        %v5610 = vadd.f32 %v5252, %v5520
        %v5611 = vadd.f32 %v5253, %v5523
        %v5612 = vadd.f32 %v5254, %v5528
        %v5613 = vadd.f32 %v5255, %v5531
        %v5614 = vadd.f32 %v5256, %v5536
        %v5615 = vadd.f32 %v5257, %v5539
        %v5616 = vadd.f32 %v5258, %v5544
        %v5617 = vadd.f32 %v5259, %v5547
        %v5618 = vadd.f32 %v5260, %v5552
        %v5619 = vadd.f32 %v5261, %v5555
        %v5620 = vadd.f32 %v5262, %v5560
        %v5621 = vadd.f32 %v5263, %v5563
        %v5622 = vadd.f32 %v5264, %v5568
        %v5623 = vadd.f32 %v5265, %v5571
        %v5624 = vadd.f32 %v5266, %v5576
        %v5625 = vadd.f32 %v5267, %v5579
        %v5626 = vadd.f32 %v5268, %v5584
        %v5627 = vadd.f32 %v5269, %v5587
        %v5628 = vadd.f32 %v5270, %v5592
        %v5629 = vadd.f32 %v5271, %v5595
        %v5632 = vunpack.c.l.b16 %v5304
        %v5633 = vunpack.c.l.b16 %v5305
        %v5634 = vpack.c.b16 %v5633, %v5632
        %v5636 = vsel %vm5388, %v5634, 0
        %5638 = vmatprep.subr.bf16.mxu0 0
        %5639 = vmatpush1.bf16.msra.mxu0 0
        %5640 = vmatprep.subr.bf16.mxu0 0
        %5641 = vmatpush1.bf16.msra.mxu0 0
        %5642 = vmatprep.subr.bf16.mxu0 0
        %5643 = vmatpush1.bf16.msra.mxu0 0
        %5644 = vmatprep.subr.bf16.mxu0 0
        %5645 = vmatpush1.bf16.msra.mxu0 0
        %5646 = vmatprep.subr.bf16.mxu0 0
        %5647 = vmatpush1.bf16.msra.mxu0 %v2437
        %5648 = vmatprep.subr.bf16.mxu0 0
        %5649 = vmatpush1.bf16.msra.mxu0 %v2436
        %5650 = vmatprep.subr.bf16.mxu0 0
        %5651 = vmatpush1.bf16.msra.mxu0 %v2435
        %5652 = vmatprep.subr.bf16.mxu0 0
        %5653 = vmatpush1.bf16.msra.mxu0 %v2434
        %5654 = vmatprep.subr.bf16.mxu0 0
        %5655 = vmatpush2.bf16.msra.mxu0 0
        %5656 = vmatprep.subr.bf16.mxu0 0
        %5657 = vmatpush2.bf16.msra.mxu0 0
        %5658 = vmatprep.subr.bf16.mxu0 0
        %5659 = vmatpush2.bf16.msra.mxu0 0
        %5660 = vmatprep.subr.bf16.mxu0 0
        %5661 = vmatpush2.bf16.msra.mxu0 0
        %5662 = vmatprep.subr.bf16.mxu0 0
        %5663 = vmatpush2.bf16.msra.mxu0 0
        %5664 = vmatprep.subr.bf16.mxu0 0
        %5665 = vmatpush2.bf16.msra.mxu0 0
        %5666 = vmatprep.subr.bf16.mxu0 0
        %5667 = vmatpush2.bf16.msra.mxu0 0
        %5668 = vmatprep.subr.bf16.mxu0 0
        %5669 = vmatpush2.bf16.msra.mxu0 0
        %5670 = vmatprep.mubr.bf16.mxu0 0
        %5671 = vmatmul.mubr.bf16.gmra.mxu0 %v5393
        %v5672 = vpop.f32.mrf.mxu0
        %v5673 = vadd.f32 0.0, %v5672
        %v5674 = vpop.f32.mrf.mxu0
        %v5675 = vpop.f32.mrf.mxu0
        %v5676 = vadd.f32 0.0, %v5675
        %v5677 = vpop.f32.mrf.mxu0
        %5678 = vmatprep.mubr.bf16.mxu0 0
        %5679 = vmatmul.mubr.bf16.gmra.mxu0 %v5396
        %v5680 = vpop.f32.mrf.mxu0
        %v5681 = vadd.f32 0.0, %v5680
        %v5682 = vpop.f32.mrf.mxu0
        %v5683 = vpop.f32.mrf.mxu0
        %v5684 = vadd.f32 0.0, %v5683
        %v5685 = vpop.f32.mrf.mxu0
        %5686 = vmatprep.mubr.bf16.mxu0 0
        %5687 = vmatmul.mubr.bf16.gmra.mxu0 %v5399
        %v5688 = vpop.f32.mrf.mxu0
        %v5689 = vadd.f32 0.0, %v5688
        %v5690 = vpop.f32.mrf.mxu0
        %v5691 = vpop.f32.mrf.mxu0
        %v5692 = vadd.f32 0.0, %v5691
        %v5693 = vpop.f32.mrf.mxu0
        %5694 = vmatprep.mubr.bf16.mxu0 0
        %5695 = vmatmul.mubr.bf16.gmra.mxu0 %v5402
        %v5696 = vpop.f32.mrf.mxu0
        %v5697 = vadd.f32 0.0, %v5696
        %v5698 = vpop.f32.mrf.mxu0
        %v5699 = vpop.f32.mrf.mxu0
        %v5700 = vadd.f32 0.0, %v5699
        %v5701 = vpop.f32.mrf.mxu0
        %5702 = vmatprep.mubr.bf16.mxu0 0
        %5703 = vmatmul.mubr.bf16.gmra.mxu0 %v5405
        %v5704 = vpop.f32.mrf.mxu0
        %v5705 = vadd.f32 0.0, %v5704
        %v5706 = vpop.f32.mrf.mxu0
        %v5707 = vpop.f32.mrf.mxu0
        %v5708 = vadd.f32 0.0, %v5707
        %v5709 = vpop.f32.mrf.mxu0
        %5710 = vmatprep.mubr.bf16.mxu0 0
        %5711 = vmatmul.mubr.bf16.gmra.mxu0 %v5408
        %v5712 = vpop.f32.mrf.mxu0
        %v5713 = vadd.f32 0.0, %v5712
        %v5714 = vpop.f32.mrf.mxu0
        %v5715 = vpop.f32.mrf.mxu0
        %v5716 = vadd.f32 0.0, %v5715
        %v5717 = vpop.f32.mrf.mxu0
        %5718 = vmatprep.mubr.bf16.mxu0 0
        %5719 = vmatmul.mubr.bf16.gmra.mxu0 %v5411
        %v5720 = vpop.f32.mrf.mxu0
        %v5721 = vadd.f32 0.0, %v5720
        %v5722 = vpop.f32.mrf.mxu0
        %v5723 = vpop.f32.mrf.mxu0
        %v5724 = vadd.f32 0.0, %v5723
        %v5725 = vpop.f32.mrf.mxu0
        %5726 = vmatprep.mubr.bf16.mxu0 0
        %5727 = vmatmul.mubr.bf16.gmra.mxu0 %v5414
        %v5728 = vpop.f32.mrf.mxu0
        %v5729 = vadd.f32 0.0, %v5728
        %v5730 = vpop.f32.mrf.mxu0
        %v5731 = vpop.f32.mrf.mxu0
        %v5732 = vadd.f32 0.0, %v5731
        %v5733 = vpop.f32.mrf.mxu0
        %5734 = vmatprep.mubr.bf16.mxu0 0
        %5735 = vmatmul.mubr.bf16.gmra.mxu0 %v5417
        %v5736 = vpop.f32.mrf.mxu0
        %v5737 = vadd.f32 0.0, %v5736
        %v5738 = vpop.f32.mrf.mxu0
        %v5739 = vpop.f32.mrf.mxu0
        %v5740 = vadd.f32 0.0, %v5739
        %v5741 = vpop.f32.mrf.mxu0
        %5742 = vmatprep.mubr.bf16.mxu0 0
        %5743 = vmatmul.mubr.bf16.gmra.mxu0 %v5420
        %v5744 = vpop.f32.mrf.mxu0
        %v5745 = vadd.f32 0.0, %v5744
        %v5746 = vpop.f32.mrf.mxu0
        %v5747 = vpop.f32.mrf.mxu0
        %v5748 = vadd.f32 0.0, %v5747
        %v5749 = vpop.f32.mrf.mxu0
        %5750 = vmatprep.mubr.bf16.mxu0 0
        %5751 = vmatmul.mubr.bf16.gmra.mxu0 %v5423
        %v5752 = vpop.f32.mrf.mxu0
        %v5753 = vadd.f32 0.0, %v5752
        %v5754 = vpop.f32.mrf.mxu0
        %v5755 = vpop.f32.mrf.mxu0
        %v5756 = vadd.f32 0.0, %v5755
        %v5757 = vpop.f32.mrf.mxu0
        %5758 = vmatprep.mubr.bf16.mxu0 0
        %5759 = vmatmul.mubr.bf16.gmra.mxu0 %v5426
        %v5760 = vpop.f32.mrf.mxu0
        %v5761 = vadd.f32 0.0, %v5760
        %v5762 = vpop.f32.mrf.mxu0
        %v5763 = vpop.f32.mrf.mxu0
        %v5764 = vadd.f32 0.0, %v5763
        %v5765 = vpop.f32.mrf.mxu0
        %5766 = vmatprep.mubr.bf16.mxu0 0
        %5767 = vmatmul.mubr.bf16.gmra.mxu0 %v5429
        %v5768 = vpop.f32.mrf.mxu0
        %v5769 = vadd.f32 0.0, %v5768
        %v5770 = vpop.f32.mrf.mxu0
        %v5771 = vpop.f32.mrf.mxu0
        %v5772 = vadd.f32 0.0, %v5771
        %v5773 = vpop.f32.mrf.mxu0
        %5774 = vmatprep.mubr.bf16.mxu0 0
        %5775 = vmatmul.mubr.bf16.gmra.mxu0 %v5432
        %v5776 = vpop.f32.mrf.mxu0
        %v5777 = vadd.f32 0.0, %v5776
        %v5778 = vpop.f32.mrf.mxu0
        %v5779 = vpop.f32.mrf.mxu0
        %v5780 = vadd.f32 0.0, %v5779
        %v5781 = vpop.f32.mrf.mxu0
        %5782 = vmatprep.mubr.bf16.mxu0 0
        %5783 = vmatmul.mubr.bf16.gmra.mxu0 %v5435
        %v5784 = vpop.f32.mrf.mxu0
        %v5785 = vadd.f32 0.0, %v5784
        %v5786 = vpop.f32.mrf.mxu0
        %v5787 = vpop.f32.mrf.mxu0
        %v5788 = vadd.f32 0.0, %v5787
        %v5789 = vpop.f32.mrf.mxu0
        %5790 = vmatprep.mubr.bf16.mxu0 0
        %5791 = vmatmul.mubr.bf16.gmra.mxu0 %v5636
        %v5792 = vpop.f32.mrf.mxu0
        %v5793 = vadd.f32 0.0, %v5792
        %v5794 = vpop.f32.mrf.mxu0
        %v5795 = vpop.f32.mrf.mxu0
        %v5796 = vadd.f32 0.0, %v5795
        %v5797 = vpop.f32.mrf.mxu0
        %5798 = vdwg.mxu0
        %v5799 = vadd.f32 %v5598, %v5673
        %v5800 = vadd.f32 %v5599, %v5676
        %v5801 = vadd.f32 %v5600, %v5681
        %v5802 = vadd.f32 %v5601, %v5684
        %v5803 = vadd.f32 %v5602, %v5689
        %v5804 = vadd.f32 %v5603, %v5692
        %v5805 = vadd.f32 %v5604, %v5697
        %v5806 = vadd.f32 %v5605, %v5700
        %v5807 = vadd.f32 %v5606, %v5705
        %v5808 = vadd.f32 %v5607, %v5708
        %v5809 = vadd.f32 %v5608, %v5713
        %v5810 = vadd.f32 %v5609, %v5716
        %v5811 = vadd.f32 %v5610, %v5721
        %v5812 = vadd.f32 %v5611, %v5724
        %v5813 = vadd.f32 %v5612, %v5729
        %v5814 = vadd.f32 %v5613, %v5732
        %v5815 = vadd.f32 %v5614, %v5737
        %v5816 = vadd.f32 %v5615, %v5740
        %v5817 = vadd.f32 %v5616, %v5745
        %v5818 = vadd.f32 %v5617, %v5748
        %v5819 = vadd.f32 %v5618, %v5753
        %v5820 = vadd.f32 %v5619, %v5756
        %v5821 = vadd.f32 %v5620, %v5761
        %v5822 = vadd.f32 %v5621, %v5764
        %v5823 = vadd.f32 %v5622, %v5769
        %v5824 = vadd.f32 %v5623, %v5772
        %v5825 = vadd.f32 %v5624, %v5777
        %v5826 = vadd.f32 %v5625, %v5780
        %v5827 = vadd.f32 %v5626, %v5785
        %v5828 = vadd.f32 %v5627, %v5788
        %v5829 = vadd.f32 %v5628, %v5793
        %v5830 = vadd.f32 %v5629, %v5796
        %v5833 = vunpack.c.l.b16 %v5306
        %v5834 = vunpack.c.l.b16 %v5307
        %v5835 = vpack.c.b16 %v5834, %v5833
        %v5837 = vsel %vm5388, %v5835, 0
        %5839 = vmatprep.subr.bf16.mxu0 0
        %5840 = vmatpush1.bf16.msra.mxu0 0
        %5841 = vmatprep.subr.bf16.mxu0 0
        %5842 = vmatpush1.bf16.msra.mxu0 0
        %5843 = vmatprep.subr.bf16.mxu0 0
        %5844 = vmatpush1.bf16.msra.mxu0 0
        %5845 = vmatprep.subr.bf16.mxu0 0
        %5846 = vmatpush1.bf16.msra.mxu0 0
        %5847 = vmatprep.subr.bf16.mxu0 0
        %5848 = vmatpush1.bf16.msra.mxu0 %v2449
        %5849 = vmatprep.subr.bf16.mxu0 0
        %5850 = vmatpush1.bf16.msra.mxu0 %v2448
        %5851 = vmatprep.subr.bf16.mxu0 0
        %5852 = vmatpush1.bf16.msra.mxu0 %v2447
        %5853 = vmatprep.subr.bf16.mxu0 0
        %5854 = vmatpush1.bf16.msra.mxu0 %v2446
        %5855 = vmatprep.subr.bf16.mxu0 0
        %5856 = vmatpush2.bf16.msra.mxu0 0
        %5857 = vmatprep.subr.bf16.mxu0 0
        %5858 = vmatpush2.bf16.msra.mxu0 0
        %5859 = vmatprep.subr.bf16.mxu0 0
        %5860 = vmatpush2.bf16.msra.mxu0 0
        %5861 = vmatprep.subr.bf16.mxu0 0
        %5862 = vmatpush2.bf16.msra.mxu0 0
        %5863 = vmatprep.subr.bf16.mxu0 0
        %5864 = vmatpush2.bf16.msra.mxu0 0
        %5865 = vmatprep.subr.bf16.mxu0 0
        %5866 = vmatpush2.bf16.msra.mxu0 0
        %5867 = vmatprep.subr.bf16.mxu0 0
        %5868 = vmatpush2.bf16.msra.mxu0 0
        %5869 = vmatprep.subr.bf16.mxu0 0
        %5870 = vmatpush2.bf16.msra.mxu0 0
        %5871 = vmatprep.mubr.bf16.mxu0 0
        %5872 = vmatmul.mubr.bf16.gmra.mxu0 %v5396
        %v5873 = vpop.f32.mrf.mxu0
        %v5874 = vadd.f32 0.0, %v5873
        %v5875 = vpop.f32.mrf.mxu0
        %v5876 = vpop.f32.mrf.mxu0
        %v5877 = vadd.f32 0.0, %v5876
        %v5878 = vpop.f32.mrf.mxu0
        %5879 = vmatprep.mubr.bf16.mxu0 0
        %5880 = vmatmul.mubr.bf16.gmra.mxu0 %v5399
        %v5881 = vpop.f32.mrf.mxu0
        %v5882 = vadd.f32 0.0, %v5881
        %v5883 = vpop.f32.mrf.mxu0
        %v5884 = vpop.f32.mrf.mxu0
        %v5885 = vadd.f32 0.0, %v5884
        %v5886 = vpop.f32.mrf.mxu0
        %5887 = vmatprep.mubr.bf16.mxu0 0
        %5888 = vmatmul.mubr.bf16.gmra.mxu0 %v5402
        %v5889 = vpop.f32.mrf.mxu0
        %v5890 = vadd.f32 0.0, %v5889
        %v5891 = vpop.f32.mrf.mxu0
        %v5892 = vpop.f32.mrf.mxu0
        %v5893 = vadd.f32 0.0, %v5892
        %v5894 = vpop.f32.mrf.mxu0
        %5895 = vmatprep.mubr.bf16.mxu0 0
        %5896 = vmatmul.mubr.bf16.gmra.mxu0 %v5405
        %v5897 = vpop.f32.mrf.mxu0
        %v5898 = vadd.f32 0.0, %v5897
        %v5899 = vpop.f32.mrf.mxu0
        %v5900 = vpop.f32.mrf.mxu0
        %v5901 = vadd.f32 0.0, %v5900
        %v5902 = vpop.f32.mrf.mxu0
        %5903 = vmatprep.mubr.bf16.mxu0 0
        %5904 = vmatmul.mubr.bf16.gmra.mxu0 %v5408
        %v5905 = vpop.f32.mrf.mxu0
        %v5906 = vadd.f32 0.0, %v5905
        %v5907 = vpop.f32.mrf.mxu0
        %v5908 = vpop.f32.mrf.mxu0
        %v5909 = vadd.f32 0.0, %v5908
        %v5910 = vpop.f32.mrf.mxu0
        %5911 = vmatprep.mubr.bf16.mxu0 0
        %5912 = vmatmul.mubr.bf16.gmra.mxu0 %v5411
        %v5913 = vpop.f32.mrf.mxu0
        %v5914 = vadd.f32 0.0, %v5913
        %v5915 = vpop.f32.mrf.mxu0
        %v5916 = vpop.f32.mrf.mxu0
        %v5917 = vadd.f32 0.0, %v5916
        %v5918 = vpop.f32.mrf.mxu0
        %5919 = vmatprep.mubr.bf16.mxu0 0
        %5920 = vmatmul.mubr.bf16.gmra.mxu0 %v5414
        %v5921 = vpop.f32.mrf.mxu0
        %v5922 = vadd.f32 0.0, %v5921
        %v5923 = vpop.f32.mrf.mxu0
        %v5924 = vpop.f32.mrf.mxu0
        %v5925 = vadd.f32 0.0, %v5924
        %v5926 = vpop.f32.mrf.mxu0
        %5927 = vmatprep.mubr.bf16.mxu0 0
        %5928 = vmatmul.mubr.bf16.gmra.mxu0 %v5417
        %v5929 = vpop.f32.mrf.mxu0
        %v5930 = vadd.f32 0.0, %v5929
        %v5931 = vpop.f32.mrf.mxu0
        %v5932 = vpop.f32.mrf.mxu0
        %v5933 = vadd.f32 0.0, %v5932
        %v5934 = vpop.f32.mrf.mxu0
        %5935 = vmatprep.mubr.bf16.mxu0 0
        %5936 = vmatmul.mubr.bf16.gmra.mxu0 %v5420
        %v5937 = vpop.f32.mrf.mxu0
        %v5938 = vadd.f32 0.0, %v5937
        %v5939 = vpop.f32.mrf.mxu0
        %v5940 = vpop.f32.mrf.mxu0
        %v5941 = vadd.f32 0.0, %v5940
        %v5942 = vpop.f32.mrf.mxu0
        %5943 = vmatprep.mubr.bf16.mxu0 0
        %5944 = vmatmul.mubr.bf16.gmra.mxu0 %v5423
        %v5945 = vpop.f32.mrf.mxu0
        %v5946 = vadd.f32 0.0, %v5945
        %v5947 = vpop.f32.mrf.mxu0
        %v5948 = vpop.f32.mrf.mxu0
        %v5949 = vadd.f32 0.0, %v5948
        %v5950 = vpop.f32.mrf.mxu0
        %5951 = vmatprep.mubr.bf16.mxu0 0
        %5952 = vmatmul.mubr.bf16.gmra.mxu0 %v5426
        %v5953 = vpop.f32.mrf.mxu0
        %v5954 = vadd.f32 0.0, %v5953
        %v5955 = vpop.f32.mrf.mxu0
        %v5956 = vpop.f32.mrf.mxu0
        %v5957 = vadd.f32 0.0, %v5956
        %v5958 = vpop.f32.mrf.mxu0
        %5959 = vmatprep.mubr.bf16.mxu0 0
        %5960 = vmatmul.mubr.bf16.gmra.mxu0 %v5429
        %v5961 = vpop.f32.mrf.mxu0
        %v5962 = vadd.f32 0.0, %v5961
        %v5963 = vpop.f32.mrf.mxu0
        %v5964 = vpop.f32.mrf.mxu0
        %v5965 = vadd.f32 0.0, %v5964
        %v5966 = vpop.f32.mrf.mxu0
        %5967 = vmatprep.mubr.bf16.mxu0 0
        %5968 = vmatmul.mubr.bf16.gmra.mxu0 %v5432
        %v5969 = vpop.f32.mrf.mxu0
        %v5970 = vadd.f32 0.0, %v5969
        %v5971 = vpop.f32.mrf.mxu0
        %v5972 = vpop.f32.mrf.mxu0
        %v5973 = vadd.f32 0.0, %v5972
        %v5974 = vpop.f32.mrf.mxu0
        %5975 = vmatprep.mubr.bf16.mxu0 0
        %5976 = vmatmul.mubr.bf16.gmra.mxu0 %v5435
        %v5977 = vpop.f32.mrf.mxu0
        %v5978 = vadd.f32 0.0, %v5977
        %v5979 = vpop.f32.mrf.mxu0
        %v5980 = vpop.f32.mrf.mxu0
        %v5981 = vadd.f32 0.0, %v5980
        %v5982 = vpop.f32.mrf.mxu0
        %5983 = vmatprep.mubr.bf16.mxu0 0
        %5984 = vmatmul.mubr.bf16.gmra.mxu0 %v5636
        %v5985 = vpop.f32.mrf.mxu0
        %v5986 = vadd.f32 0.0, %v5985
        %v5987 = vpop.f32.mrf.mxu0
        %v5988 = vpop.f32.mrf.mxu0
        %v5989 = vadd.f32 0.0, %v5988
        %v5990 = vpop.f32.mrf.mxu0
        %5991 = vmatprep.mubr.bf16.mxu0 0
        %5992 = vmatmul.mubr.bf16.gmra.mxu0 %v5837
        %v5993 = vpop.f32.mrf.mxu0
        %v5994 = vadd.f32 0.0, %v5993
        %v5995 = vpop.f32.mrf.mxu0
        %v5996 = vpop.f32.mrf.mxu0
        %v5997 = vadd.f32 0.0, %v5996
        %v5998 = vpop.f32.mrf.mxu0
        %5999 = vdwg.mxu0
        %v6000 = vadd.f32 %v5799, %v5874
        %v6001 = vadd.f32 %v5800, %v5877
        %v6002 = vadd.f32 %v5801, %v5882
        %v6003 = vadd.f32 %v5802, %v5885
        %v6004 = vadd.f32 %v5803, %v5890
        %v6005 = vadd.f32 %v5804, %v5893
        %v6006 = vadd.f32 %v5805, %v5898
        %v6007 = vadd.f32 %v5806, %v5901
        %v6008 = vadd.f32 %v5807, %v5906
        %v6009 = vadd.f32 %v5808, %v5909
        %v6010 = vadd.f32 %v5809, %v5914
        %v6011 = vadd.f32 %v5810, %v5917
        %v6012 = vadd.f32 %v5811, %v5922
        %v6013 = vadd.f32 %v5812, %v5925
        %v6014 = vadd.f32 %v5813, %v5930
        %v6015 = vadd.f32 %v5814, %v5933
        %v6016 = vadd.f32 %v5815, %v5938
        %v6017 = vadd.f32 %v5816, %v5941
        %v6018 = vadd.f32 %v5817, %v5946
        %v6019 = vadd.f32 %v5818, %v5949
        %v6020 = vadd.f32 %v5819, %v5954
        %v6021 = vadd.f32 %v5820, %v5957
        %v6022 = vadd.f32 %v5821, %v5962
        %v6023 = vadd.f32 %v5822, %v5965
        %v6024 = vadd.f32 %v5823, %v5970
        %v6025 = vadd.f32 %v5824, %v5973
        %v6026 = vadd.f32 %v5825, %v5978
        %v6027 = vadd.f32 %v5826, %v5981
        %v6028 = vadd.f32 %v5827, %v5986
        %v6029 = vadd.f32 %v5828, %v5989
        %v6030 = vadd.f32 %v5829, %v5994
        %v6031 = vadd.f32 %v5830, %v5997
        %v6032 = vld [vmem:[#allocation3] sm:$0xf]
        %v6033 = vld [vmem:[#allocation3 + $0x4] sm:$0xf]
        %v6034 = vld [vmem:[#allocation3 + $0x8] sm:$0x1]
        %v6035 = vld [vmem:[#allocation3 + $0xc] sm:$0xf]
        %v6036 = vld [vmem:[#allocation3 + $0x10] sm:$0xf]
        %v6037 = vld [vmem:[#allocation3 + $0x14] sm:$0x1]
        %v6038 = vld [vmem:[#allocation3 + $0x18] sm:$0xf]
        %v6039 = vld [vmem:[#allocation3 + $0x1c] sm:$0xf]
        %v6040 = vld [vmem:[#allocation3 + $0x20] sm:$0x1]
        %v6041 = vld [vmem:[#allocation3 + $0x24] sm:$0xf]
        %v6042 = vld [vmem:[#allocation3 + $0x28] sm:$0xf]
        %v6043 = vld [vmem:[#allocation3 + $0x2c] sm:$0x1]
        %v6044 = vld [vmem:[#allocation3 + $0x30] sm:$0xf]
        %v6045 = vld [vmem:[#allocation3 + $0x34] sm:$0xf]
        %v6046 = vld [vmem:[#allocation3 + $0x38] sm:$0x1]
        %v6047 = vld [vmem:[#allocation3 + $0x3c] sm:$0xf]
        %v6048 = vld [vmem:[#allocation3 + $0x40] sm:$0xf]
        %v6049 = vld [vmem:[#allocation3 + $0x44] sm:$0x1]
        %v6050 = vld [vmem:[#allocation3 + $0x48] sm:$0xf]
        %v6051 = vld [vmem:[#allocation3 + $0x4c] sm:$0xf]
        %v6052 = vld [vmem:[#allocation3 + $0x50] sm:$0x1]
        %v6053 = vld [vmem:[#allocation3 + $0x54] sm:$0xf]
        %v6054 = vld [vmem:[#allocation3 + $0x58] sm:$0xf]
        %v6055 = vld [vmem:[#allocation3 + $0x5c] sm:$0x1]
        %v6056 = vld [vmem:[#allocation3 + $0x60] sm:$0xf]
        %v6057 = vld [vmem:[#allocation3 + $0x64] sm:$0xf]
        %v6058 = vld [vmem:[#allocation3 + $0x68] sm:$0x1]
        %v6059 = vld [vmem:[#allocation3 + $0x6c] sm:$0xf]
        %v6060 = vld [vmem:[#allocation3 + $0x70] sm:$0xf]
        %v6061 = vld [vmem:[#allocation3 + $0x74] sm:$0x1]
        %v6062 = vld [vmem:[#allocation3 + $0x78] sm:$0xf]
        %v6063 = vld [vmem:[#allocation3 + $0x7c] sm:$0xf]
        %v6064 = vld [vmem:[#allocation3 + $0x80] sm:$0x1]
        %v6065 = vld [vmem:[#allocation3 + $0x84] sm:$0xf]
        %v6066 = vld [vmem:[#allocation3 + $0x88] sm:$0xf]
        %v6067 = vld [vmem:[#allocation3 + $0x8c] sm:$0x1]
        %v6068 = vld [vmem:[#allocation3 + $0x90] sm:$0xf]
        %v6069 = vld [vmem:[#allocation3 + $0x94] sm:$0xf]
        %v6070 = vld [vmem:[#allocation3 + $0x98] sm:$0x1]
        %v6071 = vld [vmem:[#allocation3 + $0x9c] sm:$0xf]
        %v6072 = vld [vmem:[#allocation3 + $0xa0] sm:$0xf]
        %v6073 = vld [vmem:[#allocation3 + $0xa4] sm:$0x1]
        %v6074 = vld [vmem:[#allocation3 + $0xa8] sm:$0xf]
        %v6075 = vld [vmem:[#allocation3 + $0xac] sm:$0xf]
        %v6076 = vld [vmem:[#allocation3 + $0xb0] sm:$0x1]
        %v6077 = vld [vmem:[#allocation3 + $0xb4] sm:$0xf]
        %v6078 = vld [vmem:[#allocation3 + $0xb8] sm:$0xf]
        %v6079 = vld [vmem:[#allocation3 + $0xbc] sm:$0x1]
        %v6080 = vld [vmem:[#allocation3 + $0xc0] sm:$0xf]
        %v6081 = vld [vmem:[#allocation3 + $0xc4] sm:$0xf]
        %v6082 = vld [vmem:[#allocation3 + $0xc8] sm:$0x1]
        %v6083 = vld [vmem:[#allocation3 + $0xcc] sm:$0xf]
        %v6084 = vld [vmem:[#allocation3 + $0xd0] sm:$0xf]
        %v6085 = vld [vmem:[#allocation3 + $0xd4] sm:$0x1]
        %v6087 = vshrl.u32 %v6032, 16
        %v6089 = vrot.slane %v6087, 4
        %v6090 = vshll.u32 %v6032, 16
        %v6092 = vrot.slane %v6090, 5
        %v6093 = vor.u32 %v6089, %v6092
        %v6094 = vrot.slane %v6093, 4
        %v6096 = vshll.u32 %v6033, 16
        %v6098 = vrot.slane %v6096, 5
        %v6099 = vsel %vm3264, %v6094, %v6098
        %v6100 = vshrl.u32 %v6033, 16
        %v6102 = vrot.slane %v6100, 4
        %v6103 = vor.u32 %v6102, %v6098
        %v6104 = vrot.slane %v6103, 4
        %v6106 = vshll.u32 %v6034, 16
        %v6108 = vrot.slane %v6106, 5
        %v6109 = vsel %vm3264, %v6104, %v6108
        %v6111 = vshrl.u32 %v6035, 16
        %v6113 = vrot.slane %v6111, 4
        %v6114 = vshll.u32 %v6035, 16
        %v6116 = vrot.slane %v6114, 5
        %v6117 = vor.u32 %v6113, %v6116
        %v6118 = vrot.slane %v6117, 4
        %v6120 = vshll.u32 %v6036, 16
        %v6122 = vrot.slane %v6120, 5
        %v6123 = vsel %vm3264, %v6118, %v6122
        %v6124 = vshrl.u32 %v6036, 16
        %v6126 = vrot.slane %v6124, 4
        %v6127 = vor.u32 %v6126, %v6122
        %v6128 = vrot.slane %v6127, 4
        %v6130 = vshll.u32 %v6037, 16
        %v6132 = vrot.slane %v6130, 5
        %v6133 = vsel %vm3264, %v6128, %v6132
        %v6135 = vshrl.u32 %v6038, 16
        %v6137 = vrot.slane %v6135, 4
        %v6138 = vshll.u32 %v6038, 16
        %v6140 = vrot.slane %v6138, 5
        %v6141 = vor.u32 %v6137, %v6140
        %v6142 = vrot.slane %v6141, 4
        %v6144 = vshll.u32 %v6039, 16
        %v6146 = vrot.slane %v6144, 5
        %v6147 = vsel %vm3264, %v6142, %v6146
        %v6148 = vshrl.u32 %v6039, 16
        %v6150 = vrot.slane %v6148, 4
        %v6151 = vor.u32 %v6150, %v6146
        %v6152 = vrot.slane %v6151, 4
        %v6154 = vshll.u32 %v6040, 16
        %v6156 = vrot.slane %v6154, 5
        %v6157 = vsel %vm3264, %v6152, %v6156
        %v6159 = vshrl.u32 %v6041, 16
        %v6161 = vrot.slane %v6159, 4
        %v6162 = vshll.u32 %v6041, 16
        %v6164 = vrot.slane %v6162, 5
        %v6165 = vor.u32 %v6161, %v6164
        %v6166 = vrot.slane %v6165, 4
        %v6168 = vshll.u32 %v6042, 16
        %v6170 = vrot.slane %v6168, 5
        %v6171 = vsel %vm3264, %v6166, %v6170
        %v6172 = vshrl.u32 %v6042, 16
        %v6174 = vrot.slane %v6172, 4
        %v6175 = vor.u32 %v6174, %v6170
        %v6176 = vrot.slane %v6175, 4
        %v6178 = vshll.u32 %v6043, 16
        %v6180 = vrot.slane %v6178, 5
        %v6181 = vsel %vm3264, %v6176, %v6180
        %v6183 = vshrl.u32 %v6044, 16
        %v6185 = vrot.slane %v6183, 4
        %v6186 = vshll.u32 %v6044, 16
        %v6188 = vrot.slane %v6186, 5
        %v6189 = vor.u32 %v6185, %v6188
        %v6190 = vrot.slane %v6189, 4
        %v6192 = vshll.u32 %v6045, 16
        %v6194 = vrot.slane %v6192, 5
        %v6195 = vsel %vm3264, %v6190, %v6194
        %v6196 = vshrl.u32 %v6045, 16
        %v6198 = vrot.slane %v6196, 4
        %v6199 = vor.u32 %v6198, %v6194
        %v6200 = vrot.slane %v6199, 4
        %v6202 = vshll.u32 %v6046, 16
        %v6204 = vrot.slane %v6202, 5
        %v6205 = vsel %vm3264, %v6200, %v6204
        %v6207 = vshrl.u32 %v6047, 16
        %v6209 = vrot.slane %v6207, 4
        %v6210 = vshll.u32 %v6047, 16
        %v6212 = vrot.slane %v6210, 5
        %v6213 = vor.u32 %v6209, %v6212
        %v6214 = vrot.slane %v6213, 4
        %v6216 = vshll.u32 %v6048, 16
        %v6218 = vrot.slane %v6216, 5
        %v6219 = vsel %vm3264, %v6214, %v6218
        %v6220 = vshrl.u32 %v6048, 16
        %v6222 = vrot.slane %v6220, 4
        %v6223 = vor.u32 %v6222, %v6218
        %v6224 = vrot.slane %v6223, 4
        %v6226 = vshll.u32 %v6049, 16
        %v6228 = vrot.slane %v6226, 5
        %v6229 = vsel %vm3264, %v6224, %v6228
        %v6231 = vshrl.u32 %v6050, 16
        %v6233 = vrot.slane %v6231, 4
        %v6234 = vshll.u32 %v6050, 16
        %v6236 = vrot.slane %v6234, 5
        %v6237 = vor.u32 %v6233, %v6236
        %v6238 = vrot.slane %v6237, 4
        %v6240 = vshll.u32 %v6051, 16
        %v6242 = vrot.slane %v6240, 5
        %v6243 = vsel %vm3264, %v6238, %v6242
        %v6244 = vshrl.u32 %v6051, 16
        %v6246 = vrot.slane %v6244, 4
        %v6247 = vor.u32 %v6246, %v6242
        %v6248 = vrot.slane %v6247, 4
        %v6250 = vshll.u32 %v6052, 16
        %v6252 = vrot.slane %v6250, 5
        %v6253 = vsel %vm3264, %v6248, %v6252
        %v6255 = vshrl.u32 %v6053, 16
        %v6257 = vrot.slane %v6255, 4
        %v6258 = vshll.u32 %v6053, 16
        %v6260 = vrot.slane %v6258, 5
        %v6261 = vor.u32 %v6257, %v6260
        %v6262 = vrot.slane %v6261, 4
        %v6264 = vshll.u32 %v6054, 16
        %v6266 = vrot.slane %v6264, 5
        %v6267 = vsel %vm3264, %v6262, %v6266
        %v6268 = vshrl.u32 %v6054, 16
        %v6270 = vrot.slane %v6268, 4
        %v6271 = vor.u32 %v6270, %v6266
        %v6272 = vrot.slane %v6271, 4
        %v6274 = vshll.u32 %v6055, 16
        %v6276 = vrot.slane %v6274, 5
        %v6277 = vsel %vm3264, %v6272, %v6276
        %v6279 = vshrl.u32 %v6056, 16
        %v6281 = vrot.slane %v6279, 4
        %v6282 = vshll.u32 %v6056, 16
        %v6284 = vrot.slane %v6282, 5
        %v6285 = vor.u32 %v6281, %v6284
        %v6286 = vrot.slane %v6285, 4
        %v6288 = vshll.u32 %v6057, 16
        %v6290 = vrot.slane %v6288, 5
        %v6291 = vsel %vm3264, %v6286, %v6290
        %v6292 = vshrl.u32 %v6057, 16
        %v6294 = vrot.slane %v6292, 4
        %v6295 = vor.u32 %v6294, %v6290
        %v6296 = vrot.slane %v6295, 4
        %v6298 = vshll.u32 %v6058, 16
        %v6300 = vrot.slane %v6298, 5
        %v6301 = vsel %vm3264, %v6296, %v6300
        %v6303 = vshrl.u32 %v6059, 16
        %v6305 = vrot.slane %v6303, 4
        %v6306 = vshll.u32 %v6059, 16
        %v6308 = vrot.slane %v6306, 5
        %v6309 = vor.u32 %v6305, %v6308
        %v6310 = vrot.slane %v6309, 4
        %v6312 = vshll.u32 %v6060, 16
        %v6314 = vrot.slane %v6312, 5
        %v6315 = vsel %vm3264, %v6310, %v6314
        %v6316 = vshrl.u32 %v6060, 16
        %v6318 = vrot.slane %v6316, 4
        %v6319 = vor.u32 %v6318, %v6314
        %v6320 = vrot.slane %v6319, 4
        %v6322 = vshll.u32 %v6061, 16
        %v6324 = vrot.slane %v6322, 5
        %v6325 = vsel %vm3264, %v6320, %v6324
        %v6327 = vshrl.u32 %v6062, 16
        %v6329 = vrot.slane %v6327, 4
        %v6330 = vshll.u32 %v6062, 16
        %v6332 = vrot.slane %v6330, 5
        %v6333 = vor.u32 %v6329, %v6332
        %v6334 = vrot.slane %v6333, 4
        %v6336 = vshll.u32 %v6063, 16
        %v6338 = vrot.slane %v6336, 5
        %v6339 = vsel %vm3264, %v6334, %v6338
        %v6340 = vshrl.u32 %v6063, 16
        %v6342 = vrot.slane %v6340, 4
        %v6343 = vor.u32 %v6342, %v6338
        %v6344 = vrot.slane %v6343, 4
        %v6346 = vshll.u32 %v6064, 16
        %v6348 = vrot.slane %v6346, 5
        %v6349 = vsel %vm3264, %v6344, %v6348
        %v6351 = vshrl.u32 %v6065, 16
        %v6353 = vrot.slane %v6351, 4
        %v6354 = vshll.u32 %v6065, 16
        %v6356 = vrot.slane %v6354, 5
        %v6357 = vor.u32 %v6353, %v6356
        %v6358 = vrot.slane %v6357, 4
        %v6360 = vshll.u32 %v6066, 16
        %v6362 = vrot.slane %v6360, 5
        %v6363 = vsel %vm3264, %v6358, %v6362
        %v6364 = vshrl.u32 %v6066, 16
        %v6366 = vrot.slane %v6364, 4
        %v6367 = vor.u32 %v6366, %v6362
        %v6368 = vrot.slane %v6367, 4
        %v6370 = vshll.u32 %v6067, 16
        %v6372 = vrot.slane %v6370, 5
        %v6373 = vsel %vm3264, %v6368, %v6372
        %v6375 = vshrl.u32 %v6068, 16
        %v6377 = vrot.slane %v6375, 4
        %v6378 = vshll.u32 %v6068, 16
        %v6380 = vrot.slane %v6378, 5
        %v6381 = vor.u32 %v6377, %v6380
        %v6382 = vrot.slane %v6381, 4
        %v6384 = vshll.u32 %v6069, 16
        %v6386 = vrot.slane %v6384, 5
        %v6387 = vsel %vm3264, %v6382, %v6386
        %v6388 = vshrl.u32 %v6069, 16
        %v6390 = vrot.slane %v6388, 4
        %v6391 = vor.u32 %v6390, %v6386
        %v6392 = vrot.slane %v6391, 4
        %v6394 = vshll.u32 %v6070, 16
        %v6396 = vrot.slane %v6394, 5
        %v6397 = vsel %vm3264, %v6392, %v6396
        %v6399 = vshrl.u32 %v6071, 16
        %v6401 = vrot.slane %v6399, 4
        %v6402 = vshll.u32 %v6071, 16
        %v6404 = vrot.slane %v6402, 5
        %v6405 = vor.u32 %v6401, %v6404
        %v6406 = vrot.slane %v6405, 4
        %v6408 = vshll.u32 %v6072, 16
        %v6410 = vrot.slane %v6408, 5
        %v6411 = vsel %vm3264, %v6406, %v6410
        %v6412 = vshrl.u32 %v6072, 16
        %v6414 = vrot.slane %v6412, 4
        %v6415 = vor.u32 %v6414, %v6410
        %v6416 = vrot.slane %v6415, 4
        %v6418 = vshll.u32 %v6073, 16
        %v6420 = vrot.slane %v6418, 5
        %v6421 = vsel %vm3264, %v6416, %v6420
        %v6423 = vshrl.u32 %v6074, 16
        %v6425 = vrot.slane %v6423, 4
        %v6426 = vshll.u32 %v6074, 16
        %v6428 = vrot.slane %v6426, 5
        %v6429 = vor.u32 %v6425, %v6428
        %v6430 = vrot.slane %v6429, 4
        %v6432 = vshll.u32 %v6075, 16
        %v6434 = vrot.slane %v6432, 5
        %v6435 = vsel %vm3264, %v6430, %v6434
        %v6436 = vshrl.u32 %v6075, 16
        %v6438 = vrot.slane %v6436, 4
        %v6439 = vor.u32 %v6438, %v6434
        %v6440 = vrot.slane %v6439, 4
        %v6442 = vshll.u32 %v6076, 16
        %v6444 = vrot.slane %v6442, 5
        %v6445 = vsel %vm3264, %v6440, %v6444
        %v6447 = vshrl.u32 %v6077, 16
        %v6449 = vrot.slane %v6447, 4
        %v6450 = vshll.u32 %v6077, 16
        %v6452 = vrot.slane %v6450, 5
        %v6453 = vor.u32 %v6449, %v6452
        %v6454 = vrot.slane %v6453, 4
        %v6456 = vshll.u32 %v6078, 16
        %v6458 = vrot.slane %v6456, 5
        %v6459 = vsel %vm3264, %v6454, %v6458
        %v6460 = vshrl.u32 %v6078, 16
        %v6462 = vrot.slane %v6460, 4
        %v6463 = vor.u32 %v6462, %v6458
        %v6464 = vrot.slane %v6463, 4
        %v6466 = vshll.u32 %v6079, 16
        %v6468 = vrot.slane %v6466, 5
        %v6469 = vsel %vm3264, %v6464, %v6468
        %v6470 = vunpack.c.l.b16 %v6099
        %v6471 = vunpack.c.l.b16 %v6109
        %v6472 = vunpack.c.l.b16 %v6123
        %v6473 = vunpack.c.l.b16 %v6133
        %v6474 = vunpack.c.l.b16 %v6147
        %v6475 = vunpack.c.l.b16 %v6157
        %v6476 = vunpack.c.l.b16 %v6171
        %v6477 = vunpack.c.l.b16 %v6181
        %v6478 = vunpack.c.l.b16 %v6195
        %v6479 = vunpack.c.l.b16 %v6205
        %v6480 = vunpack.c.l.b16 %v6219
        %v6481 = vunpack.c.l.b16 %v6229
        %v6482 = vunpack.c.l.b16 %v6243
        %v6483 = vunpack.c.l.b16 %v6253
        %v6484 = vunpack.c.l.b16 %v6267
        %v6485 = vunpack.c.l.b16 %v6277
        %v6486 = vunpack.c.l.b16 %v6291
        %v6487 = vunpack.c.l.b16 %v6301
        %v6488 = vunpack.c.l.b16 %v6315
        %v6489 = vunpack.c.l.b16 %v6325
        %v6490 = vunpack.c.l.b16 %v6339
        %v6491 = vunpack.c.l.b16 %v6349
        %v6492 = vunpack.c.l.b16 %v6363
        %v6493 = vunpack.c.l.b16 %v6373
        %v6494 = vunpack.c.l.b16 %v6387
        %v6495 = vunpack.c.l.b16 %v6397
        %v6496 = vunpack.c.l.b16 %v6411
        %v6497 = vunpack.c.l.b16 %v6421
        %v6498 = vunpack.c.l.b16 %v6435
        %v6499 = vunpack.c.l.b16 %v6445
        %v6500 = vunpack.c.l.b16 %v6459
        %v6501 = vunpack.c.l.b16 %v6469
        %v6502 = vpack.c.b16 %v6471, %v6470
        %v6503 = vpack.c.b16 %v6473, %v6472
        %v6504 = vpack.c.b16 %v6475, %v6474
        %v6505 = vpack.c.b16 %v6477, %v6476
        %v6506 = vpack.c.b16 %v6479, %v6478
        %v6507 = vpack.c.b16 %v6481, %v6480
        %v6508 = vpack.c.b16 %v6483, %v6482
        %v6509 = vpack.c.b16 %v6485, %v6484
        %v6510 = vpack.c.b16 %v6487, %v6486
        %v6511 = vpack.c.b16 %v6489, %v6488
        %v6512 = vpack.c.b16 %v6491, %v6490
        %v6513 = vpack.c.b16 %v6493, %v6492
        %v6514 = vpack.c.b16 %v6495, %v6494
        %v6515 = vpack.c.b16 %v6497, %v6496
        %v6516 = vpack.c.b16 %v6499, %v6498
        %v6517 = vpack.c.b16 %v6501, %v6500
        %v6519 = vsel %vm5388, %v6502, 0
        %v6522 = vsel %vm5388, %v6503, 0
        %v6525 = vsel %vm5388, %v6504, 0
        %v6528 = vsel %vm5388, %v6505, 0
        %v6531 = vsel %vm5388, %v6506, 0
        %v6534 = vsel %vm5388, %v6507, 0
        %v6537 = vsel %vm5388, %v6508, 0
        %v6540 = vsel %vm5388, %v6509, 0
        %v6543 = vsel %vm5388, %v6510, 0
        %v6546 = vsel %vm5388, %v6511, 0
        %v6549 = vsel %vm5388, %v6512, 0
        %v6552 = vsel %vm5388, %v6513, 0
        %v6555 = vsel %vm5388, %v6514, 0
        %v6558 = vsel %vm5388, %v6515, 0
        %v6561 = vsel %vm5388, %v6516, 0
        %v6564 = vsel %vm5388, %v6517, 0
        %6566 = vmatprep.subr.bf16.mxu0 0
        %6567 = vmatpush1.bf16.msra.mxu0 0
        %6568 = vmatprep.subr.bf16.mxu0 0
        %6569 = vmatpush1.bf16.msra.mxu0 0
        %6570 = vmatprep.subr.bf16.mxu0 0
        %6571 = vmatpush1.bf16.msra.mxu0 0
        %6572 = vmatprep.subr.bf16.mxu0 0
        %6573 = vmatpush1.bf16.msra.mxu0 0
        %6574 = vmatprep.subr.bf16.mxu0 0
        %6575 = vmatpush1.bf16.msra.mxu0 %v2429
        %6576 = vmatprep.subr.bf16.mxu0 0
        %6577 = vmatpush1.bf16.msra.mxu0 %v2428
        %6578 = vmatprep.subr.bf16.mxu0 0
        %6579 = vmatpush1.bf16.msra.mxu0 %v2427
        %6580 = vmatprep.subr.bf16.mxu0 0
        %6581 = vmatpush1.bf16.msra.mxu0 %v2426
        %6582 = vmatprep.subr.bf16.mxu0 0
        %6583 = vmatpush2.bf16.msra.mxu0 0
        %6584 = vmatprep.subr.bf16.mxu0 0
        %6585 = vmatpush2.bf16.msra.mxu0 0
        %6586 = vmatprep.subr.bf16.mxu0 0
        %6587 = vmatpush2.bf16.msra.mxu0 0
        %6588 = vmatprep.subr.bf16.mxu0 0
        %6589 = vmatpush2.bf16.msra.mxu0 0
        %6590 = vmatprep.subr.bf16.mxu0 0
        %6591 = vmatpush2.bf16.msra.mxu0 0
        %6592 = vmatprep.subr.bf16.mxu0 0
        %6593 = vmatpush2.bf16.msra.mxu0 0
        %6594 = vmatprep.subr.bf16.mxu0 0
        %6595 = vmatpush2.bf16.msra.mxu0 0
        %6596 = vmatprep.subr.bf16.mxu0 0
        %6597 = vmatpush2.bf16.msra.mxu0 0
        %6598 = vmatprep.mubr.bf16.mxu0 0
        %6599 = vmatmul.mubr.bf16.gmra.mxu0 %v6519
        %v6600 = vpop.f32.mrf.mxu0
        %v6601 = vadd.f32 0.0, %v6600
        %v6602 = vpop.f32.mrf.mxu0
        %v6603 = vpop.f32.mrf.mxu0
        %v6604 = vadd.f32 0.0, %v6603
        %v6605 = vpop.f32.mrf.mxu0
        %6606 = vmatprep.mubr.bf16.mxu0 0
        %6607 = vmatmul.mubr.bf16.gmra.mxu0 %v6522
        %v6608 = vpop.f32.mrf.mxu0
        %v6609 = vadd.f32 0.0, %v6608
        %v6610 = vpop.f32.mrf.mxu0
        %v6611 = vpop.f32.mrf.mxu0
        %v6612 = vadd.f32 0.0, %v6611
        %v6613 = vpop.f32.mrf.mxu0
        %6614 = vmatprep.mubr.bf16.mxu0 0
        %6615 = vmatmul.mubr.bf16.gmra.mxu0 %v6525
        %v6616 = vpop.f32.mrf.mxu0
        %v6617 = vadd.f32 0.0, %v6616
        %v6618 = vpop.f32.mrf.mxu0
        %v6619 = vpop.f32.mrf.mxu0
        %v6620 = vadd.f32 0.0, %v6619
        %v6621 = vpop.f32.mrf.mxu0
        %6622 = vmatprep.mubr.bf16.mxu0 0
        %6623 = vmatmul.mubr.bf16.gmra.mxu0 %v6528
        %v6624 = vpop.f32.mrf.mxu0
        %v6625 = vadd.f32 0.0, %v6624
        %v6626 = vpop.f32.mrf.mxu0
        %v6627 = vpop.f32.mrf.mxu0
        %v6628 = vadd.f32 0.0, %v6627
        %v6629 = vpop.f32.mrf.mxu0
        %6630 = vmatprep.mubr.bf16.mxu0 0
        %6631 = vmatmul.mubr.bf16.gmra.mxu0 %v6531
        %v6632 = vpop.f32.mrf.mxu0
        %v6633 = vadd.f32 0.0, %v6632
        %v6634 = vpop.f32.mrf.mxu0
        %v6635 = vpop.f32.mrf.mxu0
        %v6636 = vadd.f32 0.0, %v6635
        %v6637 = vpop.f32.mrf.mxu0
        %6638 = vmatprep.mubr.bf16.mxu0 0
        %6639 = vmatmul.mubr.bf16.gmra.mxu0 %v6534
        %v6640 = vpop.f32.mrf.mxu0
        %v6641 = vadd.f32 0.0, %v6640
        %v6642 = vpop.f32.mrf.mxu0
        %v6643 = vpop.f32.mrf.mxu0
        %v6644 = vadd.f32 0.0, %v6643
        %v6645 = vpop.f32.mrf.mxu0
        %6646 = vmatprep.mubr.bf16.mxu0 0
        %6647 = vmatmul.mubr.bf16.gmra.mxu0 %v6537
        %v6648 = vpop.f32.mrf.mxu0
        %v6649 = vadd.f32 0.0, %v6648
        %v6650 = vpop.f32.mrf.mxu0
        %v6651 = vpop.f32.mrf.mxu0
        %v6652 = vadd.f32 0.0, %v6651
        %v6653 = vpop.f32.mrf.mxu0
        %6654 = vmatprep.mubr.bf16.mxu0 0
        %6655 = vmatmul.mubr.bf16.gmra.mxu0 %v6540
        %v6656 = vpop.f32.mrf.mxu0
        %v6657 = vadd.f32 0.0, %v6656
        %v6658 = vpop.f32.mrf.mxu0
        %v6659 = vpop.f32.mrf.mxu0
        %v6660 = vadd.f32 0.0, %v6659
        %v6661 = vpop.f32.mrf.mxu0
        %6662 = vmatprep.mubr.bf16.mxu0 0
        %6663 = vmatmul.mubr.bf16.gmra.mxu0 %v6543
        %v6664 = vpop.f32.mrf.mxu0
        %v6665 = vadd.f32 0.0, %v6664
        %v6666 = vpop.f32.mrf.mxu0
        %v6667 = vpop.f32.mrf.mxu0
        %v6668 = vadd.f32 0.0, %v6667
        %v6669 = vpop.f32.mrf.mxu0
        %6670 = vmatprep.mubr.bf16.mxu0 0
        %6671 = vmatmul.mubr.bf16.gmra.mxu0 %v6546
        %v6672 = vpop.f32.mrf.mxu0
        %v6673 = vadd.f32 0.0, %v6672
        %v6674 = vpop.f32.mrf.mxu0
        %v6675 = vpop.f32.mrf.mxu0
        %v6676 = vadd.f32 0.0, %v6675
        %v6677 = vpop.f32.mrf.mxu0
        %6678 = vmatprep.mubr.bf16.mxu0 0
        %6679 = vmatmul.mubr.bf16.gmra.mxu0 %v6549
        %v6680 = vpop.f32.mrf.mxu0
        %v6681 = vadd.f32 0.0, %v6680
        %v6682 = vpop.f32.mrf.mxu0
        %v6683 = vpop.f32.mrf.mxu0
        %v6684 = vadd.f32 0.0, %v6683
        %v6685 = vpop.f32.mrf.mxu0
        %6686 = vmatprep.mubr.bf16.mxu0 0
        %6687 = vmatmul.mubr.bf16.gmra.mxu0 %v6552
        %v6688 = vpop.f32.mrf.mxu0
        %v6689 = vadd.f32 0.0, %v6688
        %v6690 = vpop.f32.mrf.mxu0
        %v6691 = vpop.f32.mrf.mxu0
        %v6692 = vadd.f32 0.0, %v6691
        %v6693 = vpop.f32.mrf.mxu0
        %6694 = vmatprep.mubr.bf16.mxu0 0
        %6695 = vmatmul.mubr.bf16.gmra.mxu0 %v6555
        %v6696 = vpop.f32.mrf.mxu0
        %v6697 = vadd.f32 0.0, %v6696
        %v6698 = vpop.f32.mrf.mxu0
        %v6699 = vpop.f32.mrf.mxu0
        %v6700 = vadd.f32 0.0, %v6699
        %v6701 = vpop.f32.mrf.mxu0
        %6702 = vmatprep.mubr.bf16.mxu0 0
        %6703 = vmatmul.mubr.bf16.gmra.mxu0 %v6558
        %v6704 = vpop.f32.mrf.mxu0
        %v6705 = vadd.f32 0.0, %v6704
        %v6706 = vpop.f32.mrf.mxu0
        %v6707 = vpop.f32.mrf.mxu0
        %v6708 = vadd.f32 0.0, %v6707
        %v6709 = vpop.f32.mrf.mxu0
        %6710 = vmatprep.mubr.bf16.mxu0 0
        %6711 = vmatmul.mubr.bf16.gmra.mxu0 %v6561
        %v6712 = vpop.f32.mrf.mxu0
        %v6713 = vadd.f32 0.0, %v6712
        %v6714 = vpop.f32.mrf.mxu0
        %v6715 = vpop.f32.mrf.mxu0
        %v6716 = vadd.f32 0.0, %v6715
        %v6717 = vpop.f32.mrf.mxu0
        %6718 = vmatprep.mubr.bf16.mxu0 0
        %6719 = vmatmul.mubr.bf16.gmra.mxu0 %v6564
        %v6720 = vpop.f32.mrf.mxu0
        %v6721 = vadd.f32 0.0, %v6720
        %v6722 = vpop.f32.mrf.mxu0
        %v6723 = vpop.f32.mrf.mxu0
        %v6724 = vadd.f32 0.0, %v6723
        %v6725 = vpop.f32.mrf.mxu0
        %6726 = vdwg.mxu0
        %v6727 = vadd.f32 %v6000, %v6601
        %v6728 = vadd.f32 %v6001, %v6604
        %v6729 = vadd.f32 %v6002, %v6609
        %v6730 = vadd.f32 %v6003, %v6612
        %v6731 = vadd.f32 %v6004, %v6617
        %v6732 = vadd.f32 %v6005, %v6620
        %v6733 = vadd.f32 %v6006, %v6625
        %v6734 = vadd.f32 %v6007, %v6628
        %v6735 = vadd.f32 %v6008, %v6633
        %v6736 = vadd.f32 %v6009, %v6636
        %v6737 = vadd.f32 %v6010, %v6641
        %v6738 = vadd.f32 %v6011, %v6644
        %v6739 = vadd.f32 %v6012, %v6649
        %v6740 = vadd.f32 %v6013, %v6652
        %v6741 = vadd.f32 %v6014, %v6657
        %v6742 = vadd.f32 %v6015, %v6660
        %v6743 = vadd.f32 %v6016, %v6665
        %v6744 = vadd.f32 %v6017, %v6668
        %v6745 = vadd.f32 %v6018, %v6673
        %v6746 = vadd.f32 %v6019, %v6676
        %v6747 = vadd.f32 %v6020, %v6681
        %v6748 = vadd.f32 %v6021, %v6684
        %v6749 = vadd.f32 %v6022, %v6689
        %v6750 = vadd.f32 %v6023, %v6692
        %v6751 = vadd.f32 %v6024, %v6697
        %v6752 = vadd.f32 %v6025, %v6700
        %v6753 = vadd.f32 %v6026, %v6705
        %v6754 = vadd.f32 %v6027, %v6708
        %v6755 = vadd.f32 %v6028, %v6713
        %v6756 = vadd.f32 %v6029, %v6716
        %v6757 = vadd.f32 %v6030, %v6721
        %v6758 = vadd.f32 %v6031, %v6724
        %v6760 = vshrl.u32 %v6080, 16
        %v6762 = vrot.slane %v6760, 4
        %v6763 = vshll.u32 %v6080, 16
        %v6765 = vrot.slane %v6763, 5
        %v6766 = vor.u32 %v6762, %v6765
        %v6767 = vrot.slane %v6766, 4
        %v6769 = vshll.u32 %v6081, 16
        %v6771 = vrot.slane %v6769, 5
        %v6772 = vsel %vm3264, %v6767, %v6771
        %v6773 = vshrl.u32 %v6081, 16
        %v6775 = vrot.slane %v6773, 4
        %v6776 = vor.u32 %v6775, %v6771
        %v6777 = vrot.slane %v6776, 4
        %v6779 = vshll.u32 %v6082, 16
        %v6781 = vrot.slane %v6779, 5
        %v6782 = vsel %vm3264, %v6777, %v6781
        %v6783 = vunpack.c.l.b16 %v6772
        %v6784 = vunpack.c.l.b16 %v6782
        %v6785 = vpack.c.b16 %v6784, %v6783
        %v6787 = vsel %vm5388, %v6785, 0
        %6789 = vmatprep.subr.bf16.mxu0 0
        %6790 = vmatpush1.bf16.msra.mxu0 0
        %6791 = vmatprep.subr.bf16.mxu0 0
        %6792 = vmatpush1.bf16.msra.mxu0 0
        %6793 = vmatprep.subr.bf16.mxu0 0
        %6794 = vmatpush1.bf16.msra.mxu0 0
        %6795 = vmatprep.subr.bf16.mxu0 0
        %6796 = vmatpush1.bf16.msra.mxu0 0
        %6797 = vmatprep.subr.bf16.mxu0 0
        %6798 = vmatpush1.bf16.msra.mxu0 %v2441
        %6799 = vmatprep.subr.bf16.mxu0 0
        %6800 = vmatpush1.bf16.msra.mxu0 %v2440
        %6801 = vmatprep.subr.bf16.mxu0 0
        %6802 = vmatpush1.bf16.msra.mxu0 %v2439
        %6803 = vmatprep.subr.bf16.mxu0 0
        %6804 = vmatpush1.bf16.msra.mxu0 %v2438
        %6805 = vmatprep.subr.bf16.mxu0 0
        %6806 = vmatpush2.bf16.msra.mxu0 0
        %6807 = vmatprep.subr.bf16.mxu0 0
        %6808 = vmatpush2.bf16.msra.mxu0 0
        %6809 = vmatprep.subr.bf16.mxu0 0
        %6810 = vmatpush2.bf16.msra.mxu0 0
        %6811 = vmatprep.subr.bf16.mxu0 0
        %6812 = vmatpush2.bf16.msra.mxu0 0
        %6813 = vmatprep.subr.bf16.mxu0 0
        %6814 = vmatpush2.bf16.msra.mxu0 0
        %6815 = vmatprep.subr.bf16.mxu0 0
        %6816 = vmatpush2.bf16.msra.mxu0 0
        %6817 = vmatprep.subr.bf16.mxu0 0
        %6818 = vmatpush2.bf16.msra.mxu0 0
        %6819 = vmatprep.subr.bf16.mxu0 0
        %6820 = vmatpush2.bf16.msra.mxu0 0
        %6821 = vmatprep.mubr.bf16.mxu0 0
        %6822 = vmatmul.mubr.bf16.gmra.mxu0 %v6522
        %v6823 = vpop.f32.mrf.mxu0
        %v6824 = vadd.f32 0.0, %v6823
        %v6825 = vpop.f32.mrf.mxu0
        %v6826 = vpop.f32.mrf.mxu0
        %v6827 = vadd.f32 0.0, %v6826
        %v6828 = vpop.f32.mrf.mxu0
        %6829 = vmatprep.mubr.bf16.mxu0 0
        %6830 = vmatmul.mubr.bf16.gmra.mxu0 %v6525
        %v6831 = vpop.f32.mrf.mxu0
        %v6832 = vadd.f32 0.0, %v6831
        %v6833 = vpop.f32.mrf.mxu0
        %v6834 = vpop.f32.mrf.mxu0
        %v6835 = vadd.f32 0.0, %v6834
        %v6836 = vpop.f32.mrf.mxu0
        %6837 = vmatprep.mubr.bf16.mxu0 0
        %6838 = vmatmul.mubr.bf16.gmra.mxu0 %v6528
        %v6839 = vpop.f32.mrf.mxu0
        %v6840 = vadd.f32 0.0, %v6839
        %v6841 = vpop.f32.mrf.mxu0
        %v6842 = vpop.f32.mrf.mxu0
        %v6843 = vadd.f32 0.0, %v6842
        %v6844 = vpop.f32.mrf.mxu0
        %6845 = vmatprep.mubr.bf16.mxu0 0
        %6846 = vmatmul.mubr.bf16.gmra.mxu0 %v6531
        %v6847 = vpop.f32.mrf.mxu0
        %v6848 = vadd.f32 0.0, %v6847
        %v6849 = vpop.f32.mrf.mxu0
        %v6850 = vpop.f32.mrf.mxu0
        %v6851 = vadd.f32 0.0, %v6850
        %v6852 = vpop.f32.mrf.mxu0
        %6853 = vmatprep.mubr.bf16.mxu0 0
        %6854 = vmatmul.mubr.bf16.gmra.mxu0 %v6534
        %v6855 = vpop.f32.mrf.mxu0
        %v6856 = vadd.f32 0.0, %v6855
        %v6857 = vpop.f32.mrf.mxu0
        %v6858 = vpop.f32.mrf.mxu0
        %v6859 = vadd.f32 0.0, %v6858
        %v6860 = vpop.f32.mrf.mxu0
        %6861 = vmatprep.mubr.bf16.mxu0 0
        %6862 = vmatmul.mubr.bf16.gmra.mxu0 %v6537
        %v6863 = vpop.f32.mrf.mxu0
        %v6864 = vadd.f32 0.0, %v6863
        %v6865 = vpop.f32.mrf.mxu0
        %v6866 = vpop.f32.mrf.mxu0
        %v6867 = vadd.f32 0.0, %v6866
        %v6868 = vpop.f32.mrf.mxu0
        %6869 = vmatprep.mubr.bf16.mxu0 0
        %6870 = vmatmul.mubr.bf16.gmra.mxu0 %v6540
        %v6871 = vpop.f32.mrf.mxu0
        %v6872 = vadd.f32 0.0, %v6871
        %v6873 = vpop.f32.mrf.mxu0
        %v6874 = vpop.f32.mrf.mxu0
        %v6875 = vadd.f32 0.0, %v6874
        %v6876 = vpop.f32.mrf.mxu0
        %6877 = vmatprep.mubr.bf16.mxu0 0
        %6878 = vmatmul.mubr.bf16.gmra.mxu0 %v6543
        %v6879 = vpop.f32.mrf.mxu0
        %v6880 = vadd.f32 0.0, %v6879
        %v6881 = vpop.f32.mrf.mxu0
        %v6882 = vpop.f32.mrf.mxu0
        %v6883 = vadd.f32 0.0, %v6882
        %v6884 = vpop.f32.mrf.mxu0
        %6885 = vmatprep.mubr.bf16.mxu0 0
        %6886 = vmatmul.mubr.bf16.gmra.mxu0 %v6546
        %v6887 = vpop.f32.mrf.mxu0
        %v6888 = vadd.f32 0.0, %v6887
        %v6889 = vpop.f32.mrf.mxu0
        %v6890 = vpop.f32.mrf.mxu0
        %v6891 = vadd.f32 0.0, %v6890
        %v6892 = vpop.f32.mrf.mxu0
        %6893 = vmatprep.mubr.bf16.mxu0 0
        %6894 = vmatmul.mubr.bf16.gmra.mxu0 %v6549
        %v6895 = vpop.f32.mrf.mxu0
        %v6896 = vadd.f32 0.0, %v6895
        %v6897 = vpop.f32.mrf.mxu0
        %v6898 = vpop.f32.mrf.mxu0
        %v6899 = vadd.f32 0.0, %v6898
        %v6900 = vpop.f32.mrf.mxu0
        %6901 = vmatprep.mubr.bf16.mxu0 0
        %6902 = vmatmul.mubr.bf16.gmra.mxu0 %v6552
        %v6903 = vpop.f32.mrf.mxu0
        %v6904 = vadd.f32 0.0, %v6903
        %v6905 = vpop.f32.mrf.mxu0
        %v6906 = vpop.f32.mrf.mxu0
        %v6907 = vadd.f32 0.0, %v6906
        %v6908 = vpop.f32.mrf.mxu0
        %6909 = vmatprep.mubr.bf16.mxu0 0
        %6910 = vmatmul.mubr.bf16.gmra.mxu0 %v6555
        %v6911 = vpop.f32.mrf.mxu0
        %v6912 = vadd.f32 0.0, %v6911
        %v6913 = vpop.f32.mrf.mxu0
        %v6914 = vpop.f32.mrf.mxu0
        %v6915 = vadd.f32 0.0, %v6914
        %v6916 = vpop.f32.mrf.mxu0
        %6917 = vmatprep.mubr.bf16.mxu0 0
        %6918 = vmatmul.mubr.bf16.gmra.mxu0 %v6558
        %v6919 = vpop.f32.mrf.mxu0
        %v6920 = vadd.f32 0.0, %v6919
        %v6921 = vpop.f32.mrf.mxu0
        %v6922 = vpop.f32.mrf.mxu0
        %v6923 = vadd.f32 0.0, %v6922
        %v6924 = vpop.f32.mrf.mxu0
        %6925 = vmatprep.mubr.bf16.mxu0 0
        %6926 = vmatmul.mubr.bf16.gmra.mxu0 %v6561
        %v6927 = vpop.f32.mrf.mxu0
        %v6928 = vadd.f32 0.0, %v6927
        %v6929 = vpop.f32.mrf.mxu0
        %v6930 = vpop.f32.mrf.mxu0
        %v6931 = vadd.f32 0.0, %v6930
        %v6932 = vpop.f32.mrf.mxu0
        %6933 = vmatprep.mubr.bf16.mxu0 0
        %6934 = vmatmul.mubr.bf16.gmra.mxu0 %v6564
        %v6935 = vpop.f32.mrf.mxu0
        %v6936 = vadd.f32 0.0, %v6935
        %v6937 = vpop.f32.mrf.mxu0
        %v6938 = vpop.f32.mrf.mxu0
        %v6939 = vadd.f32 0.0, %v6938
        %v6940 = vpop.f32.mrf.mxu0
        %6941 = vmatprep.mubr.bf16.mxu0 0
        %6942 = vmatmul.mubr.bf16.gmra.mxu0 %v6787
        %v6943 = vpop.f32.mrf.mxu0
        %v6944 = vadd.f32 0.0, %v6943
        %v6945 = vpop.f32.mrf.mxu0
        %v6946 = vpop.f32.mrf.mxu0
        %v6947 = vadd.f32 0.0, %v6946
        %v6948 = vpop.f32.mrf.mxu0
        %6949 = vdwg.mxu0
        %v6950 = vadd.f32 %v6727, %v6824
        %v6951 = vadd.f32 %v6728, %v6827
        %v6952 = vadd.f32 %v6729, %v6832
        %v6953 = vadd.f32 %v6730, %v6835
        %v6954 = vadd.f32 %v6731, %v6840
        %v6955 = vadd.f32 %v6732, %v6843
        %v6956 = vadd.f32 %v6733, %v6848
        %v6957 = vadd.f32 %v6734, %v6851
        %v6958 = vadd.f32 %v6735, %v6856
        %v6959 = vadd.f32 %v6736, %v6859
        %v6960 = vadd.f32 %v6737, %v6864
        %v6961 = vadd.f32 %v6738, %v6867
        %v6962 = vadd.f32 %v6739, %v6872
        %v6963 = vadd.f32 %v6740, %v6875
        %v6964 = vadd.f32 %v6741, %v6880
        %v6965 = vadd.f32 %v6742, %v6883
        %v6966 = vadd.f32 %v6743, %v6888
        %v6967 = vadd.f32 %v6744, %v6891
        %v6968 = vadd.f32 %v6745, %v6896
        %v6969 = vadd.f32 %v6746, %v6899
        %v6970 = vadd.f32 %v6747, %v6904
        %v6971 = vadd.f32 %v6748, %v6907
        %v6972 = vadd.f32 %v6749, %v6912
        %v6973 = vadd.f32 %v6750, %v6915
        %v6974 = vadd.f32 %v6751, %v6920
        %v6975 = vadd.f32 %v6752, %v6923
        %v6976 = vadd.f32 %v6753, %v6928
        %v6977 = vadd.f32 %v6754, %v6931
        %v6978 = vadd.f32 %v6755, %v6936
        %v6979 = vadd.f32 %v6756, %v6939
        %v6980 = vadd.f32 %v6757, %v6944
        %v6981 = vadd.f32 %v6758, %v6947
        %v6983 = vshrl.u32 %v6083, 16
        %v6985 = vrot.slane %v6983, 4
        %v6986 = vshll.u32 %v6083, 16
        %v6988 = vrot.slane %v6986, 5
        %v6989 = vor.u32 %v6985, %v6988
        %v6990 = vrot.slane %v6989, 4
        %v6992 = vshll.u32 %v6084, 16
        %v6994 = vrot.slane %v6992, 5
        %v6995 = vsel %vm3264, %v6990, %v6994
        %v6996 = vshrl.u32 %v6084, 16
        %v6998 = vrot.slane %v6996, 4
        %v6999 = vor.u32 %v6998, %v6994
        %v7000 = vrot.slane %v6999, 4
        %v7002 = vshll.u32 %v6085, 16
        %v7004 = vrot.slane %v7002, 5
        %v7005 = vsel %vm3264, %v7000, %v7004
        %v7006 = vunpack.c.l.b16 %v6995
        %v7007 = vunpack.c.l.b16 %v7005
        %v7008 = vpack.c.b16 %v7007, %v7006
        %v7010 = vsel %vm5388, %v7008, 0
        %7012 = vmatprep.subr.bf16.mxu0 0
        %7013 = vmatpush1.bf16.msra.mxu0 0
        %7014 = vmatprep.subr.bf16.mxu0 0
        %7015 = vmatpush1.bf16.msra.mxu0 0
        %7016 = vmatprep.subr.bf16.mxu0 0
        %7017 = vmatpush1.bf16.msra.mxu0 0
        %7018 = vmatprep.subr.bf16.mxu0 0
        %7019 = vmatpush1.bf16.msra.mxu0 0
        %7020 = vmatprep.subr.bf16.mxu0 0
        %7021 = vmatpush1.bf16.msra.mxu0 %v2453
        %7022 = vmatprep.subr.bf16.mxu0 0
        %7023 = vmatpush1.bf16.msra.mxu0 %v2452
        %7024 = vmatprep.subr.bf16.mxu0 0
        %7025 = vmatpush1.bf16.msra.mxu0 %v2451
        %7026 = vmatprep.subr.bf16.mxu0 0
        %7027 = vmatpush1.bf16.msra.mxu0 %v2450
        %7028 = vmatprep.subr.bf16.mxu0 0
        %7029 = vmatpush2.bf16.msra.mxu0 0
        %7030 = vmatprep.subr.bf16.mxu0 0
        %7031 = vmatpush2.bf16.msra.mxu0 0
        %7032 = vmatprep.subr.bf16.mxu0 0
        %7033 = vmatpush2.bf16.msra.mxu0 0
        %7034 = vmatprep.subr.bf16.mxu0 0
        %7035 = vmatpush2.bf16.msra.mxu0 0
        %7036 = vmatprep.subr.bf16.mxu0 0
        %7037 = vmatpush2.bf16.msra.mxu0 0
        %7038 = vmatprep.subr.bf16.mxu0 0
        %7039 = vmatpush2.bf16.msra.mxu0 0
        %7040 = vmatprep.subr.bf16.mxu0 0
        %7041 = vmatpush2.bf16.msra.mxu0 0
        %7042 = vmatprep.subr.bf16.mxu0 0
        %7043 = vmatpush2.bf16.msra.mxu0 0
        %7044 = vmatprep.mubr.bf16.mxu0 0
        %7045 = vmatmul.mubr.bf16.gmra.mxu0 %v6525
        %v7046 = vpop.f32.mrf.mxu0
        %v7047 = vadd.f32 0.0, %v7046
        %v7048 = vpop.f32.mrf.mxu0
        %v7049 = vpop.f32.mrf.mxu0
        %v7050 = vadd.f32 0.0, %v7049
        %v7051 = vpop.f32.mrf.mxu0
        %7052 = vmatprep.mubr.bf16.mxu0 0
        %7053 = vmatmul.mubr.bf16.gmra.mxu0 %v6528
        %v7054 = vpop.f32.mrf.mxu0
        %v7055 = vadd.f32 0.0, %v7054
        %v7056 = vpop.f32.mrf.mxu0
        %v7057 = vpop.f32.mrf.mxu0
        %v7058 = vadd.f32 0.0, %v7057
        %v7059 = vpop.f32.mrf.mxu0
        %7060 = vmatprep.mubr.bf16.mxu0 0
        %7061 = vmatmul.mubr.bf16.gmra.mxu0 %v6531
        %v7062 = vpop.f32.mrf.mxu0
        %v7063 = vadd.f32 0.0, %v7062
        %v7064 = vpop.f32.mrf.mxu0
        %v7065 = vpop.f32.mrf.mxu0
        %v7066 = vadd.f32 0.0, %v7065
        %v7067 = vpop.f32.mrf.mxu0
        %7068 = vmatprep.mubr.bf16.mxu0 0
        %7069 = vmatmul.mubr.bf16.gmra.mxu0 %v6534
        %v7070 = vpop.f32.mrf.mxu0
        %v7071 = vadd.f32 0.0, %v7070
        %v7072 = vpop.f32.mrf.mxu0
        %v7073 = vpop.f32.mrf.mxu0
        %v7074 = vadd.f32 0.0, %v7073
        %v7075 = vpop.f32.mrf.mxu0
        %7076 = vmatprep.mubr.bf16.mxu0 0
        %7077 = vmatmul.mubr.bf16.gmra.mxu0 %v6537
        %v7078 = vpop.f32.mrf.mxu0
        %v7079 = vadd.f32 0.0, %v7078
        %v7080 = vpop.f32.mrf.mxu0
        %v7081 = vpop.f32.mrf.mxu0
        %v7082 = vadd.f32 0.0, %v7081
        %v7083 = vpop.f32.mrf.mxu0
        %7084 = vmatprep.mubr.bf16.mxu0 0
        %7085 = vmatmul.mubr.bf16.gmra.mxu0 %v6540
        %v7086 = vpop.f32.mrf.mxu0
        %v7087 = vadd.f32 0.0, %v7086
        %v7088 = vpop.f32.mrf.mxu0
        %v7089 = vpop.f32.mrf.mxu0
        %v7090 = vadd.f32 0.0, %v7089
        %v7091 = vpop.f32.mrf.mxu0
        %7092 = vmatprep.mubr.bf16.mxu0 0
        %7093 = vmatmul.mubr.bf16.gmra.mxu0 %v6543
        %v7094 = vpop.f32.mrf.mxu0
        %v7095 = vadd.f32 0.0, %v7094
        %v7096 = vpop.f32.mrf.mxu0
        %v7097 = vpop.f32.mrf.mxu0
        %v7098 = vadd.f32 0.0, %v7097
        %v7099 = vpop.f32.mrf.mxu0
        %7100 = vmatprep.mubr.bf16.mxu0 0
        %7101 = vmatmul.mubr.bf16.gmra.mxu0 %v6546
        %v7102 = vpop.f32.mrf.mxu0
        %v7103 = vadd.f32 0.0, %v7102
        %v7104 = vpop.f32.mrf.mxu0
        %v7105 = vpop.f32.mrf.mxu0
        %v7106 = vadd.f32 0.0, %v7105
        %v7107 = vpop.f32.mrf.mxu0
        %7108 = vmatprep.mubr.bf16.mxu0 0
        %7109 = vmatmul.mubr.bf16.gmra.mxu0 %v6549
        %v7110 = vpop.f32.mrf.mxu0
        %v7111 = vadd.f32 0.0, %v7110
        %v7112 = vpop.f32.mrf.mxu0
        %v7113 = vpop.f32.mrf.mxu0
        %v7114 = vadd.f32 0.0, %v7113
        %v7115 = vpop.f32.mrf.mxu0
        %7116 = vmatprep.mubr.bf16.mxu0 0
        %7117 = vmatmul.mubr.bf16.gmra.mxu0 %v6552
        %v7118 = vpop.f32.mrf.mxu0
        %v7119 = vadd.f32 0.0, %v7118
        %v7120 = vpop.f32.mrf.mxu0
        %v7121 = vpop.f32.mrf.mxu0
        %v7122 = vadd.f32 0.0, %v7121
        %v7123 = vpop.f32.mrf.mxu0
        %7124 = vmatprep.mubr.bf16.mxu0 0
        %7125 = vmatmul.mubr.bf16.gmra.mxu0 %v6555
        %v7126 = vpop.f32.mrf.mxu0
        %v7127 = vadd.f32 0.0, %v7126
        %v7128 = vpop.f32.mrf.mxu0
        %v7129 = vpop.f32.mrf.mxu0
        %v7130 = vadd.f32 0.0, %v7129
        %v7131 = vpop.f32.mrf.mxu0
        %7132 = vmatprep.mubr.bf16.mxu0 0
        %7133 = vmatmul.mubr.bf16.gmra.mxu0 %v6558
        %v7134 = vpop.f32.mrf.mxu0
        %v7135 = vadd.f32 0.0, %v7134
        %v7136 = vpop.f32.mrf.mxu0
        %v7137 = vpop.f32.mrf.mxu0
        %v7138 = vadd.f32 0.0, %v7137
        %v7139 = vpop.f32.mrf.mxu0
        %7140 = vmatprep.mubr.bf16.mxu0 0
        %7141 = vmatmul.mubr.bf16.gmra.mxu0 %v6561
        %v7142 = vpop.f32.mrf.mxu0
        %v7143 = vadd.f32 0.0, %v7142
        %v7144 = vpop.f32.mrf.mxu0
        %v7145 = vpop.f32.mrf.mxu0
        %v7146 = vadd.f32 0.0, %v7145
        %v7147 = vpop.f32.mrf.mxu0
        %7148 = vmatprep.mubr.bf16.mxu0 0
        %7149 = vmatmul.mubr.bf16.gmra.mxu0 %v6564
        %v7150 = vpop.f32.mrf.mxu0
        %v7151 = vadd.f32 0.0, %v7150
        %v7152 = vpop.f32.mrf.mxu0
        %v7153 = vpop.f32.mrf.mxu0
        %v7154 = vadd.f32 0.0, %v7153
        %v7155 = vpop.f32.mrf.mxu0
        %7156 = vmatprep.mubr.bf16.mxu0 0
        %7157 = vmatmul.mubr.bf16.gmra.mxu0 %v6787
        %v7158 = vpop.f32.mrf.mxu0
        %v7159 = vadd.f32 0.0, %v7158
        %v7160 = vpop.f32.mrf.mxu0
        %v7161 = vpop.f32.mrf.mxu0
        %v7162 = vadd.f32 0.0, %v7161
        %v7163 = vpop.f32.mrf.mxu0
        %7164 = vmatprep.mubr.bf16.mxu0 0
        %7165 = vmatmul.mubr.bf16.gmra.mxu0 %v7010
        %v7166 = vpop.f32.mrf.mxu0
        %v7167 = vadd.f32 0.0, %v7166
        %v7168 = vpop.f32.mrf.mxu0
        %v7169 = vpop.f32.mrf.mxu0
        %v7170 = vadd.f32 0.0, %v7169
        %v7171 = vpop.f32.mrf.mxu0
        %7172 = vdwg.mxu0
        %v7173 = vadd.f32 %v6950, %v7047
        %v7174 = vadd.f32 %v6951, %v7050
        %v7175 = vadd.f32 %v6952, %v7055
        %v7176 = vadd.f32 %v6953, %v7058
        %v7177 = vadd.f32 %v6954, %v7063
        %v7178 = vadd.f32 %v6955, %v7066
        %v7179 = vadd.f32 %v6956, %v7071
        %v7180 = vadd.f32 %v6957, %v7074
        %v7181 = vadd.f32 %v6958, %v7079
        %v7182 = vadd.f32 %v6959, %v7082
        %v7183 = vadd.f32 %v6960, %v7087
        %v7184 = vadd.f32 %v6961, %v7090
        %v7185 = vadd.f32 %v6962, %v7095
        %v7186 = vadd.f32 %v6963, %v7098
        %v7187 = vadd.f32 %v6964, %v7103
        %v7188 = vadd.f32 %v6965, %v7106
        %v7189 = vadd.f32 %v6966, %v7111
        %v7190 = vadd.f32 %v6967, %v7114
        %v7191 = vadd.f32 %v6968, %v7119
        %v7192 = vadd.f32 %v6969, %v7122
        %v7193 = vadd.f32 %v6970, %v7127
        %v7194 = vadd.f32 %v6971, %v7130
        %v7195 = vadd.f32 %v6972, %v7135
        %v7196 = vadd.f32 %v6973, %v7138
        %v7197 = vadd.f32 %v6974, %v7143
        %v7198 = vadd.f32 %v6975, %v7146
        %v7199 = vadd.f32 %v6976, %v7151
        %v7200 = vadd.f32 %v6977, %v7154
        %v7201 = vadd.f32 %v6978, %v7159
        %v7202 = vadd.f32 %v6979, %v7162
        %v7203 = vadd.f32 %v6980, %v7167
        %v7204 = vadd.f32 %v6981, %v7170
        %v7205 = vld [vmem:[#allocation3] sm:$0xe]
        %v7206 = vld [vmem:[#allocation3 + $0xc] sm:$0xe]
        %v7207 = vld [vmem:[#allocation3 + $0x18] sm:$0xe]
        %v7208 = vld [vmem:[#allocation3 + $0x24] sm:$0xe]
        %v7209 = vld [vmem:[#allocation3 + $0x30] sm:$0xe]
        %v7210 = vld [vmem:[#allocation3 + $0x3c] sm:$0xe]
        %v7211 = vld [vmem:[#allocation3 + $0x48] sm:$0xe]
        %v7212 = vld [vmem:[#allocation3 + $0x54] sm:$0xe]
        %v7213 = vld [vmem:[#allocation3 + $0x60] sm:$0xe]
        %v7214 = vld [vmem:[#allocation3 + $0x6c] sm:$0xe]
        %v7215 = vld [vmem:[#allocation3 + $0x78] sm:$0xe]
        %v7216 = vld [vmem:[#allocation3 + $0x84] sm:$0xe]
        %v7217 = vld [vmem:[#allocation3 + $0x90] sm:$0xe]
        %v7218 = vld [vmem:[#allocation3 + $0x9c] sm:$0xe]
        %v7219 = vld [vmem:[#allocation3 + $0xa8] sm:$0xe]
        %v7220 = vld [vmem:[#allocation3 + $0xb4] sm:$0xe]
        %v7221 = vld [vmem:[#allocation3 + $0xc0] sm:$0xe]
        %v7222 = vld [vmem:[#allocation3 + $0xcc] sm:$0xe]
        %v7271 = vrot.slane %v7205, 5
        %v7272 = vrot.slane %v7271, 4
        %v7273 = vrot.slane %v6033, 5
        %v7274 = vsel %vm4452, %v7272, %v7273
        %v7275 = vrot.slane %v7273, 4
        %v7276 = vrot.slane %v6034, 5
        %v7277 = vsel %vm4452, %v7275, %v7276
        %v7278 = vrot.slane %v7206, 5
        %v7279 = vrot.slane %v7278, 4
        %v7280 = vrot.slane %v6036, 5
        %v7281 = vsel %vm4452, %v7279, %v7280
        %v7282 = vrot.slane %v7280, 4
        %v7283 = vrot.slane %v6037, 5
        %v7284 = vsel %vm4452, %v7282, %v7283
        %v7285 = vrot.slane %v7207, 5
        %v7286 = vrot.slane %v7285, 4
        %v7287 = vrot.slane %v6039, 5
        %v7288 = vsel %vm4452, %v7286, %v7287
        %v7289 = vrot.slane %v7287, 4
        %v7290 = vrot.slane %v6040, 5
        %v7291 = vsel %vm4452, %v7289, %v7290
        %v7292 = vrot.slane %v7208, 5
        %v7293 = vrot.slane %v7292, 4
        %v7294 = vrot.slane %v6042, 5
        %v7295 = vsel %vm4452, %v7293, %v7294
        %v7296 = vrot.slane %v7294, 4
        %v7297 = vrot.slane %v6043, 5
        %v7298 = vsel %vm4452, %v7296, %v7297
        %v7299 = vrot.slane %v7209, 5
        %v7300 = vrot.slane %v7299, 4
        %v7301 = vrot.slane %v6045, 5
        %v7302 = vsel %vm4452, %v7300, %v7301
        %v7303 = vrot.slane %v7301, 4
        %v7304 = vrot.slane %v6046, 5
        %v7305 = vsel %vm4452, %v7303, %v7304
        %v7306 = vrot.slane %v7210, 5
        %v7307 = vrot.slane %v7306, 4
        %v7308 = vrot.slane %v6048, 5
        %v7309 = vsel %vm4452, %v7307, %v7308
        %v7310 = vrot.slane %v7308, 4
        %v7311 = vrot.slane %v6049, 5
        %v7312 = vsel %vm4452, %v7310, %v7311
        %v7313 = vrot.slane %v7211, 5
        %v7314 = vrot.slane %v7313, 4
        %v7315 = vrot.slane %v6051, 5
        %v7316 = vsel %vm4452, %v7314, %v7315
        %v7317 = vrot.slane %v7315, 4
        %v7318 = vrot.slane %v6052, 5
        %v7319 = vsel %vm4452, %v7317, %v7318
        %v7320 = vrot.slane %v7212, 5
        %v7321 = vrot.slane %v7320, 4
        %v7322 = vrot.slane %v6054, 5
        %v7323 = vsel %vm4452, %v7321, %v7322
        %v7324 = vrot.slane %v7322, 4
        %v7325 = vrot.slane %v6055, 5
        %v7326 = vsel %vm4452, %v7324, %v7325
        %v7327 = vrot.slane %v7213, 5
        %v7328 = vrot.slane %v7327, 4
        %v7329 = vrot.slane %v6057, 5
        %v7330 = vsel %vm4452, %v7328, %v7329
        %v7331 = vrot.slane %v7329, 4
        %v7332 = vrot.slane %v6058, 5
        %v7333 = vsel %vm4452, %v7331, %v7332
        %v7334 = vrot.slane %v7214, 5
        %v7335 = vrot.slane %v7334, 4
        %v7336 = vrot.slane %v6060, 5
        %v7337 = vsel %vm4452, %v7335, %v7336
        %v7338 = vrot.slane %v7336, 4
        %v7339 = vrot.slane %v6061, 5
        %v7340 = vsel %vm4452, %v7338, %v7339
        %v7341 = vrot.slane %v7215, 5
        %v7342 = vrot.slane %v7341, 4
        %v7343 = vrot.slane %v6063, 5
        %v7344 = vsel %vm4452, %v7342, %v7343
        %v7345 = vrot.slane %v7343, 4
        %v7346 = vrot.slane %v6064, 5
        %v7347 = vsel %vm4452, %v7345, %v7346
        %v7348 = vrot.slane %v7216, 5
        %v7349 = vrot.slane %v7348, 4
        %v7350 = vrot.slane %v6066, 5
        %v7351 = vsel %vm4452, %v7349, %v7350
        %v7352 = vrot.slane %v7350, 4
        %v7353 = vrot.slane %v6067, 5
        %v7354 = vsel %vm4452, %v7352, %v7353
        %v7355 = vrot.slane %v7217, 5
        %v7356 = vrot.slane %v7355, 4
        %v7357 = vrot.slane %v6069, 5
        %v7358 = vsel %vm4452, %v7356, %v7357
        %v7359 = vrot.slane %v7357, 4
        %v7360 = vrot.slane %v6070, 5
        %v7361 = vsel %vm4452, %v7359, %v7360
        %v7362 = vrot.slane %v7218, 5
        %v7363 = vrot.slane %v7362, 4
        %v7364 = vrot.slane %v6072, 5
        %v7365 = vsel %vm4452, %v7363, %v7364
        %v7366 = vrot.slane %v7364, 4
        %v7367 = vrot.slane %v6073, 5
        %v7368 = vsel %vm4452, %v7366, %v7367
        %v7369 = vrot.slane %v7219, 5
        %v7370 = vrot.slane %v7369, 4
        %v7371 = vrot.slane %v6075, 5
        %v7372 = vsel %vm4452, %v7370, %v7371
        %v7373 = vrot.slane %v7371, 4
        %v7374 = vrot.slane %v6076, 5
        %v7375 = vsel %vm4452, %v7373, %v7374
        %v7376 = vrot.slane %v7220, 5
        %v7377 = vrot.slane %v7376, 4
        %v7378 = vrot.slane %v6078, 5
        %v7379 = vsel %vm4452, %v7377, %v7378
        %v7380 = vrot.slane %v7378, 4
        %v7381 = vrot.slane %v6079, 5
        %v7382 = vsel %vm4452, %v7380, %v7381
        %v7383 = vunpack.c.l.b16 %v7274
        %v7384 = vunpack.c.l.b16 %v7277
        %v7385 = vunpack.c.l.b16 %v7281
        %v7386 = vunpack.c.l.b16 %v7284
        %v7387 = vunpack.c.l.b16 %v7288
        %v7388 = vunpack.c.l.b16 %v7291
        %v7389 = vunpack.c.l.b16 %v7295
        %v7390 = vunpack.c.l.b16 %v7298
        %v7391 = vunpack.c.l.b16 %v7302
        %v7392 = vunpack.c.l.b16 %v7305
        %v7393 = vunpack.c.l.b16 %v7309
        %v7394 = vunpack.c.l.b16 %v7312
        %v7395 = vunpack.c.l.b16 %v7316
        %v7396 = vunpack.c.l.b16 %v7319
        %v7397 = vunpack.c.l.b16 %v7323
        %v7398 = vunpack.c.l.b16 %v7326
        %v7399 = vunpack.c.l.b16 %v7330
        %v7400 = vunpack.c.l.b16 %v7333
        %v7401 = vunpack.c.l.b16 %v7337
        %v7402 = vunpack.c.l.b16 %v7340
        %v7403 = vunpack.c.l.b16 %v7344
        %v7404 = vunpack.c.l.b16 %v7347
        %v7405 = vunpack.c.l.b16 %v7351
        %v7406 = vunpack.c.l.b16 %v7354
        %v7407 = vunpack.c.l.b16 %v7358
        %v7408 = vunpack.c.l.b16 %v7361
        %v7409 = vunpack.c.l.b16 %v7365
        %v7410 = vunpack.c.l.b16 %v7368
        %v7411 = vunpack.c.l.b16 %v7372
        %v7412 = vunpack.c.l.b16 %v7375
        %v7413 = vunpack.c.l.b16 %v7379
        %v7414 = vunpack.c.l.b16 %v7382
        %v7415 = vpack.c.b16 %v7384, %v7383
        %v7416 = vpack.c.b16 %v7386, %v7385
        %v7417 = vpack.c.b16 %v7388, %v7387
        %v7418 = vpack.c.b16 %v7390, %v7389
        %v7419 = vpack.c.b16 %v7392, %v7391
        %v7420 = vpack.c.b16 %v7394, %v7393
        %v7421 = vpack.c.b16 %v7396, %v7395
        %v7422 = vpack.c.b16 %v7398, %v7397
        %v7423 = vpack.c.b16 %v7400, %v7399
        %v7424 = vpack.c.b16 %v7402, %v7401
        %v7425 = vpack.c.b16 %v7404, %v7403
        %v7426 = vpack.c.b16 %v7406, %v7405
        %v7427 = vpack.c.b16 %v7408, %v7407
        %v7428 = vpack.c.b16 %v7410, %v7409
        %v7429 = vpack.c.b16 %v7412, %v7411
        %v7430 = vpack.c.b16 %v7414, %v7413
        %v7432 = vsel %vm5388, %v7415, 0
        %v7435 = vsel %vm5388, %v7416, 0
        %v7438 = vsel %vm5388, %v7417, 0
        %v7441 = vsel %vm5388, %v7418, 0
        %v7444 = vsel %vm5388, %v7419, 0
        %v7447 = vsel %vm5388, %v7420, 0
        %v7450 = vsel %vm5388, %v7421, 0
        %v7453 = vsel %vm5388, %v7422, 0
        %v7456 = vsel %vm5388, %v7423, 0
        %v7459 = vsel %vm5388, %v7424, 0
        %v7462 = vsel %vm5388, %v7425, 0
        %v7465 = vsel %vm5388, %v7426, 0
        %v7468 = vsel %vm5388, %v7427, 0
        %v7471 = vsel %vm5388, %v7428, 0
        %v7474 = vsel %vm5388, %v7429, 0
        %v7477 = vsel %vm5388, %v7430, 0
        %7479 = vmatprep.subr.bf16.mxu0 0
        %7480 = vmatpush1.bf16.msra.mxu0 0
        %7481 = vmatprep.subr.bf16.mxu0 0
        %7482 = vmatpush1.bf16.msra.mxu0 0
        %7483 = vmatprep.subr.bf16.mxu0 0
        %7484 = vmatpush1.bf16.msra.mxu0 0
        %7485 = vmatprep.subr.bf16.mxu0 0
        %7486 = vmatpush1.bf16.msra.mxu0 0
        %7487 = vmatprep.subr.bf16.mxu0 0
        %7488 = vmatpush1.bf16.msra.mxu0 %v2433
        %7489 = vmatprep.subr.bf16.mxu0 0
        %7490 = vmatpush1.bf16.msra.mxu0 %v2432
        %7491 = vmatprep.subr.bf16.mxu0 0
        %7492 = vmatpush1.bf16.msra.mxu0 %v2431
        %7493 = vmatprep.subr.bf16.mxu0 0
        %7494 = vmatpush1.bf16.msra.mxu0 %v2430
        %7495 = vmatprep.subr.bf16.mxu0 0
        %7496 = vmatpush2.bf16.msra.mxu0 0
        %7497 = vmatprep.subr.bf16.mxu0 0
        %7498 = vmatpush2.bf16.msra.mxu0 0
        %7499 = vmatprep.subr.bf16.mxu0 0
        %7500 = vmatpush2.bf16.msra.mxu0 0
        %7501 = vmatprep.subr.bf16.mxu0 0
        %7502 = vmatpush2.bf16.msra.mxu0 0
        %7503 = vmatprep.subr.bf16.mxu0 0
        %7504 = vmatpush2.bf16.msra.mxu0 0
        %7505 = vmatprep.subr.bf16.mxu0 0
        %7506 = vmatpush2.bf16.msra.mxu0 0
        %7507 = vmatprep.subr.bf16.mxu0 0
        %7508 = vmatpush2.bf16.msra.mxu0 0
        %7509 = vmatprep.subr.bf16.mxu0 0
        %7510 = vmatpush2.bf16.msra.mxu0 0
        %7511 = vmatprep.mubr.bf16.mxu0 0
        %7512 = vmatmul.mubr.bf16.gmra.mxu0 %v7432
        %v7513 = vpop.f32.mrf.mxu0
        %v7514 = vadd.f32 0.0, %v7513
        %v7515 = vpop.f32.mrf.mxu0
        %v7516 = vpop.f32.mrf.mxu0
        %v7517 = vadd.f32 0.0, %v7516
        %v7518 = vpop.f32.mrf.mxu0
        %7519 = vmatprep.mubr.bf16.mxu0 0
        %7520 = vmatmul.mubr.bf16.gmra.mxu0 %v7435
        %v7521 = vpop.f32.mrf.mxu0
        %v7522 = vadd.f32 0.0, %v7521
        %v7523 = vpop.f32.mrf.mxu0
        %v7524 = vpop.f32.mrf.mxu0
        %v7525 = vadd.f32 0.0, %v7524
        %v7526 = vpop.f32.mrf.mxu0
        %7527 = vmatprep.mubr.bf16.mxu0 0
        %7528 = vmatmul.mubr.bf16.gmra.mxu0 %v7438
        %v7529 = vpop.f32.mrf.mxu0
        %v7530 = vadd.f32 0.0, %v7529
        %v7531 = vpop.f32.mrf.mxu0
        %v7532 = vpop.f32.mrf.mxu0
        %v7533 = vadd.f32 0.0, %v7532
        %v7534 = vpop.f32.mrf.mxu0
        %7535 = vmatprep.mubr.bf16.mxu0 0
        %7536 = vmatmul.mubr.bf16.gmra.mxu0 %v7441
        %v7537 = vpop.f32.mrf.mxu0
        %v7538 = vadd.f32 0.0, %v7537
        %v7539 = vpop.f32.mrf.mxu0
        %v7540 = vpop.f32.mrf.mxu0
        %v7541 = vadd.f32 0.0, %v7540
        %v7542 = vpop.f32.mrf.mxu0
        %7543 = vmatprep.mubr.bf16.mxu0 0
        %7544 = vmatmul.mubr.bf16.gmra.mxu0 %v7444
        %v7545 = vpop.f32.mrf.mxu0
        %v7546 = vadd.f32 0.0, %v7545
        %v7547 = vpop.f32.mrf.mxu0
        %v7548 = vpop.f32.mrf.mxu0
        %v7549 = vadd.f32 0.0, %v7548
        %v7550 = vpop.f32.mrf.mxu0
        %7551 = vmatprep.mubr.bf16.mxu0 0
        %7552 = vmatmul.mubr.bf16.gmra.mxu0 %v7447
        %v7553 = vpop.f32.mrf.mxu0
        %v7554 = vadd.f32 0.0, %v7553
        %v7555 = vpop.f32.mrf.mxu0
        %v7556 = vpop.f32.mrf.mxu0
        %v7557 = vadd.f32 0.0, %v7556
        %v7558 = vpop.f32.mrf.mxu0
        %7559 = vmatprep.mubr.bf16.mxu0 0
        %7560 = vmatmul.mubr.bf16.gmra.mxu0 %v7450
        %v7561 = vpop.f32.mrf.mxu0
        %v7562 = vadd.f32 0.0, %v7561
        %v7563 = vpop.f32.mrf.mxu0
        %v7564 = vpop.f32.mrf.mxu0
        %v7565 = vadd.f32 0.0, %v7564
        %v7566 = vpop.f32.mrf.mxu0
        %7567 = vmatprep.mubr.bf16.mxu0 0
        %7568 = vmatmul.mubr.bf16.gmra.mxu0 %v7453
        %v7569 = vpop.f32.mrf.mxu0
        %v7570 = vadd.f32 0.0, %v7569
        %v7571 = vpop.f32.mrf.mxu0
        %v7572 = vpop.f32.mrf.mxu0
        %v7573 = vadd.f32 0.0, %v7572
        %v7574 = vpop.f32.mrf.mxu0
        %7575 = vmatprep.mubr.bf16.mxu0 0
        %7576 = vmatmul.mubr.bf16.gmra.mxu0 %v7456
        %v7577 = vpop.f32.mrf.mxu0
        %v7578 = vadd.f32 0.0, %v7577
        %v7579 = vpop.f32.mrf.mxu0
        %v7580 = vpop.f32.mrf.mxu0
        %v7581 = vadd.f32 0.0, %v7580
        %v7582 = vpop.f32.mrf.mxu0
        %7583 = vmatprep.mubr.bf16.mxu0 0
        %7584 = vmatmul.mubr.bf16.gmra.mxu0 %v7459
        %v7585 = vpop.f32.mrf.mxu0
        %v7586 = vadd.f32 0.0, %v7585
        %v7587 = vpop.f32.mrf.mxu0
        %v7588 = vpop.f32.mrf.mxu0
        %v7589 = vadd.f32 0.0, %v7588
        %v7590 = vpop.f32.mrf.mxu0
        %7591 = vmatprep.mubr.bf16.mxu0 0
        %7592 = vmatmul.mubr.bf16.gmra.mxu0 %v7462
        %v7593 = vpop.f32.mrf.mxu0
        %v7594 = vadd.f32 0.0, %v7593
        %v7595 = vpop.f32.mrf.mxu0
        %v7596 = vpop.f32.mrf.mxu0
        %v7597 = vadd.f32 0.0, %v7596
        %v7598 = vpop.f32.mrf.mxu0
        %7599 = vmatprep.mubr.bf16.mxu0 0
        %7600 = vmatmul.mubr.bf16.gmra.mxu0 %v7465
        %v7601 = vpop.f32.mrf.mxu0
        %v7602 = vadd.f32 0.0, %v7601
        %v7603 = vpop.f32.mrf.mxu0
        %v7604 = vpop.f32.mrf.mxu0
        %v7605 = vadd.f32 0.0, %v7604
        %v7606 = vpop.f32.mrf.mxu0
        %7607 = vmatprep.mubr.bf16.mxu0 0
        %7608 = vmatmul.mubr.bf16.gmra.mxu0 %v7468
        %v7609 = vpop.f32.mrf.mxu0
        %v7610 = vadd.f32 0.0, %v7609
        %v7611 = vpop.f32.mrf.mxu0
        %v7612 = vpop.f32.mrf.mxu0
        %v7613 = vadd.f32 0.0, %v7612
        %v7614 = vpop.f32.mrf.mxu0
        %7615 = vmatprep.mubr.bf16.mxu0 0
        %7616 = vmatmul.mubr.bf16.gmra.mxu0 %v7471
        %v7617 = vpop.f32.mrf.mxu0
        %v7618 = vadd.f32 0.0, %v7617
        %v7619 = vpop.f32.mrf.mxu0
        %v7620 = vpop.f32.mrf.mxu0
        %v7621 = vadd.f32 0.0, %v7620
        %v7622 = vpop.f32.mrf.mxu0
        %7623 = vmatprep.mubr.bf16.mxu0 0
        %7624 = vmatmul.mubr.bf16.gmra.mxu0 %v7474
        %v7625 = vpop.f32.mrf.mxu0
        %v7626 = vadd.f32 0.0, %v7625
        %v7627 = vpop.f32.mrf.mxu0
        %v7628 = vpop.f32.mrf.mxu0
        %v7629 = vadd.f32 0.0, %v7628
        %v7630 = vpop.f32.mrf.mxu0
        %7631 = vmatprep.mubr.bf16.mxu0 0
        %7632 = vmatmul.mubr.bf16.gmra.mxu0 %v7477
        %v7633 = vpop.f32.mrf.mxu0
        %v7634 = vadd.f32 0.0, %v7633
        %v7635 = vpop.f32.mrf.mxu0
        %v7636 = vpop.f32.mrf.mxu0
        %v7637 = vadd.f32 0.0, %v7636
        %v7638 = vpop.f32.mrf.mxu0
        %7639 = vdwg.mxu0
        %v7640 = vadd.f32 %v7173, %v7514
        %v7641 = vadd.f32 %v7174, %v7517
        %v7642 = vadd.f32 %v7175, %v7522
        %v7643 = vadd.f32 %v7176, %v7525
        %v7644 = vadd.f32 %v7177, %v7530
        %v7645 = vadd.f32 %v7178, %v7533
        %v7646 = vadd.f32 %v7179, %v7538
        %v7647 = vadd.f32 %v7180, %v7541
        %v7648 = vadd.f32 %v7181, %v7546
        %v7649 = vadd.f32 %v7182, %v7549
        %v7650 = vadd.f32 %v7183, %v7554
        %v7651 = vadd.f32 %v7184, %v7557
        %v7652 = vadd.f32 %v7185, %v7562
        %v7653 = vadd.f32 %v7186, %v7565
        %v7654 = vadd.f32 %v7187, %v7570
        %v7655 = vadd.f32 %v7188, %v7573
        %v7656 = vadd.f32 %v7189, %v7578
        %v7657 = vadd.f32 %v7190, %v7581
        %v7658 = vadd.f32 %v7191, %v7586
        %v7659 = vadd.f32 %v7192, %v7589
        %v7660 = vadd.f32 %v7193, %v7594
        %v7661 = vadd.f32 %v7194, %v7597
        %v7662 = vadd.f32 %v7195, %v7602
        %v7663 = vadd.f32 %v7196, %v7605
        %v7664 = vadd.f32 %v7197, %v7610
        %v7665 = vadd.f32 %v7198, %v7613
        %v7666 = vadd.f32 %v7199, %v7618
        %v7667 = vadd.f32 %v7200, %v7621
        %v7668 = vadd.f32 %v7201, %v7626
        %v7669 = vadd.f32 %v7202, %v7629
        %v7670 = vadd.f32 %v7203, %v7634
        %v7671 = vadd.f32 %v7204, %v7637
        %v7675 = vrot.slane %v7221, 5
        %v7676 = vrot.slane %v7675, 4
        %v7677 = vrot.slane %v6081, 5
        %v7678 = vsel %vm4452, %v7676, %v7677
        %v7679 = vrot.slane %v7677, 4
        %v7680 = vrot.slane %v6082, 5
        %v7681 = vsel %vm4452, %v7679, %v7680
        %v7682 = vunpack.c.l.b16 %v7678
        %v7683 = vunpack.c.l.b16 %v7681
        %v7684 = vpack.c.b16 %v7683, %v7682
        %v7686 = vsel %vm5388, %v7684, 0
        %7688 = vmatprep.subr.bf16.mxu0 0
        %7689 = vmatpush1.bf16.msra.mxu0 0
        %7690 = vmatprep.subr.bf16.mxu0 0
        %7691 = vmatpush1.bf16.msra.mxu0 0
        %7692 = vmatprep.subr.bf16.mxu0 0
        %7693 = vmatpush1.bf16.msra.mxu0 0
        %7694 = vmatprep.subr.bf16.mxu0 0
        %7695 = vmatpush1.bf16.msra.mxu0 0
        %7696 = vmatprep.subr.bf16.mxu0 0
        %7697 = vmatpush1.bf16.msra.mxu0 %v2445
        %7698 = vmatprep.subr.bf16.mxu0 0
        %7699 = vmatpush1.bf16.msra.mxu0 %v2444
        %7700 = vmatprep.subr.bf16.mxu0 0
        %7701 = vmatpush1.bf16.msra.mxu0 %v2443
        %7702 = vmatprep.subr.bf16.mxu0 0
        %7703 = vmatpush1.bf16.msra.mxu0 %v2442
        %7704 = vmatprep.subr.bf16.mxu0 0
        %7705 = vmatpush2.bf16.msra.mxu0 0
        %7706 = vmatprep.subr.bf16.mxu0 0
        %7707 = vmatpush2.bf16.msra.mxu0 0
        %7708 = vmatprep.subr.bf16.mxu0 0
        %7709 = vmatpush2.bf16.msra.mxu0 0
        %7710 = vmatprep.subr.bf16.mxu0 0
        %7711 = vmatpush2.bf16.msra.mxu0 0
        %7712 = vmatprep.subr.bf16.mxu0 0
        %7713 = vmatpush2.bf16.msra.mxu0 0
        %7714 = vmatprep.subr.bf16.mxu0 0
        %7715 = vmatpush2.bf16.msra.mxu0 0
        %7716 = vmatprep.subr.bf16.mxu0 0
        %7717 = vmatpush2.bf16.msra.mxu0 0
        %7718 = vmatprep.subr.bf16.mxu0 0
        %7719 = vmatpush2.bf16.msra.mxu0 0
        %7720 = vmatprep.mubr.bf16.mxu0 0
        %7721 = vmatmul.mubr.bf16.gmra.mxu0 %v7435
        %v7722 = vpop.f32.mrf.mxu0
        %v7723 = vadd.f32 0.0, %v7722
        %v7724 = vpop.f32.mrf.mxu0
        %v7725 = vpop.f32.mrf.mxu0
        %v7726 = vadd.f32 0.0, %v7725
        %v7727 = vpop.f32.mrf.mxu0
        %7728 = vmatprep.mubr.bf16.mxu0 0
        %7729 = vmatmul.mubr.bf16.gmra.mxu0 %v7438
        %v7730 = vpop.f32.mrf.mxu0
        %v7731 = vadd.f32 0.0, %v7730
        %v7732 = vpop.f32.mrf.mxu0
        %v7733 = vpop.f32.mrf.mxu0
        %v7734 = vadd.f32 0.0, %v7733
        %v7735 = vpop.f32.mrf.mxu0
        %7736 = vmatprep.mubr.bf16.mxu0 0
        %7737 = vmatmul.mubr.bf16.gmra.mxu0 %v7441
        %v7738 = vpop.f32.mrf.mxu0
        %v7739 = vadd.f32 0.0, %v7738
        %v7740 = vpop.f32.mrf.mxu0
        %v7741 = vpop.f32.mrf.mxu0
        %v7742 = vadd.f32 0.0, %v7741
        %v7743 = vpop.f32.mrf.mxu0
        %7744 = vmatprep.mubr.bf16.mxu0 0
        %7745 = vmatmul.mubr.bf16.gmra.mxu0 %v7444
        %v7746 = vpop.f32.mrf.mxu0
        %v7747 = vadd.f32 0.0, %v7746
        %v7748 = vpop.f32.mrf.mxu0
        %v7749 = vpop.f32.mrf.mxu0
        %v7750 = vadd.f32 0.0, %v7749
        %v7751 = vpop.f32.mrf.mxu0
        %7752 = vmatprep.mubr.bf16.mxu0 0
        %7753 = vmatmul.mubr.bf16.gmra.mxu0 %v7447
        %v7754 = vpop.f32.mrf.mxu0
        %v7755 = vadd.f32 0.0, %v7754
        %v7756 = vpop.f32.mrf.mxu0
        %v7757 = vpop.f32.mrf.mxu0
        %v7758 = vadd.f32 0.0, %v7757
        %v7759 = vpop.f32.mrf.mxu0
        %7760 = vmatprep.mubr.bf16.mxu0 0
        %7761 = vmatmul.mubr.bf16.gmra.mxu0 %v7450
        %v7762 = vpop.f32.mrf.mxu0
        %v7763 = vadd.f32 0.0, %v7762
        %v7764 = vpop.f32.mrf.mxu0
        %v7765 = vpop.f32.mrf.mxu0
        %v7766 = vadd.f32 0.0, %v7765
        %v7767 = vpop.f32.mrf.mxu0
        %7768 = vmatprep.mubr.bf16.mxu0 0
        %7769 = vmatmul.mubr.bf16.gmra.mxu0 %v7453
        %v7770 = vpop.f32.mrf.mxu0
        %v7771 = vadd.f32 0.0, %v7770
        %v7772 = vpop.f32.mrf.mxu0
        %v7773 = vpop.f32.mrf.mxu0
        %v7774 = vadd.f32 0.0, %v7773
        %v7775 = vpop.f32.mrf.mxu0
        %7776 = vmatprep.mubr.bf16.mxu0 0
        %7777 = vmatmul.mubr.bf16.gmra.mxu0 %v7456
        %v7778 = vpop.f32.mrf.mxu0
        %v7779 = vadd.f32 0.0, %v7778
        %v7780 = vpop.f32.mrf.mxu0
        %v7781 = vpop.f32.mrf.mxu0
        %v7782 = vadd.f32 0.0, %v7781
        %v7783 = vpop.f32.mrf.mxu0
        %7784 = vmatprep.mubr.bf16.mxu0 0
        %7785 = vmatmul.mubr.bf16.gmra.mxu0 %v7459
        %v7786 = vpop.f32.mrf.mxu0
        %v7787 = vadd.f32 0.0, %v7786
        %v7788 = vpop.f32.mrf.mxu0
        %v7789 = vpop.f32.mrf.mxu0
        %v7790 = vadd.f32 0.0, %v7789
        %v7791 = vpop.f32.mrf.mxu0
        %7792 = vmatprep.mubr.bf16.mxu0 0
        %7793 = vmatmul.mubr.bf16.gmra.mxu0 %v7462
        %v7794 = vpop.f32.mrf.mxu0
        %v7795 = vadd.f32 0.0, %v7794
        %v7796 = vpop.f32.mrf.mxu0
        %v7797 = vpop.f32.mrf.mxu0
        %v7798 = vadd.f32 0.0, %v7797
        %v7799 = vpop.f32.mrf.mxu0
        %7800 = vmatprep.mubr.bf16.mxu0 0
        %7801 = vmatmul.mubr.bf16.gmra.mxu0 %v7465
        %v7802 = vpop.f32.mrf.mxu0
        %v7803 = vadd.f32 0.0, %v7802
        %v7804 = vpop.f32.mrf.mxu0
        %v7805 = vpop.f32.mrf.mxu0
        %v7806 = vadd.f32 0.0, %v7805
        %v7807 = vpop.f32.mrf.mxu0
        %7808 = vmatprep.mubr.bf16.mxu0 0
        %7809 = vmatmul.mubr.bf16.gmra.mxu0 %v7468
        %v7810 = vpop.f32.mrf.mxu0
        %v7811 = vadd.f32 0.0, %v7810
        %v7812 = vpop.f32.mrf.mxu0
        %v7813 = vpop.f32.mrf.mxu0
        %v7814 = vadd.f32 0.0, %v7813
        %v7815 = vpop.f32.mrf.mxu0
        %7816 = vmatprep.mubr.bf16.mxu0 0
        %7817 = vmatmul.mubr.bf16.gmra.mxu0 %v7471
        %v7818 = vpop.f32.mrf.mxu0
        %v7819 = vadd.f32 0.0, %v7818
        %v7820 = vpop.f32.mrf.mxu0
        %v7821 = vpop.f32.mrf.mxu0
        %v7822 = vadd.f32 0.0, %v7821
        %v7823 = vpop.f32.mrf.mxu0
        %7824 = vmatprep.mubr.bf16.mxu0 0
        %7825 = vmatmul.mubr.bf16.gmra.mxu0 %v7474
        %v7826 = vpop.f32.mrf.mxu0
        %v7827 = vadd.f32 0.0, %v7826
        %v7828 = vpop.f32.mrf.mxu0
        %v7829 = vpop.f32.mrf.mxu0
        %v7830 = vadd.f32 0.0, %v7829
        %v7831 = vpop.f32.mrf.mxu0
        %7832 = vmatprep.mubr.bf16.mxu0 0
        %7833 = vmatmul.mubr.bf16.gmra.mxu0 %v7477
        %v7834 = vpop.f32.mrf.mxu0
        %v7835 = vadd.f32 0.0, %v7834
        %v7836 = vpop.f32.mrf.mxu0
        %v7837 = vpop.f32.mrf.mxu0
        %v7838 = vadd.f32 0.0, %v7837
        %v7839 = vpop.f32.mrf.mxu0
        %7840 = vmatprep.mubr.bf16.mxu0 0
        %7841 = vmatmul.mubr.bf16.gmra.mxu0 %v7686
        %v7842 = vpop.f32.mrf.mxu0
        %v7843 = vadd.f32 0.0, %v7842
        %v7844 = vpop.f32.mrf.mxu0
        %v7845 = vpop.f32.mrf.mxu0
        %v7846 = vadd.f32 0.0, %v7845
        %v7847 = vpop.f32.mrf.mxu0
        %7848 = vdwg.mxu0
        %v7849 = vadd.f32 %v7640, %v7723
        %v7850 = vadd.f32 %v7641, %v7726
        %v7851 = vadd.f32 %v7642, %v7731
        %v7852 = vadd.f32 %v7643, %v7734
        %v7853 = vadd.f32 %v7644, %v7739
        %v7854 = vadd.f32 %v7645, %v7742
        %v7855 = vadd.f32 %v7646, %v7747
        %v7856 = vadd.f32 %v7647, %v7750
        %v7857 = vadd.f32 %v7648, %v7755
        %v7858 = vadd.f32 %v7649, %v7758
        %v7859 = vadd.f32 %v7650, %v7763
        %v7860 = vadd.f32 %v7651, %v7766
        %v7861 = vadd.f32 %v7652, %v7771
        %v7862 = vadd.f32 %v7653, %v7774
        %v7863 = vadd.f32 %v7654, %v7779
        %v7864 = vadd.f32 %v7655, %v7782
        %v7865 = vadd.f32 %v7656, %v7787
        %v7866 = vadd.f32 %v7657, %v7790
        %v7867 = vadd.f32 %v7658, %v7795
        %v7868 = vadd.f32 %v7659, %v7798
        %v7869 = vadd.f32 %v7660, %v7803
        %v7870 = vadd.f32 %v7661, %v7806
        %v7871 = vadd.f32 %v7662, %v7811
        %v7872 = vadd.f32 %v7663, %v7814
        %v7873 = vadd.f32 %v7664, %v7819
        %v7874 = vadd.f32 %v7665, %v7822
        %v7875 = vadd.f32 %v7666, %v7827
        %v7876 = vadd.f32 %v7667, %v7830
        %v7877 = vadd.f32 %v7668, %v7835
        %v7878 = vadd.f32 %v7669, %v7838
        %v7879 = vadd.f32 %v7670, %v7843
        %v7880 = vadd.f32 %v7671, %v7846
        %v7884 = vrot.slane %v7222, 5
        %v7885 = vrot.slane %v7884, 4
        %v7886 = vrot.slane %v6084, 5
        %v7887 = vsel %vm4452, %v7885, %v7886
        %v7888 = vrot.slane %v7886, 4
        %v7889 = vrot.slane %v6085, 5
        %v7890 = vsel %vm4452, %v7888, %v7889
        %v7891 = vunpack.c.l.b16 %v7887
        %v7892 = vunpack.c.l.b16 %v7890
        %v7893 = vpack.c.b16 %v7892, %v7891
        %v7895 = vsel %vm5388, %v7893, 0
        %7897 = vmatprep.subr.bf16.mxu0 0
        %7898 = vmatpush1.bf16.msra.mxu0 0
        %7899 = vmatprep.subr.bf16.mxu0 0
        %7900 = vmatpush1.bf16.msra.mxu0 0
        %7901 = vmatprep.subr.bf16.mxu0 0
        %7902 = vmatpush1.bf16.msra.mxu0 0
        %7903 = vmatprep.subr.bf16.mxu0 0
        %7904 = vmatpush1.bf16.msra.mxu0 0
        %7905 = vmatprep.subr.bf16.mxu0 0
        %7906 = vmatpush1.bf16.msra.mxu0 %v2457
        %7907 = vmatprep.subr.bf16.mxu0 0
        %7908 = vmatpush1.bf16.msra.mxu0 %v2456
        %7909 = vmatprep.subr.bf16.mxu0 0
        %7910 = vmatpush1.bf16.msra.mxu0 %v2455
        %7911 = vmatprep.subr.bf16.mxu0 0
        %7912 = vmatpush1.bf16.msra.mxu0 %v2454
        %7913 = vmatprep.subr.bf16.mxu0 0
        %7914 = vmatpush2.bf16.msra.mxu0 0
        %7915 = vmatprep.subr.bf16.mxu0 0
        %7916 = vmatpush2.bf16.msra.mxu0 0
        %7917 = vmatprep.subr.bf16.mxu0 0
        %7918 = vmatpush2.bf16.msra.mxu0 0
        %7919 = vmatprep.subr.bf16.mxu0 0
        %7920 = vmatpush2.bf16.msra.mxu0 0
        %7921 = vmatprep.subr.bf16.mxu0 0
        %7922 = vmatpush2.bf16.msra.mxu0 0
        %7923 = vmatprep.subr.bf16.mxu0 0
        %7924 = vmatpush2.bf16.msra.mxu0 0
        %7925 = vmatprep.subr.bf16.mxu0 0
        %7926 = vmatpush2.bf16.msra.mxu0 0
        %7927 = vmatprep.subr.bf16.mxu0 0
        %7928 = vmatpush2.bf16.msra.mxu0 0
        %7929 = vmatprep.mubr.bf16.mxu0 0
        %7930 = vmatmul.mubr.bf16.gmra.mxu0 %v7438
        %v7931 = vpop.f32.mrf.mxu0
        %v7932 = vadd.f32 0.0, %v7931
        %v7933 = vpop.f32.mrf.mxu0
        %v7934 = vpop.f32.mrf.mxu0
        %v7935 = vadd.f32 0.0, %v7934
        %v7936 = vpop.f32.mrf.mxu0
        %7937 = vmatprep.mubr.bf16.mxu0 0
        %7938 = vmatmul.mubr.bf16.gmra.mxu0 %v7441
        %v7939 = vpop.f32.mrf.mxu0
        %v7940 = vadd.f32 0.0, %v7939
        %v7941 = vpop.f32.mrf.mxu0
        %v7942 = vpop.f32.mrf.mxu0
        %v7943 = vadd.f32 0.0, %v7942
        %v7944 = vpop.f32.mrf.mxu0
        %7945 = vmatprep.mubr.bf16.mxu0 0
        %7946 = vmatmul.mubr.bf16.gmra.mxu0 %v7444
        %v7947 = vpop.f32.mrf.mxu0
        %v7948 = vadd.f32 0.0, %v7947
        %v7949 = vpop.f32.mrf.mxu0
        %v7950 = vpop.f32.mrf.mxu0
        %v7951 = vadd.f32 0.0, %v7950
        %v7952 = vpop.f32.mrf.mxu0
        %7953 = vmatprep.mubr.bf16.mxu0 0
        %7954 = vmatmul.mubr.bf16.gmra.mxu0 %v7447
        %v7955 = vpop.f32.mrf.mxu0
        %v7956 = vadd.f32 0.0, %v7955
        %v7957 = vpop.f32.mrf.mxu0
        %v7958 = vpop.f32.mrf.mxu0
        %v7959 = vadd.f32 0.0, %v7958
        %v7960 = vpop.f32.mrf.mxu0
        %7961 = vmatprep.mubr.bf16.mxu0 0
        %7962 = vmatmul.mubr.bf16.gmra.mxu0 %v7450
        %v7963 = vpop.f32.mrf.mxu0
        %v7964 = vadd.f32 0.0, %v7963
        %v7965 = vpop.f32.mrf.mxu0
        %v7966 = vpop.f32.mrf.mxu0
        %v7967 = vadd.f32 0.0, %v7966
        %v7968 = vpop.f32.mrf.mxu0
        %7969 = vmatprep.mubr.bf16.mxu0 0
        %7970 = vmatmul.mubr.bf16.gmra.mxu0 %v7453
        %v7971 = vpop.f32.mrf.mxu0
        %v7972 = vadd.f32 0.0, %v7971
        %v7973 = vpop.f32.mrf.mxu0
        %v7974 = vpop.f32.mrf.mxu0
        %v7975 = vadd.f32 0.0, %v7974
        %v7976 = vpop.f32.mrf.mxu0
        %7977 = vmatprep.mubr.bf16.mxu0 0
        %7978 = vmatmul.mubr.bf16.gmra.mxu0 %v7456
        %v7979 = vpop.f32.mrf.mxu0
        %v7980 = vadd.f32 0.0, %v7979
        %v7981 = vpop.f32.mrf.mxu0
        %v7982 = vpop.f32.mrf.mxu0
        %v7983 = vadd.f32 0.0, %v7982
        %v7984 = vpop.f32.mrf.mxu0
        %7985 = vmatprep.mubr.bf16.mxu0 0
        %7986 = vmatmul.mubr.bf16.gmra.mxu0 %v7459
        %v7987 = vpop.f32.mrf.mxu0
        %v7988 = vadd.f32 0.0, %v7987
        %v7989 = vpop.f32.mrf.mxu0
        %v7990 = vpop.f32.mrf.mxu0
        %v7991 = vadd.f32 0.0, %v7990
        %v7992 = vpop.f32.mrf.mxu0
        %7993 = vmatprep.mubr.bf16.mxu0 0
        %7994 = vmatmul.mubr.bf16.gmra.mxu0 %v7462
        %v7995 = vpop.f32.mrf.mxu0
        %v7996 = vadd.f32 0.0, %v7995
        %v7997 = vpop.f32.mrf.mxu0
        %v7998 = vpop.f32.mrf.mxu0
        %v7999 = vadd.f32 0.0, %v7998
        %v8000 = vpop.f32.mrf.mxu0
        %8001 = vmatprep.mubr.bf16.mxu0 0
        %8002 = vmatmul.mubr.bf16.gmra.mxu0 %v7465
        %v8003 = vpop.f32.mrf.mxu0
        %v8004 = vadd.f32 0.0, %v8003
        %v8005 = vpop.f32.mrf.mxu0
        %v8006 = vpop.f32.mrf.mxu0
        %v8007 = vadd.f32 0.0, %v8006
        %v8008 = vpop.f32.mrf.mxu0
        %8009 = vmatprep.mubr.bf16.mxu0 0
        %8010 = vmatmul.mubr.bf16.gmra.mxu0 %v7468
        %v8011 = vpop.f32.mrf.mxu0
        %v8012 = vadd.f32 0.0, %v8011
        %v8013 = vpop.f32.mrf.mxu0
        %v8014 = vpop.f32.mrf.mxu0
        %v8015 = vadd.f32 0.0, %v8014
        %v8016 = vpop.f32.mrf.mxu0
        %8017 = vmatprep.mubr.bf16.mxu0 0
        %8018 = vmatmul.mubr.bf16.gmra.mxu0 %v7471
        %v8019 = vpop.f32.mrf.mxu0
        %v8020 = vadd.f32 0.0, %v8019
        %v8021 = vpop.f32.mrf.mxu0
        %v8022 = vpop.f32.mrf.mxu0
        %v8023 = vadd.f32 0.0, %v8022
        %v8024 = vpop.f32.mrf.mxu0
        %8025 = vmatprep.mubr.bf16.mxu0 0
        %8026 = vmatmul.mubr.bf16.gmra.mxu0 %v7474
        %v8027 = vpop.f32.mrf.mxu0
        %v8028 = vadd.f32 0.0, %v8027
        %v8029 = vpop.f32.mrf.mxu0
        %v8030 = vpop.f32.mrf.mxu0
        %v8031 = vadd.f32 0.0, %v8030
        %v8032 = vpop.f32.mrf.mxu0
        %8033 = vmatprep.mubr.bf16.mxu0 0
        %8034 = vmatmul.mubr.bf16.gmra.mxu0 %v7477
        %v8035 = vpop.f32.mrf.mxu0
        %v8036 = vadd.f32 0.0, %v8035
        %v8037 = vpop.f32.mrf.mxu0
        %v8038 = vpop.f32.mrf.mxu0
        %v8039 = vadd.f32 0.0, %v8038
        %v8040 = vpop.f32.mrf.mxu0
        %8041 = vmatprep.mubr.bf16.mxu0 0
        %8042 = vmatmul.mubr.bf16.gmra.mxu0 %v7686
        %v8043 = vpop.f32.mrf.mxu0
        %v8044 = vadd.f32 0.0, %v8043
        %v8045 = vpop.f32.mrf.mxu0
        %v8046 = vpop.f32.mrf.mxu0
        %v8047 = vadd.f32 0.0, %v8046
        %v8048 = vpop.f32.mrf.mxu0
        %8049 = vmatprep.mubr.bf16.mxu0 0
        %8050 = vmatmul.mubr.bf16.gmra.mxu0 %v7895
        %v8051 = vpop.f32.mrf.mxu0
        %v8052 = vadd.f32 0.0, %v8051
        %v8053 = vpop.f32.mrf.mxu0
        %v8054 = vpop.f32.mrf.mxu0
        %v8055 = vadd.f32 0.0, %v8054
        %v8056 = vpop.f32.mrf.mxu0
        %8057 = vdwg.mxu0
        %v8058 = vadd.f32 %v7849, %v7932
        %v8059 = vadd.f32 %v7850, %v7935
        %v8060 = vadd.f32 %v7851, %v7940
        %v8061 = vadd.f32 %v7852, %v7943
        %v8062 = vadd.f32 %v7853, %v7948
        %v8063 = vadd.f32 %v7854, %v7951
        %v8064 = vadd.f32 %v7855, %v7956
        %v8065 = vadd.f32 %v7856, %v7959
        %v8066 = vadd.f32 %v7857, %v7964
        %v8067 = vadd.f32 %v7858, %v7967
        %v8068 = vadd.f32 %v7859, %v7972
        %v8069 = vadd.f32 %v7860, %v7975
        %v8070 = vadd.f32 %v7861, %v7980
        %v8071 = vadd.f32 %v7862, %v7983
        %v8072 = vadd.f32 %v7863, %v7988
        %v8073 = vadd.f32 %v7864, %v7991
        %v8074 = vadd.f32 %v7865, %v7996
        %v8075 = vadd.f32 %v7866, %v7999
        %v8076 = vadd.f32 %v7867, %v8004
        %v8077 = vadd.f32 %v7868, %v8007
        %v8078 = vadd.f32 %v7869, %v8012
        %v8079 = vadd.f32 %v7870, %v8015
        %v8080 = vadd.f32 %v7871, %v8020
        %v8081 = vadd.f32 %v7872, %v8023
        %v8082 = vadd.f32 %v7873, %v8028
        %v8083 = vadd.f32 %v7874, %v8031
        %v8084 = vadd.f32 %v7875, %v8036
        %v8085 = vadd.f32 %v7876, %v8039
        %v8086 = vadd.f32 %v7877, %v8044
        %v8087 = vadd.f32 %v7878, %v8047
        %v8088 = vadd.f32 %v7879, %v8052
        %v8089 = vadd.f32 %v7880, %v8055
        %v8090 = vld [vmem:[%s6] sm:$0x1]
        %v8092 = vlaneseq
        %v8093 = vshrl.u32 %v8092, 7
        %v8094 = vsub.s32 0, %v8093
        %v8095 = vrot.slane %v8090, %v8094
        %v8097 = vadd.f32 %v8058, %v8095
        %v8098 = vadd.f32 %v8059, %v8095
        %v8099 = vadd.f32 %v8060, %v8095
        %v8100 = vadd.f32 %v8061, %v8095
        %v8101 = vadd.f32 %v8062, %v8095
        %v8102 = vadd.f32 %v8063, %v8095
        %v8103 = vadd.f32 %v8064, %v8095
        %v8104 = vadd.f32 %v8065, %v8095
        %v8105 = vadd.f32 %v8066, %v8095
        %v8106 = vadd.f32 %v8067, %v8095
        %v8107 = vadd.f32 %v8068, %v8095
        %v8108 = vadd.f32 %v8069, %v8095
        %v8109 = vadd.f32 %v8070, %v8095
        %v8110 = vadd.f32 %v8071, %v8095
        %v8111 = vadd.f32 %v8072, %v8095
        %v8112 = vadd.f32 %v8073, %v8095
        %v8113 = vadd.f32 %v8074, %v8095
        %v8114 = vadd.f32 %v8075, %v8095
        %v8115 = vadd.f32 %v8076, %v8095
        %v8116 = vadd.f32 %v8077, %v8095
        %v8117 = vadd.f32 %v8078, %v8095
        %v8118 = vadd.f32 %v8079, %v8095
        %v8119 = vadd.f32 %v8080, %v8095
        %v8120 = vadd.f32 %v8081, %v8095
        %v8121 = vadd.f32 %v8082, %v8095
        %v8122 = vadd.f32 %v8083, %v8095
        %v8123 = vadd.f32 %v8084, %v8095
        %v8124 = vadd.f32 %v8085, %v8095
        %v8125 = vadd.f32 %v8086, %v8095
        %v8126 = vadd.f32 %v8087, %v8095
        %v8127 = vadd.f32 %v8088, %v8095
        %v8128 = vadd.f32 %v8089, %v8095
        %v8129 = vmax.f32 %v8097, 0.0
        %v8130 = vmax.f32 %v8098, 0.0
        %v8131 = vmax.f32 %v8099, 0.0
        %v8132 = vmax.f32 %v8100, 0.0
        %v8133 = vmax.f32 %v8101, 0.0
        %v8134 = vmax.f32 %v8102, 0.0
        %v8135 = vmax.f32 %v8103, 0.0
        %v8136 = vmax.f32 %v8104, 0.0
        %v8137 = vmax.f32 %v8105, 0.0
        %v8138 = vmax.f32 %v8106, 0.0
        %v8139 = vmax.f32 %v8107, 0.0
        %v8140 = vmax.f32 %v8108, 0.0
        %v8141 = vmax.f32 %v8109, 0.0
        %v8142 = vmax.f32 %v8110, 0.0
        %v8143 = vmax.f32 %v8111, 0.0
        %v8144 = vmax.f32 %v8112, 0.0
        %v8145 = vmax.f32 %v8113, 0.0
        %v8146 = vmax.f32 %v8114, 0.0
        %v8147 = vmax.f32 %v8115, 0.0
        %v8148 = vmax.f32 %v8116, 0.0
        %v8149 = vmax.f32 %v8117, 0.0
        %v8150 = vmax.f32 %v8118, 0.0
        %v8151 = vmax.f32 %v8119, 0.0
        %v8152 = vmax.f32 %v8120, 0.0
        %v8153 = vmax.f32 %v8121, 0.0
        %v8154 = vmax.f32 %v8122, 0.0
        %v8155 = vmax.f32 %v8123, 0.0
        %v8156 = vmax.f32 %v8124, 0.0
        %v8157 = vmax.f32 %v8125, 0.0
        %v8158 = vmax.f32 %v8126, 0.0
        %v8159 = vmax.f32 %v8127, 0.0
        %v8160 = vmax.f32 %v8128, 0.0
        %8161 = vst.msk [vmem:[#allocation4] sm:$0xf] %vm1082, 0
        %8162 = vst.msk [vmem:[#allocation4 + $0x4] sm:$0xf] %vm1082, 0
        %8163 = vst.msk [vmem:[#allocation4 + $0x8] sm:$0x1] %vm1085, 0
        %8164 = vst.msk [vmem:[#allocation4 + $0xc] sm:$0xf] %vm1082, 0
        %8165 = vst.msk [vmem:[#allocation4 + $0x10] sm:$0xf] %vm1082, 0
        %8166 = vst.msk [vmem:[#allocation4 + $0x14] sm:$0x1] %vm1085, 0
        %8167 = vst.msk [vmem:[#allocation4 + $0x18] sm:$0xf] %vm1082, 0
        %8168 = vst.msk [vmem:[#allocation4 + $0x1c] sm:$0xf] %vm1082, 0
        %8169 = vst.msk [vmem:[#allocation4 + $0x20] sm:$0x1] %vm1085, 0
        %8170 = vst.msk [vmem:[#allocation4 + $0x24] sm:$0xf] %vm1082, 0
        %8171 = vst.msk [vmem:[#allocation4 + $0x28] sm:$0xf] %vm1082, 0
        %8172 = vst.msk [vmem:[#allocation4 + $0x2c] sm:$0x1] %vm1085, 0
        %8173 = vst.msk [vmem:[#allocation4 + $0x30] sm:$0xf] %vm1082, 0
        %8174 = vst.msk [vmem:[#allocation4 + $0x34] sm:$0xf] %vm1082, 0
        %8175 = vst.msk [vmem:[#allocation4 + $0x38] sm:$0x1] %vm1085, 0
        %8176 = vst.msk [vmem:[#allocation4 + $0x3c] sm:$0xf] %vm1082, 0
        %8177 = vst.msk [vmem:[#allocation4 + $0x40] sm:$0xf] %vm1082, 0
        %8178 = vst.msk [vmem:[#allocation4 + $0x44] sm:$0x1] %vm1085, 0
        %8179 = vst.msk [vmem:[#allocation4 + $0x48] sm:$0xf] %vm1082, 0
        %8180 = vst.msk [vmem:[#allocation4 + $0x4c] sm:$0xf] %vm1082, 0
        %8181 = vst.msk [vmem:[#allocation4 + $0x50] sm:$0x1] %vm1085, 0
        %8182 = vst.msk [vmem:[#allocation4 + $0x54] sm:$0xf] %vm1082, 0
        %8183 = vst.msk [vmem:[#allocation4 + $0x58] sm:$0xf] %vm1082, 0
        %8184 = vst.msk [vmem:[#allocation4 + $0x5c] sm:$0x1] %vm1085, 0
        %8185 = vst.msk [vmem:[#allocation4 + $0x60] sm:$0xf] %vm1082, 0
        %8186 = vst.msk [vmem:[#allocation4 + $0x64] sm:$0xf] %vm1082, 0
        %8187 = vst.msk [vmem:[#allocation4 + $0x68] sm:$0x1] %vm1085, 0
        %8188 = vst.msk [vmem:[#allocation4 + $0x6c] sm:$0xf] %vm1082, 0
        %8189 = vst.msk [vmem:[#allocation4 + $0x70] sm:$0xf] %vm1082, 0
        %8190 = vst.msk [vmem:[#allocation4 + $0x74] sm:$0x1] %vm1085, 0
        %8191 = vst.msk [vmem:[#allocation4 + $0x78] sm:$0xf] %vm1082, 0
        %8192 = vst.msk [vmem:[#allocation4 + $0x7c] sm:$0xf] %vm1082, 0
        %8193 = vst.msk [vmem:[#allocation4 + $0x80] sm:$0x1] %vm1085, 0
        %8194 = vst.msk [vmem:[#allocation4 + $0x84] sm:$0xf] %vm1082, 0
        %8195 = vst.msk [vmem:[#allocation4 + $0x88] sm:$0xf] %vm1082, 0
        %8196 = vst.msk [vmem:[#allocation4 + $0x8c] sm:$0x1] %vm1085, 0
        %8197 = vst.msk [vmem:[#allocation4 + $0x90] sm:$0xf] %vm1082, 0
        %8198 = vst.msk [vmem:[#allocation4 + $0x94] sm:$0xf] %vm1082, 0
        %8199 = vst.msk [vmem:[#allocation4 + $0x98] sm:$0x1] %vm1085, 0
        %8200 = vst.msk [vmem:[#allocation4 + $0x9c] sm:$0xf] %vm1082, 0
        %8201 = vst.msk [vmem:[#allocation4 + $0xa0] sm:$0xf] %vm1082, 0
        %8202 = vst.msk [vmem:[#allocation4 + $0xa4] sm:$0x1] %vm1085, 0
        %8203 = vst.msk [vmem:[#allocation4 + $0xa8] sm:$0xf] %vm1082, 0
        %8204 = vst.msk [vmem:[#allocation4 + $0xac] sm:$0xf] %vm1082, 0
        %8205 = vst.msk [vmem:[#allocation4 + $0xb0] sm:$0x1] %vm1085, 0
        %8206 = vst.msk [vmem:[#allocation4 + $0xb4] sm:$0xf] %vm1082, 0
        %8207 = vst.msk [vmem:[#allocation4 + $0xb8] sm:$0xf] %vm1082, 0
        %8208 = vst.msk [vmem:[#allocation4 + $0xbc] sm:$0x1] %vm1085, 0
        %8209 = vst.msk [vmem:[#allocation4 + $0xc0] sm:$0xf] %vm1082, 0
        %8210 = vst.msk [vmem:[#allocation4 + $0xc4] sm:$0xf] %vm1082, 0
        %8211 = vst.msk [vmem:[#allocation4 + $0xc8] sm:$0x1] %vm1085, 0
        %8212 = vst.msk [vmem:[#allocation4 + $0xcc] sm:$0xf] %vm1082, 0
        %8213 = vst.msk [vmem:[#allocation4 + $0xd0] sm:$0xf] %vm1082, 0
        %8214 = vst.msk [vmem:[#allocation4 + $0xd4] sm:$0x1] %vm1085, 0
        %v8215 = vpack.c.bf16 %v8130, %v8129
        %v8216 = vpack.c.bf16 %v8132, %v8131
        %v8217 = vpack.c.bf16 %v8134, %v8133
        %v8218 = vpack.c.bf16 %v8136, %v8135
        %v8219 = vpack.c.bf16 %v8138, %v8137
        %v8220 = vpack.c.bf16 %v8140, %v8139
        %v8221 = vpack.c.bf16 %v8142, %v8141
        %v8222 = vpack.c.bf16 %v8144, %v8143
        %v8223 = vpack.c.bf16 %v8146, %v8145
        %v8224 = vpack.c.bf16 %v8148, %v8147
        %v8225 = vpack.c.bf16 %v8150, %v8149
        %v8226 = vpack.c.bf16 %v8152, %v8151
        %v8227 = vpack.c.bf16 %v8154, %v8153
        %v8228 = vpack.c.bf16 %v8156, %v8155
        %v8229 = vpack.c.bf16 %v8158, %v8157
        %v8230 = vpack.c.bf16 %v8160, %v8159
        %v8247 = vunpack.c.l.b16 %v8215
        %v8248 = vunpack.c.h.b16 %v8215
        %v8249 = vunpack.c.l.b16 %v8216
        %v8250 = vunpack.c.h.b16 %v8216
        %v8251 = vunpack.c.l.b16 %v8217
        %v8252 = vunpack.c.h.b16 %v8217
        %v8253 = vunpack.c.l.b16 %v8218
        %v8254 = vunpack.c.h.b16 %v8218
        %v8255 = vunpack.c.l.b16 %v8219
        %v8256 = vunpack.c.h.b16 %v8219
        %v8257 = vunpack.c.l.b16 %v8220
        %v8258 = vunpack.c.h.b16 %v8220
        %v8259 = vunpack.c.l.b16 %v8221
        %v8260 = vunpack.c.h.b16 %v8221
        %v8261 = vunpack.c.l.b16 %v8222
        %v8262 = vunpack.c.h.b16 %v8222
        %v8263 = vunpack.c.l.b16 %v8223
        %v8264 = vunpack.c.h.b16 %v8223
        %v8265 = vunpack.c.l.b16 %v8224
        %v8266 = vunpack.c.h.b16 %v8224
        %v8267 = vunpack.c.l.b16 %v8225
        %v8268 = vunpack.c.h.b16 %v8225
        %v8269 = vunpack.c.l.b16 %v8226
        %v8270 = vunpack.c.h.b16 %v8226
        %v8271 = vunpack.c.l.b16 %v8227
        %v8272 = vunpack.c.h.b16 %v8227
        %v8273 = vunpack.c.l.b16 %v8228
        %v8274 = vunpack.c.h.b16 %v8228
        %v8275 = vunpack.c.l.b16 %v8229
        %v8276 = vunpack.c.h.b16 %v8229
        %v8277 = vunpack.c.l.b16 %v8230
        %v8278 = vunpack.c.h.b16 %v8230
        %v8279 = vpack.c.b16 %v8247, %v8247
        %v8280 = vpack.c.b16 %v8248, %v8248
        %v8281 = vpack.c.b16 %v8249, %v8249
        %v8282 = vpack.c.b16 %v8250, %v8250
        %v8283 = vpack.c.b16 %v8251, %v8251
        %v8284 = vpack.c.b16 %v8252, %v8252
        %v8285 = vpack.c.b16 %v8253, %v8253
        %v8286 = vpack.c.b16 %v8254, %v8254
        %v8287 = vpack.c.b16 %v8255, %v8255
        %v8288 = vpack.c.b16 %v8256, %v8256
        %v8289 = vpack.c.b16 %v8257, %v8257
        %v8290 = vpack.c.b16 %v8258, %v8258
        %v8291 = vpack.c.b16 %v8259, %v8259
        %v8292 = vpack.c.b16 %v8260, %v8260
        %v8293 = vpack.c.b16 %v8261, %v8261
        %v8294 = vpack.c.b16 %v8262, %v8262
        %v8295 = vpack.c.b16 %v8263, %v8263
        %v8296 = vpack.c.b16 %v8264, %v8264
        %v8297 = vpack.c.b16 %v8265, %v8265
        %v8298 = vpack.c.b16 %v8266, %v8266
        %v8299 = vpack.c.b16 %v8267, %v8267
        %v8300 = vpack.c.b16 %v8268, %v8268
        %v8301 = vpack.c.b16 %v8269, %v8269
        %v8302 = vpack.c.b16 %v8270, %v8270
        %v8303 = vpack.c.b16 %v8271, %v8271
        %v8304 = vpack.c.b16 %v8272, %v8272
        %v8305 = vpack.c.b16 %v8273, %v8273
        %v8306 = vpack.c.b16 %v8274, %v8274
        %v8307 = vpack.c.b16 %v8275, %v8275
        %v8308 = vpack.c.b16 %v8276, %v8276
        %v8309 = vpack.c.b16 %v8277, %v8277
        %v8310 = vpack.c.b16 %v8278, %v8278
        %v8312 = vshrl.u32 %v8279, 16
        %v8314 = vrot.slane %v8312, 7
        %v8315 = vshll.u32 %v8279, 16
        %v8317 = vor.u32 %v8314, %v8315
        %v8318 = vrot.slane %v8314, 4
        %v8320 = vshrl.u32 %v8280, 16
        %v8322 = vrot.slane %v8320, 7
        %v8323 = vshll.u32 %v8280, 16
        %v8325 = vor.u32 %v8322, %v8323
        %v8326 = vsel %vm1324, %v8318, %v8325
        %v8327 = vrot.slane %v8322, 4
        %v8329 = vshrl.u32 %v8281, 16
        %v8331 = vrot.slane %v8329, 7
        %v8332 = vshll.u32 %v8281, 16
        %v8334 = vor.u32 %v8331, %v8332
        %v8335 = vrot.slane %v8331, 4
        %v8337 = vshrl.u32 %v8282, 16
        %v8339 = vrot.slane %v8337, 7
        %v8340 = vshll.u32 %v8282, 16
        %v8342 = vor.u32 %v8339, %v8340
        %v8343 = vsel %vm1324, %v8335, %v8342
        %v8344 = vrot.slane %v8339, 4
        %v8346 = vshrl.u32 %v8283, 16
        %v8348 = vrot.slane %v8346, 7
        %v8349 = vshll.u32 %v8283, 16
        %v8351 = vor.u32 %v8348, %v8349
        %v8352 = vrot.slane %v8348, 4
        %v8354 = vshrl.u32 %v8284, 16
        %v8356 = vrot.slane %v8354, 7
        %v8357 = vshll.u32 %v8284, 16
        %v8359 = vor.u32 %v8356, %v8357
        %v8360 = vsel %vm1324, %v8352, %v8359
        %v8361 = vrot.slane %v8356, 4
        %v8363 = vshrl.u32 %v8285, 16
        %v8365 = vrot.slane %v8363, 7
        %v8366 = vshll.u32 %v8285, 16
        %v8368 = vor.u32 %v8365, %v8366
        %v8369 = vrot.slane %v8365, 4
        %v8371 = vshrl.u32 %v8286, 16
        %v8373 = vrot.slane %v8371, 7
        %v8374 = vshll.u32 %v8286, 16
        %v8376 = vor.u32 %v8373, %v8374
        %v8377 = vsel %vm1324, %v8369, %v8376
        %v8378 = vrot.slane %v8373, 4
        %v8380 = vshrl.u32 %v8287, 16
        %v8382 = vrot.slane %v8380, 7
        %v8383 = vshll.u32 %v8287, 16
        %v8385 = vor.u32 %v8382, %v8383
        %v8386 = vrot.slane %v8382, 4
        %v8388 = vshrl.u32 %v8288, 16
        %v8390 = vrot.slane %v8388, 7
        %v8391 = vshll.u32 %v8288, 16
        %v8393 = vor.u32 %v8390, %v8391
        %v8394 = vsel %vm1324, %v8386, %v8393
        %v8395 = vrot.slane %v8390, 4
        %v8397 = vshrl.u32 %v8289, 16
        %v8399 = vrot.slane %v8397, 7
        %v8400 = vshll.u32 %v8289, 16
        %v8402 = vor.u32 %v8399, %v8400
        %v8403 = vrot.slane %v8399, 4
        %v8405 = vshrl.u32 %v8290, 16
        %v8407 = vrot.slane %v8405, 7
        %v8408 = vshll.u32 %v8290, 16
        %v8410 = vor.u32 %v8407, %v8408
        %v8411 = vsel %vm1324, %v8403, %v8410
        %v8412 = vrot.slane %v8407, 4
        %v8414 = vshrl.u32 %v8291, 16
        %v8416 = vrot.slane %v8414, 7
        %v8417 = vshll.u32 %v8291, 16
        %v8419 = vor.u32 %v8416, %v8417
        %v8420 = vrot.slane %v8416, 4
        %v8422 = vshrl.u32 %v8292, 16
        %v8424 = vrot.slane %v8422, 7
        %v8425 = vshll.u32 %v8292, 16
        %v8427 = vor.u32 %v8424, %v8425
        %v8428 = vsel %vm1324, %v8420, %v8427
        %v8429 = vrot.slane %v8424, 4
        %v8431 = vshrl.u32 %v8293, 16
        %v8433 = vrot.slane %v8431, 7
        %v8434 = vshll.u32 %v8293, 16
        %v8436 = vor.u32 %v8433, %v8434
        %v8437 = vrot.slane %v8433, 4
        %v8439 = vshrl.u32 %v8294, 16
        %v8441 = vrot.slane %v8439, 7
        %v8442 = vshll.u32 %v8294, 16
        %v8444 = vor.u32 %v8441, %v8442
        %v8445 = vsel %vm1324, %v8437, %v8444
        %v8446 = vrot.slane %v8441, 4
        %v8448 = vshrl.u32 %v8295, 16
        %v8450 = vrot.slane %v8448, 7
        %v8451 = vshll.u32 %v8295, 16
        %v8453 = vor.u32 %v8450, %v8451
        %v8454 = vrot.slane %v8450, 4
        %v8456 = vshrl.u32 %v8296, 16
        %v8458 = vrot.slane %v8456, 7
        %v8459 = vshll.u32 %v8296, 16
        %v8461 = vor.u32 %v8458, %v8459
        %v8462 = vsel %vm1324, %v8454, %v8461
        %v8463 = vrot.slane %v8458, 4
        %v8465 = vshrl.u32 %v8297, 16
        %v8467 = vrot.slane %v8465, 7
        %v8468 = vshll.u32 %v8297, 16
        %v8470 = vor.u32 %v8467, %v8468
        %v8471 = vrot.slane %v8467, 4
        %v8473 = vshrl.u32 %v8298, 16
        %v8475 = vrot.slane %v8473, 7
        %v8476 = vshll.u32 %v8298, 16
        %v8478 = vor.u32 %v8475, %v8476
        %v8479 = vsel %vm1324, %v8471, %v8478
        %v8480 = vrot.slane %v8475, 4
        %v8482 = vshrl.u32 %v8299, 16
        %v8484 = vrot.slane %v8482, 7
        %v8485 = vshll.u32 %v8299, 16
        %v8487 = vor.u32 %v8484, %v8485
        %v8488 = vrot.slane %v8484, 4
        %v8490 = vshrl.u32 %v8300, 16
        %v8492 = vrot.slane %v8490, 7
        %v8493 = vshll.u32 %v8300, 16
        %v8495 = vor.u32 %v8492, %v8493
        %v8496 = vsel %vm1324, %v8488, %v8495
        %v8497 = vrot.slane %v8492, 4
        %v8499 = vshrl.u32 %v8301, 16
        %v8501 = vrot.slane %v8499, 7
        %v8502 = vshll.u32 %v8301, 16
        %v8504 = vor.u32 %v8501, %v8502
        %v8505 = vrot.slane %v8501, 4
        %v8507 = vshrl.u32 %v8302, 16
        %v8509 = vrot.slane %v8507, 7
        %v8510 = vshll.u32 %v8302, 16
        %v8512 = vor.u32 %v8509, %v8510
        %v8513 = vsel %vm1324, %v8505, %v8512
        %v8514 = vrot.slane %v8509, 4
        %v8516 = vshrl.u32 %v8303, 16
        %v8518 = vrot.slane %v8516, 7
        %v8519 = vshll.u32 %v8303, 16
        %v8521 = vor.u32 %v8518, %v8519
        %v8522 = vrot.slane %v8518, 4
        %v8524 = vshrl.u32 %v8304, 16
        %v8526 = vrot.slane %v8524, 7
        %v8527 = vshll.u32 %v8304, 16
        %v8529 = vor.u32 %v8526, %v8527
        %v8530 = vsel %vm1324, %v8522, %v8529
        %v8531 = vrot.slane %v8526, 4
        %v8533 = vshrl.u32 %v8305, 16
        %v8535 = vrot.slane %v8533, 7
        %v8536 = vshll.u32 %v8305, 16
        %v8538 = vor.u32 %v8535, %v8536
        %v8539 = vrot.slane %v8535, 4
        %v8541 = vshrl.u32 %v8306, 16
        %v8543 = vrot.slane %v8541, 7
        %v8544 = vshll.u32 %v8306, 16
        %v8546 = vor.u32 %v8543, %v8544
        %v8547 = vsel %vm1324, %v8539, %v8546
        %v8548 = vrot.slane %v8543, 4
        %v8550 = vshrl.u32 %v8307, 16
        %v8552 = vrot.slane %v8550, 7
        %v8553 = vshll.u32 %v8307, 16
        %v8555 = vor.u32 %v8552, %v8553
        %v8556 = vrot.slane %v8552, 4
        %v8558 = vshrl.u32 %v8308, 16
        %v8560 = vrot.slane %v8558, 7
        %v8561 = vshll.u32 %v8308, 16
        %v8563 = vor.u32 %v8560, %v8561
        %v8564 = vsel %vm1324, %v8556, %v8563
        %v8565 = vrot.slane %v8560, 4
        %v8567 = vshrl.u32 %v8309, 16
        %v8569 = vrot.slane %v8567, 7
        %v8570 = vshll.u32 %v8309, 16
        %v8572 = vor.u32 %v8569, %v8570
        %v8573 = vrot.slane %v8569, 4
        %v8575 = vshrl.u32 %v8310, 16
        %v8577 = vrot.slane %v8575, 7
        %v8578 = vshll.u32 %v8310, 16
        %v8580 = vor.u32 %v8577, %v8578
        %v8581 = vsel %vm1324, %v8573, %v8580
        %v8582 = vrot.slane %v8577, 4
        %s8631 = scalar_lea.vmem [#allocation4], 12
        %v8632 = vld [vmem:[%s8631] sm:$0xf]
        %v8633 = vsel %vm1648, %v8317, %v8632
        %8634 = vst [vmem:[%s8631] sm:$0xf] %v8633
        %8635 = vst.msk [vmem:[%s8631 + $0x4] sm:$0xf] %vm1082, %v8326
        %v8636 = vld [vmem:[%s8631 + $0x8] sm:$0x1]
        %v8637 = vsel %vm1654, %v8327, %v8636
        %8638 = vst [vmem:[%s8631 + $0x8] sm:$0x1] %v8637
        %v8639 = vld [vmem:[%s8631 + $0xc] sm:$0xf]
        %v8640 = vsel %vm1648, %v8334, %v8639
        %8641 = vst [vmem:[%s8631 + $0xc] sm:$0xf] %v8640
        %8642 = vst.msk [vmem:[%s8631 + $0x10] sm:$0xf] %vm1082, %v8343
        %v8643 = vld [vmem:[%s8631 + $0x14] sm:$0x1]
        %v8644 = vsel %vm1654, %v8344, %v8643
        %8645 = vst [vmem:[%s8631 + $0x14] sm:$0x1] %v8644
        %v8646 = vld [vmem:[%s8631 + $0x18] sm:$0xf]
        %v8647 = vsel %vm1648, %v8351, %v8646
        %8648 = vst [vmem:[%s8631 + $0x18] sm:$0xf] %v8647
        %8649 = vst.msk [vmem:[%s8631 + $0x1c] sm:$0xf] %vm1082, %v8360
        %v8650 = vld [vmem:[%s8631 + $0x20] sm:$0x1]
        %v8651 = vsel %vm1654, %v8361, %v8650
        %8652 = vst [vmem:[%s8631 + $0x20] sm:$0x1] %v8651
        %v8653 = vld [vmem:[%s8631 + $0x24] sm:$0xf]
        %v8654 = vsel %vm1648, %v8368, %v8653
        %8655 = vst [vmem:[%s8631 + $0x24] sm:$0xf] %v8654
        %8656 = vst.msk [vmem:[%s8631 + $0x28] sm:$0xf] %vm1082, %v8377
        %v8657 = vld [vmem:[%s8631 + $0x2c] sm:$0x1]
        %v8658 = vsel %vm1654, %v8378, %v8657
        %8659 = vst [vmem:[%s8631 + $0x2c] sm:$0x1] %v8658
        %v8660 = vld [vmem:[%s8631 + $0x30] sm:$0xf]
        %v8661 = vsel %vm1648, %v8385, %v8660
        %8662 = vst [vmem:[%s8631 + $0x30] sm:$0xf] %v8661
        %8663 = vst.msk [vmem:[%s8631 + $0x34] sm:$0xf] %vm1082, %v8394
        %v8664 = vld [vmem:[%s8631 + $0x38] sm:$0x1]
        %v8665 = vsel %vm1654, %v8395, %v8664
        %8666 = vst [vmem:[%s8631 + $0x38] sm:$0x1] %v8665
        %v8667 = vld [vmem:[%s8631 + $0x3c] sm:$0xf]
        %v8668 = vsel %vm1648, %v8402, %v8667
        %8669 = vst [vmem:[%s8631 + $0x3c] sm:$0xf] %v8668
        %8670 = vst.msk [vmem:[%s8631 + $0x40] sm:$0xf] %vm1082, %v8411
        %v8671 = vld [vmem:[%s8631 + $0x44] sm:$0x1]
        %v8672 = vsel %vm1654, %v8412, %v8671
        %8673 = vst [vmem:[%s8631 + $0x44] sm:$0x1] %v8672
        %v8674 = vld [vmem:[%s8631 + $0x48] sm:$0xf]
        %v8675 = vsel %vm1648, %v8419, %v8674
        %8676 = vst [vmem:[%s8631 + $0x48] sm:$0xf] %v8675
        %8677 = vst.msk [vmem:[%s8631 + $0x4c] sm:$0xf] %vm1082, %v8428
        %v8678 = vld [vmem:[%s8631 + $0x50] sm:$0x1]
        %v8679 = vsel %vm1654, %v8429, %v8678
        %8680 = vst [vmem:[%s8631 + $0x50] sm:$0x1] %v8679
        %v8681 = vld [vmem:[%s8631 + $0x54] sm:$0xf]
        %v8682 = vsel %vm1648, %v8436, %v8681
        %8683 = vst [vmem:[%s8631 + $0x54] sm:$0xf] %v8682
        %8684 = vst.msk [vmem:[%s8631 + $0x58] sm:$0xf] %vm1082, %v8445
        %v8685 = vld [vmem:[%s8631 + $0x5c] sm:$0x1]
        %v8686 = vsel %vm1654, %v8446, %v8685
        %8687 = vst [vmem:[%s8631 + $0x5c] sm:$0x1] %v8686
        %v8688 = vld [vmem:[%s8631 + $0x60] sm:$0xf]
        %v8689 = vsel %vm1648, %v8453, %v8688
        %8690 = vst [vmem:[%s8631 + $0x60] sm:$0xf] %v8689
        %8691 = vst.msk [vmem:[%s8631 + $0x64] sm:$0xf] %vm1082, %v8462
        %v8692 = vld [vmem:[%s8631 + $0x68] sm:$0x1]
        %v8693 = vsel %vm1654, %v8463, %v8692
        %8694 = vst [vmem:[%s8631 + $0x68] sm:$0x1] %v8693
        %v8695 = vld [vmem:[%s8631 + $0x6c] sm:$0xf]
        %v8696 = vsel %vm1648, %v8470, %v8695
        %8697 = vst [vmem:[%s8631 + $0x6c] sm:$0xf] %v8696
        %8698 = vst.msk [vmem:[%s8631 + $0x70] sm:$0xf] %vm1082, %v8479
        %v8699 = vld [vmem:[%s8631 + $0x74] sm:$0x1]
        %v8700 = vsel %vm1654, %v8480, %v8699
        %8701 = vst [vmem:[%s8631 + $0x74] sm:$0x1] %v8700
        %v8702 = vld [vmem:[%s8631 + $0x78] sm:$0xf]
        %v8703 = vsel %vm1648, %v8487, %v8702
        %8704 = vst [vmem:[%s8631 + $0x78] sm:$0xf] %v8703
        %8705 = vst.msk [vmem:[%s8631 + $0x7c] sm:$0xf] %vm1082, %v8496
        %v8706 = vld [vmem:[%s8631 + $0x80] sm:$0x1]
        %v8707 = vsel %vm1654, %v8497, %v8706
        %8708 = vst [vmem:[%s8631 + $0x80] sm:$0x1] %v8707
        %v8709 = vld [vmem:[%s8631 + $0x84] sm:$0xf]
        %v8710 = vsel %vm1648, %v8504, %v8709
        %8711 = vst [vmem:[%s8631 + $0x84] sm:$0xf] %v8710
        %8712 = vst.msk [vmem:[%s8631 + $0x88] sm:$0xf] %vm1082, %v8513
        %v8713 = vld [vmem:[%s8631 + $0x8c] sm:$0x1]
        %v8714 = vsel %vm1654, %v8514, %v8713
        %8715 = vst [vmem:[%s8631 + $0x8c] sm:$0x1] %v8714
        %v8716 = vld [vmem:[%s8631 + $0x90] sm:$0xf]
        %v8717 = vsel %vm1648, %v8521, %v8716
        %8718 = vst [vmem:[%s8631 + $0x90] sm:$0xf] %v8717
        %8719 = vst.msk [vmem:[%s8631 + $0x94] sm:$0xf] %vm1082, %v8530
        %v8720 = vld [vmem:[%s8631 + $0x98] sm:$0x1]
        %v8721 = vsel %vm1654, %v8531, %v8720
        %8722 = vst [vmem:[%s8631 + $0x98] sm:$0x1] %v8721
        %v8723 = vld [vmem:[%s8631 + $0x9c] sm:$0xf]
        %v8724 = vsel %vm1648, %v8538, %v8723
        %8725 = vst [vmem:[%s8631 + $0x9c] sm:$0xf] %v8724
        %8726 = vst.msk [vmem:[%s8631 + $0xa0] sm:$0xf] %vm1082, %v8547
        %v8727 = vld [vmem:[%s8631 + $0xa4] sm:$0x1]
        %v8728 = vsel %vm1654, %v8548, %v8727
        %8729 = vst [vmem:[%s8631 + $0xa4] sm:$0x1] %v8728
        %v8730 = vld [vmem:[%s8631 + $0xa8] sm:$0xf]
        %v8731 = vsel %vm1648, %v8555, %v8730
        %8732 = vst [vmem:[%s8631 + $0xa8] sm:$0xf] %v8731
        %8733 = vst.msk [vmem:[%s8631 + $0xac] sm:$0xf] %vm1082, %v8564
        %v8734 = vld [vmem:[%s8631 + $0xb0] sm:$0x1]
        %v8735 = vsel %vm1654, %v8565, %v8734
        %8736 = vst [vmem:[%s8631 + $0xb0] sm:$0x1] %v8735
        %v8737 = vld [vmem:[%s8631 + $0xb4] sm:$0xf]
        %v8738 = vsel %vm1648, %v8572, %v8737
        %8739 = vst [vmem:[%s8631 + $0xb4] sm:$0xf] %v8738
        %8740 = vst.msk [vmem:[%s8631 + $0xb8] sm:$0xf] %vm1082, %v8581
        %v8741 = vld [vmem:[%s8631 + $0xbc] sm:$0x1]
        %v8742 = vsel %vm1654, %v8582, %v8741
        %8743 = vst [vmem:[%s8631 + $0xbc] sm:$0x1] %v8742
        %v8744 = vld [vmem:[#allocation4] sm:$0xf]
        %v8745 = vld [vmem:[#allocation4 + $0x4] sm:$0xf]
        %v8746 = vld [vmem:[#allocation4 + $0xc] sm:$0xf]
        %v8747 = vld [vmem:[#allocation4 + $0x10] sm:$0xf]
        %v8748 = vld [vmem:[#allocation4 + $0x18] sm:$0xf]
        %v8749 = vld [vmem:[#allocation4 + $0x1c] sm:$0xf]
        %v8750 = vld [vmem:[#allocation4 + $0x24] sm:$0xf]
        %v8751 = vld [vmem:[#allocation4 + $0x28] sm:$0xf]
        %v8752 = vld [vmem:[#allocation4 + $0x30] sm:$0xf]
        %v8753 = vld [vmem:[#allocation4 + $0x34] sm:$0xf]
        %v8754 = vld [vmem:[#allocation4 + $0x3c] sm:$0xf]
        %v8755 = vld [vmem:[#allocation4 + $0x40] sm:$0xf]
        %v8756 = vld [vmem:[#allocation4 + $0x48] sm:$0xf]
        %v8757 = vld [vmem:[#allocation4 + $0x4c] sm:$0xf]
        %v8758 = vld [vmem:[#allocation4 + $0x54] sm:$0xf]
        %v8759 = vld [vmem:[#allocation4 + $0x58] sm:$0xf]
        %v8760 = vld [vmem:[#allocation4 + $0x60] sm:$0xf]
        %v8761 = vld [vmem:[#allocation4 + $0x64] sm:$0xf]
        %v8762 = vld [vmem:[#allocation4 + $0x6c] sm:$0xf]
        %v8763 = vld [vmem:[#allocation4 + $0x70] sm:$0xf]
        %v8764 = vld [vmem:[#allocation4 + $0x78] sm:$0xf]
        %v8765 = vld [vmem:[#allocation4 + $0x7c] sm:$0xf]
        %v8766 = vld [vmem:[#allocation4 + $0x84] sm:$0xf]
        %v8767 = vld [vmem:[#allocation4 + $0x88] sm:$0xf]
        %v8768 = vld [vmem:[#allocation4 + $0x90] sm:$0xf]
        %v8769 = vld [vmem:[#allocation4 + $0x94] sm:$0xf]
        %v8770 = vld [vmem:[#allocation4 + $0x9c] sm:$0xf]
        %v8771 = vld [vmem:[#allocation4 + $0xa0] sm:$0xf]
        %v8772 = vld [vmem:[#allocation4 + $0xa8] sm:$0xf]
        %v8773 = vld [vmem:[#allocation4 + $0xac] sm:$0xf]
        %v8774 = vld [vmem:[#allocation4 + $0xb4] sm:$0xf]
        %v8775 = vld [vmem:[#allocation4 + $0xb8] sm:$0xf]
        %v8776 = vld [vmem:[#allocation4 + $0xc0] sm:$0xf]
        %v8777 = vld [vmem:[#allocation4 + $0xc4] sm:$0xf]
        %v8778 = vld [vmem:[#allocation4 + $0xcc] sm:$0xf]
        %v8779 = vld [vmem:[#allocation4 + $0xd0] sm:$0xf]
        %v8812 = vunpack.c.l.b16 %v8746
        %v8813 = vunpack.c.l.b16 %v8747
        %v8814 = vunpack.c.l.b16 %v8748
        %v8815 = vunpack.c.l.b16 %v8749
        %v8816 = vunpack.c.l.b16 %v8750
        %v8817 = vunpack.c.l.b16 %v8751
        %v8818 = vunpack.c.l.b16 %v8752
        %v8819 = vunpack.c.l.b16 %v8753
        %v8820 = vunpack.c.l.b16 %v8754
        %v8821 = vunpack.c.l.b16 %v8755
        %v8822 = vunpack.c.l.b16 %v8756
        %v8823 = vunpack.c.l.b16 %v8757
        %v8824 = vunpack.c.l.b16 %v8758
        %v8825 = vunpack.c.l.b16 %v8759
        %v8826 = vunpack.c.l.b16 %v8760
        %v8827 = vunpack.c.l.b16 %v8761
        %v8828 = vunpack.c.l.b16 %v8762
        %v8829 = vunpack.c.l.b16 %v8763
        %v8830 = vunpack.c.l.b16 %v8764
        %v8831 = vunpack.c.l.b16 %v8765
        %v8832 = vunpack.c.l.b16 %v8766
        %v8833 = vunpack.c.l.b16 %v8767
        %v8834 = vunpack.c.l.b16 %v8768
        %v8835 = vunpack.c.l.b16 %v8769
        %v8836 = vunpack.c.l.b16 %v8770
        %v8837 = vunpack.c.l.b16 %v8771
        %v8838 = vunpack.c.l.b16 %v8772
        %v8839 = vunpack.c.l.b16 %v8773
        %v8840 = vunpack.c.l.b16 %v8774
        %v8841 = vunpack.c.l.b16 %v8775
        %v8842 = vunpack.c.l.b16 %v8776
        %v8843 = vunpack.c.l.b16 %v8777
        %v8844 = vpack.c.b16 %v8813, %v8812
        %v8845 = vpack.c.b16 %v8815, %v8814
        %v8846 = vpack.c.b16 %v8817, %v8816
        %v8847 = vpack.c.b16 %v8819, %v8818
        %v8848 = vpack.c.b16 %v8821, %v8820
        %v8849 = vpack.c.b16 %v8823, %v8822
        %v8850 = vpack.c.b16 %v8825, %v8824
        %v8851 = vpack.c.b16 %v8827, %v8826
        %v8852 = vpack.c.b16 %v8829, %v8828
        %v8853 = vpack.c.b16 %v8831, %v8830
        %v8854 = vpack.c.b16 %v8833, %v8832
        %v8855 = vpack.c.b16 %v8835, %v8834
        %v8856 = vpack.c.b16 %v8837, %v8836
        %v8857 = vpack.c.b16 %v8839, %v8838
        %v8858 = vpack.c.b16 %v8841, %v8840
        %v8859 = vpack.c.b16 %v8843, %v8842
        %v8861 = vsel %vm2628, %v8844, 0
        %v8864 = vsel %vm2628, %v8845, 0
        %v8867 = vsel %vm2628, %v8846, 0
        %v8870 = vsel %vm2628, %v8847, 0
        %v8873 = vsel %vm2628, %v8848, 0
        %v8876 = vsel %vm2628, %v8849, 0
        %v8879 = vsel %vm2628, %v8850, 0
        %v8882 = vsel %vm2628, %v8851, 0
        %v8885 = vsel %vm2628, %v8852, 0
        %v8888 = vsel %vm2628, %v8853, 0
        %v8891 = vsel %vm2628, %v8854, 0
        %v8894 = vsel %vm2628, %v8855, 0
        %v8897 = vsel %vm2628, %v8856, 0
        %v8900 = vsel %vm2628, %v8857, 0
        %v8903 = vsel %vm2628, %v8858, 0
        %v8906 = vsel %vm2628, %v8859, 0
        %8908 = vmatprep.subr.bf16.mxu0 0
        %8909 = vmatpush1.bf16.msra.mxu0 0
        %8910 = vmatprep.subr.bf16.mxu0 0
        %8911 = vmatpush1.bf16.msra.mxu0 0
        %8912 = vmatprep.subr.bf16.mxu0 0
        %8913 = vmatpush1.bf16.msra.mxu0 0
        %8914 = vmatprep.subr.bf16.mxu0 0
        %8915 = vmatpush1.bf16.msra.mxu0 0
        %8916 = vmatprep.subr.bf16.mxu0 0
        %8917 = vmatpush1.bf16.msra.mxu0 0
        %8918 = vmatprep.subr.bf16.mxu0 0
        %8919 = vmatpush1.bf16.msra.mxu0 0
        %8920 = vmatprep.subr.bf16.mxu0 0
        %8921 = vmatpush1.bf16.msra.mxu0 %v2501
        %8922 = vmatprep.subr.bf16.mxu0 0
        %8923 = vmatpush1.bf16.msra.mxu0 %v2500
        %8924 = vmatprep.subr.bf16.mxu0 0
        %8925 = vmatpush2.bf16.msra.mxu0 0
        %8926 = vmatprep.subr.bf16.mxu0 0
        %8927 = vmatpush2.bf16.msra.mxu0 0
        %8928 = vmatprep.subr.bf16.mxu0 0
        %8929 = vmatpush2.bf16.msra.mxu0 0
        %8930 = vmatprep.subr.bf16.mxu0 0
        %8931 = vmatpush2.bf16.msra.mxu0 0
        %8932 = vmatprep.subr.bf16.mxu0 0
        %8933 = vmatpush2.bf16.msra.mxu0 0
        %8934 = vmatprep.subr.bf16.mxu0 0
        %8935 = vmatpush2.bf16.msra.mxu0 0
        %8936 = vmatprep.subr.bf16.mxu0 0
        %8937 = vmatpush2.bf16.msra.mxu0 0
        %8938 = vmatprep.subr.bf16.mxu0 0
        %8939 = vmatpush2.bf16.msra.mxu0 0
        %8940 = vmatprep.mubr.bf16.mxu0 0
        %8941 = vmatmul.mubr.bf16.gmra.mxu0 %v8861
        %v8942 = vpop.f32.mrf.mxu0
        %v8943 = vadd.f32 0.0, %v8942
        %v8944 = vpop.f32.mrf.mxu0
        %v8945 = vpop.f32.mrf.mxu0
        %v8946 = vadd.f32 0.0, %v8945
        %v8947 = vpop.f32.mrf.mxu0
        %8948 = vmatprep.mubr.bf16.mxu0 0
        %8949 = vmatmul.mubr.bf16.gmra.mxu0 %v8864
        %v8950 = vpop.f32.mrf.mxu0
        %v8951 = vadd.f32 0.0, %v8950
        %v8952 = vpop.f32.mrf.mxu0
        %v8953 = vpop.f32.mrf.mxu0
        %v8954 = vadd.f32 0.0, %v8953
        %v8955 = vpop.f32.mrf.mxu0
        %8956 = vmatprep.mubr.bf16.mxu0 0
        %8957 = vmatmul.mubr.bf16.gmra.mxu0 %v8867
        %v8958 = vpop.f32.mrf.mxu0
        %v8959 = vadd.f32 0.0, %v8958
        %v8960 = vpop.f32.mrf.mxu0
        %v8961 = vpop.f32.mrf.mxu0
        %v8962 = vadd.f32 0.0, %v8961
        %v8963 = vpop.f32.mrf.mxu0
        %8964 = vmatprep.mubr.bf16.mxu0 0
        %8965 = vmatmul.mubr.bf16.gmra.mxu0 %v8870
        %v8966 = vpop.f32.mrf.mxu0
        %v8967 = vadd.f32 0.0, %v8966
        %v8968 = vpop.f32.mrf.mxu0
        %v8969 = vpop.f32.mrf.mxu0
        %v8970 = vadd.f32 0.0, %v8969
        %v8971 = vpop.f32.mrf.mxu0
        %8972 = vmatprep.mubr.bf16.mxu0 0
        %8973 = vmatmul.mubr.bf16.gmra.mxu0 %v8873
        %v8974 = vpop.f32.mrf.mxu0
        %v8975 = vadd.f32 0.0, %v8974
        %v8976 = vpop.f32.mrf.mxu0
        %v8977 = vpop.f32.mrf.mxu0
        %v8978 = vadd.f32 0.0, %v8977
        %v8979 = vpop.f32.mrf.mxu0
        %8980 = vmatprep.mubr.bf16.mxu0 0
        %8981 = vmatmul.mubr.bf16.gmra.mxu0 %v8876
        %v8982 = vpop.f32.mrf.mxu0
        %v8983 = vadd.f32 0.0, %v8982
        %v8984 = vpop.f32.mrf.mxu0
        %v8985 = vpop.f32.mrf.mxu0
        %v8986 = vadd.f32 0.0, %v8985
        %v8987 = vpop.f32.mrf.mxu0
        %8988 = vmatprep.mubr.bf16.mxu0 0
        %8989 = vmatmul.mubr.bf16.gmra.mxu0 %v8879
        %v8990 = vpop.f32.mrf.mxu0
        %v8991 = vadd.f32 0.0, %v8990
        %v8992 = vpop.f32.mrf.mxu0
        %v8993 = vpop.f32.mrf.mxu0
        %v8994 = vadd.f32 0.0, %v8993
        %v8995 = vpop.f32.mrf.mxu0
        %8996 = vmatprep.mubr.bf16.mxu0 0
        %8997 = vmatmul.mubr.bf16.gmra.mxu0 %v8882
        %v8998 = vpop.f32.mrf.mxu0
        %v8999 = vadd.f32 0.0, %v8998
        %v9000 = vpop.f32.mrf.mxu0
        %v9001 = vpop.f32.mrf.mxu0
        %v9002 = vadd.f32 0.0, %v9001
        %v9003 = vpop.f32.mrf.mxu0
        %9004 = vmatprep.mubr.bf16.mxu0 0
        %9005 = vmatmul.mubr.bf16.gmra.mxu0 %v8885
        %v9006 = vpop.f32.mrf.mxu0
        %v9007 = vadd.f32 0.0, %v9006
        %v9008 = vpop.f32.mrf.mxu0
        %v9009 = vpop.f32.mrf.mxu0
        %v9010 = vadd.f32 0.0, %v9009
        %v9011 = vpop.f32.mrf.mxu0
        %9012 = vmatprep.mubr.bf16.mxu0 0
        %9013 = vmatmul.mubr.bf16.gmra.mxu0 %v8888
        %v9014 = vpop.f32.mrf.mxu0
        %v9015 = vadd.f32 0.0, %v9014
        %v9016 = vpop.f32.mrf.mxu0
        %v9017 = vpop.f32.mrf.mxu0
        %v9018 = vadd.f32 0.0, %v9017
        %v9019 = vpop.f32.mrf.mxu0
        %9020 = vmatprep.mubr.bf16.mxu0 0
        %9021 = vmatmul.mubr.bf16.gmra.mxu0 %v8891
        %v9022 = vpop.f32.mrf.mxu0
        %v9023 = vadd.f32 0.0, %v9022
        %v9024 = vpop.f32.mrf.mxu0
        %v9025 = vpop.f32.mrf.mxu0
        %v9026 = vadd.f32 0.0, %v9025
        %v9027 = vpop.f32.mrf.mxu0
        %9028 = vmatprep.mubr.bf16.mxu0 0
        %9029 = vmatmul.mubr.bf16.gmra.mxu0 %v8894
        %v9030 = vpop.f32.mrf.mxu0
        %v9031 = vadd.f32 0.0, %v9030
        %v9032 = vpop.f32.mrf.mxu0
        %v9033 = vpop.f32.mrf.mxu0
        %v9034 = vadd.f32 0.0, %v9033
        %v9035 = vpop.f32.mrf.mxu0
        %9036 = vmatprep.mubr.bf16.mxu0 0
        %9037 = vmatmul.mubr.bf16.gmra.mxu0 %v8897
        %v9038 = vpop.f32.mrf.mxu0
        %v9039 = vadd.f32 0.0, %v9038
        %v9040 = vpop.f32.mrf.mxu0
        %v9041 = vpop.f32.mrf.mxu0
        %v9042 = vadd.f32 0.0, %v9041
        %v9043 = vpop.f32.mrf.mxu0
        %9044 = vmatprep.mubr.bf16.mxu0 0
        %9045 = vmatmul.mubr.bf16.gmra.mxu0 %v8900
        %v9046 = vpop.f32.mrf.mxu0
        %v9047 = vadd.f32 0.0, %v9046
        %v9048 = vpop.f32.mrf.mxu0
        %v9049 = vpop.f32.mrf.mxu0
        %v9050 = vadd.f32 0.0, %v9049
        %v9051 = vpop.f32.mrf.mxu0
        %9052 = vmatprep.mubr.bf16.mxu0 0
        %9053 = vmatmul.mubr.bf16.gmra.mxu0 %v8903
        %v9054 = vpop.f32.mrf.mxu0
        %v9055 = vadd.f32 0.0, %v9054
        %v9056 = vpop.f32.mrf.mxu0
        %v9057 = vpop.f32.mrf.mxu0
        %v9058 = vadd.f32 0.0, %v9057
        %v9059 = vpop.f32.mrf.mxu0
        %9060 = vmatprep.mubr.bf16.mxu0 0
        %9061 = vmatmul.mubr.bf16.gmra.mxu0 %v8906
        %v9062 = vpop.f32.mrf.mxu0
        %v9063 = vadd.f32 0.0, %v9062
        %v9064 = vpop.f32.mrf.mxu0
        %v9065 = vpop.f32.mrf.mxu0
        %v9066 = vadd.f32 0.0, %v9065
        %v9067 = vpop.f32.mrf.mxu0
        %9068 = vdwg.mxu0
        %v9071 = vunpack.c.l.b16 %v8744
        %v9072 = vunpack.c.l.b16 %v8745
        %v9073 = vpack.c.b16 %v9072, %v9071
        %v9075 = vsel %vm2628, %v9073, 0
        %9077 = vmatprep.subr.bf16.mxu0 0
        %9078 = vmatpush1.bf16.msra.mxu0 0
        %9079 = vmatprep.subr.bf16.mxu0 0
        %9080 = vmatpush1.bf16.msra.mxu0 0
        %9081 = vmatprep.subr.bf16.mxu0 0
        %9082 = vmatpush1.bf16.msra.mxu0 0
        %9083 = vmatprep.subr.bf16.mxu0 0
        %9084 = vmatpush1.bf16.msra.mxu0 0
        %9085 = vmatprep.subr.bf16.mxu0 0
        %9086 = vmatpush1.bf16.msra.mxu0 0
        %9087 = vmatprep.subr.bf16.mxu0 0
        %9088 = vmatpush1.bf16.msra.mxu0 0
        %9089 = vmatprep.subr.bf16.mxu0 0
        %9090 = vmatpush1.bf16.msra.mxu0 %v2495
        %9091 = vmatprep.subr.bf16.mxu0 0
        %9092 = vmatpush1.bf16.msra.mxu0 %v2494
        %9093 = vmatprep.subr.bf16.mxu0 0
        %9094 = vmatpush2.bf16.msra.mxu0 0
        %9095 = vmatprep.subr.bf16.mxu0 0
        %9096 = vmatpush2.bf16.msra.mxu0 0
        %9097 = vmatprep.subr.bf16.mxu0 0
        %9098 = vmatpush2.bf16.msra.mxu0 0
        %9099 = vmatprep.subr.bf16.mxu0 0
        %9100 = vmatpush2.bf16.msra.mxu0 0
        %9101 = vmatprep.subr.bf16.mxu0 0
        %9102 = vmatpush2.bf16.msra.mxu0 0
        %9103 = vmatprep.subr.bf16.mxu0 0
        %9104 = vmatpush2.bf16.msra.mxu0 0
        %9105 = vmatprep.subr.bf16.mxu0 0
        %9106 = vmatpush2.bf16.msra.mxu0 0
        %9107 = vmatprep.subr.bf16.mxu0 0
        %9108 = vmatpush2.bf16.msra.mxu0 0
        %9109 = vmatprep.mubr.bf16.mxu0 0
        %9110 = vmatmul.mubr.bf16.gmra.mxu0 %v9075
        %v9111 = vpop.f32.mrf.mxu0
        %v9112 = vadd.f32 %v8943, %v9111
        %v9113 = vpop.f32.mrf.mxu0
        %v9114 = vpop.f32.mrf.mxu0
        %v9115 = vadd.f32 %v8946, %v9114
        %v9116 = vpop.f32.mrf.mxu0
        %9117 = vmatprep.mubr.bf16.mxu0 0
        %9118 = vmatmul.mubr.bf16.gmra.mxu0 %v8861
        %v9119 = vpop.f32.mrf.mxu0
        %v9120 = vadd.f32 %v8951, %v9119
        %v9121 = vpop.f32.mrf.mxu0
        %v9122 = vpop.f32.mrf.mxu0
        %v9123 = vadd.f32 %v8954, %v9122
        %v9124 = vpop.f32.mrf.mxu0
        %9125 = vmatprep.mubr.bf16.mxu0 0
        %9126 = vmatmul.mubr.bf16.gmra.mxu0 %v8864
        %v9127 = vpop.f32.mrf.mxu0
        %v9128 = vadd.f32 %v8959, %v9127
        %v9129 = vpop.f32.mrf.mxu0
        %v9130 = vpop.f32.mrf.mxu0
        %v9131 = vadd.f32 %v8962, %v9130
        %v9132 = vpop.f32.mrf.mxu0
        %9133 = vmatprep.mubr.bf16.mxu0 0
        %9134 = vmatmul.mubr.bf16.gmra.mxu0 %v8867
        %v9135 = vpop.f32.mrf.mxu0
        %v9136 = vadd.f32 %v8967, %v9135
        %v9137 = vpop.f32.mrf.mxu0
        %v9138 = vpop.f32.mrf.mxu0
        %v9139 = vadd.f32 %v8970, %v9138
        %v9140 = vpop.f32.mrf.mxu0
        %9141 = vmatprep.mubr.bf16.mxu0 0
        %9142 = vmatmul.mubr.bf16.gmra.mxu0 %v8870
        %v9143 = vpop.f32.mrf.mxu0
        %v9144 = vadd.f32 %v8975, %v9143
        %v9145 = vpop.f32.mrf.mxu0
        %v9146 = vpop.f32.mrf.mxu0
        %v9147 = vadd.f32 %v8978, %v9146
        %v9148 = vpop.f32.mrf.mxu0
        %9149 = vmatprep.mubr.bf16.mxu0 0
        %9150 = vmatmul.mubr.bf16.gmra.mxu0 %v8873
        %v9151 = vpop.f32.mrf.mxu0
        %v9152 = vadd.f32 %v8983, %v9151
        %v9153 = vpop.f32.mrf.mxu0
        %v9154 = vpop.f32.mrf.mxu0
        %v9155 = vadd.f32 %v8986, %v9154
        %v9156 = vpop.f32.mrf.mxu0
        %9157 = vmatprep.mubr.bf16.mxu0 0
        %9158 = vmatmul.mubr.bf16.gmra.mxu0 %v8876
        %v9159 = vpop.f32.mrf.mxu0
        %v9160 = vadd.f32 %v8991, %v9159
        %v9161 = vpop.f32.mrf.mxu0
        %v9162 = vpop.f32.mrf.mxu0
        %v9163 = vadd.f32 %v8994, %v9162
        %v9164 = vpop.f32.mrf.mxu0
        %9165 = vmatprep.mubr.bf16.mxu0 0
        %9166 = vmatmul.mubr.bf16.gmra.mxu0 %v8879
        %v9167 = vpop.f32.mrf.mxu0
        %v9168 = vadd.f32 %v8999, %v9167
        %v9169 = vpop.f32.mrf.mxu0
        %v9170 = vpop.f32.mrf.mxu0
        %v9171 = vadd.f32 %v9002, %v9170
        %v9172 = vpop.f32.mrf.mxu0
        %9173 = vmatprep.mubr.bf16.mxu0 0
        %9174 = vmatmul.mubr.bf16.gmra.mxu0 %v8882
        %v9175 = vpop.f32.mrf.mxu0
        %v9176 = vadd.f32 %v9007, %v9175
        %v9177 = vpop.f32.mrf.mxu0
        %v9178 = vpop.f32.mrf.mxu0
        %v9179 = vadd.f32 %v9010, %v9178
        %v9180 = vpop.f32.mrf.mxu0
        %9181 = vmatprep.mubr.bf16.mxu0 0
        %9182 = vmatmul.mubr.bf16.gmra.mxu0 %v8885
        %v9183 = vpop.f32.mrf.mxu0
        %v9184 = vadd.f32 %v9015, %v9183
        %v9185 = vpop.f32.mrf.mxu0
        %v9186 = vpop.f32.mrf.mxu0
        %v9187 = vadd.f32 %v9018, %v9186
        %v9188 = vpop.f32.mrf.mxu0
        %9189 = vmatprep.mubr.bf16.mxu0 0
        %9190 = vmatmul.mubr.bf16.gmra.mxu0 %v8888
        %v9191 = vpop.f32.mrf.mxu0
        %v9192 = vadd.f32 %v9023, %v9191
        %v9193 = vpop.f32.mrf.mxu0
        %v9194 = vpop.f32.mrf.mxu0
        %v9195 = vadd.f32 %v9026, %v9194
        %v9196 = vpop.f32.mrf.mxu0
        %9197 = vmatprep.mubr.bf16.mxu0 0
        %9198 = vmatmul.mubr.bf16.gmra.mxu0 %v8891
        %v9199 = vpop.f32.mrf.mxu0
        %v9200 = vadd.f32 %v9031, %v9199
        %v9201 = vpop.f32.mrf.mxu0
        %v9202 = vpop.f32.mrf.mxu0
        %v9203 = vadd.f32 %v9034, %v9202
        %v9204 = vpop.f32.mrf.mxu0
        %9205 = vmatprep.mubr.bf16.mxu0 0
        %9206 = vmatmul.mubr.bf16.gmra.mxu0 %v8894
        %v9207 = vpop.f32.mrf.mxu0
        %v9208 = vadd.f32 %v9039, %v9207
        %v9209 = vpop.f32.mrf.mxu0
        %v9210 = vpop.f32.mrf.mxu0
        %v9211 = vadd.f32 %v9042, %v9210
        %v9212 = vpop.f32.mrf.mxu0
        %9213 = vmatprep.mubr.bf16.mxu0 0
        %9214 = vmatmul.mubr.bf16.gmra.mxu0 %v8897
        %v9215 = vpop.f32.mrf.mxu0
        %v9216 = vadd.f32 %v9047, %v9215
        %v9217 = vpop.f32.mrf.mxu0
        %v9218 = vpop.f32.mrf.mxu0
        %v9219 = vadd.f32 %v9050, %v9218
        %v9220 = vpop.f32.mrf.mxu0
        %9221 = vmatprep.mubr.bf16.mxu0 0
        %9222 = vmatmul.mubr.bf16.gmra.mxu0 %v8900
        %v9223 = vpop.f32.mrf.mxu0
        %v9224 = vadd.f32 %v9055, %v9223
        %v9225 = vpop.f32.mrf.mxu0
        %v9226 = vpop.f32.mrf.mxu0
        %v9227 = vadd.f32 %v9058, %v9226
        %v9228 = vpop.f32.mrf.mxu0
        %9229 = vmatprep.mubr.bf16.mxu0 0
        %9230 = vmatmul.mubr.bf16.gmra.mxu0 %v8903
        %v9231 = vpop.f32.mrf.mxu0
        %v9232 = vadd.f32 %v9063, %v9231
        %v9233 = vpop.f32.mrf.mxu0
        %v9234 = vpop.f32.mrf.mxu0
        %v9235 = vadd.f32 %v9066, %v9234
        %v9236 = vpop.f32.mrf.mxu0
        %9237 = vdwg.mxu0
        %v9240 = vunpack.c.l.b16 %v8778
        %v9241 = vunpack.c.l.b16 %v8779
        %v9242 = vpack.c.b16 %v9241, %v9240
        %v9244 = vsel %vm2628, %v9242, 0
        %9246 = vmatprep.subr.bf16.mxu0 0
        %9247 = vmatpush1.bf16.msra.mxu0 0
        %9248 = vmatprep.subr.bf16.mxu0 0
        %9249 = vmatpush1.bf16.msra.mxu0 0
        %9250 = vmatprep.subr.bf16.mxu0 0
        %9251 = vmatpush1.bf16.msra.mxu0 0
        %9252 = vmatprep.subr.bf16.mxu0 0
        %9253 = vmatpush1.bf16.msra.mxu0 0
        %9254 = vmatprep.subr.bf16.mxu0 0
        %9255 = vmatpush1.bf16.msra.mxu0 0
        %9256 = vmatprep.subr.bf16.mxu0 0
        %9257 = vmatpush1.bf16.msra.mxu0 0
        %9258 = vmatprep.subr.bf16.mxu0 0
        %9259 = vmatpush1.bf16.msra.mxu0 %v2507
        %9260 = vmatprep.subr.bf16.mxu0 0
        %9261 = vmatpush1.bf16.msra.mxu0 %v2506
        %9262 = vmatprep.subr.bf16.mxu0 0
        %9263 = vmatpush2.bf16.msra.mxu0 0
        %9264 = vmatprep.subr.bf16.mxu0 0
        %9265 = vmatpush2.bf16.msra.mxu0 0
        %9266 = vmatprep.subr.bf16.mxu0 0
        %9267 = vmatpush2.bf16.msra.mxu0 0
        %9268 = vmatprep.subr.bf16.mxu0 0
        %9269 = vmatpush2.bf16.msra.mxu0 0
        %9270 = vmatprep.subr.bf16.mxu0 0
        %9271 = vmatpush2.bf16.msra.mxu0 0
        %9272 = vmatprep.subr.bf16.mxu0 0
        %9273 = vmatpush2.bf16.msra.mxu0 0
        %9274 = vmatprep.subr.bf16.mxu0 0
        %9275 = vmatpush2.bf16.msra.mxu0 0
        %9276 = vmatprep.subr.bf16.mxu0 0
        %9277 = vmatpush2.bf16.msra.mxu0 0
        %9278 = vmatprep.mubr.bf16.mxu0 0
        %9279 = vmatmul.mubr.bf16.gmra.mxu0 %v8864
        %v9280 = vpop.f32.mrf.mxu0
        %v9281 = vadd.f32 0.0, %v9280
        %v9282 = vpop.f32.mrf.mxu0
        %v9283 = vpop.f32.mrf.mxu0
        %v9284 = vadd.f32 0.0, %v9283
        %v9285 = vpop.f32.mrf.mxu0
        %9286 = vmatprep.mubr.bf16.mxu0 0
        %9287 = vmatmul.mubr.bf16.gmra.mxu0 %v8867
        %v9288 = vpop.f32.mrf.mxu0
        %v9289 = vadd.f32 0.0, %v9288
        %v9290 = vpop.f32.mrf.mxu0
        %v9291 = vpop.f32.mrf.mxu0
        %v9292 = vadd.f32 0.0, %v9291
        %v9293 = vpop.f32.mrf.mxu0
        %9294 = vmatprep.mubr.bf16.mxu0 0
        %9295 = vmatmul.mubr.bf16.gmra.mxu0 %v8870
        %v9296 = vpop.f32.mrf.mxu0
        %v9297 = vadd.f32 0.0, %v9296
        %v9298 = vpop.f32.mrf.mxu0
        %v9299 = vpop.f32.mrf.mxu0
        %v9300 = vadd.f32 0.0, %v9299
        %v9301 = vpop.f32.mrf.mxu0
        %9302 = vmatprep.mubr.bf16.mxu0 0
        %9303 = vmatmul.mubr.bf16.gmra.mxu0 %v8873
        %v9304 = vpop.f32.mrf.mxu0
        %v9305 = vadd.f32 0.0, %v9304
        %v9306 = vpop.f32.mrf.mxu0
        %v9307 = vpop.f32.mrf.mxu0
        %v9308 = vadd.f32 0.0, %v9307
        %v9309 = vpop.f32.mrf.mxu0
        %9310 = vmatprep.mubr.bf16.mxu0 0
        %9311 = vmatmul.mubr.bf16.gmra.mxu0 %v8876
        %v9312 = vpop.f32.mrf.mxu0
        %v9313 = vadd.f32 0.0, %v9312
        %v9314 = vpop.f32.mrf.mxu0
        %v9315 = vpop.f32.mrf.mxu0
        %v9316 = vadd.f32 0.0, %v9315
        %v9317 = vpop.f32.mrf.mxu0
        %9318 = vmatprep.mubr.bf16.mxu0 0
        %9319 = vmatmul.mubr.bf16.gmra.mxu0 %v8879
        %v9320 = vpop.f32.mrf.mxu0
        %v9321 = vadd.f32 0.0, %v9320
        %v9322 = vpop.f32.mrf.mxu0
        %v9323 = vpop.f32.mrf.mxu0
        %v9324 = vadd.f32 0.0, %v9323
        %v9325 = vpop.f32.mrf.mxu0
        %9326 = vmatprep.mubr.bf16.mxu0 0
        %9327 = vmatmul.mubr.bf16.gmra.mxu0 %v8882
        %v9328 = vpop.f32.mrf.mxu0
        %v9329 = vadd.f32 0.0, %v9328
        %v9330 = vpop.f32.mrf.mxu0
        %v9331 = vpop.f32.mrf.mxu0
        %v9332 = vadd.f32 0.0, %v9331
        %v9333 = vpop.f32.mrf.mxu0
        %9334 = vmatprep.mubr.bf16.mxu0 0
        %9335 = vmatmul.mubr.bf16.gmra.mxu0 %v8885
        %v9336 = vpop.f32.mrf.mxu0
        %v9337 = vadd.f32 0.0, %v9336
        %v9338 = vpop.f32.mrf.mxu0
        %v9339 = vpop.f32.mrf.mxu0
        %v9340 = vadd.f32 0.0, %v9339
        %v9341 = vpop.f32.mrf.mxu0
        %9342 = vmatprep.mubr.bf16.mxu0 0
        %9343 = vmatmul.mubr.bf16.gmra.mxu0 %v8888
        %v9344 = vpop.f32.mrf.mxu0
        %v9345 = vadd.f32 0.0, %v9344
        %v9346 = vpop.f32.mrf.mxu0
        %v9347 = vpop.f32.mrf.mxu0
        %v9348 = vadd.f32 0.0, %v9347
        %v9349 = vpop.f32.mrf.mxu0
        %9350 = vmatprep.mubr.bf16.mxu0 0
        %9351 = vmatmul.mubr.bf16.gmra.mxu0 %v8891
        %v9352 = vpop.f32.mrf.mxu0
        %v9353 = vadd.f32 0.0, %v9352
        %v9354 = vpop.f32.mrf.mxu0
        %v9355 = vpop.f32.mrf.mxu0
        %v9356 = vadd.f32 0.0, %v9355
        %v9357 = vpop.f32.mrf.mxu0
        %9358 = vmatprep.mubr.bf16.mxu0 0
        %9359 = vmatmul.mubr.bf16.gmra.mxu0 %v8894
        %v9360 = vpop.f32.mrf.mxu0
        %v9361 = vadd.f32 0.0, %v9360
        %v9362 = vpop.f32.mrf.mxu0
        %v9363 = vpop.f32.mrf.mxu0
        %v9364 = vadd.f32 0.0, %v9363
        %v9365 = vpop.f32.mrf.mxu0
        %9366 = vmatprep.mubr.bf16.mxu0 0
        %9367 = vmatmul.mubr.bf16.gmra.mxu0 %v8897
        %v9368 = vpop.f32.mrf.mxu0
        %v9369 = vadd.f32 0.0, %v9368
        %v9370 = vpop.f32.mrf.mxu0
        %v9371 = vpop.f32.mrf.mxu0
        %v9372 = vadd.f32 0.0, %v9371
        %v9373 = vpop.f32.mrf.mxu0
        %9374 = vmatprep.mubr.bf16.mxu0 0
        %9375 = vmatmul.mubr.bf16.gmra.mxu0 %v8900
        %v9376 = vpop.f32.mrf.mxu0
        %v9377 = vadd.f32 0.0, %v9376
        %v9378 = vpop.f32.mrf.mxu0
        %v9379 = vpop.f32.mrf.mxu0
        %v9380 = vadd.f32 0.0, %v9379
        %v9381 = vpop.f32.mrf.mxu0
        %9382 = vmatprep.mubr.bf16.mxu0 0
        %9383 = vmatmul.mubr.bf16.gmra.mxu0 %v8903
        %v9384 = vpop.f32.mrf.mxu0
        %v9385 = vadd.f32 0.0, %v9384
        %v9386 = vpop.f32.mrf.mxu0
        %v9387 = vpop.f32.mrf.mxu0
        %v9388 = vadd.f32 0.0, %v9387
        %v9389 = vpop.f32.mrf.mxu0
        %9390 = vmatprep.mubr.bf16.mxu0 0
        %9391 = vmatmul.mubr.bf16.gmra.mxu0 %v8906
        %v9392 = vpop.f32.mrf.mxu0
        %v9393 = vadd.f32 0.0, %v9392
        %v9394 = vpop.f32.mrf.mxu0
        %v9395 = vpop.f32.mrf.mxu0
        %v9396 = vadd.f32 0.0, %v9395
        %v9397 = vpop.f32.mrf.mxu0
        %9398 = vmatprep.mubr.bf16.mxu0 0
        %9399 = vmatmul.mubr.bf16.gmra.mxu0 %v9244
        %v9400 = vpop.f32.mrf.mxu0
        %v9401 = vadd.f32 0.0, %v9400
        %v9402 = vpop.f32.mrf.mxu0
        %v9403 = vpop.f32.mrf.mxu0
        %v9404 = vadd.f32 0.0, %v9403
        %v9405 = vpop.f32.mrf.mxu0
        %9406 = vdwg.mxu0
        %v9407 = vadd.f32 %v9112, %v9281
        %v9408 = vadd.f32 %v9115, %v9284
        %v9409 = vadd.f32 %v9120, %v9289
        %v9410 = vadd.f32 %v9123, %v9292
        %v9411 = vadd.f32 %v9128, %v9297
        %v9412 = vadd.f32 %v9131, %v9300
        %v9413 = vadd.f32 %v9136, %v9305
        %v9414 = vadd.f32 %v9139, %v9308
        %v9415 = vadd.f32 %v9144, %v9313
        %v9416 = vadd.f32 %v9147, %v9316
        %v9417 = vadd.f32 %v9152, %v9321
        %v9418 = vadd.f32 %v9155, %v9324
        %v9419 = vadd.f32 %v9160, %v9329
        %v9420 = vadd.f32 %v9163, %v9332
        %v9421 = vadd.f32 %v9168, %v9337
        %v9422 = vadd.f32 %v9171, %v9340
        %v9423 = vadd.f32 %v9176, %v9345
        %v9424 = vadd.f32 %v9179, %v9348
        %v9425 = vadd.f32 %v9184, %v9353
        %v9426 = vadd.f32 %v9187, %v9356
        %v9427 = vadd.f32 %v9192, %v9361
        %v9428 = vadd.f32 %v9195, %v9364
        %v9429 = vadd.f32 %v9200, %v9369
        %v9430 = vadd.f32 %v9203, %v9372
        %v9431 = vadd.f32 %v9208, %v9377
        %v9432 = vadd.f32 %v9211, %v9380
        %v9433 = vadd.f32 %v9216, %v9385
        %v9434 = vadd.f32 %v9219, %v9388
        %v9435 = vadd.f32 %v9224, %v9393
        %v9436 = vadd.f32 %v9227, %v9396
        %v9437 = vadd.f32 %v9232, %v9401
        %v9438 = vadd.f32 %v9235, %v9404
        %v9439 = vld [vmem:[#allocation4] sm:$0xf]
        %v9440 = vld [vmem:[#allocation4 + $0x4] sm:$0xf]
        %v9441 = vld [vmem:[#allocation4 + $0x8] sm:$0x1]
        %v9442 = vld [vmem:[#allocation4 + $0xc] sm:$0xf]
        %v9443 = vld [vmem:[#allocation4 + $0x10] sm:$0xf]
        %v9444 = vld [vmem:[#allocation4 + $0x14] sm:$0x1]
        %v9445 = vld [vmem:[#allocation4 + $0x18] sm:$0xf]
        %v9446 = vld [vmem:[#allocation4 + $0x1c] sm:$0xf]
        %v9447 = vld [vmem:[#allocation4 + $0x20] sm:$0x1]
        %v9448 = vld [vmem:[#allocation4 + $0x24] sm:$0xf]
        %v9449 = vld [vmem:[#allocation4 + $0x28] sm:$0xf]
        %v9450 = vld [vmem:[#allocation4 + $0x2c] sm:$0x1]
        %v9451 = vld [vmem:[#allocation4 + $0x30] sm:$0xf]
        %v9452 = vld [vmem:[#allocation4 + $0x34] sm:$0xf]
        %v9453 = vld [vmem:[#allocation4 + $0x38] sm:$0x1]
        %v9454 = vld [vmem:[#allocation4 + $0x3c] sm:$0xf]
        %v9455 = vld [vmem:[#allocation4 + $0x40] sm:$0xf]
        %v9456 = vld [vmem:[#allocation4 + $0x44] sm:$0x1]
        %v9457 = vld [vmem:[#allocation4 + $0x48] sm:$0xf]
        %v9458 = vld [vmem:[#allocation4 + $0x4c] sm:$0xf]
        %v9459 = vld [vmem:[#allocation4 + $0x50] sm:$0x1]
        %v9460 = vld [vmem:[#allocation4 + $0x54] sm:$0xf]
        %v9461 = vld [vmem:[#allocation4 + $0x58] sm:$0xf]
        %v9462 = vld [vmem:[#allocation4 + $0x5c] sm:$0x1]
        %v9463 = vld [vmem:[#allocation4 + $0x60] sm:$0xf]
        %v9464 = vld [vmem:[#allocation4 + $0x64] sm:$0xf]
        %v9465 = vld [vmem:[#allocation4 + $0x68] sm:$0x1]
        %v9466 = vld [vmem:[#allocation4 + $0x6c] sm:$0xf]
        %v9467 = vld [vmem:[#allocation4 + $0x70] sm:$0xf]
        %v9468 = vld [vmem:[#allocation4 + $0x74] sm:$0x1]
        %v9469 = vld [vmem:[#allocation4 + $0x78] sm:$0xf]
        %v9470 = vld [vmem:[#allocation4 + $0x7c] sm:$0xf]
        %v9471 = vld [vmem:[#allocation4 + $0x80] sm:$0x1]
        %v9472 = vld [vmem:[#allocation4 + $0x84] sm:$0xf]
        %v9473 = vld [vmem:[#allocation4 + $0x88] sm:$0xf]
        %v9474 = vld [vmem:[#allocation4 + $0x8c] sm:$0x1]
        %v9475 = vld [vmem:[#allocation4 + $0x90] sm:$0xf]
        %v9476 = vld [vmem:[#allocation4 + $0x94] sm:$0xf]
        %v9477 = vld [vmem:[#allocation4 + $0x98] sm:$0x1]
        %v9478 = vld [vmem:[#allocation4 + $0x9c] sm:$0xf]
        %v9479 = vld [vmem:[#allocation4 + $0xa0] sm:$0xf]
        %v9480 = vld [vmem:[#allocation4 + $0xa4] sm:$0x1]
        %v9481 = vld [vmem:[#allocation4 + $0xa8] sm:$0xf]
        %v9482 = vld [vmem:[#allocation4 + $0xac] sm:$0xf]
        %v9483 = vld [vmem:[#allocation4 + $0xb0] sm:$0x1]
        %v9484 = vld [vmem:[#allocation4 + $0xb4] sm:$0xf]
        %v9485 = vld [vmem:[#allocation4 + $0xb8] sm:$0xf]
        %v9486 = vld [vmem:[#allocation4 + $0xbc] sm:$0x1]
        %v9487 = vld [vmem:[#allocation4 + $0xc0] sm:$0xf]
        %v9488 = vld [vmem:[#allocation4 + $0xc4] sm:$0xf]
        %v9489 = vld [vmem:[#allocation4 + $0xc8] sm:$0x1]
        %v9490 = vld [vmem:[#allocation4 + $0xcc] sm:$0xf]
        %v9491 = vld [vmem:[#allocation4 + $0xd0] sm:$0xf]
        %v9492 = vld [vmem:[#allocation4 + $0xd4] sm:$0x1]
        %v9494 = vshrl.u32 %v9439, 16
        %v9496 = vrot.slane %v9494, 4
        %v9497 = vshll.u32 %v9439, 16
        %v9499 = vrot.slane %v9497, 5
        %v9500 = vor.u32 %v9496, %v9499
        %v9501 = vrot.slane %v9500, 4
        %v9503 = vshll.u32 %v9440, 16
        %v9505 = vrot.slane %v9503, 5
        %v9506 = vsel %vm3264, %v9501, %v9505
        %v9507 = vshrl.u32 %v9440, 16
        %v9509 = vrot.slane %v9507, 4
        %v9510 = vor.u32 %v9509, %v9505
        %v9511 = vrot.slane %v9510, 4
        %v9513 = vshll.u32 %v9441, 16
        %v9515 = vrot.slane %v9513, 5
        %v9516 = vsel %vm3264, %v9511, %v9515
        %v9518 = vshrl.u32 %v9442, 16
        %v9520 = vrot.slane %v9518, 4
        %v9521 = vshll.u32 %v9442, 16
        %v9523 = vrot.slane %v9521, 5
        %v9524 = vor.u32 %v9520, %v9523
        %v9525 = vrot.slane %v9524, 4
        %v9527 = vshll.u32 %v9443, 16
        %v9529 = vrot.slane %v9527, 5
        %v9530 = vsel %vm3264, %v9525, %v9529
        %v9531 = vshrl.u32 %v9443, 16
        %v9533 = vrot.slane %v9531, 4
        %v9534 = vor.u32 %v9533, %v9529
        %v9535 = vrot.slane %v9534, 4
        %v9537 = vshll.u32 %v9444, 16
        %v9539 = vrot.slane %v9537, 5
        %v9540 = vsel %vm3264, %v9535, %v9539
        %v9542 = vshrl.u32 %v9445, 16
        %v9544 = vrot.slane %v9542, 4
        %v9545 = vshll.u32 %v9445, 16
        %v9547 = vrot.slane %v9545, 5
        %v9548 = vor.u32 %v9544, %v9547
        %v9549 = vrot.slane %v9548, 4
        %v9551 = vshll.u32 %v9446, 16
        %v9553 = vrot.slane %v9551, 5
        %v9554 = vsel %vm3264, %v9549, %v9553
        %v9555 = vshrl.u32 %v9446, 16
        %v9557 = vrot.slane %v9555, 4
        %v9558 = vor.u32 %v9557, %v9553
        %v9559 = vrot.slane %v9558, 4
        %v9561 = vshll.u32 %v9447, 16
        %v9563 = vrot.slane %v9561, 5
        %v9564 = vsel %vm3264, %v9559, %v9563
        %v9566 = vshrl.u32 %v9448, 16
        %v9568 = vrot.slane %v9566, 4
        %v9569 = vshll.u32 %v9448, 16
        %v9571 = vrot.slane %v9569, 5
        %v9572 = vor.u32 %v9568, %v9571
        %v9573 = vrot.slane %v9572, 4
        %v9575 = vshll.u32 %v9449, 16
        %v9577 = vrot.slane %v9575, 5
        %v9578 = vsel %vm3264, %v9573, %v9577
        %v9579 = vshrl.u32 %v9449, 16
        %v9581 = vrot.slane %v9579, 4
        %v9582 = vor.u32 %v9581, %v9577
        %v9583 = vrot.slane %v9582, 4
        %v9585 = vshll.u32 %v9450, 16
        %v9587 = vrot.slane %v9585, 5
        %v9588 = vsel %vm3264, %v9583, %v9587
        %v9590 = vshrl.u32 %v9451, 16
        %v9592 = vrot.slane %v9590, 4
        %v9593 = vshll.u32 %v9451, 16
        %v9595 = vrot.slane %v9593, 5
        %v9596 = vor.u32 %v9592, %v9595
        %v9597 = vrot.slane %v9596, 4
        %v9599 = vshll.u32 %v9452, 16
        %v9601 = vrot.slane %v9599, 5
        %v9602 = vsel %vm3264, %v9597, %v9601
        %v9603 = vshrl.u32 %v9452, 16
        %v9605 = vrot.slane %v9603, 4
        %v9606 = vor.u32 %v9605, %v9601
        %v9607 = vrot.slane %v9606, 4
        %v9609 = vshll.u32 %v9453, 16
        %v9611 = vrot.slane %v9609, 5
        %v9612 = vsel %vm3264, %v9607, %v9611
        %v9614 = vshrl.u32 %v9454, 16
        %v9616 = vrot.slane %v9614, 4
        %v9617 = vshll.u32 %v9454, 16
        %v9619 = vrot.slane %v9617, 5
        %v9620 = vor.u32 %v9616, %v9619
        %v9621 = vrot.slane %v9620, 4
        %v9623 = vshll.u32 %v9455, 16
        %v9625 = vrot.slane %v9623, 5
        %v9626 = vsel %vm3264, %v9621, %v9625
        %v9627 = vshrl.u32 %v9455, 16
        %v9629 = vrot.slane %v9627, 4
        %v9630 = vor.u32 %v9629, %v9625
        %v9631 = vrot.slane %v9630, 4
        %v9633 = vshll.u32 %v9456, 16
        %v9635 = vrot.slane %v9633, 5
        %v9636 = vsel %vm3264, %v9631, %v9635
        %v9638 = vshrl.u32 %v9457, 16
        %v9640 = vrot.slane %v9638, 4
        %v9641 = vshll.u32 %v9457, 16
        %v9643 = vrot.slane %v9641, 5
        %v9644 = vor.u32 %v9640, %v9643
        %v9645 = vrot.slane %v9644, 4
        %v9647 = vshll.u32 %v9458, 16
        %v9649 = vrot.slane %v9647, 5
        %v9650 = vsel %vm3264, %v9645, %v9649
        %v9651 = vshrl.u32 %v9458, 16
        %v9653 = vrot.slane %v9651, 4
        %v9654 = vor.u32 %v9653, %v9649
        %v9655 = vrot.slane %v9654, 4
        %v9657 = vshll.u32 %v9459, 16
        %v9659 = vrot.slane %v9657, 5
        %v9660 = vsel %vm3264, %v9655, %v9659
        %v9662 = vshrl.u32 %v9460, 16
        %v9664 = vrot.slane %v9662, 4
        %v9665 = vshll.u32 %v9460, 16
        %v9667 = vrot.slane %v9665, 5
        %v9668 = vor.u32 %v9664, %v9667
        %v9669 = vrot.slane %v9668, 4
        %v9671 = vshll.u32 %v9461, 16
        %v9673 = vrot.slane %v9671, 5
        %v9674 = vsel %vm3264, %v9669, %v9673
        %v9675 = vshrl.u32 %v9461, 16
        %v9677 = vrot.slane %v9675, 4
        %v9678 = vor.u32 %v9677, %v9673
        %v9679 = vrot.slane %v9678, 4
        %v9681 = vshll.u32 %v9462, 16
        %v9683 = vrot.slane %v9681, 5
        %v9684 = vsel %vm3264, %v9679, %v9683
        %v9686 = vshrl.u32 %v9463, 16
        %v9688 = vrot.slane %v9686, 4
        %v9689 = vshll.u32 %v9463, 16
        %v9691 = vrot.slane %v9689, 5
        %v9692 = vor.u32 %v9688, %v9691
        %v9693 = vrot.slane %v9692, 4
        %v9695 = vshll.u32 %v9464, 16
        %v9697 = vrot.slane %v9695, 5
        %v9698 = vsel %vm3264, %v9693, %v9697
        %v9699 = vshrl.u32 %v9464, 16
        %v9701 = vrot.slane %v9699, 4
        %v9702 = vor.u32 %v9701, %v9697
        %v9703 = vrot.slane %v9702, 4
        %v9705 = vshll.u32 %v9465, 16
        %v9707 = vrot.slane %v9705, 5
        %v9708 = vsel %vm3264, %v9703, %v9707
        %v9710 = vshrl.u32 %v9466, 16
        %v9712 = vrot.slane %v9710, 4
        %v9713 = vshll.u32 %v9466, 16
        %v9715 = vrot.slane %v9713, 5
        %v9716 = vor.u32 %v9712, %v9715
        %v9717 = vrot.slane %v9716, 4
        %v9719 = vshll.u32 %v9467, 16
        %v9721 = vrot.slane %v9719, 5
        %v9722 = vsel %vm3264, %v9717, %v9721
        %v9723 = vshrl.u32 %v9467, 16
        %v9725 = vrot.slane %v9723, 4
        %v9726 = vor.u32 %v9725, %v9721
        %v9727 = vrot.slane %v9726, 4
        %v9729 = vshll.u32 %v9468, 16
        %v9731 = vrot.slane %v9729, 5
        %v9732 = vsel %vm3264, %v9727, %v9731
        %v9734 = vshrl.u32 %v9469, 16
        %v9736 = vrot.slane %v9734, 4
        %v9737 = vshll.u32 %v9469, 16
        %v9739 = vrot.slane %v9737, 5
        %v9740 = vor.u32 %v9736, %v9739
        %v9741 = vrot.slane %v9740, 4
        %v9743 = vshll.u32 %v9470, 16
        %v9745 = vrot.slane %v9743, 5
        %v9746 = vsel %vm3264, %v9741, %v9745
        %v9747 = vshrl.u32 %v9470, 16
        %v9749 = vrot.slane %v9747, 4
        %v9750 = vor.u32 %v9749, %v9745
        %v9751 = vrot.slane %v9750, 4
        %v9753 = vshll.u32 %v9471, 16
        %v9755 = vrot.slane %v9753, 5
        %v9756 = vsel %vm3264, %v9751, %v9755
        %v9758 = vshrl.u32 %v9472, 16
        %v9760 = vrot.slane %v9758, 4
        %v9761 = vshll.u32 %v9472, 16
        %v9763 = vrot.slane %v9761, 5
        %v9764 = vor.u32 %v9760, %v9763
        %v9765 = vrot.slane %v9764, 4
        %v9767 = vshll.u32 %v9473, 16
        %v9769 = vrot.slane %v9767, 5
        %v9770 = vsel %vm3264, %v9765, %v9769
        %v9771 = vshrl.u32 %v9473, 16
        %v9773 = vrot.slane %v9771, 4
        %v9774 = vor.u32 %v9773, %v9769
        %v9775 = vrot.slane %v9774, 4
        %v9777 = vshll.u32 %v9474, 16
        %v9779 = vrot.slane %v9777, 5
        %v9780 = vsel %vm3264, %v9775, %v9779
        %v9782 = vshrl.u32 %v9475, 16
        %v9784 = vrot.slane %v9782, 4
        %v9785 = vshll.u32 %v9475, 16
        %v9787 = vrot.slane %v9785, 5
        %v9788 = vor.u32 %v9784, %v9787
        %v9789 = vrot.slane %v9788, 4
        %v9791 = vshll.u32 %v9476, 16
        %v9793 = vrot.slane %v9791, 5
        %v9794 = vsel %vm3264, %v9789, %v9793
        %v9795 = vshrl.u32 %v9476, 16
        %v9797 = vrot.slane %v9795, 4
        %v9798 = vor.u32 %v9797, %v9793
        %v9799 = vrot.slane %v9798, 4
        %v9801 = vshll.u32 %v9477, 16
        %v9803 = vrot.slane %v9801, 5
        %v9804 = vsel %vm3264, %v9799, %v9803
        %v9806 = vshrl.u32 %v9478, 16
        %v9808 = vrot.slane %v9806, 4
        %v9809 = vshll.u32 %v9478, 16
        %v9811 = vrot.slane %v9809, 5
        %v9812 = vor.u32 %v9808, %v9811
        %v9813 = vrot.slane %v9812, 4
        %v9815 = vshll.u32 %v9479, 16
        %v9817 = vrot.slane %v9815, 5
        %v9818 = vsel %vm3264, %v9813, %v9817
        %v9819 = vshrl.u32 %v9479, 16
        %v9821 = vrot.slane %v9819, 4
        %v9822 = vor.u32 %v9821, %v9817
        %v9823 = vrot.slane %v9822, 4
        %v9825 = vshll.u32 %v9480, 16
        %v9827 = vrot.slane %v9825, 5
        %v9828 = vsel %vm3264, %v9823, %v9827
        %v9830 = vshrl.u32 %v9481, 16
        %v9832 = vrot.slane %v9830, 4
        %v9833 = vshll.u32 %v9481, 16
        %v9835 = vrot.slane %v9833, 5
        %v9836 = vor.u32 %v9832, %v9835
        %v9837 = vrot.slane %v9836, 4
        %v9839 = vshll.u32 %v9482, 16
        %v9841 = vrot.slane %v9839, 5
        %v9842 = vsel %vm3264, %v9837, %v9841
        %v9843 = vshrl.u32 %v9482, 16
        %v9845 = vrot.slane %v9843, 4
        %v9846 = vor.u32 %v9845, %v9841
        %v9847 = vrot.slane %v9846, 4
        %v9849 = vshll.u32 %v9483, 16
        %v9851 = vrot.slane %v9849, 5
        %v9852 = vsel %vm3264, %v9847, %v9851
        %v9854 = vshrl.u32 %v9484, 16
        %v9856 = vrot.slane %v9854, 4
        %v9857 = vshll.u32 %v9484, 16
        %v9859 = vrot.slane %v9857, 5
        %v9860 = vor.u32 %v9856, %v9859
        %v9861 = vrot.slane %v9860, 4
        %v9863 = vshll.u32 %v9485, 16
        %v9865 = vrot.slane %v9863, 5
        %v9866 = vsel %vm3264, %v9861, %v9865
        %v9867 = vshrl.u32 %v9485, 16
        %v9869 = vrot.slane %v9867, 4
        %v9870 = vor.u32 %v9869, %v9865
        %v9871 = vrot.slane %v9870, 4
        %v9873 = vshll.u32 %v9486, 16
        %v9875 = vrot.slane %v9873, 5
        %v9876 = vsel %vm3264, %v9871, %v9875
        %v9877 = vunpack.c.l.b16 %v9506
        %v9878 = vunpack.c.l.b16 %v9516
        %v9879 = vunpack.c.l.b16 %v9530
        %v9880 = vunpack.c.l.b16 %v9540
        %v9881 = vunpack.c.l.b16 %v9554
        %v9882 = vunpack.c.l.b16 %v9564
        %v9883 = vunpack.c.l.b16 %v9578
        %v9884 = vunpack.c.l.b16 %v9588
        %v9885 = vunpack.c.l.b16 %v9602
        %v9886 = vunpack.c.l.b16 %v9612
        %v9887 = vunpack.c.l.b16 %v9626
        %v9888 = vunpack.c.l.b16 %v9636
        %v9889 = vunpack.c.l.b16 %v9650
        %v9890 = vunpack.c.l.b16 %v9660
        %v9891 = vunpack.c.l.b16 %v9674
        %v9892 = vunpack.c.l.b16 %v9684
        %v9893 = vunpack.c.l.b16 %v9698
        %v9894 = vunpack.c.l.b16 %v9708
        %v9895 = vunpack.c.l.b16 %v9722
        %v9896 = vunpack.c.l.b16 %v9732
        %v9897 = vunpack.c.l.b16 %v9746
        %v9898 = vunpack.c.l.b16 %v9756
        %v9899 = vunpack.c.l.b16 %v9770
        %v9900 = vunpack.c.l.b16 %v9780
        %v9901 = vunpack.c.l.b16 %v9794
        %v9902 = vunpack.c.l.b16 %v9804
        %v9903 = vunpack.c.l.b16 %v9818
        %v9904 = vunpack.c.l.b16 %v9828
        %v9905 = vunpack.c.l.b16 %v9842
        %v9906 = vunpack.c.l.b16 %v9852
        %v9907 = vunpack.c.l.b16 %v9866
        %v9908 = vunpack.c.l.b16 %v9876
        %v9909 = vpack.c.b16 %v9878, %v9877
        %v9910 = vpack.c.b16 %v9880, %v9879
        %v9911 = vpack.c.b16 %v9882, %v9881
        %v9912 = vpack.c.b16 %v9884, %v9883
        %v9913 = vpack.c.b16 %v9886, %v9885
        %v9914 = vpack.c.b16 %v9888, %v9887
        %v9915 = vpack.c.b16 %v9890, %v9889
        %v9916 = vpack.c.b16 %v9892, %v9891
        %v9917 = vpack.c.b16 %v9894, %v9893
        %v9918 = vpack.c.b16 %v9896, %v9895
        %v9919 = vpack.c.b16 %v9898, %v9897
        %v9920 = vpack.c.b16 %v9900, %v9899
        %v9921 = vpack.c.b16 %v9902, %v9901
        %v9922 = vpack.c.b16 %v9904, %v9903
        %v9923 = vpack.c.b16 %v9906, %v9905
        %v9924 = vpack.c.b16 %v9908, %v9907
        %v9926 = vsel %vm2628, %v9909, 0
        %v9929 = vsel %vm2628, %v9910, 0
        %v9932 = vsel %vm2628, %v9911, 0
        %v9935 = vsel %vm2628, %v9912, 0
        %v9938 = vsel %vm2628, %v9913, 0
        %v9941 = vsel %vm2628, %v9914, 0
        %v9944 = vsel %vm2628, %v9915, 0
        %v9947 = vsel %vm2628, %v9916, 0
        %v9950 = vsel %vm2628, %v9917, 0
        %v9953 = vsel %vm2628, %v9918, 0
        %v9956 = vsel %vm2628, %v9919, 0
        %v9959 = vsel %vm2628, %v9920, 0
        %v9962 = vsel %vm2628, %v9921, 0
        %v9965 = vsel %vm2628, %v9922, 0
        %v9968 = vsel %vm2628, %v9923, 0
        %v9971 = vsel %vm2628, %v9924, 0
        %9973 = vmatprep.subr.bf16.mxu0 0
        %9974 = vmatpush1.bf16.msra.mxu0 0
        %9975 = vmatprep.subr.bf16.mxu0 0
        %9976 = vmatpush1.bf16.msra.mxu0 0
        %9977 = vmatprep.subr.bf16.mxu0 0
        %9978 = vmatpush1.bf16.msra.mxu0 0
        %9979 = vmatprep.subr.bf16.mxu0 0
        %9980 = vmatpush1.bf16.msra.mxu0 0
        %9981 = vmatprep.subr.bf16.mxu0 0
        %9982 = vmatpush1.bf16.msra.mxu0 0
        %9983 = vmatprep.subr.bf16.mxu0 0
        %9984 = vmatpush1.bf16.msra.mxu0 0
        %9985 = vmatprep.subr.bf16.mxu0 0
        %9986 = vmatpush1.bf16.msra.mxu0 %v2497
        %9987 = vmatprep.subr.bf16.mxu0 0
        %9988 = vmatpush1.bf16.msra.mxu0 %v2496
        %9989 = vmatprep.subr.bf16.mxu0 0
        %9990 = vmatpush2.bf16.msra.mxu0 0
        %9991 = vmatprep.subr.bf16.mxu0 0
        %9992 = vmatpush2.bf16.msra.mxu0 0
        %9993 = vmatprep.subr.bf16.mxu0 0
        %9994 = vmatpush2.bf16.msra.mxu0 0
        %9995 = vmatprep.subr.bf16.mxu0 0
        %9996 = vmatpush2.bf16.msra.mxu0 0
        %9997 = vmatprep.subr.bf16.mxu0 0
        %9998 = vmatpush2.bf16.msra.mxu0 0
        %9999 = vmatprep.subr.bf16.mxu0 0
        %10000 = vmatpush2.bf16.msra.mxu0 0
        %10001 = vmatprep.subr.bf16.mxu0 0
        %10002 = vmatpush2.bf16.msra.mxu0 0
        %10003 = vmatprep.subr.bf16.mxu0 0
        %10004 = vmatpush2.bf16.msra.mxu0 0
        %10005 = vmatprep.mubr.bf16.mxu0 0
        %10006 = vmatmul.mubr.bf16.gmra.mxu0 %v9926
        %v10007 = vpop.f32.mrf.mxu0
        %v10008 = vadd.f32 0.0, %v10007
        %v10009 = vpop.f32.mrf.mxu0
        %v10010 = vpop.f32.mrf.mxu0
        %v10011 = vadd.f32 0.0, %v10010
        %v10012 = vpop.f32.mrf.mxu0
        %10013 = vmatprep.mubr.bf16.mxu0 0
        %10014 = vmatmul.mubr.bf16.gmra.mxu0 %v9929
        %v10015 = vpop.f32.mrf.mxu0
        %v10016 = vadd.f32 0.0, %v10015
        %v10017 = vpop.f32.mrf.mxu0
        %v10018 = vpop.f32.mrf.mxu0
        %v10019 = vadd.f32 0.0, %v10018
        %v10020 = vpop.f32.mrf.mxu0
        %10021 = vmatprep.mubr.bf16.mxu0 0
        %10022 = vmatmul.mubr.bf16.gmra.mxu0 %v9932
        %v10023 = vpop.f32.mrf.mxu0
        %v10024 = vadd.f32 0.0, %v10023
        %v10025 = vpop.f32.mrf.mxu0
        %v10026 = vpop.f32.mrf.mxu0
        %v10027 = vadd.f32 0.0, %v10026
        %v10028 = vpop.f32.mrf.mxu0
        %10029 = vmatprep.mubr.bf16.mxu0 0
        %10030 = vmatmul.mubr.bf16.gmra.mxu0 %v9935
        %v10031 = vpop.f32.mrf.mxu0
        %v10032 = vadd.f32 0.0, %v10031
        %v10033 = vpop.f32.mrf.mxu0
        %v10034 = vpop.f32.mrf.mxu0
        %v10035 = vadd.f32 0.0, %v10034
        %v10036 = vpop.f32.mrf.mxu0
        %10037 = vmatprep.mubr.bf16.mxu0 0
        %10038 = vmatmul.mubr.bf16.gmra.mxu0 %v9938
        %v10039 = vpop.f32.mrf.mxu0
        %v10040 = vadd.f32 0.0, %v10039
        %v10041 = vpop.f32.mrf.mxu0
        %v10042 = vpop.f32.mrf.mxu0
        %v10043 = vadd.f32 0.0, %v10042
        %v10044 = vpop.f32.mrf.mxu0
        %10045 = vmatprep.mubr.bf16.mxu0 0
        %10046 = vmatmul.mubr.bf16.gmra.mxu0 %v9941
        %v10047 = vpop.f32.mrf.mxu0
        %v10048 = vadd.f32 0.0, %v10047
        %v10049 = vpop.f32.mrf.mxu0
        %v10050 = vpop.f32.mrf.mxu0
        %v10051 = vadd.f32 0.0, %v10050
        %v10052 = vpop.f32.mrf.mxu0
        %10053 = vmatprep.mubr.bf16.mxu0 0
        %10054 = vmatmul.mubr.bf16.gmra.mxu0 %v9944
        %v10055 = vpop.f32.mrf.mxu0
        %v10056 = vadd.f32 0.0, %v10055
        %v10057 = vpop.f32.mrf.mxu0
        %v10058 = vpop.f32.mrf.mxu0
        %v10059 = vadd.f32 0.0, %v10058
        %v10060 = vpop.f32.mrf.mxu0
        %10061 = vmatprep.mubr.bf16.mxu0 0
        %10062 = vmatmul.mubr.bf16.gmra.mxu0 %v9947
        %v10063 = vpop.f32.mrf.mxu0
        %v10064 = vadd.f32 0.0, %v10063
        %v10065 = vpop.f32.mrf.mxu0
        %v10066 = vpop.f32.mrf.mxu0
        %v10067 = vadd.f32 0.0, %v10066
        %v10068 = vpop.f32.mrf.mxu0
        %10069 = vmatprep.mubr.bf16.mxu0 0
        %10070 = vmatmul.mubr.bf16.gmra.mxu0 %v9950
        %v10071 = vpop.f32.mrf.mxu0
        %v10072 = vadd.f32 0.0, %v10071
        %v10073 = vpop.f32.mrf.mxu0
        %v10074 = vpop.f32.mrf.mxu0
        %v10075 = vadd.f32 0.0, %v10074
        %v10076 = vpop.f32.mrf.mxu0
        %10077 = vmatprep.mubr.bf16.mxu0 0
        %10078 = vmatmul.mubr.bf16.gmra.mxu0 %v9953
        %v10079 = vpop.f32.mrf.mxu0
        %v10080 = vadd.f32 0.0, %v10079
        %v10081 = vpop.f32.mrf.mxu0
        %v10082 = vpop.f32.mrf.mxu0
        %v10083 = vadd.f32 0.0, %v10082
        %v10084 = vpop.f32.mrf.mxu0
        %10085 = vmatprep.mubr.bf16.mxu0 0
        %10086 = vmatmul.mubr.bf16.gmra.mxu0 %v9956
        %v10087 = vpop.f32.mrf.mxu0
        %v10088 = vadd.f32 0.0, %v10087
        %v10089 = vpop.f32.mrf.mxu0
        %v10090 = vpop.f32.mrf.mxu0
        %v10091 = vadd.f32 0.0, %v10090
        %v10092 = vpop.f32.mrf.mxu0
        %10093 = vmatprep.mubr.bf16.mxu0 0
        %10094 = vmatmul.mubr.bf16.gmra.mxu0 %v9959
        %v10095 = vpop.f32.mrf.mxu0
        %v10096 = vadd.f32 0.0, %v10095
        %v10097 = vpop.f32.mrf.mxu0
        %v10098 = vpop.f32.mrf.mxu0
        %v10099 = vadd.f32 0.0, %v10098
        %v10100 = vpop.f32.mrf.mxu0
        %10101 = vmatprep.mubr.bf16.mxu0 0
        %10102 = vmatmul.mubr.bf16.gmra.mxu0 %v9962
        %v10103 = vpop.f32.mrf.mxu0
        %v10104 = vadd.f32 0.0, %v10103
        %v10105 = vpop.f32.mrf.mxu0
        %v10106 = vpop.f32.mrf.mxu0
        %v10107 = vadd.f32 0.0, %v10106
        %v10108 = vpop.f32.mrf.mxu0
        %10109 = vmatprep.mubr.bf16.mxu0 0
        %10110 = vmatmul.mubr.bf16.gmra.mxu0 %v9965
        %v10111 = vpop.f32.mrf.mxu0
        %v10112 = vadd.f32 0.0, %v10111
        %v10113 = vpop.f32.mrf.mxu0
        %v10114 = vpop.f32.mrf.mxu0
        %v10115 = vadd.f32 0.0, %v10114
        %v10116 = vpop.f32.mrf.mxu0
        %10117 = vmatprep.mubr.bf16.mxu0 0
        %10118 = vmatmul.mubr.bf16.gmra.mxu0 %v9968
        %v10119 = vpop.f32.mrf.mxu0
        %v10120 = vadd.f32 0.0, %v10119
        %v10121 = vpop.f32.mrf.mxu0
        %v10122 = vpop.f32.mrf.mxu0
        %v10123 = vadd.f32 0.0, %v10122
        %v10124 = vpop.f32.mrf.mxu0
        %10125 = vmatprep.mubr.bf16.mxu0 0
        %10126 = vmatmul.mubr.bf16.gmra.mxu0 %v9971
        %v10127 = vpop.f32.mrf.mxu0
        %v10128 = vadd.f32 0.0, %v10127
        %v10129 = vpop.f32.mrf.mxu0
        %v10130 = vpop.f32.mrf.mxu0
        %v10131 = vadd.f32 0.0, %v10130
        %v10132 = vpop.f32.mrf.mxu0
        %10133 = vdwg.mxu0
        %v10134 = vadd.f32 %v9407, %v10008
        %v10135 = vadd.f32 %v9408, %v10011
        %v10136 = vadd.f32 %v9409, %v10016
        %v10137 = vadd.f32 %v9410, %v10019
        %v10138 = vadd.f32 %v9411, %v10024
        %v10139 = vadd.f32 %v9412, %v10027
        %v10140 = vadd.f32 %v9413, %v10032
        %v10141 = vadd.f32 %v9414, %v10035
        %v10142 = vadd.f32 %v9415, %v10040
        %v10143 = vadd.f32 %v9416, %v10043
        %v10144 = vadd.f32 %v9417, %v10048
        %v10145 = vadd.f32 %v9418, %v10051
        %v10146 = vadd.f32 %v9419, %v10056
        %v10147 = vadd.f32 %v9420, %v10059
        %v10148 = vadd.f32 %v9421, %v10064
        %v10149 = vadd.f32 %v9422, %v10067
        %v10150 = vadd.f32 %v9423, %v10072
        %v10151 = vadd.f32 %v9424, %v10075
        %v10152 = vadd.f32 %v9425, %v10080
        %v10153 = vadd.f32 %v9426, %v10083
        %v10154 = vadd.f32 %v9427, %v10088
        %v10155 = vadd.f32 %v9428, %v10091
        %v10156 = vadd.f32 %v9429, %v10096
        %v10157 = vadd.f32 %v9430, %v10099
        %v10158 = vadd.f32 %v9431, %v10104
        %v10159 = vadd.f32 %v9432, %v10107
        %v10160 = vadd.f32 %v9433, %v10112
        %v10161 = vadd.f32 %v9434, %v10115
        %v10162 = vadd.f32 %v9435, %v10120
        %v10163 = vadd.f32 %v9436, %v10123
        %v10164 = vadd.f32 %v9437, %v10128
        %v10165 = vadd.f32 %v9438, %v10131
        %v10167 = vshrl.u32 %v9487, 16
        %v10169 = vrot.slane %v10167, 4
        %v10170 = vshll.u32 %v9487, 16
        %v10172 = vrot.slane %v10170, 5
        %v10173 = vor.u32 %v10169, %v10172
        %v10174 = vrot.slane %v10173, 4
        %v10176 = vshll.u32 %v9488, 16
        %v10178 = vrot.slane %v10176, 5
        %v10179 = vsel %vm3264, %v10174, %v10178
        %v10180 = vshrl.u32 %v9488, 16
        %v10182 = vrot.slane %v10180, 4
        %v10183 = vor.u32 %v10182, %v10178
        %v10184 = vrot.slane %v10183, 4
        %v10186 = vshll.u32 %v9489, 16
        %v10188 = vrot.slane %v10186, 5
        %v10189 = vsel %vm3264, %v10184, %v10188
        %v10190 = vunpack.c.l.b16 %v10179
        %v10191 = vunpack.c.l.b16 %v10189
        %v10192 = vpack.c.b16 %v10191, %v10190
        %v10194 = vsel %vm2628, %v10192, 0
        %10196 = vmatprep.subr.bf16.mxu0 0
        %10197 = vmatpush1.bf16.msra.mxu0 0
        %10198 = vmatprep.subr.bf16.mxu0 0
        %10199 = vmatpush1.bf16.msra.mxu0 0
        %10200 = vmatprep.subr.bf16.mxu0 0
        %10201 = vmatpush1.bf16.msra.mxu0 0
        %10202 = vmatprep.subr.bf16.mxu0 0
        %10203 = vmatpush1.bf16.msra.mxu0 0
        %10204 = vmatprep.subr.bf16.mxu0 0
        %10205 = vmatpush1.bf16.msra.mxu0 0
        %10206 = vmatprep.subr.bf16.mxu0 0
        %10207 = vmatpush1.bf16.msra.mxu0 0
        %10208 = vmatprep.subr.bf16.mxu0 0
        %10209 = vmatpush1.bf16.msra.mxu0 %v2503
        %10210 = vmatprep.subr.bf16.mxu0 0
        %10211 = vmatpush1.bf16.msra.mxu0 %v2502
        %10212 = vmatprep.subr.bf16.mxu0 0
        %10213 = vmatpush2.bf16.msra.mxu0 0
        %10214 = vmatprep.subr.bf16.mxu0 0
        %10215 = vmatpush2.bf16.msra.mxu0 0
        %10216 = vmatprep.subr.bf16.mxu0 0
        %10217 = vmatpush2.bf16.msra.mxu0 0
        %10218 = vmatprep.subr.bf16.mxu0 0
        %10219 = vmatpush2.bf16.msra.mxu0 0
        %10220 = vmatprep.subr.bf16.mxu0 0
        %10221 = vmatpush2.bf16.msra.mxu0 0
        %10222 = vmatprep.subr.bf16.mxu0 0
        %10223 = vmatpush2.bf16.msra.mxu0 0
        %10224 = vmatprep.subr.bf16.mxu0 0
        %10225 = vmatpush2.bf16.msra.mxu0 0
        %10226 = vmatprep.subr.bf16.mxu0 0
        %10227 = vmatpush2.bf16.msra.mxu0 0
        %10228 = vmatprep.mubr.bf16.mxu0 0
        %10229 = vmatmul.mubr.bf16.gmra.mxu0 %v9929
        %v10230 = vpop.f32.mrf.mxu0
        %v10231 = vadd.f32 0.0, %v10230
        %v10232 = vpop.f32.mrf.mxu0
        %v10233 = vpop.f32.mrf.mxu0
        %v10234 = vadd.f32 0.0, %v10233
        %v10235 = vpop.f32.mrf.mxu0
        %10236 = vmatprep.mubr.bf16.mxu0 0
        %10237 = vmatmul.mubr.bf16.gmra.mxu0 %v9932
        %v10238 = vpop.f32.mrf.mxu0
        %v10239 = vadd.f32 0.0, %v10238
        %v10240 = vpop.f32.mrf.mxu0
        %v10241 = vpop.f32.mrf.mxu0
        %v10242 = vadd.f32 0.0, %v10241
        %v10243 = vpop.f32.mrf.mxu0
        %10244 = vmatprep.mubr.bf16.mxu0 0
        %10245 = vmatmul.mubr.bf16.gmra.mxu0 %v9935
        %v10246 = vpop.f32.mrf.mxu0
        %v10247 = vadd.f32 0.0, %v10246
        %v10248 = vpop.f32.mrf.mxu0
        %v10249 = vpop.f32.mrf.mxu0
        %v10250 = vadd.f32 0.0, %v10249
        %v10251 = vpop.f32.mrf.mxu0
        %10252 = vmatprep.mubr.bf16.mxu0 0
        %10253 = vmatmul.mubr.bf16.gmra.mxu0 %v9938
        %v10254 = vpop.f32.mrf.mxu0
        %v10255 = vadd.f32 0.0, %v10254
        %v10256 = vpop.f32.mrf.mxu0
        %v10257 = vpop.f32.mrf.mxu0
        %v10258 = vadd.f32 0.0, %v10257
        %v10259 = vpop.f32.mrf.mxu0
        %10260 = vmatprep.mubr.bf16.mxu0 0
        %10261 = vmatmul.mubr.bf16.gmra.mxu0 %v9941
        %v10262 = vpop.f32.mrf.mxu0
        %v10263 = vadd.f32 0.0, %v10262
        %v10264 = vpop.f32.mrf.mxu0
        %v10265 = vpop.f32.mrf.mxu0
        %v10266 = vadd.f32 0.0, %v10265
        %v10267 = vpop.f32.mrf.mxu0
        %10268 = vmatprep.mubr.bf16.mxu0 0
        %10269 = vmatmul.mubr.bf16.gmra.mxu0 %v9944
        %v10270 = vpop.f32.mrf.mxu0
        %v10271 = vadd.f32 0.0, %v10270
        %v10272 = vpop.f32.mrf.mxu0
        %v10273 = vpop.f32.mrf.mxu0
        %v10274 = vadd.f32 0.0, %v10273
        %v10275 = vpop.f32.mrf.mxu0
        %10276 = vmatprep.mubr.bf16.mxu0 0
        %10277 = vmatmul.mubr.bf16.gmra.mxu0 %v9947
        %v10278 = vpop.f32.mrf.mxu0
        %v10279 = vadd.f32 0.0, %v10278
        %v10280 = vpop.f32.mrf.mxu0
        %v10281 = vpop.f32.mrf.mxu0
        %v10282 = vadd.f32 0.0, %v10281
        %v10283 = vpop.f32.mrf.mxu0
        %10284 = vmatprep.mubr.bf16.mxu0 0
        %10285 = vmatmul.mubr.bf16.gmra.mxu0 %v9950
        %v10286 = vpop.f32.mrf.mxu0
        %v10287 = vadd.f32 0.0, %v10286
        %v10288 = vpop.f32.mrf.mxu0
        %v10289 = vpop.f32.mrf.mxu0
        %v10290 = vadd.f32 0.0, %v10289
        %v10291 = vpop.f32.mrf.mxu0
        %10292 = vmatprep.mubr.bf16.mxu0 0
        %10293 = vmatmul.mubr.bf16.gmra.mxu0 %v9953
        %v10294 = vpop.f32.mrf.mxu0
        %v10295 = vadd.f32 0.0, %v10294
        %v10296 = vpop.f32.mrf.mxu0
        %v10297 = vpop.f32.mrf.mxu0
        %v10298 = vadd.f32 0.0, %v10297
        %v10299 = vpop.f32.mrf.mxu0
        %10300 = vmatprep.mubr.bf16.mxu0 0
        %10301 = vmatmul.mubr.bf16.gmra.mxu0 %v9956
        %v10302 = vpop.f32.mrf.mxu0
        %v10303 = vadd.f32 0.0, %v10302
        %v10304 = vpop.f32.mrf.mxu0
        %v10305 = vpop.f32.mrf.mxu0
        %v10306 = vadd.f32 0.0, %v10305
        %v10307 = vpop.f32.mrf.mxu0
        %10308 = vmatprep.mubr.bf16.mxu0 0
        %10309 = vmatmul.mubr.bf16.gmra.mxu0 %v9959
        %v10310 = vpop.f32.mrf.mxu0
        %v10311 = vadd.f32 0.0, %v10310
        %v10312 = vpop.f32.mrf.mxu0
        %v10313 = vpop.f32.mrf.mxu0
        %v10314 = vadd.f32 0.0, %v10313
        %v10315 = vpop.f32.mrf.mxu0
        %10316 = vmatprep.mubr.bf16.mxu0 0
        %10317 = vmatmul.mubr.bf16.gmra.mxu0 %v9962
        %v10318 = vpop.f32.mrf.mxu0
        %v10319 = vadd.f32 0.0, %v10318
        %v10320 = vpop.f32.mrf.mxu0
        %v10321 = vpop.f32.mrf.mxu0
        %v10322 = vadd.f32 0.0, %v10321
        %v10323 = vpop.f32.mrf.mxu0
        %10324 = vmatprep.mubr.bf16.mxu0 0
        %10325 = vmatmul.mubr.bf16.gmra.mxu0 %v9965
        %v10326 = vpop.f32.mrf.mxu0
        %v10327 = vadd.f32 0.0, %v10326
        %v10328 = vpop.f32.mrf.mxu0
        %v10329 = vpop.f32.mrf.mxu0
        %v10330 = vadd.f32 0.0, %v10329
        %v10331 = vpop.f32.mrf.mxu0
        %10332 = vmatprep.mubr.bf16.mxu0 0
        %10333 = vmatmul.mubr.bf16.gmra.mxu0 %v9968
        %v10334 = vpop.f32.mrf.mxu0
        %v10335 = vadd.f32 0.0, %v10334
        %v10336 = vpop.f32.mrf.mxu0
        %v10337 = vpop.f32.mrf.mxu0
        %v10338 = vadd.f32 0.0, %v10337
        %v10339 = vpop.f32.mrf.mxu0
        %10340 = vmatprep.mubr.bf16.mxu0 0
        %10341 = vmatmul.mubr.bf16.gmra.mxu0 %v9971
        %v10342 = vpop.f32.mrf.mxu0
        %v10343 = vadd.f32 0.0, %v10342
        %v10344 = vpop.f32.mrf.mxu0
        %v10345 = vpop.f32.mrf.mxu0
        %v10346 = vadd.f32 0.0, %v10345
        %v10347 = vpop.f32.mrf.mxu0
        %10348 = vmatprep.mubr.bf16.mxu0 0
        %10349 = vmatmul.mubr.bf16.gmra.mxu0 %v10194
        %v10350 = vpop.f32.mrf.mxu0
        %v10351 = vadd.f32 0.0, %v10350
        %v10352 = vpop.f32.mrf.mxu0
        %v10353 = vpop.f32.mrf.mxu0
        %v10354 = vadd.f32 0.0, %v10353
        %v10355 = vpop.f32.mrf.mxu0
        %10356 = vdwg.mxu0
        %v10357 = vadd.f32 %v10134, %v10231
        %v10358 = vadd.f32 %v10135, %v10234
        %v10359 = vadd.f32 %v10136, %v10239
        %v10360 = vadd.f32 %v10137, %v10242
        %v10361 = vadd.f32 %v10138, %v10247
        %v10362 = vadd.f32 %v10139, %v10250
        %v10363 = vadd.f32 %v10140, %v10255
        %v10364 = vadd.f32 %v10141, %v10258
        %v10365 = vadd.f32 %v10142, %v10263
        %v10366 = vadd.f32 %v10143, %v10266
        %v10367 = vadd.f32 %v10144, %v10271
        %v10368 = vadd.f32 %v10145, %v10274
        %v10369 = vadd.f32 %v10146, %v10279
        %v10370 = vadd.f32 %v10147, %v10282
        %v10371 = vadd.f32 %v10148, %v10287
        %v10372 = vadd.f32 %v10149, %v10290
        %v10373 = vadd.f32 %v10150, %v10295
        %v10374 = vadd.f32 %v10151, %v10298
        %v10375 = vadd.f32 %v10152, %v10303
        %v10376 = vadd.f32 %v10153, %v10306
        %v10377 = vadd.f32 %v10154, %v10311
        %v10378 = vadd.f32 %v10155, %v10314
        %v10379 = vadd.f32 %v10156, %v10319
        %v10380 = vadd.f32 %v10157, %v10322
        %v10381 = vadd.f32 %v10158, %v10327
        %v10382 = vadd.f32 %v10159, %v10330
        %v10383 = vadd.f32 %v10160, %v10335
        %v10384 = vadd.f32 %v10161, %v10338
        %v10385 = vadd.f32 %v10162, %v10343
        %v10386 = vadd.f32 %v10163, %v10346
        %v10387 = vadd.f32 %v10164, %v10351
        %v10388 = vadd.f32 %v10165, %v10354
        %v10390 = vshrl.u32 %v9490, 16
        %v10392 = vrot.slane %v10390, 4
        %v10393 = vshll.u32 %v9490, 16
        %v10395 = vrot.slane %v10393, 5
        %v10396 = vor.u32 %v10392, %v10395
        %v10397 = vrot.slane %v10396, 4
        %v10399 = vshll.u32 %v9491, 16
        %v10401 = vrot.slane %v10399, 5
        %v10402 = vsel %vm3264, %v10397, %v10401
        %v10403 = vshrl.u32 %v9491, 16
        %v10405 = vrot.slane %v10403, 4
        %v10406 = vor.u32 %v10405, %v10401
        %v10407 = vrot.slane %v10406, 4
        %v10409 = vshll.u32 %v9492, 16
        %v10411 = vrot.slane %v10409, 5
        %v10412 = vsel %vm3264, %v10407, %v10411
        %v10413 = vunpack.c.l.b16 %v10402
        %v10414 = vunpack.c.l.b16 %v10412
        %v10415 = vpack.c.b16 %v10414, %v10413
        %v10417 = vsel %vm2628, %v10415, 0
        %10419 = vmatprep.subr.bf16.mxu0 0
        %10420 = vmatpush1.bf16.msra.mxu0 0
        %10421 = vmatprep.subr.bf16.mxu0 0
        %10422 = vmatpush1.bf16.msra.mxu0 0
        %10423 = vmatprep.subr.bf16.mxu0 0
        %10424 = vmatpush1.bf16.msra.mxu0 0
        %10425 = vmatprep.subr.bf16.mxu0 0
        %10426 = vmatpush1.bf16.msra.mxu0 0
        %10427 = vmatprep.subr.bf16.mxu0 0
        %10428 = vmatpush1.bf16.msra.mxu0 0
        %10429 = vmatprep.subr.bf16.mxu0 0
        %10430 = vmatpush1.bf16.msra.mxu0 0
        %10431 = vmatprep.subr.bf16.mxu0 0
        %10432 = vmatpush1.bf16.msra.mxu0 %v2509
        %10433 = vmatprep.subr.bf16.mxu0 0
        %10434 = vmatpush1.bf16.msra.mxu0 %v2508
        %10435 = vmatprep.subr.bf16.mxu0 0
        %10436 = vmatpush2.bf16.msra.mxu0 0
        %10437 = vmatprep.subr.bf16.mxu0 0
        %10438 = vmatpush2.bf16.msra.mxu0 0
        %10439 = vmatprep.subr.bf16.mxu0 0
        %10440 = vmatpush2.bf16.msra.mxu0 0
        %10441 = vmatprep.subr.bf16.mxu0 0
        %10442 = vmatpush2.bf16.msra.mxu0 0
        %10443 = vmatprep.subr.bf16.mxu0 0
        %10444 = vmatpush2.bf16.msra.mxu0 0
        %10445 = vmatprep.subr.bf16.mxu0 0
        %10446 = vmatpush2.bf16.msra.mxu0 0
        %10447 = vmatprep.subr.bf16.mxu0 0
        %10448 = vmatpush2.bf16.msra.mxu0 0
        %10449 = vmatprep.subr.bf16.mxu0 0
        %10450 = vmatpush2.bf16.msra.mxu0 0
        %10451 = vmatprep.mubr.bf16.mxu0 0
        %10452 = vmatmul.mubr.bf16.gmra.mxu0 %v9932
        %v10453 = vpop.f32.mrf.mxu0
        %v10454 = vadd.f32 0.0, %v10453
        %v10455 = vpop.f32.mrf.mxu0
        %v10456 = vpop.f32.mrf.mxu0
        %v10457 = vadd.f32 0.0, %v10456
        %v10458 = vpop.f32.mrf.mxu0
        %10459 = vmatprep.mubr.bf16.mxu0 0
        %10460 = vmatmul.mubr.bf16.gmra.mxu0 %v9935
        %v10461 = vpop.f32.mrf.mxu0
        %v10462 = vadd.f32 0.0, %v10461
        %v10463 = vpop.f32.mrf.mxu0
        %v10464 = vpop.f32.mrf.mxu0
        %v10465 = vadd.f32 0.0, %v10464
        %v10466 = vpop.f32.mrf.mxu0
        %10467 = vmatprep.mubr.bf16.mxu0 0
        %10468 = vmatmul.mubr.bf16.gmra.mxu0 %v9938
        %v10469 = vpop.f32.mrf.mxu0
        %v10470 = vadd.f32 0.0, %v10469
        %v10471 = vpop.f32.mrf.mxu0
        %v10472 = vpop.f32.mrf.mxu0
        %v10473 = vadd.f32 0.0, %v10472
        %v10474 = vpop.f32.mrf.mxu0
        %10475 = vmatprep.mubr.bf16.mxu0 0
        %10476 = vmatmul.mubr.bf16.gmra.mxu0 %v9941
        %v10477 = vpop.f32.mrf.mxu0
        %v10478 = vadd.f32 0.0, %v10477
        %v10479 = vpop.f32.mrf.mxu0
        %v10480 = vpop.f32.mrf.mxu0
        %v10481 = vadd.f32 0.0, %v10480
        %v10482 = vpop.f32.mrf.mxu0
        %10483 = vmatprep.mubr.bf16.mxu0 0
        %10484 = vmatmul.mubr.bf16.gmra.mxu0 %v9944
        %v10485 = vpop.f32.mrf.mxu0
        %v10486 = vadd.f32 0.0, %v10485
        %v10487 = vpop.f32.mrf.mxu0
        %v10488 = vpop.f32.mrf.mxu0
        %v10489 = vadd.f32 0.0, %v10488
        %v10490 = vpop.f32.mrf.mxu0
        %10491 = vmatprep.mubr.bf16.mxu0 0
        %10492 = vmatmul.mubr.bf16.gmra.mxu0 %v9947
        %v10493 = vpop.f32.mrf.mxu0
        %v10494 = vadd.f32 0.0, %v10493
        %v10495 = vpop.f32.mrf.mxu0
        %v10496 = vpop.f32.mrf.mxu0
        %v10497 = vadd.f32 0.0, %v10496
        %v10498 = vpop.f32.mrf.mxu0
        %10499 = vmatprep.mubr.bf16.mxu0 0
        %10500 = vmatmul.mubr.bf16.gmra.mxu0 %v9950
        %v10501 = vpop.f32.mrf.mxu0
        %v10502 = vadd.f32 0.0, %v10501
        %v10503 = vpop.f32.mrf.mxu0
        %v10504 = vpop.f32.mrf.mxu0
        %v10505 = vadd.f32 0.0, %v10504
        %v10506 = vpop.f32.mrf.mxu0
        %10507 = vmatprep.mubr.bf16.mxu0 0
        %10508 = vmatmul.mubr.bf16.gmra.mxu0 %v9953
        %v10509 = vpop.f32.mrf.mxu0
        %v10510 = vadd.f32 0.0, %v10509
        %v10511 = vpop.f32.mrf.mxu0
        %v10512 = vpop.f32.mrf.mxu0
        %v10513 = vadd.f32 0.0, %v10512
        %v10514 = vpop.f32.mrf.mxu0
        %10515 = vmatprep.mubr.bf16.mxu0 0
        %10516 = vmatmul.mubr.bf16.gmra.mxu0 %v9956
        %v10517 = vpop.f32.mrf.mxu0
        %v10518 = vadd.f32 0.0, %v10517
        %v10519 = vpop.f32.mrf.mxu0
        %v10520 = vpop.f32.mrf.mxu0
        %v10521 = vadd.f32 0.0, %v10520
        %v10522 = vpop.f32.mrf.mxu0
        %10523 = vmatprep.mubr.bf16.mxu0 0
        %10524 = vmatmul.mubr.bf16.gmra.mxu0 %v9959
        %v10525 = vpop.f32.mrf.mxu0
        %v10526 = vadd.f32 0.0, %v10525
        %v10527 = vpop.f32.mrf.mxu0
        %v10528 = vpop.f32.mrf.mxu0
        %v10529 = vadd.f32 0.0, %v10528
        %v10530 = vpop.f32.mrf.mxu0
        %10531 = vmatprep.mubr.bf16.mxu0 0
        %10532 = vmatmul.mubr.bf16.gmra.mxu0 %v9962
        %v10533 = vpop.f32.mrf.mxu0
        %v10534 = vadd.f32 0.0, %v10533
        %v10535 = vpop.f32.mrf.mxu0
        %v10536 = vpop.f32.mrf.mxu0
        %v10537 = vadd.f32 0.0, %v10536
        %v10538 = vpop.f32.mrf.mxu0
        %10539 = vmatprep.mubr.bf16.mxu0 0
        %10540 = vmatmul.mubr.bf16.gmra.mxu0 %v9965
        %v10541 = vpop.f32.mrf.mxu0
        %v10542 = vadd.f32 0.0, %v10541
        %v10543 = vpop.f32.mrf.mxu0
        %v10544 = vpop.f32.mrf.mxu0
        %v10545 = vadd.f32 0.0, %v10544
        %v10546 = vpop.f32.mrf.mxu0
        %10547 = vmatprep.mubr.bf16.mxu0 0
        %10548 = vmatmul.mubr.bf16.gmra.mxu0 %v9968
        %v10549 = vpop.f32.mrf.mxu0
        %v10550 = vadd.f32 0.0, %v10549
        %v10551 = vpop.f32.mrf.mxu0
        %v10552 = vpop.f32.mrf.mxu0
        %v10553 = vadd.f32 0.0, %v10552
        %v10554 = vpop.f32.mrf.mxu0
        %10555 = vmatprep.mubr.bf16.mxu0 0
        %10556 = vmatmul.mubr.bf16.gmra.mxu0 %v9971
        %v10557 = vpop.f32.mrf.mxu0
        %v10558 = vadd.f32 0.0, %v10557
        %v10559 = vpop.f32.mrf.mxu0
        %v10560 = vpop.f32.mrf.mxu0
        %v10561 = vadd.f32 0.0, %v10560
        %v10562 = vpop.f32.mrf.mxu0
        %10563 = vmatprep.mubr.bf16.mxu0 0
        %10564 = vmatmul.mubr.bf16.gmra.mxu0 %v10194
        %v10565 = vpop.f32.mrf.mxu0
        %v10566 = vadd.f32 0.0, %v10565
        %v10567 = vpop.f32.mrf.mxu0
        %v10568 = vpop.f32.mrf.mxu0
        %v10569 = vadd.f32 0.0, %v10568
        %v10570 = vpop.f32.mrf.mxu0
        %10571 = vmatprep.mubr.bf16.mxu0 0
        %10572 = vmatmul.mubr.bf16.gmra.mxu0 %v10417
        %v10573 = vpop.f32.mrf.mxu0
        %v10574 = vadd.f32 0.0, %v10573
        %v10575 = vpop.f32.mrf.mxu0
        %v10576 = vpop.f32.mrf.mxu0
        %v10577 = vadd.f32 0.0, %v10576
        %v10578 = vpop.f32.mrf.mxu0
        %10579 = vdwg.mxu0
        %v10580 = vadd.f32 %v10357, %v10454
        %v10581 = vadd.f32 %v10358, %v10457
        %v10582 = vadd.f32 %v10359, %v10462
        %v10583 = vadd.f32 %v10360, %v10465
        %v10584 = vadd.f32 %v10361, %v10470
        %v10585 = vadd.f32 %v10362, %v10473
        %v10586 = vadd.f32 %v10363, %v10478
        %v10587 = vadd.f32 %v10364, %v10481
        %v10588 = vadd.f32 %v10365, %v10486
        %v10589 = vadd.f32 %v10366, %v10489
        %v10590 = vadd.f32 %v10367, %v10494
        %v10591 = vadd.f32 %v10368, %v10497
        %v10592 = vadd.f32 %v10369, %v10502
        %v10593 = vadd.f32 %v10370, %v10505
        %v10594 = vadd.f32 %v10371, %v10510
        %v10595 = vadd.f32 %v10372, %v10513
        %v10596 = vadd.f32 %v10373, %v10518
        %v10597 = vadd.f32 %v10374, %v10521
        %v10598 = vadd.f32 %v10375, %v10526
        %v10599 = vadd.f32 %v10376, %v10529
        %v10600 = vadd.f32 %v10377, %v10534
        %v10601 = vadd.f32 %v10378, %v10537
        %v10602 = vadd.f32 %v10379, %v10542
        %v10603 = vadd.f32 %v10380, %v10545
        %v10604 = vadd.f32 %v10381, %v10550
        %v10605 = vadd.f32 %v10382, %v10553
        %v10606 = vadd.f32 %v10383, %v10558
        %v10607 = vadd.f32 %v10384, %v10561
        %v10608 = vadd.f32 %v10385, %v10566
        %v10609 = vadd.f32 %v10386, %v10569
        %v10610 = vadd.f32 %v10387, %v10574
        %v10611 = vadd.f32 %v10388, %v10577
        %v10612 = vld [vmem:[#allocation4] sm:$0xe]
        %v10613 = vld [vmem:[#allocation4 + $0xc] sm:$0xe]
        %v10614 = vld [vmem:[#allocation4 + $0x18] sm:$0xe]
        %v10615 = vld [vmem:[#allocation4 + $0x24] sm:$0xe]
        %v10616 = vld [vmem:[#allocation4 + $0x30] sm:$0xe]
        %v10617 = vld [vmem:[#allocation4 + $0x3c] sm:$0xe]
        %v10618 = vld [vmem:[#allocation4 + $0x48] sm:$0xe]
        %v10619 = vld [vmem:[#allocation4 + $0x54] sm:$0xe]
        %v10620 = vld [vmem:[#allocation4 + $0x60] sm:$0xe]
        %v10621 = vld [vmem:[#allocation4 + $0x6c] sm:$0xe]
        %v10622 = vld [vmem:[#allocation4 + $0x78] sm:$0xe]
        %v10623 = vld [vmem:[#allocation4 + $0x84] sm:$0xe]
        %v10624 = vld [vmem:[#allocation4 + $0x90] sm:$0xe]
        %v10625 = vld [vmem:[#allocation4 + $0x9c] sm:$0xe]
        %v10626 = vld [vmem:[#allocation4 + $0xa8] sm:$0xe]
        %v10627 = vld [vmem:[#allocation4 + $0xb4] sm:$0xe]
        %v10628 = vld [vmem:[#allocation4 + $0xc0] sm:$0xe]
        %v10629 = vld [vmem:[#allocation4 + $0xcc] sm:$0xe]
        %v10678 = vrot.slane %v10612, 5
        %v10679 = vrot.slane %v10678, 4
        %v10680 = vrot.slane %v9440, 5
        %v10681 = vsel %vm4452, %v10679, %v10680
        %v10682 = vrot.slane %v10680, 4
        %v10683 = vrot.slane %v9441, 5
        %v10684 = vsel %vm4452, %v10682, %v10683
        %v10685 = vrot.slane %v10613, 5
        %v10686 = vrot.slane %v10685, 4
        %v10687 = vrot.slane %v9443, 5
        %v10688 = vsel %vm4452, %v10686, %v10687
        %v10689 = vrot.slane %v10687, 4
        %v10690 = vrot.slane %v9444, 5
        %v10691 = vsel %vm4452, %v10689, %v10690
        %v10692 = vrot.slane %v10614, 5
        %v10693 = vrot.slane %v10692, 4
        %v10694 = vrot.slane %v9446, 5
        %v10695 = vsel %vm4452, %v10693, %v10694
        %v10696 = vrot.slane %v10694, 4
        %v10697 = vrot.slane %v9447, 5
        %v10698 = vsel %vm4452, %v10696, %v10697
        %v10699 = vrot.slane %v10615, 5
        %v10700 = vrot.slane %v10699, 4
        %v10701 = vrot.slane %v9449, 5
        %v10702 = vsel %vm4452, %v10700, %v10701
        %v10703 = vrot.slane %v10701, 4
        %v10704 = vrot.slane %v9450, 5
        %v10705 = vsel %vm4452, %v10703, %v10704
        %v10706 = vrot.slane %v10616, 5
        %v10707 = vrot.slane %v10706, 4
        %v10708 = vrot.slane %v9452, 5
        %v10709 = vsel %vm4452, %v10707, %v10708
        %v10710 = vrot.slane %v10708, 4
        %v10711 = vrot.slane %v9453, 5
        %v10712 = vsel %vm4452, %v10710, %v10711
        %v10713 = vrot.slane %v10617, 5
        %v10714 = vrot.slane %v10713, 4
        %v10715 = vrot.slane %v9455, 5
        %v10716 = vsel %vm4452, %v10714, %v10715
        %v10717 = vrot.slane %v10715, 4
        %v10718 = vrot.slane %v9456, 5
        %v10719 = vsel %vm4452, %v10717, %v10718
        %v10720 = vrot.slane %v10618, 5
        %v10721 = vrot.slane %v10720, 4
        %v10722 = vrot.slane %v9458, 5
        %v10723 = vsel %vm4452, %v10721, %v10722
        %v10724 = vrot.slane %v10722, 4
        %v10725 = vrot.slane %v9459, 5
        %v10726 = vsel %vm4452, %v10724, %v10725
        %v10727 = vrot.slane %v10619, 5
        %v10728 = vrot.slane %v10727, 4
        %v10729 = vrot.slane %v9461, 5
        %v10730 = vsel %vm4452, %v10728, %v10729
        %v10731 = vrot.slane %v10729, 4
        %v10732 = vrot.slane %v9462, 5
        %v10733 = vsel %vm4452, %v10731, %v10732
        %v10734 = vrot.slane %v10620, 5
        %v10735 = vrot.slane %v10734, 4
        %v10736 = vrot.slane %v9464, 5
        %v10737 = vsel %vm4452, %v10735, %v10736
        %v10738 = vrot.slane %v10736, 4
        %v10739 = vrot.slane %v9465, 5
        %v10740 = vsel %vm4452, %v10738, %v10739
        %v10741 = vrot.slane %v10621, 5
        %v10742 = vrot.slane %v10741, 4
        %v10743 = vrot.slane %v9467, 5
        %v10744 = vsel %vm4452, %v10742, %v10743
        %v10745 = vrot.slane %v10743, 4
        %v10746 = vrot.slane %v9468, 5
        %v10747 = vsel %vm4452, %v10745, %v10746
        %v10748 = vrot.slane %v10622, 5
        %v10749 = vrot.slane %v10748, 4
        %v10750 = vrot.slane %v9470, 5
        %v10751 = vsel %vm4452, %v10749, %v10750
        %v10752 = vrot.slane %v10750, 4
        %v10753 = vrot.slane %v9471, 5
        %v10754 = vsel %vm4452, %v10752, %v10753
        %v10755 = vrot.slane %v10623, 5
        %v10756 = vrot.slane %v10755, 4
        %v10757 = vrot.slane %v9473, 5
        %v10758 = vsel %vm4452, %v10756, %v10757
        %v10759 = vrot.slane %v10757, 4
        %v10760 = vrot.slane %v9474, 5
        %v10761 = vsel %vm4452, %v10759, %v10760
        %v10762 = vrot.slane %v10624, 5
        %v10763 = vrot.slane %v10762, 4
        %v10764 = vrot.slane %v9476, 5
        %v10765 = vsel %vm4452, %v10763, %v10764
        %v10766 = vrot.slane %v10764, 4
        %v10767 = vrot.slane %v9477, 5
        %v10768 = vsel %vm4452, %v10766, %v10767
        %v10769 = vrot.slane %v10625, 5
        %v10770 = vrot.slane %v10769, 4
        %v10771 = vrot.slane %v9479, 5
        %v10772 = vsel %vm4452, %v10770, %v10771
        %v10773 = vrot.slane %v10771, 4
        %v10774 = vrot.slane %v9480, 5
        %v10775 = vsel %vm4452, %v10773, %v10774
        %v10776 = vrot.slane %v10626, 5
        %v10777 = vrot.slane %v10776, 4
        %v10778 = vrot.slane %v9482, 5
        %v10779 = vsel %vm4452, %v10777, %v10778
        %v10780 = vrot.slane %v10778, 4
        %v10781 = vrot.slane %v9483, 5
        %v10782 = vsel %vm4452, %v10780, %v10781
        %v10783 = vrot.slane %v10627, 5
        %v10784 = vrot.slane %v10783, 4
        %v10785 = vrot.slane %v9485, 5
        %v10786 = vsel %vm4452, %v10784, %v10785
        %v10787 = vrot.slane %v10785, 4
        %v10788 = vrot.slane %v9486, 5
        %v10789 = vsel %vm4452, %v10787, %v10788
        %v10790 = vunpack.c.l.b16 %v10681
        %v10791 = vunpack.c.l.b16 %v10684
        %v10792 = vunpack.c.l.b16 %v10688
        %v10793 = vunpack.c.l.b16 %v10691
        %v10794 = vunpack.c.l.b16 %v10695
        %v10795 = vunpack.c.l.b16 %v10698
        %v10796 = vunpack.c.l.b16 %v10702
        %v10797 = vunpack.c.l.b16 %v10705
        %v10798 = vunpack.c.l.b16 %v10709
        %v10799 = vunpack.c.l.b16 %v10712
        %v10800 = vunpack.c.l.b16 %v10716
        %v10801 = vunpack.c.l.b16 %v10719
        %v10802 = vunpack.c.l.b16 %v10723
        %v10803 = vunpack.c.l.b16 %v10726
        %v10804 = vunpack.c.l.b16 %v10730
        %v10805 = vunpack.c.l.b16 %v10733
        %v10806 = vunpack.c.l.b16 %v10737
        %v10807 = vunpack.c.l.b16 %v10740
        %v10808 = vunpack.c.l.b16 %v10744
        %v10809 = vunpack.c.l.b16 %v10747
        %v10810 = vunpack.c.l.b16 %v10751
        %v10811 = vunpack.c.l.b16 %v10754
        %v10812 = vunpack.c.l.b16 %v10758
        %v10813 = vunpack.c.l.b16 %v10761
        %v10814 = vunpack.c.l.b16 %v10765
        %v10815 = vunpack.c.l.b16 %v10768
        %v10816 = vunpack.c.l.b16 %v10772
        %v10817 = vunpack.c.l.b16 %v10775
        %v10818 = vunpack.c.l.b16 %v10779
        %v10819 = vunpack.c.l.b16 %v10782
        %v10820 = vunpack.c.l.b16 %v10786
        %v10821 = vunpack.c.l.b16 %v10789
        %v10822 = vpack.c.b16 %v10791, %v10790
        %v10823 = vpack.c.b16 %v10793, %v10792
        %v10824 = vpack.c.b16 %v10795, %v10794
        %v10825 = vpack.c.b16 %v10797, %v10796
        %v10826 = vpack.c.b16 %v10799, %v10798
        %v10827 = vpack.c.b16 %v10801, %v10800
        %v10828 = vpack.c.b16 %v10803, %v10802
        %v10829 = vpack.c.b16 %v10805, %v10804
        %v10830 = vpack.c.b16 %v10807, %v10806
        %v10831 = vpack.c.b16 %v10809, %v10808
        %v10832 = vpack.c.b16 %v10811, %v10810
        %v10833 = vpack.c.b16 %v10813, %v10812
        %v10834 = vpack.c.b16 %v10815, %v10814
        %v10835 = vpack.c.b16 %v10817, %v10816
        %v10836 = vpack.c.b16 %v10819, %v10818
        %v10837 = vpack.c.b16 %v10821, %v10820
        %v10839 = vsel %vm2628, %v10822, 0
        %v10842 = vsel %vm2628, %v10823, 0
        %v10845 = vsel %vm2628, %v10824, 0
        %v10848 = vsel %vm2628, %v10825, 0
        %v10851 = vsel %vm2628, %v10826, 0
        %v10854 = vsel %vm2628, %v10827, 0
        %v10857 = vsel %vm2628, %v10828, 0
        %v10860 = vsel %vm2628, %v10829, 0
        %v10863 = vsel %vm2628, %v10830, 0
        %v10866 = vsel %vm2628, %v10831, 0
        %v10869 = vsel %vm2628, %v10832, 0
        %v10872 = vsel %vm2628, %v10833, 0
        %v10875 = vsel %vm2628, %v10834, 0
        %v10878 = vsel %vm2628, %v10835, 0
        %v10881 = vsel %vm2628, %v10836, 0
        %v10884 = vsel %vm2628, %v10837, 0
        %10886 = vmatprep.subr.bf16.mxu0 0
        %10887 = vmatpush1.bf16.msra.mxu0 0
        %10888 = vmatprep.subr.bf16.mxu0 0
        %10889 = vmatpush1.bf16.msra.mxu0 0
        %10890 = vmatprep.subr.bf16.mxu0 0
        %10891 = vmatpush1.bf16.msra.mxu0 0
        %10892 = vmatprep.subr.bf16.mxu0 0
        %10893 = vmatpush1.bf16.msra.mxu0 0
        %10894 = vmatprep.subr.bf16.mxu0 0
        %10895 = vmatpush1.bf16.msra.mxu0 0
        %10896 = vmatprep.subr.bf16.mxu0 0
        %10897 = vmatpush1.bf16.msra.mxu0 0
        %10898 = vmatprep.subr.bf16.mxu0 0
        %10899 = vmatpush1.bf16.msra.mxu0 %v2499
        %10900 = vmatprep.subr.bf16.mxu0 0
        %10901 = vmatpush1.bf16.msra.mxu0 %v2498
        %10902 = vmatprep.subr.bf16.mxu0 0
        %10903 = vmatpush2.bf16.msra.mxu0 0
        %10904 = vmatprep.subr.bf16.mxu0 0
        %10905 = vmatpush2.bf16.msra.mxu0 0
        %10906 = vmatprep.subr.bf16.mxu0 0
        %10907 = vmatpush2.bf16.msra.mxu0 0
        %10908 = vmatprep.subr.bf16.mxu0 0
        %10909 = vmatpush2.bf16.msra.mxu0 0
        %10910 = vmatprep.subr.bf16.mxu0 0
        %10911 = vmatpush2.bf16.msra.mxu0 0
        %10912 = vmatprep.subr.bf16.mxu0 0
        %10913 = vmatpush2.bf16.msra.mxu0 0
        %10914 = vmatprep.subr.bf16.mxu0 0
        %10915 = vmatpush2.bf16.msra.mxu0 0
        %10916 = vmatprep.subr.bf16.mxu0 0
        %10917 = vmatpush2.bf16.msra.mxu0 0
        %10918 = vmatprep.mubr.bf16.mxu0 0
        %10919 = vmatmul.mubr.bf16.gmra.mxu0 %v10839
        %v10920 = vpop.f32.mrf.mxu0
        %v10921 = vadd.f32 0.0, %v10920
        %v10922 = vpop.f32.mrf.mxu0
        %v10923 = vpop.f32.mrf.mxu0
        %v10924 = vadd.f32 0.0, %v10923
        %v10925 = vpop.f32.mrf.mxu0
        %10926 = vmatprep.mubr.bf16.mxu0 0
        %10927 = vmatmul.mubr.bf16.gmra.mxu0 %v10842
        %v10928 = vpop.f32.mrf.mxu0
        %v10929 = vadd.f32 0.0, %v10928
        %v10930 = vpop.f32.mrf.mxu0
        %v10931 = vpop.f32.mrf.mxu0
        %v10932 = vadd.f32 0.0, %v10931
        %v10933 = vpop.f32.mrf.mxu0
        %10934 = vmatprep.mubr.bf16.mxu0 0
        %10935 = vmatmul.mubr.bf16.gmra.mxu0 %v10845
        %v10936 = vpop.f32.mrf.mxu0
        %v10937 = vadd.f32 0.0, %v10936
        %v10938 = vpop.f32.mrf.mxu0
        %v10939 = vpop.f32.mrf.mxu0
        %v10940 = vadd.f32 0.0, %v10939
        %v10941 = vpop.f32.mrf.mxu0
        %10942 = vmatprep.mubr.bf16.mxu0 0
        %10943 = vmatmul.mubr.bf16.gmra.mxu0 %v10848
        %v10944 = vpop.f32.mrf.mxu0
        %v10945 = vadd.f32 0.0, %v10944
        %v10946 = vpop.f32.mrf.mxu0
        %v10947 = vpop.f32.mrf.mxu0
        %v10948 = vadd.f32 0.0, %v10947
        %v10949 = vpop.f32.mrf.mxu0
        %10950 = vmatprep.mubr.bf16.mxu0 0
        %10951 = vmatmul.mubr.bf16.gmra.mxu0 %v10851
        %v10952 = vpop.f32.mrf.mxu0
        %v10953 = vadd.f32 0.0, %v10952
        %v10954 = vpop.f32.mrf.mxu0
        %v10955 = vpop.f32.mrf.mxu0
        %v10956 = vadd.f32 0.0, %v10955
        %v10957 = vpop.f32.mrf.mxu0
        %10958 = vmatprep.mubr.bf16.mxu0 0
        %10959 = vmatmul.mubr.bf16.gmra.mxu0 %v10854
        %v10960 = vpop.f32.mrf.mxu0
        %v10961 = vadd.f32 0.0, %v10960
        %v10962 = vpop.f32.mrf.mxu0
        %v10963 = vpop.f32.mrf.mxu0
        %v10964 = vadd.f32 0.0, %v10963
        %v10965 = vpop.f32.mrf.mxu0
        %10966 = vmatprep.mubr.bf16.mxu0 0
        %10967 = vmatmul.mubr.bf16.gmra.mxu0 %v10857
        %v10968 = vpop.f32.mrf.mxu0
        %v10969 = vadd.f32 0.0, %v10968
        %v10970 = vpop.f32.mrf.mxu0
        %v10971 = vpop.f32.mrf.mxu0
        %v10972 = vadd.f32 0.0, %v10971
        %v10973 = vpop.f32.mrf.mxu0
        %10974 = vmatprep.mubr.bf16.mxu0 0
        %10975 = vmatmul.mubr.bf16.gmra.mxu0 %v10860
        %v10976 = vpop.f32.mrf.mxu0
        %v10977 = vadd.f32 0.0, %v10976
        %v10978 = vpop.f32.mrf.mxu0
        %v10979 = vpop.f32.mrf.mxu0
        %v10980 = vadd.f32 0.0, %v10979
        %v10981 = vpop.f32.mrf.mxu0
        %10982 = vmatprep.mubr.bf16.mxu0 0
        %10983 = vmatmul.mubr.bf16.gmra.mxu0 %v10863
        %v10984 = vpop.f32.mrf.mxu0
        %v10985 = vadd.f32 0.0, %v10984
        %v10986 = vpop.f32.mrf.mxu0
        %v10987 = vpop.f32.mrf.mxu0
        %v10988 = vadd.f32 0.0, %v10987
        %v10989 = vpop.f32.mrf.mxu0
        %10990 = vmatprep.mubr.bf16.mxu0 0
        %10991 = vmatmul.mubr.bf16.gmra.mxu0 %v10866
        %v10992 = vpop.f32.mrf.mxu0
        %v10993 = vadd.f32 0.0, %v10992
        %v10994 = vpop.f32.mrf.mxu0
        %v10995 = vpop.f32.mrf.mxu0
        %v10996 = vadd.f32 0.0, %v10995
        %v10997 = vpop.f32.mrf.mxu0
        %10998 = vmatprep.mubr.bf16.mxu0 0
        %10999 = vmatmul.mubr.bf16.gmra.mxu0 %v10869
        %v11000 = vpop.f32.mrf.mxu0
        %v11001 = vadd.f32 0.0, %v11000
        %v11002 = vpop.f32.mrf.mxu0
        %v11003 = vpop.f32.mrf.mxu0
        %v11004 = vadd.f32 0.0, %v11003
        %v11005 = vpop.f32.mrf.mxu0
        %11006 = vmatprep.mubr.bf16.mxu0 0
        %11007 = vmatmul.mubr.bf16.gmra.mxu0 %v10872
        %v11008 = vpop.f32.mrf.mxu0
        %v11009 = vadd.f32 0.0, %v11008
        %v11010 = vpop.f32.mrf.mxu0
        %v11011 = vpop.f32.mrf.mxu0
        %v11012 = vadd.f32 0.0, %v11011
        %v11013 = vpop.f32.mrf.mxu0
        %11014 = vmatprep.mubr.bf16.mxu0 0
        %11015 = vmatmul.mubr.bf16.gmra.mxu0 %v10875
        %v11016 = vpop.f32.mrf.mxu0
        %v11017 = vadd.f32 0.0, %v11016
        %v11018 = vpop.f32.mrf.mxu0
        %v11019 = vpop.f32.mrf.mxu0
        %v11020 = vadd.f32 0.0, %v11019
        %v11021 = vpop.f32.mrf.mxu0
        %11022 = vmatprep.mubr.bf16.mxu0 0
        %11023 = vmatmul.mubr.bf16.gmra.mxu0 %v10878
        %v11024 = vpop.f32.mrf.mxu0
        %v11025 = vadd.f32 0.0, %v11024
        %v11026 = vpop.f32.mrf.mxu0
        %v11027 = vpop.f32.mrf.mxu0
        %v11028 = vadd.f32 0.0, %v11027
        %v11029 = vpop.f32.mrf.mxu0
        %11030 = vmatprep.mubr.bf16.mxu0 0
        %11031 = vmatmul.mubr.bf16.gmra.mxu0 %v10881
        %v11032 = vpop.f32.mrf.mxu0
        %v11033 = vadd.f32 0.0, %v11032
        %v11034 = vpop.f32.mrf.mxu0
        %v11035 = vpop.f32.mrf.mxu0
        %v11036 = vadd.f32 0.0, %v11035
        %v11037 = vpop.f32.mrf.mxu0
        %11038 = vmatprep.mubr.bf16.mxu0 0
        %11039 = vmatmul.mubr.bf16.gmra.mxu0 %v10884
        %v11040 = vpop.f32.mrf.mxu0
        %v11041 = vadd.f32 0.0, %v11040
        %v11042 = vpop.f32.mrf.mxu0
        %v11043 = vpop.f32.mrf.mxu0
        %v11044 = vadd.f32 0.0, %v11043
        %v11045 = vpop.f32.mrf.mxu0
        %11046 = vdwg.mxu0
        %v11047 = vadd.f32 %v10580, %v10921
        %v11048 = vadd.f32 %v10581, %v10924
        %v11049 = vadd.f32 %v10582, %v10929
        %v11050 = vadd.f32 %v10583, %v10932
        %v11051 = vadd.f32 %v10584, %v10937
        %v11052 = vadd.f32 %v10585, %v10940
        %v11053 = vadd.f32 %v10586, %v10945
        %v11054 = vadd.f32 %v10587, %v10948
        %v11055 = vadd.f32 %v10588, %v10953
        %v11056 = vadd.f32 %v10589, %v10956
        %v11057 = vadd.f32 %v10590, %v10961
        %v11058 = vadd.f32 %v10591, %v10964
        %v11059 = vadd.f32 %v10592, %v10969
        %v11060 = vadd.f32 %v10593, %v10972
        %v11061 = vadd.f32 %v10594, %v10977
        %v11062 = vadd.f32 %v10595, %v10980
        %v11063 = vadd.f32 %v10596, %v10985
        %v11064 = vadd.f32 %v10597, %v10988
        %v11065 = vadd.f32 %v10598, %v10993
        %v11066 = vadd.f32 %v10599, %v10996
        %v11067 = vadd.f32 %v10600, %v11001
        %v11068 = vadd.f32 %v10601, %v11004
        %v11069 = vadd.f32 %v10602, %v11009
        %v11070 = vadd.f32 %v10603, %v11012
        %v11071 = vadd.f32 %v10604, %v11017
        %v11072 = vadd.f32 %v10605, %v11020
        %v11073 = vadd.f32 %v10606, %v11025
        %v11074 = vadd.f32 %v10607, %v11028
        %v11075 = vadd.f32 %v10608, %v11033
        %v11076 = vadd.f32 %v10609, %v11036
        %v11077 = vadd.f32 %v10610, %v11041
        %v11078 = vadd.f32 %v10611, %v11044
        %v11082 = vrot.slane %v10628, 5
        %v11083 = vrot.slane %v11082, 4
        %v11084 = vrot.slane %v9488, 5
        %v11085 = vsel %vm4452, %v11083, %v11084
        %v11086 = vrot.slane %v11084, 4
        %v11087 = vrot.slane %v9489, 5
        %v11088 = vsel %vm4452, %v11086, %v11087
        %v11089 = vunpack.c.l.b16 %v11085
        %v11090 = vunpack.c.l.b16 %v11088
        %v11091 = vpack.c.b16 %v11090, %v11089
        %v11093 = vsel %vm2628, %v11091, 0
        %11095 = vmatprep.subr.bf16.mxu0 0
        %11096 = vmatpush1.bf16.msra.mxu0 0
        %11097 = vmatprep.subr.bf16.mxu0 0
        %11098 = vmatpush1.bf16.msra.mxu0 0
        %11099 = vmatprep.subr.bf16.mxu0 0
        %11100 = vmatpush1.bf16.msra.mxu0 0
        %11101 = vmatprep.subr.bf16.mxu0 0
        %11102 = vmatpush1.bf16.msra.mxu0 0
        %11103 = vmatprep.subr.bf16.mxu0 0
        %11104 = vmatpush1.bf16.msra.mxu0 0
        %11105 = vmatprep.subr.bf16.mxu0 0
        %11106 = vmatpush1.bf16.msra.mxu0 0
        %11107 = vmatprep.subr.bf16.mxu0 0
        %11108 = vmatpush1.bf16.msra.mxu0 %v2505
        %11109 = vmatprep.subr.bf16.mxu0 0
        %11110 = vmatpush1.bf16.msra.mxu0 %v2504
        %11111 = vmatprep.subr.bf16.mxu0 0
        %11112 = vmatpush2.bf16.msra.mxu0 0
        %11113 = vmatprep.subr.bf16.mxu0 0
        %11114 = vmatpush2.bf16.msra.mxu0 0
        %11115 = vmatprep.subr.bf16.mxu0 0
        %11116 = vmatpush2.bf16.msra.mxu0 0
        %11117 = vmatprep.subr.bf16.mxu0 0
        %11118 = vmatpush2.bf16.msra.mxu0 0
        %11119 = vmatprep.subr.bf16.mxu0 0
        %11120 = vmatpush2.bf16.msra.mxu0 0
        %11121 = vmatprep.subr.bf16.mxu0 0
        %11122 = vmatpush2.bf16.msra.mxu0 0
        %11123 = vmatprep.subr.bf16.mxu0 0
        %11124 = vmatpush2.bf16.msra.mxu0 0
        %11125 = vmatprep.subr.bf16.mxu0 0
        %11126 = vmatpush2.bf16.msra.mxu0 0
        %11127 = vmatprep.mubr.bf16.mxu0 0
        %11128 = vmatmul.mubr.bf16.gmra.mxu0 %v10842
        %v11129 = vpop.f32.mrf.mxu0
        %v11130 = vadd.f32 0.0, %v11129
        %v11131 = vpop.f32.mrf.mxu0
        %v11132 = vpop.f32.mrf.mxu0
        %v11133 = vadd.f32 0.0, %v11132
        %v11134 = vpop.f32.mrf.mxu0
        %11135 = vmatprep.mubr.bf16.mxu0 0
        %11136 = vmatmul.mubr.bf16.gmra.mxu0 %v10845
        %v11137 = vpop.f32.mrf.mxu0
        %v11138 = vadd.f32 0.0, %v11137
        %v11139 = vpop.f32.mrf.mxu0
        %v11140 = vpop.f32.mrf.mxu0
        %v11141 = vadd.f32 0.0, %v11140
        %v11142 = vpop.f32.mrf.mxu0
        %11143 = vmatprep.mubr.bf16.mxu0 0
        %11144 = vmatmul.mubr.bf16.gmra.mxu0 %v10848
        %v11145 = vpop.f32.mrf.mxu0
        %v11146 = vadd.f32 0.0, %v11145
        %v11147 = vpop.f32.mrf.mxu0
        %v11148 = vpop.f32.mrf.mxu0
        %v11149 = vadd.f32 0.0, %v11148
        %v11150 = vpop.f32.mrf.mxu0
        %11151 = vmatprep.mubr.bf16.mxu0 0
        %11152 = vmatmul.mubr.bf16.gmra.mxu0 %v10851
        %v11153 = vpop.f32.mrf.mxu0
        %v11154 = vadd.f32 0.0, %v11153
        %v11155 = vpop.f32.mrf.mxu0
        %v11156 = vpop.f32.mrf.mxu0
        %v11157 = vadd.f32 0.0, %v11156
        %v11158 = vpop.f32.mrf.mxu0
        %11159 = vmatprep.mubr.bf16.mxu0 0
        %11160 = vmatmul.mubr.bf16.gmra.mxu0 %v10854
        %v11161 = vpop.f32.mrf.mxu0
        %v11162 = vadd.f32 0.0, %v11161
        %v11163 = vpop.f32.mrf.mxu0
        %v11164 = vpop.f32.mrf.mxu0
        %v11165 = vadd.f32 0.0, %v11164
        %v11166 = vpop.f32.mrf.mxu0
        %11167 = vmatprep.mubr.bf16.mxu0 0
        %11168 = vmatmul.mubr.bf16.gmra.mxu0 %v10857
        %v11169 = vpop.f32.mrf.mxu0
        %v11170 = vadd.f32 0.0, %v11169
        %v11171 = vpop.f32.mrf.mxu0
        %v11172 = vpop.f32.mrf.mxu0
        %v11173 = vadd.f32 0.0, %v11172
        %v11174 = vpop.f32.mrf.mxu0
        %11175 = vmatprep.mubr.bf16.mxu0 0
        %11176 = vmatmul.mubr.bf16.gmra.mxu0 %v10860
        %v11177 = vpop.f32.mrf.mxu0
        %v11178 = vadd.f32 0.0, %v11177
        %v11179 = vpop.f32.mrf.mxu0
        %v11180 = vpop.f32.mrf.mxu0
        %v11181 = vadd.f32 0.0, %v11180
        %v11182 = vpop.f32.mrf.mxu0
        %11183 = vmatprep.mubr.bf16.mxu0 0
        %11184 = vmatmul.mubr.bf16.gmra.mxu0 %v10863
        %v11185 = vpop.f32.mrf.mxu0
        %v11186 = vadd.f32 0.0, %v11185
        %v11187 = vpop.f32.mrf.mxu0
        %v11188 = vpop.f32.mrf.mxu0
        %v11189 = vadd.f32 0.0, %v11188
        %v11190 = vpop.f32.mrf.mxu0
        %11191 = vmatprep.mubr.bf16.mxu0 0
        %11192 = vmatmul.mubr.bf16.gmra.mxu0 %v10866
        %v11193 = vpop.f32.mrf.mxu0
        %v11194 = vadd.f32 0.0, %v11193
        %v11195 = vpop.f32.mrf.mxu0
        %v11196 = vpop.f32.mrf.mxu0
        %v11197 = vadd.f32 0.0, %v11196
        %v11198 = vpop.f32.mrf.mxu0
        %11199 = vmatprep.mubr.bf16.mxu0 0
        %11200 = vmatmul.mubr.bf16.gmra.mxu0 %v10869
        %v11201 = vpop.f32.mrf.mxu0
        %v11202 = vadd.f32 0.0, %v11201
        %v11203 = vpop.f32.mrf.mxu0
        %v11204 = vpop.f32.mrf.mxu0
        %v11205 = vadd.f32 0.0, %v11204
        %v11206 = vpop.f32.mrf.mxu0
        %11207 = vmatprep.mubr.bf16.mxu0 0
        %11208 = vmatmul.mubr.bf16.gmra.mxu0 %v10872
        %v11209 = vpop.f32.mrf.mxu0
        %v11210 = vadd.f32 0.0, %v11209
        %v11211 = vpop.f32.mrf.mxu0
        %v11212 = vpop.f32.mrf.mxu0
        %v11213 = vadd.f32 0.0, %v11212
        %v11214 = vpop.f32.mrf.mxu0
        %11215 = vmatprep.mubr.bf16.mxu0 0
        %11216 = vmatmul.mubr.bf16.gmra.mxu0 %v10875
        %v11217 = vpop.f32.mrf.mxu0
        %v11218 = vadd.f32 0.0, %v11217
        %v11219 = vpop.f32.mrf.mxu0
        %v11220 = vpop.f32.mrf.mxu0
        %v11221 = vadd.f32 0.0, %v11220
        %v11222 = vpop.f32.mrf.mxu0
        %11223 = vmatprep.mubr.bf16.mxu0 0
        %11224 = vmatmul.mubr.bf16.gmra.mxu0 %v10878
        %v11225 = vpop.f32.mrf.mxu0
        %v11226 = vadd.f32 0.0, %v11225
        %v11227 = vpop.f32.mrf.mxu0
        %v11228 = vpop.f32.mrf.mxu0
        %v11229 = vadd.f32 0.0, %v11228
        %v11230 = vpop.f32.mrf.mxu0
        %11231 = vmatprep.mubr.bf16.mxu0 0
        %11232 = vmatmul.mubr.bf16.gmra.mxu0 %v10881
        %v11233 = vpop.f32.mrf.mxu0
        %v11234 = vadd.f32 0.0, %v11233
        %v11235 = vpop.f32.mrf.mxu0
        %v11236 = vpop.f32.mrf.mxu0
        %v11237 = vadd.f32 0.0, %v11236
        %v11238 = vpop.f32.mrf.mxu0
        %11239 = vmatprep.mubr.bf16.mxu0 0
        %11240 = vmatmul.mubr.bf16.gmra.mxu0 %v10884
        %v11241 = vpop.f32.mrf.mxu0
        %v11242 = vadd.f32 0.0, %v11241
        %v11243 = vpop.f32.mrf.mxu0
        %v11244 = vpop.f32.mrf.mxu0
        %v11245 = vadd.f32 0.0, %v11244
        %v11246 = vpop.f32.mrf.mxu0
        %11247 = vmatprep.mubr.bf16.mxu0 0
        %11248 = vmatmul.mubr.bf16.gmra.mxu0 %v11093
        %v11249 = vpop.f32.mrf.mxu0
        %v11250 = vadd.f32 0.0, %v11249
        %v11251 = vpop.f32.mrf.mxu0
        %v11252 = vpop.f32.mrf.mxu0
        %v11253 = vadd.f32 0.0, %v11252
        %v11254 = vpop.f32.mrf.mxu0
        %11255 = vdwg.mxu0
        %v11256 = vadd.f32 %v11047, %v11130
        %v11257 = vadd.f32 %v11048, %v11133
        %v11258 = vadd.f32 %v11049, %v11138
        %v11259 = vadd.f32 %v11050, %v11141
        %v11260 = vadd.f32 %v11051, %v11146
        %v11261 = vadd.f32 %v11052, %v11149
        %v11262 = vadd.f32 %v11053, %v11154
        %v11263 = vadd.f32 %v11054, %v11157
        %v11264 = vadd.f32 %v11055, %v11162
        %v11265 = vadd.f32 %v11056, %v11165
        %v11266 = vadd.f32 %v11057, %v11170
        %v11267 = vadd.f32 %v11058, %v11173
        %v11268 = vadd.f32 %v11059, %v11178
        %v11269 = vadd.f32 %v11060, %v11181
        %v11270 = vadd.f32 %v11061, %v11186
        %v11271 = vadd.f32 %v11062, %v11189
        %v11272 = vadd.f32 %v11063, %v11194
        %v11273 = vadd.f32 %v11064, %v11197
        %v11274 = vadd.f32 %v11065, %v11202
        %v11275 = vadd.f32 %v11066, %v11205
        %v11276 = vadd.f32 %v11067, %v11210
        %v11277 = vadd.f32 %v11068, %v11213
        %v11278 = vadd.f32 %v11069, %v11218
        %v11279 = vadd.f32 %v11070, %v11221
        %v11280 = vadd.f32 %v11071, %v11226
        %v11281 = vadd.f32 %v11072, %v11229
        %v11282 = vadd.f32 %v11073, %v11234
        %v11283 = vadd.f32 %v11074, %v11237
        %v11284 = vadd.f32 %v11075, %v11242
        %v11285 = vadd.f32 %v11076, %v11245
        %v11286 = vadd.f32 %v11077, %v11250
        %v11287 = vadd.f32 %v11078, %v11253
        %v11291 = vrot.slane %v10629, 5
        %v11292 = vrot.slane %v11291, 4
        %v11293 = vrot.slane %v9491, 5
        %v11294 = vsel %vm4452, %v11292, %v11293
        %v11295 = vrot.slane %v11293, 4
        %v11296 = vrot.slane %v9492, 5
        %v11297 = vsel %vm4452, %v11295, %v11296
        %v11298 = vunpack.c.l.b16 %v11294
        %v11299 = vunpack.c.l.b16 %v11297
        %v11300 = vpack.c.b16 %v11299, %v11298
        %v11302 = vsel %vm2628, %v11300, 0
        %11304 = vmatprep.subr.bf16.mxu0 0
        %11305 = vmatpush1.bf16.msra.mxu0 0
        %11306 = vmatprep.subr.bf16.mxu0 0
        %11307 = vmatpush1.bf16.msra.mxu0 0
        %11308 = vmatprep.subr.bf16.mxu0 0
        %11309 = vmatpush1.bf16.msra.mxu0 0
        %11310 = vmatprep.subr.bf16.mxu0 0
        %11311 = vmatpush1.bf16.msra.mxu0 0
        %11312 = vmatprep.subr.bf16.mxu0 0
        %11313 = vmatpush1.bf16.msra.mxu0 0
        %11314 = vmatprep.subr.bf16.mxu0 0
        %11315 = vmatpush1.bf16.msra.mxu0 0
        %11316 = vmatprep.subr.bf16.mxu0 0
        %11317 = vmatpush1.bf16.msra.mxu0 %v2511
        %11318 = vmatprep.subr.bf16.mxu0 0
        %11319 = vmatpush1.bf16.msra.mxu0 %v2510
        %11320 = vmatprep.subr.bf16.mxu0 0
        %11321 = vmatpush2.bf16.msra.mxu0 0
        %11322 = vmatprep.subr.bf16.mxu0 0
        %11323 = vmatpush2.bf16.msra.mxu0 0
        %11324 = vmatprep.subr.bf16.mxu0 0
        %11325 = vmatpush2.bf16.msra.mxu0 0
        %11326 = vmatprep.subr.bf16.mxu0 0
        %11327 = vmatpush2.bf16.msra.mxu0 0
        %11328 = vmatprep.subr.bf16.mxu0 0
        %11329 = vmatpush2.bf16.msra.mxu0 0
        %11330 = vmatprep.subr.bf16.mxu0 0
        %11331 = vmatpush2.bf16.msra.mxu0 0
        %11332 = vmatprep.subr.bf16.mxu0 0
        %11333 = vmatpush2.bf16.msra.mxu0 0
        %11334 = vmatprep.subr.bf16.mxu0 0
        %11335 = vmatpush2.bf16.msra.mxu0 0
        %11336 = vmatprep.mubr.bf16.mxu0 0
        %11337 = vmatmul.mubr.bf16.gmra.mxu0 %v10845
        %v11338 = vpop.f32.mrf.mxu0
        %v11339 = vadd.f32 0.0, %v11338
        %v11340 = vpop.f32.mrf.mxu0
        %v11341 = vpop.f32.mrf.mxu0
        %v11342 = vadd.f32 0.0, %v11341
        %v11343 = vpop.f32.mrf.mxu0
        %11344 = vmatprep.mubr.bf16.mxu0 0
        %11345 = vmatmul.mubr.bf16.gmra.mxu0 %v10848
        %v11346 = vpop.f32.mrf.mxu0
        %v11347 = vadd.f32 0.0, %v11346
        %v11348 = vpop.f32.mrf.mxu0
        %v11349 = vpop.f32.mrf.mxu0
        %v11350 = vadd.f32 0.0, %v11349
        %v11351 = vpop.f32.mrf.mxu0
        %11352 = vmatprep.mubr.bf16.mxu0 0
        %11353 = vmatmul.mubr.bf16.gmra.mxu0 %v10851
        %v11354 = vpop.f32.mrf.mxu0
        %v11355 = vadd.f32 0.0, %v11354
        %v11356 = vpop.f32.mrf.mxu0
        %v11357 = vpop.f32.mrf.mxu0
        %v11358 = vadd.f32 0.0, %v11357
        %v11359 = vpop.f32.mrf.mxu0
        %11360 = vmatprep.mubr.bf16.mxu0 0
        %11361 = vmatmul.mubr.bf16.gmra.mxu0 %v10854
        %v11362 = vpop.f32.mrf.mxu0
        %v11363 = vadd.f32 0.0, %v11362
        %v11364 = vpop.f32.mrf.mxu0
        %v11365 = vpop.f32.mrf.mxu0
        %v11366 = vadd.f32 0.0, %v11365
        %v11367 = vpop.f32.mrf.mxu0
        %11368 = vmatprep.mubr.bf16.mxu0 0
        %11369 = vmatmul.mubr.bf16.gmra.mxu0 %v10857
        %v11370 = vpop.f32.mrf.mxu0
        %v11371 = vadd.f32 0.0, %v11370
        %v11372 = vpop.f32.mrf.mxu0
        %v11373 = vpop.f32.mrf.mxu0
        %v11374 = vadd.f32 0.0, %v11373
        %v11375 = vpop.f32.mrf.mxu0
        %11376 = vmatprep.mubr.bf16.mxu0 0
        %11377 = vmatmul.mubr.bf16.gmra.mxu0 %v10860
        %v11378 = vpop.f32.mrf.mxu0
        %v11379 = vadd.f32 0.0, %v11378
        %v11380 = vpop.f32.mrf.mxu0
        %v11381 = vpop.f32.mrf.mxu0
        %v11382 = vadd.f32 0.0, %v11381
        %v11383 = vpop.f32.mrf.mxu0
        %11384 = vmatprep.mubr.bf16.mxu0 0
        %11385 = vmatmul.mubr.bf16.gmra.mxu0 %v10863
        %v11386 = vpop.f32.mrf.mxu0
        %v11387 = vadd.f32 0.0, %v11386
        %v11388 = vpop.f32.mrf.mxu0
        %v11389 = vpop.f32.mrf.mxu0
        %v11390 = vadd.f32 0.0, %v11389
        %v11391 = vpop.f32.mrf.mxu0
        %11392 = vmatprep.mubr.bf16.mxu0 0
        %11393 = vmatmul.mubr.bf16.gmra.mxu0 %v10866
        %v11394 = vpop.f32.mrf.mxu0
        %v11395 = vadd.f32 0.0, %v11394
        %v11396 = vpop.f32.mrf.mxu0
        %v11397 = vpop.f32.mrf.mxu0
        %v11398 = vadd.f32 0.0, %v11397
        %v11399 = vpop.f32.mrf.mxu0
        %11400 = vmatprep.mubr.bf16.mxu0 0
        %11401 = vmatmul.mubr.bf16.gmra.mxu0 %v10869
        %v11402 = vpop.f32.mrf.mxu0
        %v11403 = vadd.f32 0.0, %v11402
        %v11404 = vpop.f32.mrf.mxu0
        %v11405 = vpop.f32.mrf.mxu0
        %v11406 = vadd.f32 0.0, %v11405
        %v11407 = vpop.f32.mrf.mxu0
        %11408 = vmatprep.mubr.bf16.mxu0 0
        %11409 = vmatmul.mubr.bf16.gmra.mxu0 %v10872
        %v11410 = vpop.f32.mrf.mxu0
        %v11411 = vadd.f32 0.0, %v11410
        %v11412 = vpop.f32.mrf.mxu0
        %v11413 = vpop.f32.mrf.mxu0
        %v11414 = vadd.f32 0.0, %v11413
        %v11415 = vpop.f32.mrf.mxu0
        %11416 = vmatprep.mubr.bf16.mxu0 0
        %11417 = vmatmul.mubr.bf16.gmra.mxu0 %v10875
        %v11418 = vpop.f32.mrf.mxu0
        %v11419 = vadd.f32 0.0, %v11418
        %v11420 = vpop.f32.mrf.mxu0
        %v11421 = vpop.f32.mrf.mxu0
        %v11422 = vadd.f32 0.0, %v11421
        %v11423 = vpop.f32.mrf.mxu0
        %11424 = vmatprep.mubr.bf16.mxu0 0
        %11425 = vmatmul.mubr.bf16.gmra.mxu0 %v10878
        %v11426 = vpop.f32.mrf.mxu0
        %v11427 = vadd.f32 0.0, %v11426
        %v11428 = vpop.f32.mrf.mxu0
        %v11429 = vpop.f32.mrf.mxu0
        %v11430 = vadd.f32 0.0, %v11429
        %v11431 = vpop.f32.mrf.mxu0
        %11432 = vmatprep.mubr.bf16.mxu0 0
        %11433 = vmatmul.mubr.bf16.gmra.mxu0 %v10881
        %v11434 = vpop.f32.mrf.mxu0
        %v11435 = vadd.f32 0.0, %v11434
        %v11436 = vpop.f32.mrf.mxu0
        %v11437 = vpop.f32.mrf.mxu0
        %v11438 = vadd.f32 0.0, %v11437
        %v11439 = vpop.f32.mrf.mxu0
        %11440 = vmatprep.mubr.bf16.mxu0 0
        %11441 = vmatmul.mubr.bf16.gmra.mxu0 %v10884
        %v11442 = vpop.f32.mrf.mxu0
        %v11443 = vadd.f32 0.0, %v11442
        %v11444 = vpop.f32.mrf.mxu0
        %v11445 = vpop.f32.mrf.mxu0
        %v11446 = vadd.f32 0.0, %v11445
        %v11447 = vpop.f32.mrf.mxu0
        %11448 = vmatprep.mubr.bf16.mxu0 0
        %11449 = vmatmul.mubr.bf16.gmra.mxu0 %v11093
        %v11450 = vpop.f32.mrf.mxu0
        %v11451 = vadd.f32 0.0, %v11450
        %v11452 = vpop.f32.mrf.mxu0
        %v11453 = vpop.f32.mrf.mxu0
        %v11454 = vadd.f32 0.0, %v11453
        %v11455 = vpop.f32.mrf.mxu0
        %11456 = vmatprep.mubr.bf16.mxu0 0
        %11457 = vmatmul.mubr.bf16.gmra.mxu0 %v11302
        %v11458 = vpop.f32.mrf.mxu0
        %v11459 = vadd.f32 0.0, %v11458
        %v11460 = vpop.f32.mrf.mxu0
        %v11461 = vpop.f32.mrf.mxu0
        %v11462 = vadd.f32 0.0, %v11461
        %v11463 = vpop.f32.mrf.mxu0
        %11464 = vdwg.mxu0
        %v11465 = vadd.f32 %v11256, %v11339
        %v11466 = vadd.f32 %v11257, %v11342
        %v11467 = vadd.f32 %v11258, %v11347
        %v11468 = vadd.f32 %v11259, %v11350
        %v11469 = vadd.f32 %v11260, %v11355
        %v11470 = vadd.f32 %v11261, %v11358
        %v11471 = vadd.f32 %v11262, %v11363
        %v11472 = vadd.f32 %v11263, %v11366
        %v11473 = vadd.f32 %v11264, %v11371
        %v11474 = vadd.f32 %v11265, %v11374
        %v11475 = vadd.f32 %v11266, %v11379
        %v11476 = vadd.f32 %v11267, %v11382
        %v11477 = vadd.f32 %v11268, %v11387
        %v11478 = vadd.f32 %v11269, %v11390
        %v11479 = vadd.f32 %v11270, %v11395
        %v11480 = vadd.f32 %v11271, %v11398
        %v11481 = vadd.f32 %v11272, %v11403
        %v11482 = vadd.f32 %v11273, %v11406
        %v11483 = vadd.f32 %v11274, %v11411
        %v11484 = vadd.f32 %v11275, %v11414
        %v11485 = vadd.f32 %v11276, %v11419
        %v11486 = vadd.f32 %v11277, %v11422
        %v11487 = vadd.f32 %v11278, %v11427
        %v11488 = vadd.f32 %v11279, %v11430
        %v11489 = vadd.f32 %v11280, %v11435
        %v11490 = vadd.f32 %v11281, %v11438
        %v11491 = vadd.f32 %v11282, %v11443
        %v11492 = vadd.f32 %v11283, %v11446
        %v11493 = vadd.f32 %v11284, %v11451
        %v11494 = vadd.f32 %v11285, %v11454
        %v11495 = vadd.f32 %v11286, %v11459
        %v11496 = vadd.f32 %v11287, %v11462
        %v11497 = vld [vmem:[%s7] sm:$0x1]
        %v11499 = vlaneseq
        %v11500 = vshrl.u32 %v11499, 7
        %v11501 = vsub.s32 0, %v11500
        %v11502 = vrot.slane %v11497, %v11501
        %v11504 = vadd.f32 %v11465, %v11502
        %v11505 = vadd.f32 %v11466, %v11502
        %v11506 = vadd.f32 %v11467, %v11502
        %v11507 = vadd.f32 %v11468, %v11502
        %v11508 = vadd.f32 %v11469, %v11502
        %v11509 = vadd.f32 %v11470, %v11502
        %v11510 = vadd.f32 %v11471, %v11502
        %v11511 = vadd.f32 %v11472, %v11502
        %v11512 = vadd.f32 %v11473, %v11502
        %v11513 = vadd.f32 %v11474, %v11502
        %v11514 = vadd.f32 %v11475, %v11502
        %v11515 = vadd.f32 %v11476, %v11502
        %v11516 = vadd.f32 %v11477, %v11502
        %v11517 = vadd.f32 %v11478, %v11502
        %v11518 = vadd.f32 %v11479, %v11502
        %v11519 = vadd.f32 %v11480, %v11502
        %v11520 = vadd.f32 %v11481, %v11502
        %v11521 = vadd.f32 %v11482, %v11502
        %v11522 = vadd.f32 %v11483, %v11502
        %v11523 = vadd.f32 %v11484, %v11502
        %v11524 = vadd.f32 %v11485, %v11502
        %v11525 = vadd.f32 %v11486, %v11502
        %v11526 = vadd.f32 %v11487, %v11502
        %v11527 = vadd.f32 %v11488, %v11502
        %v11528 = vadd.f32 %v11489, %v11502
        %v11529 = vadd.f32 %v11490, %v11502
        %v11530 = vadd.f32 %v11491, %v11502
        %v11531 = vadd.f32 %v11492, %v11502
        %v11532 = vadd.f32 %v11493, %v11502
        %v11533 = vadd.f32 %v11494, %v11502
        %v11534 = vadd.f32 %v11495, %v11502
        %v11535 = vadd.f32 %v11496, %v11502
        %v11536 = vmax.f32 %v11504, 0.0
        %v11537 = vmax.f32 %v11505, 0.0
        %v11538 = vmax.f32 %v11506, 0.0
        %v11539 = vmax.f32 %v11507, 0.0
        %v11540 = vmax.f32 %v11508, 0.0
        %v11541 = vmax.f32 %v11509, 0.0
        %v11542 = vmax.f32 %v11510, 0.0
        %v11543 = vmax.f32 %v11511, 0.0
        %v11544 = vmax.f32 %v11512, 0.0
        %v11545 = vmax.f32 %v11513, 0.0
        %v11546 = vmax.f32 %v11514, 0.0
        %v11547 = vmax.f32 %v11515, 0.0
        %v11548 = vmax.f32 %v11516, 0.0
        %v11549 = vmax.f32 %v11517, 0.0
        %v11550 = vmax.f32 %v11518, 0.0
        %v11551 = vmax.f32 %v11519, 0.0
        %v11552 = vmax.f32 %v11520, 0.0
        %v11553 = vmax.f32 %v11521, 0.0
        %v11554 = vmax.f32 %v11522, 0.0
        %v11555 = vmax.f32 %v11523, 0.0
        %v11556 = vmax.f32 %v11524, 0.0
        %v11557 = vmax.f32 %v11525, 0.0
        %v11558 = vmax.f32 %v11526, 0.0
        %v11559 = vmax.f32 %v11527, 0.0
        %v11560 = vmax.f32 %v11528, 0.0
        %v11561 = vmax.f32 %v11529, 0.0
        %v11562 = vmax.f32 %v11530, 0.0
        %v11563 = vmax.f32 %v11531, 0.0
        %v11564 = vmax.f32 %v11532, 0.0
        %v11565 = vmax.f32 %v11533, 0.0
        %v11566 = vmax.f32 %v11534, 0.0
        %v11567 = vmax.f32 %v11535, 0.0
        %11568 = vst.msk [vmem:[%s313] sm:$0xff] %vm2628, %v11536
        %11569 = vst.msk [vmem:[%s313 + $0x8] sm:$0xff] %vm2628, %v11537
        %11570 = vst.msk [vmem:[%s313 + $0x10] sm:$0xff] %vm2628, %v11538
        %11571 = vst.msk [vmem:[%s313 + $0x18] sm:$0xff] %vm2628, %v11539
        %11572 = vst.msk [vmem:[%s313 + $0x20] sm:$0xff] %vm2628, %v11540
        %11573 = vst.msk [vmem:[%s313 + $0x28] sm:$0xff] %vm2628, %v11541
        %11574 = vst.msk [vmem:[%s313 + $0x30] sm:$0xff] %vm2628, %v11542
        %11575 = vst.msk [vmem:[%s313 + $0x38] sm:$0xff] %vm2628, %v11543
        %11576 = vst.msk [vmem:[%s313 + $0x40] sm:$0xff] %vm2628, %v11544
        %11577 = vst.msk [vmem:[%s313 + $0x48] sm:$0xff] %vm2628, %v11545
        %11578 = vst.msk [vmem:[%s313 + $0x50] sm:$0xff] %vm2628, %v11546
        %11579 = vst.msk [vmem:[%s313 + $0x58] sm:$0xff] %vm2628, %v11547
        %11580 = vst.msk [vmem:[%s313 + $0x60] sm:$0xff] %vm2628, %v11548
        %11581 = vst.msk [vmem:[%s313 + $0x68] sm:$0xff] %vm2628, %v11549
        %11582 = vst.msk [vmem:[%s313 + $0x70] sm:$0xff] %vm2628, %v11550
        %11583 = vst.msk [vmem:[%s313 + $0x78] sm:$0xff] %vm2628, %v11551
        %11584 = vst.msk [vmem:[%s313 + $0x80] sm:$0xff] %vm2628, %v11552
        %11585 = vst.msk [vmem:[%s313 + $0x88] sm:$0xff] %vm2628, %v11553
        %11586 = vst.msk [vmem:[%s313 + $0x90] sm:$0xff] %vm2628, %v11554
        %11587 = vst.msk [vmem:[%s313 + $0x98] sm:$0xff] %vm2628, %v11555
        %11588 = vst.msk [vmem:[%s313 + $0xa0] sm:$0xff] %vm2628, %v11556
        %11589 = vst.msk [vmem:[%s313 + $0xa8] sm:$0xff] %vm2628, %v11557
        %11590 = vst.msk [vmem:[%s313 + $0xb0] sm:$0xff] %vm2628, %v11558
        %11591 = vst.msk [vmem:[%s313 + $0xb8] sm:$0xff] %vm2628, %v11559
        %11592 = vst.msk [vmem:[%s313 + $0xc0] sm:$0xff] %vm2628, %v11560
        %11593 = vst.msk [vmem:[%s313 + $0xc8] sm:$0xff] %vm2628, %v11561
        %11594 = vst.msk [vmem:[%s313 + $0xd0] sm:$0xff] %vm2628, %v11562
        %11595 = vst.msk [vmem:[%s313 + $0xd8] sm:$0xff] %vm2628, %v11563
        %11596 = vst.msk [vmem:[%s313 + $0xe0] sm:$0xff] %vm2628, %v11564
        %11597 = vst.msk [vmem:[%s313 + $0xe8] sm:$0xff] %vm2628, %v11565
        %11598 = vst.msk [vmem:[%s313 + $0xf0] sm:$0xff] %vm2628, %v11566
        %11599 = vst.msk [vmem:[%s313 + $0xf8] sm:$0xff] %vm2628, %v11567
        %s11600 = sand.u32 %s208, 1
        %s11601 = scalar_lea.sflag [#allocation6], %s11600
        %s11602 = sand.u32 %s208, 1
        %s11603 = smul.addr %s11602, 256
        %s11604 = scalar_lea.vmem [#allocation5], %s11603
        // Predicated region
        $region53: #{up_forward.1} parent=51 // pred_check
          %p11605 = pneg %p218
        $region54: #{up_forward.1} parent=51 // pred_check_branch
          %11607 = sbr.rel (%p11605) target = $region56
        $region55: #{up_forward.1} parent=51 // pred_region
          %s11609 = ssub.s32 4096, 4096
          %11610 = vsyncadd %s11601, %s11609
          %s11611 = smul.addr %s22, 32
          %s11612 = smul.addr %s11611, 128
          %s11613 = scalar_lea.hbm %s8, %s11612
          %s11614 = sshll.u32 %s11604, 4
          %s11615 = int_to_ptr.vmem [resolvable:$true] %s11614
          %11620 = dma.vmem_to_hbm [thread:$0]  %s11615, 4096, %s11613, %s11601, 128, 128, 8
        $region56: #{up_forward.1} parent=51 // pred_fallthru
          _
      $region52: #{up_forward.1} parent=5 // pred_fallthru
        _
      %p11621 = scmp.le.s32.totalorder 2, %s17
      // Predicated region
      $region57: #{up_forward.1} parent=5 // pred_check
        %p11622 = pneg %p11621
      $region58: #{up_forward.1} parent=5 // pred_check_branch
        %11624 = sbr.rel (%p11622) target = $region60
      $region59: #{up_forward.1} parent=5 // pred_region
        %s11625 = ssub.s32 %s17, 2
        // Predicated region
        $region61: #{up_forward.1} parent=59 // pred_check
          %p11626 = pneg %p224
        $region62: #{up_forward.1} parent=59 // pred_check_branch
          %11628 = sbr.rel (%p11626) target = $region64
        $region63: #{up_forward.1} parent=59 // pred_region
          %s11629 = sand.u32 %s209, 1
          %s11630 = scalar_lea.sflag [#allocation6], %s11629
          %s11631 = sand.u32 %s209, 1
          %s11632 = smul.addr %s11631, 256
          %s11633 = scalar_lea.vmem [#allocation5], %s11632
          %11634 = dma.done %s11630, 4096
        $region64: #{up_forward.1} parent=59 // pred_fallthru
          _
      $region60: #{up_forward.1} parent=5 // pred_fallthru
        _
    $region6: #{up_forward.1} parent=1 // loop_footer
      %s21 = sadd.s32 1, %s17
    $region7: #{up_forward.1} parent=1 // loop_footer_branch
      %16 = sbr.rel target = $region3
    $region8: #{up_forward.1} parent=1 // loop_exit
      _
    %11635 = vsyncpa [#allocation6], 1
    %s11636 = scalar_lea.sflag [#allocation6], 1
    %11637 = vsyncpa %s11636, 1

</llo_original>
